<compile_context>
chip_gen: v6e
topology: v6e:2x2x1
jax: 0.10.0
libtpu: 0.0.40
codegen_flags: <defaults>
</compile_context>

<pallas_src>
import functools

import numpy as np
import jax
import jax.numpy as jnp
from jax.experimental import pallas as pl
from jax.experimental.pallas import tpu as pltpu


# ---------------------------------------------------------------------------
# Kernel 1: fused Conv2d(3x3, stride 2, pad 1) + bias + ReLU + MaxPool2d(2, 2)
# ---------------------------------------------------------------------------
#
# Factor-4 space-to-depth: for pooled pixel (i', j') and pool phase (p, q) in
# {0,1}^2, the conv output at (2i'+p, 2j'+q) reads padded input pixels
# (4i' + 2p + kh, 4j' + 2q + kw).  Writing 2p+kh = 4*dh + A and
# 2q+kw = 4*dw + B (dh, dw in {0,1}, A, B in {0..3}) turns each phase into at
# most 4 dense matmuls against *contiguous shifted windows* of the flattened
# s4d activation (16*Cin, Hs*Ws), and the 2x2 max-pool into an elementwise max
# of the 4 phase accumulators.

def _conv_relu_pool_kernel(x_ref, w_ref, b_ref, o_ref, *, ws4, ph):
    # x_ref : (1, 16*Cin, Sp)       bf16  flattened s4d activation (one image)
    # w_ref : (4, 4, Cout, 16*Cin)  bf16  [2p+q, 2dh+dw] phase/shift matrices
    # b_ref : (Cout, 1)             f32
    # o_ref : (1, Cout, ph*ws4)     bf16  pooled output (junk col at j' = pw)
    x0 = x_ref[0]
    L = ph * ws4
    # The four (dh, dw) shift windows; hoisted so each relayout happens once.
    xt = [x0[:, s0:s0 + L] for s0 in (0, 1, ws4, ws4 + 1)]

    m = None
    for p in range(2):
        for q in range(2):
            acc = None
            for dh in range(2):
                for dw in range(2):
                    # Phase (p,q) has no tap reaching shift 1 when p==0 / q==0
                    # (the corresponding weight block is identically zero).
                    if (dh == 1 and p == 0) or (dw == 1 and q == 0):
                        continue
                    d = jnp.dot(w_ref[2 * p + q, 2 * dh + dw],
                                xt[2 * dh + dw],
                                preferred_element_type=jnp.float32)
                    acc = d if acc is None else acc + d
            m = acc if m is None else jnp.maximum(m, acc)

    y = jnp.maximum(m + b_ref[...], 0.0)         # bias + ReLU on the pooled max
    o_ref[0] = y.astype(o_ref.dtype)


def _s4d_pack(x_nchw, ph, pw):
    """NCHW -> channels-major factor-4 space-to-depth, flattened, bf16.

    out[n, (A*4+B)*Cin + ci, i4*(pw+1) + j4] = xpad[n, ci, 4*i4 + A, 4*j4 + B]
    where xpad is zero-padded by 1 (the conv pad) on top/left and 3 on
    bottom/right (the 2 extra rows/cols are never read by valid outputs).
    The flat spatial axis is zero-padded to a multiple of 128 (>= S+1) so every
    shifted window the kernel takes stays in bounds and the DMA is lane-dense.
    """
    n, c, h, w = x_nchw.shape
    hs, ws = ph + 1, pw + 1
    xp = jnp.pad(x_nchw, ((0, 0), (0, 0),
                          (1, 4 * hs - h - 1), (1, 4 * ws - w - 1)))
    xs = xp.reshape(n, c, hs, 4, ws, 4).transpose(0, 3, 5, 1, 2, 4)  # n,A,B,c,i4,j4
    xs = xs.reshape(n, 16 * c, hs * ws)
    sp = ((hs * ws + 1 + 127) // 128) * 128
    xs = jnp.pad(xs, ((0, 0), (0, 0), (0, sp - hs * ws)))
    return xs.astype(jnp.bfloat16)


def conv_relu_pool(x_nchw, w_packed, bias, out_dtype=jnp.bfloat16):
    """Fused Conv2d(3x3, s=2, p=1) + ReLU + MaxPool2d(2,2) on NCHW input.

    Returns (N, Cout, (H//4)*(W//4 + 1)) bf16: pooled output, row-major over
    (i', j') with row stride W//4 + 1; column j' = W//4 of every row is junk.
    """
    n, cin, h, w = x_nchw.shape
    assert h % 4 == 0 and w % 4 == 0, "input spatial dims must be multiples of 4"
    ph, pw = h // 4, w // 4
    ws4 = pw + 1
    cout = w_packed.shape[2]
    k16 = 16 * cin
    xs = _s4d_pack(x_nchw, ph, pw)
    sp = xs.shape[-1]
    L = ph * ws4

    return pl.pallas_call(
        functools.partial(_conv_relu_pool_kernel, ws4=ws4, ph=ph),
        out_shape=jax.ShapeDtypeStruct((n, cout, L), out_dtype),
        grid=(n,),
        in_specs=[
            pl.BlockSpec((1, k16, sp), lambda i: (i, 0, 0)),
            pl.BlockSpec((4, 4, cout, k16), lambda i: (0, 0, 0, 0)),
            pl.BlockSpec((cout, 1), lambda i: (0, 0)),
        ],
        out_specs=pl.BlockSpec((1, cout, L), lambda i: (i, 0, 0)),
        compiler_params=pltpu.CompilerParams(
            dimension_semantics=("parallel",)),
    )(xs, w_packed, bias)


# ---------------------------------------------------------------------------
# Kernel 2: fused Linear(2592,256) + ReLU + Linear(256,2), hidden dim split
#           across the grid so v7x shards the HBM-bound fc1 weight load.
# ---------------------------------------------------------------------------

def _fc_fused_kernel(x_ref, w1_ref, b1_ref, w2_ref, o_ref):
    h = jnp.dot(x_ref[...], w1_ref[...], preferred_element_type=jnp.float32)
    h = jnp.maximum(h + b1_ref[...], 0.0)
    o_ref[0] = jnp.dot(h.astype(w2_ref.dtype), w2_ref[...],
                       preferred_element_type=jnp.float32)


def fc_head(x, w1, b1, w2, b2, *, nsplit=2):
    """relu(x @ w1 + b1) @ w2 + b2 with the hidden dim split into `nsplit`
    column blocks; the tiny partial-sum + b2 add is left to XLA."""
    n, k = x.shape
    hdim = w1.shape[1]
    c = w2.shape[1]
    assert hdim % nsplit == 0
    hs = hdim // nsplit
    partial = pl.pallas_call(
        _fc_fused_kernel,
        out_shape=jax.ShapeDtypeStruct((nsplit, n, c), jnp.float32),
        grid=(nsplit,),
        in_specs=[
            pl.BlockSpec((n, k), lambda i: (0, 0)),
            pl.BlockSpec((k, hs), lambda i: (0, i)),
            pl.BlockSpec((1, hs), lambda i: (0, i)),
            pl.BlockSpec((hs, c), lambda i: (i, 0)),
        ],
        out_specs=pl.BlockSpec((1, n, c), lambda i: (i, 0, 0)),
        compiler_params=pltpu.CompilerParams(
            dimension_semantics=("parallel",)),
    )(x, w1, b1, w2)
    return jnp.sum(partial, axis=0) + b2[None, :]


# ---------------------------------------------------------------------------
# Full forward pass
# ---------------------------------------------------------------------------

def cnn_forward(x_nchw, params):
    n = x_nchw.shape[0]
    ph1, pw1 = x_nchw.shape[2] // 4, x_nchw.shape[3] // 4

    # Stage 1: Conv(3->16) + ReLU + Pool        -> (N, 16, 36*37) lane-dense slab
    a1 = conv_relu_pool(x_nchw, params["conv1_w"], params["conv1_b"])
    # Drop the junk column and repack for stage 2 (small fused XLA transform).
    # TODO(synk): emit conv2's s4d layout straight from conv1's epilogue and
    # prefetch fc1_w cross-call during the convs (perf items 7/8), not done here.
    a1 = a1.reshape(n, a1.shape[1], ph1, pw1 + 1)[:, :, :, :pw1]   # (N,16,36,36)

    # Stage 2: Conv(16->32) + ReLU + Pool       -> (N, 32, 9*10)
    a2 = conv_relu_pool(a1, params["conv2_w"], params["conv2_b"])

    # The FC head consumes conv2's slab directly: junk columns (j' = 9) hit
    # zero rows folded into fc1_w, so this reshape is a free bitcast.
    x_fc = a2.reshape(n, -1)                                       # (N, 2880)
    return fc_head(x_fc, params["fc1_w"], params["fc1_b"],
                   params["fc2_w"], params["fc2_b"])               # (N, 2)


# ---------------------------------------------------------------------------
# Weight repacking (torch layouts -> kernel layouts) and init
# ---------------------------------------------------------------------------

def pack_conv_weight(w_oihw):
    """torch Conv2d weight (Cout, Cin, 3, 3) -> (4, 4, Cout, 16*Cin) bf16.

    Index [2p+q, 2dh+dw, co, (A*4+B)*Cin + ci] holds w[co, ci, kh, kw] with
    kh = 4*dh + A - 2*p, kw = 4*dw + B - 2*q (zero when outside the 3x3 taps).
    """
    w = np.asarray(w_oihw, np.float32)
    cout, cin, kh_, kw_ = w.shape
    assert (kh_, kw_) == (3, 3)
    out = np.zeros((2, 2, 2, 2, cout, 4, 4, cin), np.float32)
    for p in range(2):
        for q in range(2):
            for dh in range(2):
                for dw in range(2):
                    for a in range(4):
                        for b in range(4):
                            kh = 4 * dh + a - 2 * p
                            kw = 4 * dw + b - 2 * q
                            if 0 <= kh < 3 and 0 <= kw < 3:
                                out[p, q, dh, dw, :, a, b, :] = w[:, :, kh, kw]
    return jnp.asarray(out.reshape(4, 4, cout, 16 * cin), jnp.bfloat16)


def pack_fc1_weight(w_torch, ph, pw, cout_prev):
    """torch Linear weight (256, C*ph*pw) in torch's (C,H,W) flatten order ->
    (C*ph*(pw+1), 256) bf16 with zero rows inserted for the conv stage's junk
    column j' = pw, matching conv2's lane-dense output slab."""
    w = np.asarray(w_torch, np.float32).T.reshape(cout_prev, ph, pw, -1)
    w = np.pad(w, ((0, 0), (0, 0), (0, 1), (0, 0)))
    return jnp.asarray(w.reshape(cout_prev * ph * (pw + 1), -1), jnp.bfloat16)


def init_params(key):
    ks = jax.random.split(key, 8)
    # Raw weights in torch layouts (OIHW convs, (out,in) linears), then packed.
    conv1 = jax.random.normal(ks[0], (16, 3, 3, 3), jnp.float32) * 0.1
    conv2 = jax.random.normal(ks[1], (32, 16, 3, 3), jnp.float32) * 0.05
    fc1 = jax.random.normal(ks[2], (256, 9 * 9 * 32), jnp.float32) * 0.02
    fc2 = jax.random.normal(ks[3], (2, 256), jnp.float32) * 0.05
    return {
        "conv1_w": pack_conv_weight(conv1),
        "conv1_b": (jax.random.normal(ks[4], (16,), jnp.float32) * 0.05
                    ).reshape(16, 1),
        "conv2_w": pack_conv_weight(conv2),
        "conv2_b": (jax.random.normal(ks[5], (32,), jnp.float32) * 0.05
                    ).reshape(32, 1),
        "fc1_w": pack_fc1_weight(fc1, 9, 9, 32),
        "fc1_b": (jax.random.normal(ks[6], (256,), jnp.float32) * 0.02
                  ).reshape(1, 256),
        "fc2_w": jnp.asarray(np.asarray(fc2, np.float32).T, jnp.bfloat16),
        "fc2_b": jax.random.normal(ks[7], (2,), jnp.float32) * 0.05,
    }


if __name__ == "__main__":
    key = jax.random.PRNGKey(0)
    pkey, xkey = jax.random.split(key)
    params = init_params(pkey)
    # Smallest input size consistent with Linear(9*9*32, 256): 144x144.
    x = jax.random.normal(xkey, (2, 3, 144, 144), jnp.float32)

    y = jax.jit(cnn_forward)(x, params)
    y = jax.block_until_ready(y)

    assert y.shape == (2, 2), y.shape
    assert y.dtype == jnp.float32
    assert bool(jnp.all(jnp.isfinite(y)))
    print("KERNEL_OK")
</pallas_src>

<mosaic_0001>
module attributes {stable_mosaic.version = 11 : i64} {
  func.func @_conv_relu_pool_kernel(%arg0: i32, %arg1: memref<1x48x1408xbf16, #tpu.memory_space<vmem>>, %arg2: memref<4x4x16x48xbf16, #tpu.memory_space<vmem>>, %arg3: memref<16x1xf32, #tpu.memory_space<vmem>>, %arg4: memref<1x16x1332xbf16, #tpu.memory_space<vmem>>) attributes {dimension_semantics = [#tpu.dimension_semantics<parallel>], iteration_bounds = array<i64: 2>, scalar_prefetch = 0 : i64, scratch_operands = 0 : i64, tpu.core_type = #tpu.core_type<tc>, window_params = [{transform_indices = @transform_0, window_bounds = array<i64: 1, 48, 1408>}, {pipeline_mode = #tpu.pipeline_mode<synchronous>, transform_indices = @transform_1, window_bounds = array<i64: 4, 4, 16, 48>}, {pipeline_mode = #tpu.pipeline_mode<synchronous>, transform_indices = @transform_2, window_bounds = array<i64: 16, 1>}, {transform_indices = @transform_3, window_bounds = array<i64: 1, 16, 1332>}]} {
    %c0 = arith.constant 0 : index
    %c0_0 = arith.constant 0 : index
    %c0_1 = arith.constant 0 : index
    %0 = vector.load %arg1[%c0, %c0_0, %c0_1] : memref<1x48x1408xbf16, #tpu.memory_space<vmem>>, vector<1x48x1408xbf16>
    %1 = vector.shape_cast %0 : vector<1x48x1408xbf16> to vector<48x1408xbf16>
    %2 = vector.extract_strided_slice %1 {offsets = [0, 0], sizes = [48, 1332], strides = [1, 1]} : vector<48x1408xbf16> to vector<48x1332xbf16>
    %3 = vector.extract_strided_slice %1 {offsets = [0, 1], sizes = [48, 1332], strides = [1, 1]} : vector<48x1408xbf16> to vector<48x1332xbf16>
    %4 = vector.extract_strided_slice %1 {offsets = [0, 37], sizes = [48, 1332], strides = [1, 1]} : vector<48x1408xbf16> to vector<48x1332xbf16>
    %5 = vector.extract_strided_slice %1 {offsets = [0, 38], sizes = [48, 1332], strides = [1, 1]} : vector<48x1408xbf16> to vector<48x1332xbf16>
    %c0_2 = arith.constant 0 : index
    %c0_3 = arith.constant 0 : index
    %c0_4 = arith.constant 0 : index
    %c0_5 = arith.constant 0 : index
    %6 = vector.load %arg2[%c0_2, %c0_3, %c0_4, %c0_5] : memref<4x4x16x48xbf16, #tpu.memory_space<vmem>>, vector<1x1x16x48xbf16>
    %7 = vector.shape_cast %6 : vector<1x1x16x48xbf16> to vector<16x48xbf16>
    %cst = arith.constant dense<0.000000e+00> : vector<16x1332xf32>
    %8 = tpu.matmul %7, %2, %cst {dimension_numbers = #tpu.dot_dimension_numbers<[1], [0], [0], [1], [0, 0, 1, 1], [], []>} : vector<16x48xbf16>, vector<48x1332xbf16>, vector<16x1332xf32> -> vector<16x1332xf32>
    %c1 = arith.constant 1 : index
    %c0_6 = arith.constant 0 : index
    %c0_7 = arith.constant 0 : index
    %c0_8 = arith.constant 0 : index
    %9 = vector.load %arg2[%c1, %c0_6, %c0_7, %c0_8] : memref<4x4x16x48xbf16, #tpu.memory_space<vmem>>, vector<1x1x16x48xbf16>
    %10 = vector.shape_cast %9 : vector<1x1x16x48xbf16> to vector<16x48xbf16>
    %cst_9 = arith.constant dense<0.000000e+00> : vector<16x1332xf32>
    %11 = tpu.matmul %10, %2, %cst_9 {dimension_numbers = #tpu.dot_dimension_numbers<[1], [0], [0], [1], [0, 0, 1, 1], [], []>} : vector<16x48xbf16>, vector<48x1332xbf16>, vector<16x1332xf32> -> vector<16x1332xf32>
    %c1_10 = arith.constant 1 : index
    %c1_11 = arith.constant 1 : index
    %c0_12 = arith.constant 0 : index
    %c0_13 = arith.constant 0 : index
    %12 = vector.load %arg2[%c1_10, %c1_11, %c0_12, %c0_13] : memref<4x4x16x48xbf16, #tpu.memory_space<vmem>>, vector<1x1x16x48xbf16>
    %13 = vector.shape_cast %12 : vector<1x1x16x48xbf16> to vector<16x48xbf16>
    %cst_14 = arith.constant dense<0.000000e+00> : vector<16x1332xf32>
    %14 = tpu.matmul %13, %3, %cst_14 {dimension_numbers = #tpu.dot_dimension_numbers<[1], [0], [0], [1], [0, 0, 1, 1], [], []>} : vector<16x48xbf16>, vector<48x1332xbf16>, vector<16x1332xf32> -> vector<16x1332xf32>
    %15 = arith.addf %11, %14 : vector<16x1332xf32>
    %16 = arith.maximumf %8, %15 : vector<16x1332xf32>
    %c2 = arith.constant 2 : index
    %c0_15 = arith.constant 0 : index
    %c0_16 = arith.constant 0 : index
    %c0_17 = arith.constant 0 : index
    %17 = vector.load %arg2[%c2, %c0_15, %c0_16, %c0_17] : memref<4x4x16x48xbf16, #tpu.memory_space<vmem>>, vector<1x1x16x48xbf16>
    %18 = vector.shape_cast %17 : vector<1x1x16x48xbf16> to vector<16x48xbf16>
    %cst_18 = arith.constant dense<0.000000e+00> : vector<16x1332xf32>
    %19 = tpu.matmul %18, %2, %cst_18 {dimension_numbers = #tpu.dot_dimension_numbers<[1], [0], [0], [1], [0, 0, 1, 1], [], []>} : vector<16x48xbf16>, vector<48x1332xbf16>, vector<16x1332xf32> -> vector<16x1332xf32>
    %c2_19 = arith.constant 2 : index
    %c2_20 = arith.constant 2 : index
    %c0_21 = arith.constant 0 : index
    %c0_22 = arith.constant 0 : index
    %20 = vector.load %arg2[%c2_19, %c2_20, %c0_21, %c0_22] : memref<4x4x16x48xbf16, #tpu.memory_space<vmem>>, vector<1x1x16x48xbf16>
    %21 = vector.shape_cast %20 : vector<1x1x16x48xbf16> to vector<16x48xbf16>
    %cst_23 = arith.constant dense<0.000000e+00> : vector<16x1332xf32>
    %22 = tpu.matmul %21, %4, %cst_23 {dimension_numbers = #tpu.dot_dimension_numbers<[1], [0], [0], [1], [0, 0, 1, 1], [], []>} : vector<16x48xbf16>, vector<48x1332xbf16>, vector<16x1332xf32> -> vector<16x1332xf32>
    %23 = arith.addf %19, %22 : vector<16x1332xf32>
    %24 = arith.maximumf %16, %23 : vector<16x1332xf32>
    %c3 = arith.constant 3 : index
    %c0_24 = arith.constant 0 : index
    %c0_25 = arith.constant 0 : index
    %c0_26 = arith.constant 0 : index
    %25 = vector.load %arg2[%c3, %c0_24, %c0_25, %c0_26] : memref<4x4x16x48xbf16, #tpu.memory_space<vmem>>, vector<1x1x16x48xbf16>
    %26 = vector.shape_cast %25 : vector<1x1x16x48xbf16> to vector<16x48xbf16>
    %cst_27 = arith.constant dense<0.000000e+00> : vector<16x1332xf32>
    %27 = tpu.matmul %26, %2, %cst_27 {dimension_numbers = #tpu.dot_dimension_numbers<[1], [0], [0], [1], [0, 0, 1, 1], [], []>} : vector<16x48xbf16>, vector<48x1332xbf16>, vector<16x1332xf32> -> vector<16x1332xf32>
    %c3_28 = arith.constant 3 : index
    %c1_29 = arith.constant 1 : index
    %c0_30 = arith.constant 0 : index
    %c0_31 = arith.constant 0 : index
    %28 = vector.load %arg2[%c3_28, %c1_29, %c0_30, %c0_31] : memref<4x4x16x48xbf16, #tpu.memory_space<vmem>>, vector<1x1x16x48xbf16>
    %29 = vector.shape_cast %28 : vector<1x1x16x48xbf16> to vector<16x48xbf16>
    %cst_32 = arith.constant dense<0.000000e+00> : vector<16x1332xf32>
    %30 = tpu.matmul %29, %3, %cst_32 {dimension_numbers = #tpu.dot_dimension_numbers<[1], [0], [0], [1], [0, 0, 1, 1], [], []>} : vector<16x48xbf16>, vector<48x1332xbf16>, vector<16x1332xf32> -> vector<16x1332xf32>
    %31 = arith.addf %27, %30 : vector<16x1332xf32>
    %c3_33 = arith.constant 3 : index
    %c2_34 = arith.constant 2 : index
    %c0_35 = arith.constant 0 : index
    %c0_36 = arith.constant 0 : index
    %32 = vector.load %arg2[%c3_33, %c2_34, %c0_35, %c0_36] : memref<4x4x16x48xbf16, #tpu.memory_space<vmem>>, vector<1x1x16x48xbf16>
    %33 = vector.shape_cast %32 : vector<1x1x16x48xbf16> to vector<16x48xbf16>
    %cst_37 = arith.constant dense<0.000000e+00> : vector<16x1332xf32>
    %34 = tpu.matmul %33, %4, %cst_37 {dimension_numbers = #tpu.dot_dimension_numbers<[1], [0], [0], [1], [0, 0, 1, 1], [], []>} : vector<16x48xbf16>, vector<48x1332xbf16>, vector<16x1332xf32> -> vector<16x1332xf32>
    %35 = arith.addf %31, %34 : vector<16x1332xf32>
    %c3_38 = arith.constant 3 : index
    %c3_39 = arith.constant 3 : index
    %c0_40 = arith.constant 0 : index
    %c0_41 = arith.constant 0 : index
    %36 = vector.load %arg2[%c3_38, %c3_39, %c0_40, %c0_41] : memref<4x4x16x48xbf16, #tpu.memory_space<vmem>>, vector<1x1x16x48xbf16>
    %37 = vector.shape_cast %36 : vector<1x1x16x48xbf16> to vector<16x48xbf16>
    %cst_42 = arith.constant dense<0.000000e+00> : vector<16x1332xf32>
    %38 = tpu.matmul %37, %5, %cst_42 {dimension_numbers = #tpu.dot_dimension_numbers<[1], [0], [0], [1], [0, 0, 1, 1], [], []>} : vector<16x48xbf16>, vector<48x1332xbf16>, vector<16x1332xf32> -> vector<16x1332xf32>
    %39 = arith.addf %35, %38 : vector<16x1332xf32>
    %40 = arith.maximumf %24, %39 : vector<16x1332xf32>
    %c0_43 = arith.constant 0 : index
    %c0_44 = arith.constant 0 : index
    %41 = vector.load %arg3[%c0_43, %c0_44] : memref<16x1xf32, #tpu.memory_space<vmem>>, vector<16x1xf32>
    %42 = vector.broadcast %41 : vector<16x1xf32> to vector<16x1332xf32>
    %43 = arith.addf %40, %42 : vector<16x1332xf32>
    %cst_45 = arith.constant 0.000000e+00 : f32
    %44 = vector.broadcast %cst_45 : f32 to vector<16x1332xf32>
    %45 = arith.maximumf %43, %44 : vector<16x1332xf32>
    %46 = arith.truncf %45 : vector<16x1332xf32> to vector<16x1332xbf16>
    %c0_46 = arith.constant 0 : index
    %c0_47 = arith.constant 0 : index
    %c0_48 = arith.constant 0 : index
    %47 = vector.load %arg4[%c0_46, %c0_47, %c0_48] : memref<1x16x1332xbf16, #tpu.memory_space<vmem>>, vector<1x16x1332xbf16>
    %48 = vector.shape_cast %47 : vector<1x16x1332xbf16> to vector<16x1332xbf16>
    %49 = vector.shape_cast %46 : vector<16x1332xbf16> to vector<1x16x1332xbf16>
    tpu.vector_store %arg4[%c0_46, %c0_47, %c0_48], %49 {strides = array<i32>} : memref<1x16x1332xbf16, #tpu.memory_space<vmem>>, vector<1x16x1332xbf16>,
    return
  }
  func.func @transform_0(%arg0: i32) -> (i32, i32, i32) {
    %c0_i32 = arith.constant 0 : i32
    %c0_i32_0 = arith.constant 0 : i32
    %c0_i32_1 = arith.constant 0 : i32
    return %arg0, %c0_i32, %c0_i32_0 : i32, i32, i32
  }
  func.func @transform_1(%arg0: i32) -> (i32, i32, i32, i32) {
    %c0_i32 = arith.constant 0 : i32
    %c0_i32_0 = arith.constant 0 : i32
    %c0_i32_1 = arith.constant 0 : i32
    %c0_i32_2 = arith.constant 0 : i32
    %c0_i32_3 = arith.constant 0 : i32
    return %c0_i32, %c0_i32_0, %c0_i32_1, %c0_i32_2 : i32, i32, i32, i32
  }
  func.func @transform_2(%arg0: i32) -> (i32, i32) {
    %c0_i32 = arith.constant 0 : i32
    %c0_i32_0 = arith.constant 0 : i32
    %c0_i32_1 = arith.constant 0 : i32
    return %c0_i32, %c0_i32_0 : i32, i32
  }
  func.func @transform_3(%arg0: i32) -> (i32, i32, i32) {
    %c0_i32 = arith.constant 0 : i32
    %c0_i32_0 = arith.constant 0 : i32
    %c0_i32_1 = arith.constant 0 : i32
    return %arg0, %c0_i32, %c0_i32_0 : i32, i32, i32
  }
}

module attributes {stable_mosaic.version = 11 : i64} {
  func.func @_conv_relu_pool_kernel(%arg0: i32, %arg1: memref<1x256x128xbf16, #tpu.memory_space<vmem>>, %arg2: memref<4x4x32x256xbf16, #tpu.memory_space<vmem>>, %arg3: memref<32x1xf32, #tpu.memory_space<vmem>>, %arg4: memref<1x32x90xbf16, #tpu.memory_space<vmem>>) attributes {dimension_semantics = [#tpu.dimension_semantics<parallel>], iteration_bounds = array<i64: 2>, scalar_prefetch = 0 : i64, scratch_operands = 0 : i64, tpu.core_type = #tpu.core_type<tc>, window_params = [{transform_indices = @transform_0, window_bounds = array<i64: 1, 256, 128>}, {pipeline_mode = #tpu.pipeline_mode<synchronous>, transform_indices = @transform_1, window_bounds = array<i64: 4, 4, 32, 256>}, {pipeline_mode = #tpu.pipeline_mode<synchronous>, transform_indices = @transform_2, window_bounds = array<i64: 32, 1>}, {transform_indices = @transform_3, window_bounds = array<i64: 1, 32, 90>}]} {
    %c0 = arith.constant 0 : index
    %c0_0 = arith.constant 0 : index
    %c0_1 = arith.constant 0 : index
    %0 = vector.load %arg1[%c0, %c0_0, %c0_1] : memref<1x256x128xbf16, #tpu.memory_space<vmem>>, vector<1x256x128xbf16>
    %1 = vector.shape_cast %0 : vector<1x256x128xbf16> to vector<256x128xbf16>
    %2 = vector.extract_strided_slice %1 {offsets = [0, 0], sizes = [256, 90], strides = [1, 1]} : vector<256x128xbf16> to vector<256x90xbf16>
    %3 = vector.extract_strided_slice %1 {offsets = [0, 1], sizes = [256, 90], strides = [1, 1]} : vector<256x128xbf16> to vector<256x90xbf16>
    %4 = vector.extract_strided_slice %1 {offsets = [0, 10], sizes = [256, 90], strides = [1, 1]} : vector<256x128xbf16> to vector<256x90xbf16>
    %5 = vector.extract_strided_slice %1 {offsets = [0, 11], sizes = [256, 90], strides = [1, 1]} : vector<256x128xbf16> to vector<256x90xbf16>
    %c0_2 = arith.constant 0 : index
    %c0_3 = arith.constant 0 : index
    %c0_4 = arith.constant 0 : index
    %c0_5 = arith.constant 0 : index
    %6 = vector.load %arg2[%c0_2, %c0_3, %c0_4, %c0_5] : memref<4x4x32x256xbf16, #tpu.memory_space<vmem>>, vector<1x1x32x256xbf16>
    %7 = vector.shape_cast %6 : vector<1x1x32x256xbf16> to vector<32x256xbf16>
    %cst = arith.constant dense<0.000000e+00> : vector<32x90xf32>
    %8 = tpu.matmul %7, %2, %cst {dimension_numbers = #tpu.dot_dimension_numbers<[1], [0], [0], [1], [0, 0, 1, 1], [], []>} : vector<32x256xbf16>, vector<256x90xbf16>, vector<32x90xf32> -> vector<32x90xf32>
    %c1 = arith.constant 1 : index
    %c0_6 = arith.constant 0 : index
    %c0_7 = arith.constant 0 : index
    %c0_8 = arith.constant 0 : index
    %9 = vector.load %arg2[%c1, %c0_6, %c0_7, %c0_8] : memref<4x4x32x256xbf16, #tpu.memory_space<vmem>>, vector<1x1x32x256xbf16>
    %10 = vector.shape_cast %9 : vector<1x1x32x256xbf16> to vector<32x256xbf16>
    %cst_9 = arith.constant dense<0.000000e+00> : vector<32x90xf32>
    %11 = tpu.matmul %10, %2, %cst_9 {dimension_numbers = #tpu.dot_dimension_numbers<[1], [0], [0], [1], [0, 0, 1, 1], [], []>} : vector<32x256xbf16>, vector<256x90xbf16>, vector<32x90xf32> -> vector<32x90xf32>
    %c1_10 = arith.constant 1 : index
    %c1_11 = arith.constant 1 : index
    %c0_12 = arith.constant 0 : index
    %c0_13 = arith.constant 0 : index
    %12 = vector.load %arg2[%c1_10, %c1_11, %c0_12, %c0_13] : memref<4x4x32x256xbf16, #tpu.memory_space<vmem>>, vector<1x1x32x256xbf16>
    %13 = vector.shape_cast %12 : vector<1x1x32x256xbf16> to vector<32x256xbf16>
    %cst_14 = arith.constant dense<0.000000e+00> : vector<32x90xf32>
    %14 = tpu.matmul %13, %3, %cst_14 {dimension_numbers = #tpu.dot_dimension_numbers<[1], [0], [0], [1], [0, 0, 1, 1], [], []>} : vector<32x256xbf16>, vector<256x90xbf16>, vector<32x90xf32> -> vector<32x90xf32>
    %15 = arith.addf %11, %14 : vector<32x90xf32>
    %16 = arith.maximumf %8, %15 : vector<32x90xf32>
    %c2 = arith.constant 2 : index
    %c0_15 = arith.constant 0 : index
    %c0_16 = arith.constant 0 : index
    %c0_17 = arith.constant 0 : index
    %17 = vector.load %arg2[%c2, %c0_15, %c0_16, %c0_17] : memref<4x4x32x256xbf16, #tpu.memory_space<vmem>>, vector<1x1x32x256xbf16>
    %18 = vector.shape_cast %17 : vector<1x1x32x256xbf16> to vector<32x256xbf16>
    %cst_18 = arith.constant dense<0.000000e+00> : vector<32x90xf32>
    %19 = tpu.matmul %18, %2, %cst_18 {dimension_numbers = #tpu.dot_dimension_numbers<[1], [0], [0], [1], [0, 0, 1, 1], [], []>} : vector<32x256xbf16>, vector<256x90xbf16>, vector<32x90xf32> -> vector<32x90xf32>
    %c2_19 = arith.constant 2 : index
    %c2_20 = arith.constant 2 : index
    %c0_21 = arith.constant 0 : index
    %c0_22 = arith.constant 0 : index
    %20 = vector.load %arg2[%c2_19, %c2_20, %c0_21, %c0_22] : memref<4x4x32x256xbf16, #tpu.memory_space<vmem>>, vector<1x1x32x256xbf16>
    %21 = vector.shape_cast %20 : vector<1x1x32x256xbf16> to vector<32x256xbf16>
    %cst_23 = arith.constant dense<0.000000e+00> : vector<32x90xf32>
    %22 = tpu.matmul %21, %4, %cst_23 {dimension_numbers = #tpu.dot_dimension_numbers<[1], [0], [0], [1], [0, 0, 1, 1], [], []>} : vector<32x256xbf16>, vector<256x90xbf16>, vector<32x90xf32> -> vector<32x90xf32>
    %23 = arith.addf %19, %22 : vector<32x90xf32>
    %24 = arith.maximumf %16, %23 : vector<32x90xf32>
    %c3 = arith.constant 3 : index
    %c0_24 = arith.constant 0 : index
    %c0_25 = arith.constant 0 : index
    %c0_26 = arith.constant 0 : index
    %25 = vector.load %arg2[%c3, %c0_24, %c0_25, %c0_26] : memref<4x4x32x256xbf16, #tpu.memory_space<vmem>>, vector<1x1x32x256xbf16>
    %26 = vector.shape_cast %25 : vector<1x1x32x256xbf16> to vector<32x256xbf16>
    %cst_27 = arith.constant dense<0.000000e+00> : vector<32x90xf32>
    %27 = tpu.matmul %26, %2, %cst_27 {dimension_numbers = #tpu.dot_dimension_numbers<[1], [0], [0], [1], [0, 0, 1, 1], [], []>} : vector<32x256xbf16>, vector<256x90xbf16>, vector<32x90xf32> -> vector<32x90xf32>
    %c3_28 = arith.constant 3 : index
    %c1_29 = arith.constant 1 : index
    %c0_30 = arith.constant 0 : index
    %c0_31 = arith.constant 0 : index
    %28 = vector.load %arg2[%c3_28, %c1_29, %c0_30, %c0_31] : memref<4x4x32x256xbf16, #tpu.memory_space<vmem>>, vector<1x1x32x256xbf16>
    %29 = vector.shape_cast %28 : vector<1x1x32x256xbf16> to vector<32x256xbf16>
    %cst_32 = arith.constant dense<0.000000e+00> : vector<32x90xf32>
    %30 = tpu.matmul %29, %3, %cst_32 {dimension_numbers = #tpu.dot_dimension_numbers<[1], [0], [0], [1], [0, 0, 1, 1], [], []>} : vector<32x256xbf16>, vector<256x90xbf16>, vector<32x90xf32> -> vector<32x90xf32>
    %31 = arith.addf %27, %30 : vector<32x90xf32>
    %c3_33 = arith.constant 3 : index
    %c2_34 = arith.constant 2 : index
    %c0_35 = arith.constant 0 : index
    %c0_36 = arith.constant 0 : index
    %32 = vector.load %arg2[%c3_33, %c2_34, %c0_35, %c0_36] : memref<4x4x32x256xbf16, #tpu.memory_space<vmem>>, vector<1x1x32x256xbf16>
    %33 = vector.shape_cast %32 : vector<1x1x32x256xbf16> to vector<32x256xbf16>
    %cst_37 = arith.constant dense<0.000000e+00> : vector<32x90xf32>
    %34 = tpu.matmul %33, %4, %cst_37 {dimension_numbers = #tpu.dot_dimension_numbers<[1], [0], [0], [1], [0, 0, 1, 1], [], []>} : vector<32x256xbf16>, vector<256x90xbf16>, vector<32x90xf32> -> vector<32x90xf32>
    %35 = arith.addf %31, %34 : vector<32x90xf32>
    %c3_38 = arith.constant 3 : index
    %c3_39 = arith.constant 3 : index
    %c0_40 = arith.constant 0 : index
    %c0_41 = arith.constant 0 : index
    %36 = vector.load %arg2[%c3_38, %c3_39, %c0_40, %c0_41] : memref<4x4x32x256xbf16, #tpu.memory_space<vmem>>, vector<1x1x32x256xbf16>
    %37 = vector.shape_cast %36 : vector<1x1x32x256xbf16> to vector<32x256xbf16>
    %cst_42 = arith.constant dense<0.000000e+00> : vector<32x90xf32>
    %38 = tpu.matmul %37, %5, %cst_42 {dimension_numbers = #tpu.dot_dimension_numbers<[1], [0], [0], [1], [0, 0, 1, 1], [], []>} : vector<32x256xbf16>, vector<256x90xbf16>, vector<32x90xf32> -> vector<32x90xf32>
    %39 = arith.addf %35, %38 : vector<32x90xf32>
    %40 = arith.maximumf %24, %39 : vector<32x90xf32>
    %c0_43 = arith.constant 0 : index
    %c0_44 = arith.constant 0 : index
    %41 = vector.load %arg3[%c0_43, %c0_44] : memref<32x1xf32, #tpu.memory_space<vmem>>, vector<32x1xf32>
    %42 = vector.broadcast %41 : vector<32x1xf32> to vector<32x90xf32>
    %43 = arith.addf %40, %42 : vector<32x90xf32>
    %cst_45 = arith.constant 0.000000e+00 : f32
    %44 = vector.broadcast %cst_45 : f32 to vector<32x90xf32>
    %45 = arith.maximumf %43, %44 : vector<32x90xf32>
    %46 = arith.truncf %45 : vector<32x90xf32> to vector<32x90xbf16>
    %c0_46 = arith.constant 0 : index
    %c0_47 = arith.constant 0 : index
    %c0_48 = arith.constant 0 : index
    %47 = vector.load %arg4[%c0_46, %c0_47, %c0_48] : memref<1x32x90xbf16, #tpu.memory_space<vmem>>, vector<1x32x90xbf16>
    %48 = vector.shape_cast %47 : vector<1x32x90xbf16> to vector<32x90xbf16>
    %49 = vector.shape_cast %46 : vector<32x90xbf16> to vector<1x32x90xbf16>
    tpu.vector_store %arg4[%c0_46, %c0_47, %c0_48], %49 {strides = array<i32>} : memref<1x32x90xbf16, #tpu.memory_space<vmem>>, vector<1x32x90xbf16>,
    return
  }
  func.func @transform_0(%arg0: i32) -> (i32, i32, i32) {
    %c0_i32 = arith.constant 0 : i32
    %c0_i32_0 = arith.constant 0 : i32
    %c0_i32_1 = arith.constant 0 : i32
    return %arg0, %c0_i32, %c0_i32_0 : i32, i32, i32
  }
  func.func @transform_1(%arg0: i32) -> (i32, i32, i32, i32) {
    %c0_i32 = arith.constant 0 : i32
    %c0_i32_0 = arith.constant 0 : i32
    %c0_i32_1 = arith.constant 0 : i32
    %c0_i32_2 = arith.constant 0 : i32
    %c0_i32_3 = arith.constant 0 : i32
    return %c0_i32, %c0_i32_0, %c0_i32_1, %c0_i32_2 : i32, i32, i32, i32
  }
  func.func @transform_2(%arg0: i32) -> (i32, i32) {
    %c0_i32 = arith.constant 0 : i32
    %c0_i32_0 = arith.constant 0 : i32
    %c0_i32_1 = arith.constant 0 : i32
    return %c0_i32, %c0_i32_0 : i32, i32
  }
  func.func @transform_3(%arg0: i32) -> (i32, i32, i32) {
    %c0_i32 = arith.constant 0 : i32
    %c0_i32_0 = arith.constant 0 : i32
    %c0_i32_1 = arith.constant 0 : i32
    return %arg0, %c0_i32, %c0_i32_0 : i32, i32, i32
  }
}

module attributes {stable_mosaic.version = 11 : i64} {
  func.func @_fc_fused_kernel(%arg0: i32, %arg1: memref<2x2880xbf16, #tpu.memory_space<vmem>>, %arg2: memref<2880x128xbf16, #tpu.memory_space<vmem>>, %arg3: memref<1x128xf32, #tpu.memory_space<vmem>>, %arg4: memref<128x2xbf16, #tpu.memory_space<vmem>>, %arg5: memref<1x2x2xf32, #tpu.memory_space<vmem>>) attributes {dimension_semantics = [#tpu.dimension_semantics<parallel>], iteration_bounds = array<i64: 2>, scalar_prefetch = 0 : i64, scratch_operands = 0 : i64, tpu.core_type = #tpu.core_type<tc>, window_params = [{pipeline_mode = #tpu.pipeline_mode<synchronous>, transform_indices = @transform_0, window_bounds = array<i64: 2, 2880>}, {transform_indices = @transform_1, window_bounds = array<i64: 2880, 128>}, {transform_indices = @transform_2, window_bounds = array<i64: 1, 128>}, {transform_indices = @transform_3, window_bounds = array<i64: 128, 2>}, {transform_indices = @transform_4, window_bounds = array<i64: 1, 2, 2>}]} {
    %c0 = arith.constant 0 : index
    %c0_0 = arith.constant 0 : index
    %0 = vector.load %arg1[%c0, %c0_0] : memref<2x2880xbf16, #tpu.memory_space<vmem>>, vector<2x2880xbf16>
    %c0_1 = arith.constant 0 : index
    %c0_2 = arith.constant 0 : index
    %1 = vector.load %arg2[%c0_1, %c0_2] : memref<2880x128xbf16, #tpu.memory_space<vmem>>, vector<2880x128xbf16>
    %cst = arith.constant dense<0.000000e+00> : vector<2x128xf32>
    %2 = tpu.matmul %0, %1, %cst {dimension_numbers = #tpu.dot_dimension_numbers<[1], [0], [0], [1], [0, 0, 1, 1], [], []>} : vector<2x2880xbf16>, vector<2880x128xbf16>, vector<2x128xf32> -> vector<2x128xf32>
    %c0_3 = arith.constant 0 : index
    %c0_4 = arith.constant 0 : index
    %3 = vector.load %arg3[%c0_3, %c0_4] : memref<1x128xf32, #tpu.memory_space<vmem>>, vector<1x128xf32>
    %4 = vector.broadcast %3 : vector<1x128xf32> to vector<2x128xf32>
    %5 = arith.addf %2, %4 : vector<2x128xf32>
    %cst_5 = arith.constant 0.000000e+00 : f32
    %6 = vector.broadcast %cst_5 : f32 to vector<2x128xf32>
    %7 = arith.maximumf %5, %6 : vector<2x128xf32>
    %8 = arith.truncf %7 : vector<2x128xf32> to vector<2x128xbf16>
    %c0_6 = arith.constant 0 : index
    %c0_7 = arith.constant 0 : index
    %9 = vector.load %arg4[%c0_6, %c0_7] : memref<128x2xbf16, #tpu.memory_space<vmem>>, vector<128x2xbf16>
    %cst_8 = arith.constant dense<0.000000e+00> : vector<2x2xf32>
    %10 = tpu.matmul %8, %9, %cst_8 {dimension_numbers = #tpu.dot_dimension_numbers<[1], [0], [0], [1], [0, 0, 1, 1], [], []>} : vector<2x128xbf16>, vector<128x2xbf16>, vector<2x2xf32> -> vector<2x2xf32>
    %c0_9 = arith.constant 0 : index
    %c0_10 = arith.constant 0 : index
    %c0_11 = arith.constant 0 : index
    %11 = vector.load %arg5[%c0_9, %c0_10, %c0_11] : memref<1x2x2xf32, #tpu.memory_space<vmem>>, vector<1x2x2xf32>
    %12 = vector.shape_cast %11 : vector<1x2x2xf32> to vector<2x2xf32>
    %13 = vector.shape_cast %10 : vector<2x2xf32> to vector<1x2x2xf32>
    tpu.vector_store %arg5[%c0_9, %c0_10, %c0_11], %13 {strides = array<i32>} : memref<1x2x2xf32, #tpu.memory_space<vmem>>, vector<1x2x2xf32>,
    return
  }
  func.func @transform_0(%arg0: i32) -> (i32, i32) {
    %c0_i32 = arith.constant 0 : i32
    %c0_i32_0 = arith.constant 0 : i32
    %c0_i32_1 = arith.constant 0 : i32
    return %c0_i32, %c0_i32_0 : i32, i32
  }
  func.func @transform_1(%arg0: i32) -> (i32, i32) {
    %c0_i32 = arith.constant 0 : i32
    %c0_i32_0 = arith.constant 0 : i32
    return %c0_i32, %arg0 : i32, i32
  }
  func.func @transform_2(%arg0: i32) -> (i32, i32) {
    %c0_i32 = arith.constant 0 : i32
    %c0_i32_0 = arith.constant 0 : i32
    return %c0_i32, %arg0 : i32, i32
  }
  func.func @transform_3(%arg0: i32) -> (i32, i32) {
    %c0_i32 = arith.constant 0 : i32
    %c0_i32_0 = arith.constant 0 : i32
    return %arg0, %c0_i32 : i32, i32
  }
  func.func @transform_4(%arg0: i32) -> (i32, i32, i32) {
    %c0_i32 = arith.constant 0 : i32
    %c0_i32_0 = arith.constant 0 : i32
    %c0_i32_1 = arith.constant 0 : i32
    return %arg0, %c0_i32, %c0_i32_0 : i32, i32, i32
  }
}

</mosaic_0001>

<llo_original>
// kernel: cnn_forward.3
$region0: #{cnn_forward.3}
  #allocation0 [shape = 'u32[]', space=smem, size = 0x4, offset = 0x4, fixed_abs, tag = 'smem constant byte address 0x4 - core index']
  #allocation1 [shape = 'u32[144,128]{1,0:T(1,128)}', space=vmem, size = 0x12000, scoped, tag = 'internal scratch']
  %s0 = inlined_call_operand.vmem [shape: bf16[2,48,1408], index: 0, kind: input, shape index: {}]
  %s1 = inlined_call_operand.vmem [shape: bf16[4,4,16,48], index: 1, kind: input, shape index: {}]
  %s2 = inlined_call_operand.vmem [shape: f32[16,1], index: 2, kind: input, shape index: {}]
  %s3 = inlined_call_operand.vmem [shape: bf16[2,16,1332], index: 3, kind: output, shape index: {}]
  %s4 = sld [smem:[#allocation0]]
  $region45: #{cnn_forward.3} parent=0
    _
  %s6 = ssub.s32 1, %s4
  %s7 = scalar_select 0, %s6, %s4
  loop: start=0, step=1, limit=4
  $region2: #{cnn_forward.3} parent=0 // loop_pre_header
    _
  $region3: #{cnn_forward.3} parent=0 // loop_header
    %s9 = sphi 0, %s13
    %p10 = scmp.ge.s32.totalorder %s9, 4
    %s19 = sphi 0, %s21
    %s22 = sphi 0, %s19
    %s23 = sphi 0, %s22
    %s39 = sphi 0, %s23
    %s43 = sphi 0, %s43
    %s45 = sphi 0, %s43
    %s46 = sphi 0, %s45
    %s60 = sphi 0, %s46
    %s64 = sphi 0, %s64
    %s66 = sphi 0, %s64
    %s67 = sphi 0, %s66
    %s81 = sphi 0, %s67
    %s87 = sphi 0, %s89
    %s90 = sphi 0, %s87
    %s91 = sphi 0, %s90
    %s107 = sphi 0, %s91
  $region4: #{cnn_forward.3} parent=0 // loop_header_branch
    %12 = sbr.rel (%p10) target = $region8
  $region5: #{cnn_forward.3} parent=0 // loop_body
    %s14 = ssub.s32 %s9, 1
    %s15 = ssub.s32 %s9, 2
    %s16 = sadd.s32 %s9, 1
    %s17 = ssub.s32 %s9, %s16
    %p18 = scmp.eq.s32.totalorder %s17, 0
    %s20 = sadd.s32 %s19, 1
    %s21 = scalar_select %p18, %s19, %s20
    %p24 = pneg %p18
    %p25 = scmp.eq.s32.totalorder %s9, 1
    %p26 = por %p24, %p25
    %p27 = scmp.ne.s32.totalorder %s19, %s22
    %p28 = scmp.eq.s32.totalorder %s9, 0
    %p29 = por %p27, %p28
    %p30 = scmp.ne.s32.totalorder %s19, %s22
    %p31 = scmp.eq.s32.totalorder %s14, 1
    %p32 = por %p30, %p31
    %p33 = scmp.ne.s32.totalorder %s22, %s23
    %p34 = scmp.eq.s32.totalorder %s14, 0
    %p35 = por %p33, %p34
    %p36 = scmp.ne.s32.totalorder %s22, %s23
    %p37 = scmp.eq.s32.totalorder %s15, 1
    %p38 = por %p36, %p37
    %p40 = scmp.ne.s32.totalorder %s23, %s39
    %p41 = scmp.eq.s32.totalorder %s15, 0
    %p42 = por %p40, %p41
    %s44 = sadd.s32 %s43, 1
    %p47 = scmp.eq.s32.totalorder %s9, 1
    %p48 = scmp.ne.s32.totalorder %s43, %s45
    %p49 = scmp.eq.s32.totalorder %s9, 0
    %p50 = por %p48, %p49
    %p51 = scmp.ne.s32.totalorder %s43, %s45
    %p52 = scmp.eq.s32.totalorder %s14, 1
    %p53 = por %p51, %p52
    %p54 = scmp.ne.s32.totalorder %s45, %s46
    %p55 = scmp.eq.s32.totalorder %s14, 0
    %p56 = por %p54, %p55
    %p57 = scmp.ne.s32.totalorder %s45, %s46
    %p58 = scmp.eq.s32.totalorder %s15, 1
    %p59 = por %p57, %p58
    %p61 = scmp.ne.s32.totalorder %s46, %s60
    %p62 = scmp.eq.s32.totalorder %s15, 0
    %p63 = por %p61, %p62
    %s65 = sadd.s32 %s64, 1
    %p68 = scmp.eq.s32.totalorder %s9, 1
    %p69 = scmp.ne.s32.totalorder %s64, %s66
    %p70 = scmp.eq.s32.totalorder %s9, 0
    %p71 = por %p69, %p70
    %p72 = scmp.ne.s32.totalorder %s64, %s66
    %p73 = scmp.eq.s32.totalorder %s14, 1
    %p74 = por %p72, %p73
    %p75 = scmp.ne.s32.totalorder %s66, %s67
    %p76 = scmp.eq.s32.totalorder %s14, 0
    %p77 = por %p75, %p76
    %p78 = scmp.ne.s32.totalorder %s66, %s67
    %p79 = scmp.eq.s32.totalorder %s15, 1
    %p80 = por %p78, %p79
    %p82 = scmp.ne.s32.totalorder %s67, %s81
    %p83 = scmp.eq.s32.totalorder %s15, 0
    %p84 = por %p82, %p83
    %s85 = ssub.s32 %s9, %s16
    %p86 = scmp.eq.s32.totalorder %s85, 0
    %s88 = sadd.s32 %s87, 1
    %s89 = scalar_select %p86, %s87, %s88
    %p92 = pneg %p86
    %p93 = scmp.eq.s32.totalorder %s9, 1
    %p94 = por %p92, %p93
    %p95 = scmp.ne.s32.totalorder %s87, %s90
    %p96 = scmp.eq.s32.totalorder %s9, 0
    %p97 = por %p95, %p96
    %p98 = scmp.ne.s32.totalorder %s87, %s90
    %p99 = scmp.eq.s32.totalorder %s14, 1
    %p100 = por %p98, %p99
    %p101 = scmp.ne.s32.totalorder %s90, %s91
    %p102 = scmp.eq.s32.totalorder %s14, 0
    %p103 = por %p101, %p102
    %p104 = scmp.ne.s32.totalorder %s90, %s91
    %p105 = scmp.eq.s32.totalorder %s15, 1
    %p106 = por %p104, %p105
    %p108 = scmp.ne.s32.totalorder %s91, %s107
    %p109 = scmp.eq.s32.totalorder %s15, 0
    %p110 = por %p108, %p109
    %p111 = scmp.le.s32.totalorder 1, %s9
    %p112 = scmp.lt.s32.totalorder %s9, 3
    %p113 = pnand %p111, %p112
    %p114 = pneg %p113
    // Predicated region
    $region9: #{cnn_forward.3} parent=5 // pred_check
      _
    $region10: #{cnn_forward.3} parent=5 // pred_check_branch
      %116 = sbr.rel (%p113) target = $region12
    $region11: #{cnn_forward.3} parent=5 // pred_region
      %s117 = ssub.s32 %s9, 1
      // Predicated region
      $region13: #{cnn_forward.3} parent=11 // pred_check
        %p118 = pneg %p56
      $region14: #{cnn_forward.3} parent=11 // pred_check_branch
        %120 = sbr.rel (%p118) target = $region16
      $region15: #{cnn_forward.3} parent=11 // pred_region
        _
      $region16: #{cnn_forward.3} parent=11 // pred_fallthru
        _
      // Predicated region
      $region17: #{cnn_forward.3} parent=11 // pred_check
        %p121 = pneg %p77
      $region18: #{cnn_forward.3} parent=11 // pred_check_branch
        %123 = sbr.rel (%p121) target = $region20
      $region19: #{cnn_forward.3} parent=11 // pred_region
        _
      $region20: #{cnn_forward.3} parent=11 // pred_fallthru
        _
    $region12: #{cnn_forward.3} parent=5 // pred_fallthru
      _
    %p124 = scmp.lt.s32.totalorder %s9, 2
    // Predicated region
    $region21: #{cnn_forward.3} parent=5 // pred_check
      %p125 = pneg %p124
    $region22: #{cnn_forward.3} parent=5 // pred_check_branch
      %127 = sbr.rel (%p125) target = $region24
    $region23: #{cnn_forward.3} parent=5 // pred_region
      // Predicated region
      $region25: #{cnn_forward.3} parent=23 // pred_check
        %p128 = pneg %p29
      $region26: #{cnn_forward.3} parent=23 // pred_check_branch
        %130 = sbr.rel (%p128) target = $region28
      $region27: #{cnn_forward.3} parent=23 // pred_region
        %p131 = scmp.lt.s32.totalorder %s9, 1
        %s132 = scalar_select %p131, %s9, 1
        %s133 = smul.addr %s132, 66
        %s134 = smul.addr %s133, 4
        %s135 = scalar_lea.vmem %s0, %s134
      $region28: #{cnn_forward.3} parent=23 // pred_fallthru
        _
    $region24: #{cnn_forward.3} parent=5 // pred_fallthru
      _
    %p136 = scmp.le.s32.totalorder 1, %s9
    %p137 = scmp.lt.s32.totalorder %s9, 3
    %p138 = pnand %p136, %p137
    %p139 = pneg %p138
    // Predicated region
    $region29: #{cnn_forward.3} parent=5 // pred_check
      _
    $region30: #{cnn_forward.3} parent=5 // pred_check_branch
      %141 = sbr.rel (%p138) target = $region32
    $region31: #{cnn_forward.3} parent=5 // pred_region
      %s142 = ssub.s32 %s9, 1
      %p143 = scmp.lt.s32.totalorder %s14, 1
      %s144 = scalar_select %p143, %s14, 1
      %s145 = smul.addr %s144, 66
      %s146 = smul.addr %s145, 4
      %s147 = scalar_lea.vmem %s0, %s146
      %p148 = pneg %p35
      %p149 = pneg %p32
      %p150 = pneg %p56
      %p151 = pneg %p53
      %p152 = pneg %p77
      %p153 = pneg %p74
      %p154 = pneg %p103
      %p155 = pneg %p100
      %p156 = scmp.lt.s32.totalorder %s14, 1
      %s157 = scalar_select %p156, %s14, 1
      %s158 = smul.addr %s157, 22
      %s159 = smul.addr %s158, 4
      %s160 = scalar_lea.vmem %s3, %s159
      %p161 = scmp.lt.s32.totalorder %s14, 1
      %s162 = scalar_select %p161, %s14, 1
      %s163 = smul.addr %s162, 66
      %s164 = smul.addr %s163, 4
      %s165 = scalar_lea.vmem %s0, %s164
      %p166 = scmp.lt.s32.totalorder %s14, 1
      %s167 = scalar_select %p166, %s14, 1
      %s168 = smul.addr %s167, 22
      %s169 = smul.addr %s168, 4
      %s170 = scalar_lea.vmem %s3, %s169
      %v172 = vld [vmem:[%s165] sm:$0xff]
      %v173 = vld [vmem:[%s165 + $0x8] sm:$0xff]
      %v174 = vld [vmem:[%s165 + $0x10] sm:$0xff]
      %v175 = vld [vmem:[%s165 + $0x18] sm:$0xff]
      %v176 = vld [vmem:[%s165 + $0x20] sm:$0xff]
      %v177 = vld [vmem:[%s165 + $0x28] sm:$0xf]
      %v178 = vld [vmem:[%s165 + $0x2c] sm:$0xff]
      %v179 = vld [vmem:[%s165 + $0x34] sm:$0xff]
      %v180 = vld [vmem:[%s165 + $0x3c] sm:$0xff]
      %v181 = vld [vmem:[%s165 + $0x44] sm:$0xff]
      %v182 = vld [vmem:[%s165 + $0x4c] sm:$0xff]
      %v183 = vld [vmem:[%s165 + $0x54] sm:$0xf]
      %v184 = vld [vmem:[%s165 + $0x58] sm:$0xff]
      %v185 = vld [vmem:[%s165 + $0x60] sm:$0xff]
      %v186 = vld [vmem:[%s165 + $0x68] sm:$0xff]
      %v187 = vld [vmem:[%s165 + $0x70] sm:$0xff]
      %v188 = vld [vmem:[%s165 + $0x78] sm:$0xff]
      %v189 = vld [vmem:[%s165 + $0x80] sm:$0xf]
      %v190 = vld [vmem:[%s165 + $0x84] sm:$0xff]
      %v191 = vld [vmem:[%s165 + $0x8c] sm:$0xff]
      %v192 = vld [vmem:[%s165 + $0x94] sm:$0xff]
      %v193 = vld [vmem:[%s165 + $0x9c] sm:$0xff]
      %v194 = vld [vmem:[%s165 + $0xa4] sm:$0xff]
      %v195 = vld [vmem:[%s165 + $0xac] sm:$0xf]
      %v196 = vld [vmem:[%s165 + $0xb0] sm:$0xff]
      %v197 = vld [vmem:[%s165 + $0xb8] sm:$0xff]
      %v198 = vld [vmem:[%s165 + $0xc0] sm:$0xff]
      %v199 = vld [vmem:[%s165 + $0xc8] sm:$0xff]
      %v200 = vld [vmem:[%s165 + $0xd0] sm:$0xff]
      %v201 = vld [vmem:[%s165 + $0xd8] sm:$0xf]
      %v202 = vld [vmem:[%s165 + $0xdc] sm:$0xff]
      %v203 = vld [vmem:[%s165 + $0xe4] sm:$0xff]
      %v204 = vld [vmem:[%s165 + $0xec] sm:$0xff]
      %v205 = vld [vmem:[%s165 + $0xf4] sm:$0xff]
      %v206 = vld [vmem:[%s165 + $0xfc] sm:$0xff]
      %v207 = vld [vmem:[%s165 + $0x104] sm:$0xf]
      %v208 = vld [vmem:[%s1] sm:$0xf]
      %v209 = vld [vmem:[%s1 + $0x4] sm:$0xf]
      %v212 = vunpack.c.l.b16 %v208
      %v213 = vunpack.c.l.b16 %v209
      %v214 = vpack.c.b16 %v213, %v212
      %v251 = vunpack.c.l.b16 %v172
      %v252 = vunpack.c.h.b16 %v172
      %v253 = vunpack.c.l.b16 %v173
      %v254 = vunpack.c.h.b16 %v173
      %v255 = vunpack.c.l.b16 %v174
      %v256 = vunpack.c.h.b16 %v174
      %v257 = vunpack.c.l.b16 %v175
      %v258 = vunpack.c.h.b16 %v175
      %v259 = vunpack.c.l.b16 %v176
      %v260 = vunpack.c.h.b16 %v176
      %v261 = vunpack.c.l.b16 %v177
      %v262 = vunpack.c.l.b16 %v178
      %v263 = vunpack.c.h.b16 %v178
      %v264 = vunpack.c.l.b16 %v179
      %v265 = vunpack.c.h.b16 %v179
      %v266 = vunpack.c.l.b16 %v180
      %v267 = vunpack.c.h.b16 %v180
      %v268 = vunpack.c.l.b16 %v181
      %v269 = vunpack.c.h.b16 %v181
      %v270 = vunpack.c.l.b16 %v182
      %v271 = vunpack.c.h.b16 %v182
      %v272 = vunpack.c.l.b16 %v183
      %v273 = vunpack.c.l.b16 %v184
      %v274 = vunpack.c.h.b16 %v184
      %v275 = vunpack.c.l.b16 %v185
      %v276 = vunpack.c.h.b16 %v185
      %v277 = vunpack.c.l.b16 %v186
      %v278 = vunpack.c.h.b16 %v186
      %v279 = vunpack.c.l.b16 %v187
      %v280 = vunpack.c.h.b16 %v187
      %v281 = vunpack.c.l.b16 %v188
      %v282 = vunpack.c.h.b16 %v188
      %v283 = vunpack.c.l.b16 %v189
      %v284 = vunpack.c.l.b16 %v190
      %v285 = vunpack.c.h.b16 %v190
      %v286 = vunpack.c.l.b16 %v191
      %v287 = vunpack.c.h.b16 %v191
      %v288 = vunpack.c.l.b16 %v192
      %v289 = vunpack.c.h.b16 %v192
      %v290 = vunpack.c.l.b16 %v193
      %v291 = vunpack.c.h.b16 %v193
      %v292 = vunpack.c.l.b16 %v194
      %v293 = vunpack.c.h.b16 %v194
      %v294 = vunpack.c.l.b16 %v195
      %v295 = vunpack.c.l.b16 %v196
      %v296 = vunpack.c.h.b16 %v196
      %v297 = vunpack.c.l.b16 %v197
      %v298 = vunpack.c.h.b16 %v197
      %v299 = vunpack.c.l.b16 %v198
      %v300 = vunpack.c.h.b16 %v198
      %v301 = vunpack.c.l.b16 %v199
      %v302 = vunpack.c.h.b16 %v199
      %v303 = vunpack.c.l.b16 %v200
      %v304 = vunpack.c.h.b16 %v200
      %v305 = vunpack.c.l.b16 %v201
      %v306 = vunpack.c.l.b16 %v202
      %v307 = vunpack.c.h.b16 %v202
      %v308 = vunpack.c.l.b16 %v203
      %v309 = vunpack.c.h.b16 %v203
      %v310 = vunpack.c.l.b16 %v204
      %v311 = vunpack.c.h.b16 %v204
      %v312 = vunpack.c.l.b16 %v205
      %v313 = vunpack.c.h.b16 %v205
      %v314 = vunpack.c.l.b16 %v206
      %v315 = vunpack.c.h.b16 %v206
      %v316 = vunpack.c.l.b16 %v207
      %v317 = vpack.c.b16 %v262, %v251
      %v318 = vpack.c.b16 %v263, %v252
      %v319 = vpack.c.b16 %v264, %v253
      %v320 = vpack.c.b16 %v265, %v254
      %v321 = vpack.c.b16 %v266, %v255
      %v322 = vpack.c.b16 %v267, %v256
      %v323 = vpack.c.b16 %v268, %v257
      %v324 = vpack.c.b16 %v269, %v258
      %v325 = vpack.c.b16 %v270, %v259
      %v326 = vpack.c.b16 %v271, %v260
      %v327 = vpack.c.b16 %v272, %v261
      %v328 = vpack.c.b16 %v284, %v273
      %v329 = vpack.c.b16 %v285, %v274
      %v330 = vpack.c.b16 %v286, %v275
      %v331 = vpack.c.b16 %v287, %v276
      %v332 = vpack.c.b16 %v288, %v277
      %v333 = vpack.c.b16 %v289, %v278
      %v334 = vpack.c.b16 %v290, %v279
      %v335 = vpack.c.b16 %v291, %v280
      %v336 = vpack.c.b16 %v292, %v281
      %v337 = vpack.c.b16 %v293, %v282
      %v338 = vpack.c.b16 %v294, %v283
      %v339 = vpack.c.b16 %v306, %v295
      %v340 = vpack.c.b16 %v307, %v296
      %v341 = vpack.c.b16 %v308, %v297
      %v342 = vpack.c.b16 %v309, %v298
      %v343 = vpack.c.b16 %v310, %v299
      %v344 = vpack.c.b16 %v311, %v300
      %v345 = vpack.c.b16 %v312, %v301
      %v346 = vpack.c.b16 %v313, %v302
      %v347 = vpack.c.b16 %v314, %v303
      %v348 = vpack.c.b16 %v315, %v304
      %v349 = vpack.c.b16 %v316, %v305
      %vm383 = vcmask 392192
      %v385 = vsel %vm383, %v214, 0
      %387 = vmatprep.subr.bf16.mxu0 0
      %388 = vmatpush1.bf16.msra.mxu0 0
      %389 = vmatprep.subr.bf16.mxu0 0
      %390 = vmatpush1.bf16.msra.mxu0 0
      %391 = vmatprep.subr.bf16.mxu0 0
      %392 = vmatpush1.bf16.msra.mxu0 0
      %393 = vmatprep.subr.bf16.mxu0 0
      %394 = vmatpush1.bf16.msra.mxu0 0
      %395 = vmatprep.subr.bf16.mxu0 0
      %396 = vmatpush1.bf16.msra.mxu0 0
      %397 = vmatprep.subr.bf16.mxu0 %v340
      %398 = vmatpush1.bf16.msra.mxu0 %v339
      %399 = vmatprep.subr.bf16.mxu0 %v329
      %400 = vmatpush1.bf16.msra.mxu0 %v328
      %401 = vmatprep.subr.bf16.mxu0 %v318
      %402 = vmatpush1.bf16.msra.mxu0 %v317
      %403 = vmatprep.subr.bf16.mxu0 0
      %404 = vmatpush2.bf16.msra.mxu0 0
      %405 = vmatprep.subr.bf16.mxu0 0
      %406 = vmatpush2.bf16.msra.mxu0 0
      %407 = vmatprep.subr.bf16.mxu0 0
      %408 = vmatpush2.bf16.msra.mxu0 0
      %409 = vmatprep.subr.bf16.mxu0 0
      %410 = vmatpush2.bf16.msra.mxu0 0
      %411 = vmatprep.subr.bf16.mxu0 0
      %412 = vmatpush2.bf16.msra.mxu0 0
      %413 = vmatprep.subr.bf16.mxu0 0
      %414 = vmatpush2.bf16.msra.mxu0 0
      %415 = vmatprep.subr.bf16.mxu0 0
      %416 = vmatpush2.bf16.msra.mxu0 0
      %417 = vmatprep.subr.bf16.mxu0 0
      %418 = vmatpush2.bf16.msra.mxu0 0
      %419 = vmatprep.mubr.bf16.mxu0 0
      %420 = vmatmul.mubr.bf16.gmra.mxu0 %v385
      %v421 = vpop.f32.mrf.mxu0
      %v422 = vadd.f32 0.0, %v421
      %v423 = vpop.f32.mrf.mxu0
      %v424 = vadd.f32 0.0, %v423
      %v425 = vpop.f32.mrf.mxu0
      %v426 = vadd.f32 0.0, %v425
      %v427 = vpop.f32.mrf.mxu0
      %v428 = vadd.f32 0.0, %v427
      %429 = vdwg.mxu0
      %430 = vmatprep.subr.bf16.mxu0 0
      %431 = vmatpush1.bf16.msra.mxu0 0
      %432 = vmatprep.subr.bf16.mxu0 0
      %433 = vmatpush1.bf16.msra.mxu0 0
      %434 = vmatprep.subr.bf16.mxu0 0
      %435 = vmatpush1.bf16.msra.mxu0 0
      %436 = vmatprep.subr.bf16.mxu0 0
      %437 = vmatpush1.bf16.msra.mxu0 0
      %438 = vmatprep.subr.bf16.mxu0 0
      %439 = vmatpush1.bf16.msra.mxu0 0
      %440 = vmatprep.subr.bf16.mxu0 %v342
      %441 = vmatpush1.bf16.msra.mxu0 %v341
      %442 = vmatprep.subr.bf16.mxu0 %v331
      %443 = vmatpush1.bf16.msra.mxu0 %v330
      %444 = vmatprep.subr.bf16.mxu0 %v320
      %445 = vmatpush1.bf16.msra.mxu0 %v319
      %446 = vmatprep.subr.bf16.mxu0 0
      %447 = vmatpush2.bf16.msra.mxu0 0
      %448 = vmatprep.subr.bf16.mxu0 0
      %449 = vmatpush2.bf16.msra.mxu0 0
      %450 = vmatprep.subr.bf16.mxu0 0
      %451 = vmatpush2.bf16.msra.mxu0 0
      %452 = vmatprep.subr.bf16.mxu0 0
      %453 = vmatpush2.bf16.msra.mxu0 0
      %454 = vmatprep.subr.bf16.mxu0 0
      %455 = vmatpush2.bf16.msra.mxu0 0
      %456 = vmatprep.subr.bf16.mxu0 0
      %457 = vmatpush2.bf16.msra.mxu0 0
      %458 = vmatprep.subr.bf16.mxu0 0
      %459 = vmatpush2.bf16.msra.mxu0 0
      %460 = vmatprep.subr.bf16.mxu0 0
      %461 = vmatpush2.bf16.msra.mxu0 0
      %462 = vmatprep.mubr.bf16.mxu0 0
      %463 = vmatmul.mubr.bf16.gmra.mxu0 %v385
      %v464 = vpop.f32.mrf.mxu0
      %v465 = vadd.f32 0.0, %v464
      %v466 = vpop.f32.mrf.mxu0
      %v467 = vadd.f32 0.0, %v466
      %v468 = vpop.f32.mrf.mxu0
      %v469 = vadd.f32 0.0, %v468
      %v470 = vpop.f32.mrf.mxu0
      %v471 = vadd.f32 0.0, %v470
      %472 = vdwg.mxu0
      %473 = vmatprep.subr.bf16.mxu0 0
      %474 = vmatpush1.bf16.msra.mxu0 0
      %475 = vmatprep.subr.bf16.mxu0 0
      %476 = vmatpush1.bf16.msra.mxu0 0
      %477 = vmatprep.subr.bf16.mxu0 0
      %478 = vmatpush1.bf16.msra.mxu0 0
      %479 = vmatprep.subr.bf16.mxu0 0
      %480 = vmatpush1.bf16.msra.mxu0 0
      %481 = vmatprep.subr.bf16.mxu0 0
      %482 = vmatpush1.bf16.msra.mxu0 0
      %483 = vmatprep.subr.bf16.mxu0 %v344
      %484 = vmatpush1.bf16.msra.mxu0 %v343
      %485 = vmatprep.subr.bf16.mxu0 %v333
      %486 = vmatpush1.bf16.msra.mxu0 %v332
      %487 = vmatprep.subr.bf16.mxu0 %v322
      %488 = vmatpush1.bf16.msra.mxu0 %v321
      %489 = vmatprep.subr.bf16.mxu0 0
      %490 = vmatpush2.bf16.msra.mxu0 0
      %491 = vmatprep.subr.bf16.mxu0 0
      %492 = vmatpush2.bf16.msra.mxu0 0
      %493 = vmatprep.subr.bf16.mxu0 0
      %494 = vmatpush2.bf16.msra.mxu0 0
      %495 = vmatprep.subr.bf16.mxu0 0
      %496 = vmatpush2.bf16.msra.mxu0 0
      %497 = vmatprep.subr.bf16.mxu0 0
      %498 = vmatpush2.bf16.msra.mxu0 0
      %499 = vmatprep.subr.bf16.mxu0 0
      %500 = vmatpush2.bf16.msra.mxu0 0
      %501 = vmatprep.subr.bf16.mxu0 0
      %502 = vmatpush2.bf16.msra.mxu0 0
      %503 = vmatprep.subr.bf16.mxu0 0
      %504 = vmatpush2.bf16.msra.mxu0 0
      %505 = vmatprep.mubr.bf16.mxu0 0
      %506 = vmatmul.mubr.bf16.gmra.mxu0 %v385
      %v507 = vpop.f32.mrf.mxu0
      %v508 = vadd.f32 0.0, %v507
      %v509 = vpop.f32.mrf.mxu0
      %v510 = vadd.f32 0.0, %v509
      %v511 = vpop.f32.mrf.mxu0
      %v512 = vadd.f32 0.0, %v511
      %v513 = vpop.f32.mrf.mxu0
      %v514 = vadd.f32 0.0, %v513
      %515 = vdwg.mxu0
      %516 = vmatprep.subr.bf16.mxu0 0
      %517 = vmatpush1.bf16.msra.mxu0 0
      %518 = vmatprep.subr.bf16.mxu0 0
      %519 = vmatpush1.bf16.msra.mxu0 0
      %520 = vmatprep.subr.bf16.mxu0 0
      %521 = vmatpush1.bf16.msra.mxu0 0
      %522 = vmatprep.subr.bf16.mxu0 0
      %523 = vmatpush1.bf16.msra.mxu0 0
      %524 = vmatprep.subr.bf16.mxu0 0
      %525 = vmatpush1.bf16.msra.mxu0 0
      %526 = vmatprep.subr.bf16.mxu0 %v346
      %527 = vmatpush1.bf16.msra.mxu0 %v345
      %528 = vmatprep.subr.bf16.mxu0 %v335
      %529 = vmatpush1.bf16.msra.mxu0 %v334
      %530 = vmatprep.subr.bf16.mxu0 %v324
      %531 = vmatpush1.bf16.msra.mxu0 %v323
      %532 = vmatprep.subr.bf16.mxu0 0
      %533 = vmatpush2.bf16.msra.mxu0 0
      %534 = vmatprep.subr.bf16.mxu0 0
      %535 = vmatpush2.bf16.msra.mxu0 0
      %536 = vmatprep.subr.bf16.mxu0 0
      %537 = vmatpush2.bf16.msra.mxu0 0
      %538 = vmatprep.subr.bf16.mxu0 0
      %539 = vmatpush2.bf16.msra.mxu0 0
      %540 = vmatprep.subr.bf16.mxu0 0
      %541 = vmatpush2.bf16.msra.mxu0 0
      %542 = vmatprep.subr.bf16.mxu0 0
      %543 = vmatpush2.bf16.msra.mxu0 0
      %544 = vmatprep.subr.bf16.mxu0 0
      %545 = vmatpush2.bf16.msra.mxu0 0
      %546 = vmatprep.subr.bf16.mxu0 0
      %547 = vmatpush2.bf16.msra.mxu0 0
      %548 = vmatprep.mubr.bf16.mxu0 0
      %549 = vmatmul.mubr.bf16.gmra.mxu0 %v385
      %v550 = vpop.f32.mrf.mxu0
      %v551 = vadd.f32 0.0, %v550
      %v552 = vpop.f32.mrf.mxu0
      %v553 = vadd.f32 0.0, %v552
      %v554 = vpop.f32.mrf.mxu0
      %v555 = vadd.f32 0.0, %v554
      %v556 = vpop.f32.mrf.mxu0
      %v557 = vadd.f32 0.0, %v556
      %558 = vdwg.mxu0
      %559 = vmatprep.subr.bf16.mxu0 0
      %560 = vmatpush1.bf16.msra.mxu0 0
      %561 = vmatprep.subr.bf16.mxu0 0
      %562 = vmatpush1.bf16.msra.mxu0 0
      %563 = vmatprep.subr.bf16.mxu0 0
      %564 = vmatpush1.bf16.msra.mxu0 0
      %565 = vmatprep.subr.bf16.mxu0 0
      %566 = vmatpush1.bf16.msra.mxu0 0
      %567 = vmatprep.subr.bf16.mxu0 0
      %568 = vmatpush1.bf16.msra.mxu0 0
      %569 = vmatprep.subr.bf16.mxu0 %v348
      %570 = vmatpush1.bf16.msra.mxu0 %v347
      %571 = vmatprep.subr.bf16.mxu0 %v337
      %572 = vmatpush1.bf16.msra.mxu0 %v336
      %573 = vmatprep.subr.bf16.mxu0 %v326
      %574 = vmatpush1.bf16.msra.mxu0 %v325
      %575 = vmatprep.subr.bf16.mxu0 0
      %576 = vmatpush2.bf16.msra.mxu0 0
      %577 = vmatprep.subr.bf16.mxu0 0
      %578 = vmatpush2.bf16.msra.mxu0 0
      %579 = vmatprep.subr.bf16.mxu0 0
      %580 = vmatpush2.bf16.msra.mxu0 0
      %581 = vmatprep.subr.bf16.mxu0 0
      %582 = vmatpush2.bf16.msra.mxu0 0
      %583 = vmatprep.subr.bf16.mxu0 0
      %584 = vmatpush2.bf16.msra.mxu0 0
      %585 = vmatprep.subr.bf16.mxu0 0
      %586 = vmatpush2.bf16.msra.mxu0 0
      %587 = vmatprep.subr.bf16.mxu0 0
      %588 = vmatpush2.bf16.msra.mxu0 0
      %589 = vmatprep.subr.bf16.mxu0 0
      %590 = vmatpush2.bf16.msra.mxu0 0
      %591 = vmatprep.mubr.bf16.mxu0 0
      %592 = vmatmul.mubr.bf16.gmra.mxu0 %v385
      %v593 = vpop.f32.mrf.mxu0
      %v594 = vadd.f32 0.0, %v593
      %v595 = vpop.f32.mrf.mxu0
      %v596 = vadd.f32 0.0, %v595
      %v597 = vpop.f32.mrf.mxu0
      %v598 = vadd.f32 0.0, %v597
      %v599 = vpop.f32.mrf.mxu0
      %v600 = vadd.f32 0.0, %v599
      %601 = vdwg.mxu0
      %602 = vmatprep.subr.bf16.mxu0 0
      %603 = vmatpush1.bf16.msra.mxu0 0
      %604 = vmatprep.subr.bf16.mxu0 0
      %605 = vmatpush1.bf16.msra.mxu0 0
      %606 = vmatprep.subr.bf16.mxu0 0
      %607 = vmatpush1.bf16.msra.mxu0 0
      %608 = vmatprep.subr.bf16.mxu0 0
      %609 = vmatpush1.bf16.msra.mxu0 0
      %610 = vmatprep.subr.bf16.mxu0 0
      %611 = vmatpush1.bf16.msra.mxu0 0
      %612 = vmatprep.subr.bf16.mxu0 0
      %613 = vmatpush1.bf16.msra.mxu0 %v349
      %614 = vmatprep.subr.bf16.mxu0 0
      %615 = vmatpush1.bf16.msra.mxu0 %v338
      %616 = vmatprep.subr.bf16.mxu0 0
      %617 = vmatpush1.bf16.msra.mxu0 %v327
      %618 = vmatprep.subr.bf16.mxu0 0
      %619 = vmatpush2.bf16.msra.mxu0 0
      %620 = vmatprep.subr.bf16.mxu0 0
      %621 = vmatpush2.bf16.msra.mxu0 0
      %622 = vmatprep.subr.bf16.mxu0 0
      %623 = vmatpush2.bf16.msra.mxu0 0
      %624 = vmatprep.subr.bf16.mxu0 0
      %625 = vmatpush2.bf16.msra.mxu0 0
      %626 = vmatprep.subr.bf16.mxu0 0
      %627 = vmatpush2.bf16.msra.mxu0 0
      %628 = vmatprep.subr.bf16.mxu0 0
      %629 = vmatpush2.bf16.msra.mxu0 0
      %630 = vmatprep.subr.bf16.mxu0 0
      %631 = vmatpush2.bf16.msra.mxu0 0
      %632 = vmatprep.subr.bf16.mxu0 0
      %633 = vmatpush2.bf16.msra.mxu0 0
      %634 = vmatprep.mubr.bf16.mxu0 0
      %635 = vmatmul.mubr.bf16.gmra.mxu0 %v385
      %v636 = vpop.f32.mrf.mxu0
      %v637 = vadd.f32 0.0, %v636
      %v638 = vpop.f32.mrf.mxu0
      %v639 = vpop.f32.mrf.mxu0
      %v640 = vadd.f32 0.0, %v639
      %v641 = vpop.f32.mrf.mxu0
      %642 = vdwg.mxu0
      %s643 = scalar_lea.vmem %s1, 32
      %v644 = vld [vmem:[%s643] sm:$0xf]
      %v645 = vld [vmem:[%s643 + $0x4] sm:$0xf]
      %s646 = scalar_lea.vmem %s1, 40
      %v647 = vld [vmem:[%s646] sm:$0xf]
      %v648 = vld [vmem:[%s646 + $0x4] sm:$0xf]
      %v651 = vunpack.c.l.b16 %v647
      %v652 = vunpack.c.l.b16 %v648
      %v653 = vpack.c.b16 %v652, %v651
      %654 = vrot.lane.b32.xlu0 %v317, 127
      %v655 = vpop.permute.xlu0 %654
      %656 = vrot.lane.b32.xlu0 %v318, 127
      %v657 = vpop.permute.xlu0 %656
      %658 = vrot.lane.b32.xlu0 %v319, 127
      %v659 = vpop.permute.xlu0 %658
      %660 = vrot.lane.b32.xlu0 %v320, 127
      %v661 = vpop.permute.xlu0 %660
      %662 = vrot.lane.b32.xlu0 %v321, 127
      %v663 = vpop.permute.xlu0 %662
      %664 = vrot.lane.b32.xlu0 %v322, 127
      %v665 = vpop.permute.xlu0 %664
      %666 = vrot.lane.b32.xlu0 %v323, 127
      %v667 = vpop.permute.xlu0 %666
      %668 = vrot.lane.b32.xlu0 %v324, 127
      %v669 = vpop.permute.xlu0 %668
      %670 = vrot.lane.b32.xlu0 %v325, 127
      %v671 = vpop.permute.xlu0 %670
      %672 = vrot.lane.b32.xlu0 %v326, 127
      %v673 = vpop.permute.xlu0 %672
      %674 = vrot.lane.b32.xlu0 %v327, 127
      %v675 = vpop.permute.xlu0 %674
      %676 = vrot.lane.b32.xlu0 %v328, 127
      %v677 = vpop.permute.xlu0 %676
      %678 = vrot.lane.b32.xlu0 %v329, 127
      %v679 = vpop.permute.xlu0 %678
      %680 = vrot.lane.b32.xlu0 %v330, 127
      %v681 = vpop.permute.xlu0 %680
      %682 = vrot.lane.b32.xlu0 %v331, 127
      %v683 = vpop.permute.xlu0 %682
      %684 = vrot.lane.b32.xlu0 %v332, 127
      %v685 = vpop.permute.xlu0 %684
      %686 = vrot.lane.b32.xlu0 %v333, 127
      %v687 = vpop.permute.xlu0 %686
      %688 = vrot.lane.b32.xlu0 %v334, 127
      %v689 = vpop.permute.xlu0 %688
      %690 = vrot.lane.b32.xlu0 %v335, 127
      %v691 = vpop.permute.xlu0 %690
      %692 = vrot.lane.b32.xlu0 %v336, 127
      %v693 = vpop.permute.xlu0 %692
      %694 = vrot.lane.b32.xlu0 %v337, 127
      %v695 = vpop.permute.xlu0 %694
      %696 = vrot.lane.b32.xlu0 %v338, 127
      %v697 = vpop.permute.xlu0 %696
      %698 = vrot.lane.b32.xlu0 %v339, 127
      %v699 = vpop.permute.xlu0 %698
      %700 = vrot.lane.b32.xlu0 %v340, 127
      %v701 = vpop.permute.xlu0 %700
      %702 = vrot.lane.b32.xlu0 %v341, 127
      %v703 = vpop.permute.xlu0 %702
      %704 = vrot.lane.b32.xlu0 %v342, 127
      %v705 = vpop.permute.xlu0 %704
      %706 = vrot.lane.b32.xlu0 %v343, 127
      %v707 = vpop.permute.xlu0 %706
      %708 = vrot.lane.b32.xlu0 %v344, 127
      %v709 = vpop.permute.xlu0 %708
      %710 = vrot.lane.b32.xlu0 %v345, 127
      %v711 = vpop.permute.xlu0 %710
      %712 = vrot.lane.b32.xlu0 %v346, 127
      %v713 = vpop.permute.xlu0 %712
      %714 = vrot.lane.b32.xlu0 %v347, 127
      %v715 = vpop.permute.xlu0 %714
      %716 = vrot.lane.b32.xlu0 %v348, 127
      %v717 = vpop.permute.xlu0 %716
      %718 = vrot.lane.b32.xlu0 %v349, 127
      %v719 = vpop.permute.xlu0 %718
      %vm720 = vcmask 1039360
      %v721 = vsel %vm720, %v655, %v657
      %v722 = vsel %vm720, %v657, %v659
      %v723 = vsel %vm720, %v659, %v661
      %v724 = vsel %vm720, %v661, %v663
      %v725 = vsel %vm720, %v663, %v665
      %v726 = vsel %vm720, %v665, %v667
      %v727 = vsel %vm720, %v667, %v669
      %v728 = vsel %vm720, %v669, %v671
      %v729 = vsel %vm720, %v671, %v673
      %v730 = vsel %vm720, %v673, %v675
      %v731 = vsel %vm720, %v677, %v679
      %v732 = vsel %vm720, %v679, %v681
      %v733 = vsel %vm720, %v681, %v683
      %v734 = vsel %vm720, %v683, %v685
      %v735 = vsel %vm720, %v685, %v687
      %v736 = vsel %vm720, %v687, %v689
      %v737 = vsel %vm720, %v689, %v691
      %v738 = vsel %vm720, %v691, %v693
      %v739 = vsel %vm720, %v693, %v695
      %v740 = vsel %vm720, %v695, %v697
      %v741 = vsel %vm720, %v699, %v701
      %v742 = vsel %vm720, %v701, %v703
      %v743 = vsel %vm720, %v703, %v705
      %v744 = vsel %vm720, %v705, %v707
      %v745 = vsel %vm720, %v707, %v709
      %v746 = vsel %vm720, %v709, %v711
      %v747 = vsel %vm720, %v711, %v713
      %v748 = vsel %vm720, %v713, %v715
      %v749 = vsel %vm720, %v715, %v717
      %v750 = vsel %vm720, %v717, %v719
      %v785 = vsel %vm383, %v653, 0
      %787 = vmatprep.subr.bf16.mxu0 0
      %788 = vmatpush1.bf16.msra.mxu0 0
      %789 = vmatprep.subr.bf16.mxu0 0
      %790 = vmatpush1.bf16.msra.mxu0 0
      %791 = vmatprep.subr.bf16.mxu0 0
      %792 = vmatpush1.bf16.msra.mxu0 0
      %793 = vmatprep.subr.bf16.mxu0 0
      %794 = vmatpush1.bf16.msra.mxu0 0
      %795 = vmatprep.subr.bf16.mxu0 0
      %796 = vmatpush1.bf16.msra.mxu0 0
      %797 = vmatprep.subr.bf16.mxu0 %v742
      %798 = vmatpush1.bf16.msra.mxu0 %v741
      %799 = vmatprep.subr.bf16.mxu0 %v732
      %800 = vmatpush1.bf16.msra.mxu0 %v731
      %801 = vmatprep.subr.bf16.mxu0 %v722
      %802 = vmatpush1.bf16.msra.mxu0 %v721
      %803 = vmatprep.subr.bf16.mxu0 0
      %804 = vmatpush2.bf16.msra.mxu0 0
      %805 = vmatprep.subr.bf16.mxu0 0
      %806 = vmatpush2.bf16.msra.mxu0 0
      %807 = vmatprep.subr.bf16.mxu0 0
      %808 = vmatpush2.bf16.msra.mxu0 0
      %809 = vmatprep.subr.bf16.mxu0 0
      %810 = vmatpush2.bf16.msra.mxu0 0
      %811 = vmatprep.subr.bf16.mxu0 0
      %812 = vmatpush2.bf16.msra.mxu0 0
      %813 = vmatprep.subr.bf16.mxu0 0
      %814 = vmatpush2.bf16.msra.mxu0 0
      %815 = vmatprep.subr.bf16.mxu0 0
      %816 = vmatpush2.bf16.msra.mxu0 0
      %817 = vmatprep.subr.bf16.mxu0 0
      %818 = vmatpush2.bf16.msra.mxu0 0
      %819 = vmatprep.mubr.bf16.mxu0 0
      %820 = vmatmul.mubr.bf16.gmra.mxu0 %v785
      %v821 = vpop.f32.mrf.mxu0
      %v822 = vadd.f32 0.0, %v821
      %v823 = vpop.f32.mrf.mxu0
      %v824 = vadd.f32 0.0, %v823
      %v825 = vpop.f32.mrf.mxu0
      %v826 = vadd.f32 0.0, %v825
      %v827 = vpop.f32.mrf.mxu0
      %v828 = vadd.f32 0.0, %v827
      %829 = vdwg.mxu0
      %830 = vmatprep.subr.bf16.mxu0 0
      %831 = vmatpush1.bf16.msra.mxu0 0
      %832 = vmatprep.subr.bf16.mxu0 0
      %833 = vmatpush1.bf16.msra.mxu0 0
      %834 = vmatprep.subr.bf16.mxu0 0
      %835 = vmatpush1.bf16.msra.mxu0 0
      %836 = vmatprep.subr.bf16.mxu0 0
      %837 = vmatpush1.bf16.msra.mxu0 0
      %838 = vmatprep.subr.bf16.mxu0 0
      %839 = vmatpush1.bf16.msra.mxu0 0
      %840 = vmatprep.subr.bf16.mxu0 %v744
      %841 = vmatpush1.bf16.msra.mxu0 %v743
      %842 = vmatprep.subr.bf16.mxu0 %v734
      %843 = vmatpush1.bf16.msra.mxu0 %v733
      %844 = vmatprep.subr.bf16.mxu0 %v724
      %845 = vmatpush1.bf16.msra.mxu0 %v723
      %846 = vmatprep.subr.bf16.mxu0 0
      %847 = vmatpush2.bf16.msra.mxu0 0
      %848 = vmatprep.subr.bf16.mxu0 0
      %849 = vmatpush2.bf16.msra.mxu0 0
      %850 = vmatprep.subr.bf16.mxu0 0
      %851 = vmatpush2.bf16.msra.mxu0 0
      %852 = vmatprep.subr.bf16.mxu0 0
      %853 = vmatpush2.bf16.msra.mxu0 0
      %854 = vmatprep.subr.bf16.mxu0 0
      %855 = vmatpush2.bf16.msra.mxu0 0
      %856 = vmatprep.subr.bf16.mxu0 0
      %857 = vmatpush2.bf16.msra.mxu0 0
      %858 = vmatprep.subr.bf16.mxu0 0
      %859 = vmatpush2.bf16.msra.mxu0 0
      %860 = vmatprep.subr.bf16.mxu0 0
      %861 = vmatpush2.bf16.msra.mxu0 0
      %862 = vmatprep.mubr.bf16.mxu0 0
      %863 = vmatmul.mubr.bf16.gmra.mxu0 %v785
      %v864 = vpop.f32.mrf.mxu0
      %v865 = vadd.f32 0.0, %v864
      %v866 = vpop.f32.mrf.mxu0
      %v867 = vadd.f32 0.0, %v866
      %v868 = vpop.f32.mrf.mxu0
      %v869 = vadd.f32 0.0, %v868
      %v870 = vpop.f32.mrf.mxu0
      %v871 = vadd.f32 0.0, %v870
      %872 = vdwg.mxu0
      %873 = vmatprep.subr.bf16.mxu0 0
      %874 = vmatpush1.bf16.msra.mxu0 0
      %875 = vmatprep.subr.bf16.mxu0 0
      %876 = vmatpush1.bf16.msra.mxu0 0
      %877 = vmatprep.subr.bf16.mxu0 0
      %878 = vmatpush1.bf16.msra.mxu0 0
      %879 = vmatprep.subr.bf16.mxu0 0
      %880 = vmatpush1.bf16.msra.mxu0 0
      %881 = vmatprep.subr.bf16.mxu0 0
      %882 = vmatpush1.bf16.msra.mxu0 0
      %883 = vmatprep.subr.bf16.mxu0 %v746
      %884 = vmatpush1.bf16.msra.mxu0 %v745
      %885 = vmatprep.subr.bf16.mxu0 %v736
      %886 = vmatpush1.bf16.msra.mxu0 %v735
      %887 = vmatprep.subr.bf16.mxu0 %v726
      %888 = vmatpush1.bf16.msra.mxu0 %v725
      %889 = vmatprep.subr.bf16.mxu0 0
      %890 = vmatpush2.bf16.msra.mxu0 0
      %891 = vmatprep.subr.bf16.mxu0 0
      %892 = vmatpush2.bf16.msra.mxu0 0
      %893 = vmatprep.subr.bf16.mxu0 0
      %894 = vmatpush2.bf16.msra.mxu0 0
      %895 = vmatprep.subr.bf16.mxu0 0
      %896 = vmatpush2.bf16.msra.mxu0 0
      %897 = vmatprep.subr.bf16.mxu0 0
      %898 = vmatpush2.bf16.msra.mxu0 0
      %899 = vmatprep.subr.bf16.mxu0 0
      %900 = vmatpush2.bf16.msra.mxu0 0
      %901 = vmatprep.subr.bf16.mxu0 0
      %902 = vmatpush2.bf16.msra.mxu0 0
      %903 = vmatprep.subr.bf16.mxu0 0
      %904 = vmatpush2.bf16.msra.mxu0 0
      %905 = vmatprep.mubr.bf16.mxu0 0
      %906 = vmatmul.mubr.bf16.gmra.mxu0 %v785
      %v907 = vpop.f32.mrf.mxu0
      %v908 = vadd.f32 0.0, %v907
      %v909 = vpop.f32.mrf.mxu0
      %v910 = vadd.f32 0.0, %v909
      %v911 = vpop.f32.mrf.mxu0
      %v912 = vadd.f32 0.0, %v911
      %v913 = vpop.f32.mrf.mxu0
      %v914 = vadd.f32 0.0, %v913
      %915 = vdwg.mxu0
      %916 = vmatprep.subr.bf16.mxu0 0
      %917 = vmatpush1.bf16.msra.mxu0 0
      %918 = vmatprep.subr.bf16.mxu0 0
      %919 = vmatpush1.bf16.msra.mxu0 0
      %920 = vmatprep.subr.bf16.mxu0 0
      %921 = vmatpush1.bf16.msra.mxu0 0
      %922 = vmatprep.subr.bf16.mxu0 0
      %923 = vmatpush1.bf16.msra.mxu0 0
      %924 = vmatprep.subr.bf16.mxu0 0
      %925 = vmatpush1.bf16.msra.mxu0 0
      %926 = vmatprep.subr.bf16.mxu0 %v748
      %927 = vmatpush1.bf16.msra.mxu0 %v747
      %928 = vmatprep.subr.bf16.mxu0 %v738
      %929 = vmatpush1.bf16.msra.mxu0 %v737
      %930 = vmatprep.subr.bf16.mxu0 %v728
      %931 = vmatpush1.bf16.msra.mxu0 %v727
      %932 = vmatprep.subr.bf16.mxu0 0
      %933 = vmatpush2.bf16.msra.mxu0 0
      %934 = vmatprep.subr.bf16.mxu0 0
      %935 = vmatpush2.bf16.msra.mxu0 0
      %936 = vmatprep.subr.bf16.mxu0 0
      %937 = vmatpush2.bf16.msra.mxu0 0
      %938 = vmatprep.subr.bf16.mxu0 0
      %939 = vmatpush2.bf16.msra.mxu0 0
      %940 = vmatprep.subr.bf16.mxu0 0
      %941 = vmatpush2.bf16.msra.mxu0 0
      %942 = vmatprep.subr.bf16.mxu0 0
      %943 = vmatpush2.bf16.msra.mxu0 0
      %944 = vmatprep.subr.bf16.mxu0 0
      %945 = vmatpush2.bf16.msra.mxu0 0
      %946 = vmatprep.subr.bf16.mxu0 0
      %947 = vmatpush2.bf16.msra.mxu0 0
      %948 = vmatprep.mubr.bf16.mxu0 0
      %949 = vmatmul.mubr.bf16.gmra.mxu0 %v785
      %v950 = vpop.f32.mrf.mxu0
      %v951 = vadd.f32 0.0, %v950
      %v952 = vpop.f32.mrf.mxu0
      %v953 = vadd.f32 0.0, %v952
      %v954 = vpop.f32.mrf.mxu0
      %v955 = vadd.f32 0.0, %v954
      %v956 = vpop.f32.mrf.mxu0
      %v957 = vadd.f32 0.0, %v956
      %958 = vdwg.mxu0
      %959 = vmatprep.subr.bf16.mxu0 0
      %960 = vmatpush1.bf16.msra.mxu0 0
      %961 = vmatprep.subr.bf16.mxu0 0
      %962 = vmatpush1.bf16.msra.mxu0 0
      %963 = vmatprep.subr.bf16.mxu0 0
      %964 = vmatpush1.bf16.msra.mxu0 0
      %965 = vmatprep.subr.bf16.mxu0 0
      %966 = vmatpush1.bf16.msra.mxu0 0
      %967 = vmatprep.subr.bf16.mxu0 0
      %968 = vmatpush1.bf16.msra.mxu0 0
      %969 = vmatprep.subr.bf16.mxu0 %v750
      %970 = vmatpush1.bf16.msra.mxu0 %v749
      %971 = vmatprep.subr.bf16.mxu0 %v740
      %972 = vmatpush1.bf16.msra.mxu0 %v739
      %973 = vmatprep.subr.bf16.mxu0 %v730
      %974 = vmatpush1.bf16.msra.mxu0 %v729
      %975 = vmatprep.subr.bf16.mxu0 0
      %976 = vmatpush2.bf16.msra.mxu0 0
      %977 = vmatprep.subr.bf16.mxu0 0
      %978 = vmatpush2.bf16.msra.mxu0 0
      %979 = vmatprep.subr.bf16.mxu0 0
      %980 = vmatpush2.bf16.msra.mxu0 0
      %981 = vmatprep.subr.bf16.mxu0 0
      %982 = vmatpush2.bf16.msra.mxu0 0
      %983 = vmatprep.subr.bf16.mxu0 0
      %984 = vmatpush2.bf16.msra.mxu0 0
      %985 = vmatprep.subr.bf16.mxu0 0
      %986 = vmatpush2.bf16.msra.mxu0 0
      %987 = vmatprep.subr.bf16.mxu0 0
      %988 = vmatpush2.bf16.msra.mxu0 0
      %989 = vmatprep.subr.bf16.mxu0 0
      %990 = vmatpush2.bf16.msra.mxu0 0
      %991 = vmatprep.mubr.bf16.mxu0 0
      %992 = vmatmul.mubr.bf16.gmra.mxu0 %v785
      %v993 = vpop.f32.mrf.mxu0
      %v994 = vadd.f32 0.0, %v993
      %v995 = vpop.f32.mrf.mxu0
      %v996 = vadd.f32 0.0, %v995
      %v997 = vpop.f32.mrf.mxu0
      %v998 = vadd.f32 0.0, %v997
      %v999 = vpop.f32.mrf.mxu0
      %v1000 = vadd.f32 0.0, %v999
      %1001 = vdwg.mxu0
      %1002 = vmatprep.subr.bf16.mxu0 0
      %1003 = vmatpush1.bf16.msra.mxu0 0
      %1004 = vmatprep.subr.bf16.mxu0 0
      %1005 = vmatpush1.bf16.msra.mxu0 0
      %1006 = vmatprep.subr.bf16.mxu0 0
      %1007 = vmatpush1.bf16.msra.mxu0 0
      %1008 = vmatprep.subr.bf16.mxu0 0
      %1009 = vmatpush1.bf16.msra.mxu0 0
      %1010 = vmatprep.subr.bf16.mxu0 0
      %1011 = vmatpush1.bf16.msra.mxu0 0
      %1012 = vmatprep.subr.bf16.mxu0 0
      %1013 = vmatpush1.bf16.msra.mxu0 %v719
      %1014 = vmatprep.subr.bf16.mxu0 0
      %1015 = vmatpush1.bf16.msra.mxu0 %v697
      %1016 = vmatprep.subr.bf16.mxu0 0
      %1017 = vmatpush1.bf16.msra.mxu0 %v675
      %1018 = vmatprep.subr.bf16.mxu0 0
      %1019 = vmatpush2.bf16.msra.mxu0 0
      %1020 = vmatprep.subr.bf16.mxu0 0
      %1021 = vmatpush2.bf16.msra.mxu0 0
      %1022 = vmatprep.subr.bf16.mxu0 0
      %1023 = vmatpush2.bf16.msra.mxu0 0
      %1024 = vmatprep.subr.bf16.mxu0 0
      %1025 = vmatpush2.bf16.msra.mxu0 0
      %1026 = vmatprep.subr.bf16.mxu0 0
      %1027 = vmatpush2.bf16.msra.mxu0 0
      %1028 = vmatprep.subr.bf16.mxu0 0
      %1029 = vmatpush2.bf16.msra.mxu0 0
      %1030 = vmatprep.subr.bf16.mxu0 0
      %1031 = vmatpush2.bf16.msra.mxu0 0
      %1032 = vmatprep.subr.bf16.mxu0 0
      %1033 = vmatpush2.bf16.msra.mxu0 0
      %1034 = vmatprep.mubr.bf16.mxu0 0
      %1035 = vmatmul.mubr.bf16.gmra.mxu0 %v785
      %v1036 = vpop.f32.mrf.mxu0
      %v1037 = vadd.f32 0.0, %v1036
      %v1038 = vpop.f32.mrf.mxu0
      %v1039 = vpop.f32.mrf.mxu0
      %v1040 = vadd.f32 0.0, %v1039
      %v1041 = vpop.f32.mrf.mxu0
      %1042 = vdwg.mxu0
      %v1045 = vunpack.c.l.b16 %v644
      %v1046 = vunpack.c.l.b16 %v645
      %v1047 = vpack.c.b16 %v1046, %v1045
      %v1049 = vsel %vm383, %v1047, 0
      %1051 = vmatprep.subr.bf16.mxu0 0
      %1052 = vmatpush1.bf16.msra.mxu0 0
      %1053 = vmatprep.subr.bf16.mxu0 0
      %1054 = vmatpush1.bf16.msra.mxu0 0
      %1055 = vmatprep.subr.bf16.mxu0 0
      %1056 = vmatpush1.bf16.msra.mxu0 0
      %1057 = vmatprep.subr.bf16.mxu0 0
      %1058 = vmatpush1.bf16.msra.mxu0 0
      %1059 = vmatprep.subr.bf16.mxu0 0
      %1060 = vmatpush1.bf16.msra.mxu0 0
      %1061 = vmatprep.subr.bf16.mxu0 %v340
      %1062 = vmatpush1.bf16.msra.mxu0 %v339
      %1063 = vmatprep.subr.bf16.mxu0 %v329
      %1064 = vmatpush1.bf16.msra.mxu0 %v328
      %1065 = vmatprep.subr.bf16.mxu0 %v318
      %1066 = vmatpush1.bf16.msra.mxu0 %v317
      %1067 = vmatprep.subr.bf16.mxu0 0
      %1068 = vmatpush2.bf16.msra.mxu0 0
      %1069 = vmatprep.subr.bf16.mxu0 0
      %1070 = vmatpush2.bf16.msra.mxu0 0
      %1071 = vmatprep.subr.bf16.mxu0 0
      %1072 = vmatpush2.bf16.msra.mxu0 0
      %1073 = vmatprep.subr.bf16.mxu0 0
      %1074 = vmatpush2.bf16.msra.mxu0 0
      %1075 = vmatprep.subr.bf16.mxu0 0
      %1076 = vmatpush2.bf16.msra.mxu0 0
      %1077 = vmatprep.subr.bf16.mxu0 0
      %1078 = vmatpush2.bf16.msra.mxu0 0
      %1079 = vmatprep.subr.bf16.mxu0 0
      %1080 = vmatpush2.bf16.msra.mxu0 0
      %1081 = vmatprep.subr.bf16.mxu0 0
      %1082 = vmatpush2.bf16.msra.mxu0 0
      %1083 = vmatprep.mubr.bf16.mxu0 0
      %1084 = vmatmul.mubr.bf16.gmra.mxu0 %v1049
      %v1085 = vpop.f32.mrf.mxu0
      %v1086 = vadd.f32 %v822, %v1085
      %v1087 = vpop.f32.mrf.mxu0
      %v1088 = vadd.f32 %v824, %v1087
      %v1089 = vpop.f32.mrf.mxu0
      %v1090 = vadd.f32 %v826, %v1089
      %v1091 = vpop.f32.mrf.mxu0
      %v1092 = vadd.f32 %v828, %v1091
      %1093 = vdwg.mxu0
      %1094 = vmatprep.subr.bf16.mxu0 0
      %1095 = vmatpush1.bf16.msra.mxu0 0
      %1096 = vmatprep.subr.bf16.mxu0 0
      %1097 = vmatpush1.bf16.msra.mxu0 0
      %1098 = vmatprep.subr.bf16.mxu0 0
      %1099 = vmatpush1.bf16.msra.mxu0 0
      %1100 = vmatprep.subr.bf16.mxu0 0
      %1101 = vmatpush1.bf16.msra.mxu0 0
      %1102 = vmatprep.subr.bf16.mxu0 0
      %1103 = vmatpush1.bf16.msra.mxu0 0
      %1104 = vmatprep.subr.bf16.mxu0 %v342
      %1105 = vmatpush1.bf16.msra.mxu0 %v341
      %1106 = vmatprep.subr.bf16.mxu0 %v331
      %1107 = vmatpush1.bf16.msra.mxu0 %v330
      %1108 = vmatprep.subr.bf16.mxu0 %v320
      %1109 = vmatpush1.bf16.msra.mxu0 %v319
      %1110 = vmatprep.subr.bf16.mxu0 0
      %1111 = vmatpush2.bf16.msra.mxu0 0
      %1112 = vmatprep.subr.bf16.mxu0 0
      %1113 = vmatpush2.bf16.msra.mxu0 0
      %1114 = vmatprep.subr.bf16.mxu0 0
      %1115 = vmatpush2.bf16.msra.mxu0 0
      %1116 = vmatprep.subr.bf16.mxu0 0
      %1117 = vmatpush2.bf16.msra.mxu0 0
      %1118 = vmatprep.subr.bf16.mxu0 0
      %1119 = vmatpush2.bf16.msra.mxu0 0
      %1120 = vmatprep.subr.bf16.mxu0 0
      %1121 = vmatpush2.bf16.msra.mxu0 0
      %1122 = vmatprep.subr.bf16.mxu0 0
      %1123 = vmatpush2.bf16.msra.mxu0 0
      %1124 = vmatprep.subr.bf16.mxu0 0
      %1125 = vmatpush2.bf16.msra.mxu0 0
      %1126 = vmatprep.mubr.bf16.mxu0 0
      %1127 = vmatmul.mubr.bf16.gmra.mxu0 %v1049
      %v1128 = vpop.f32.mrf.mxu0
      %v1129 = vadd.f32 %v865, %v1128
      %v1130 = vpop.f32.mrf.mxu0
      %v1131 = vadd.f32 %v867, %v1130
      %v1132 = vpop.f32.mrf.mxu0
      %v1133 = vadd.f32 %v869, %v1132
      %v1134 = vpop.f32.mrf.mxu0
      %v1135 = vadd.f32 %v871, %v1134
      %1136 = vdwg.mxu0
      %1137 = vmatprep.subr.bf16.mxu0 0
      %1138 = vmatpush1.bf16.msra.mxu0 0
      %1139 = vmatprep.subr.bf16.mxu0 0
      %1140 = vmatpush1.bf16.msra.mxu0 0
      %1141 = vmatprep.subr.bf16.mxu0 0
      %1142 = vmatpush1.bf16.msra.mxu0 0
      %1143 = vmatprep.subr.bf16.mxu0 0
      %1144 = vmatpush1.bf16.msra.mxu0 0
      %1145 = vmatprep.subr.bf16.mxu0 0
      %1146 = vmatpush1.bf16.msra.mxu0 0
      %1147 = vmatprep.subr.bf16.mxu0 %v344
      %1148 = vmatpush1.bf16.msra.mxu0 %v343
      %1149 = vmatprep.subr.bf16.mxu0 %v333
      %1150 = vmatpush1.bf16.msra.mxu0 %v332
      %1151 = vmatprep.subr.bf16.mxu0 %v322
      %1152 = vmatpush1.bf16.msra.mxu0 %v321
      %1153 = vmatprep.subr.bf16.mxu0 0
      %1154 = vmatpush2.bf16.msra.mxu0 0
      %1155 = vmatprep.subr.bf16.mxu0 0
      %1156 = vmatpush2.bf16.msra.mxu0 0
      %1157 = vmatprep.subr.bf16.mxu0 0
      %1158 = vmatpush2.bf16.msra.mxu0 0
      %1159 = vmatprep.subr.bf16.mxu0 0
      %1160 = vmatpush2.bf16.msra.mxu0 0
      %1161 = vmatprep.subr.bf16.mxu0 0
      %1162 = vmatpush2.bf16.msra.mxu0 0
      %1163 = vmatprep.subr.bf16.mxu0 0
      %1164 = vmatpush2.bf16.msra.mxu0 0
      %1165 = vmatprep.subr.bf16.mxu0 0
      %1166 = vmatpush2.bf16.msra.mxu0 0
      %1167 = vmatprep.subr.bf16.mxu0 0
      %1168 = vmatpush2.bf16.msra.mxu0 0
      %1169 = vmatprep.mubr.bf16.mxu0 0
      %1170 = vmatmul.mubr.bf16.gmra.mxu0 %v1049
      %v1171 = vpop.f32.mrf.mxu0
      %v1172 = vadd.f32 %v908, %v1171
      %v1173 = vpop.f32.mrf.mxu0
      %v1174 = vadd.f32 %v910, %v1173
      %v1175 = vpop.f32.mrf.mxu0
      %v1176 = vadd.f32 %v912, %v1175
      %v1177 = vpop.f32.mrf.mxu0
      %v1178 = vadd.f32 %v914, %v1177
      %1179 = vdwg.mxu0
      %1180 = vmatprep.subr.bf16.mxu0 0
      %1181 = vmatpush1.bf16.msra.mxu0 0
      %1182 = vmatprep.subr.bf16.mxu0 0
      %1183 = vmatpush1.bf16.msra.mxu0 0
      %1184 = vmatprep.subr.bf16.mxu0 0
      %1185 = vmatpush1.bf16.msra.mxu0 0
      %1186 = vmatprep.subr.bf16.mxu0 0
      %1187 = vmatpush1.bf16.msra.mxu0 0
      %1188 = vmatprep.subr.bf16.mxu0 0
      %1189 = vmatpush1.bf16.msra.mxu0 0
      %1190 = vmatprep.subr.bf16.mxu0 %v346
      %1191 = vmatpush1.bf16.msra.mxu0 %v345
      %1192 = vmatprep.subr.bf16.mxu0 %v335
      %1193 = vmatpush1.bf16.msra.mxu0 %v334
      %1194 = vmatprep.subr.bf16.mxu0 %v324
      %1195 = vmatpush1.bf16.msra.mxu0 %v323
      %1196 = vmatprep.subr.bf16.mxu0 0
      %1197 = vmatpush2.bf16.msra.mxu0 0
      %1198 = vmatprep.subr.bf16.mxu0 0
      %1199 = vmatpush2.bf16.msra.mxu0 0
      %1200 = vmatprep.subr.bf16.mxu0 0
      %1201 = vmatpush2.bf16.msra.mxu0 0
      %1202 = vmatprep.subr.bf16.mxu0 0
      %1203 = vmatpush2.bf16.msra.mxu0 0
      %1204 = vmatprep.subr.bf16.mxu0 0
      %1205 = vmatpush2.bf16.msra.mxu0 0
      %1206 = vmatprep.subr.bf16.mxu0 0
      %1207 = vmatpush2.bf16.msra.mxu0 0
      %1208 = vmatprep.subr.bf16.mxu0 0
      %1209 = vmatpush2.bf16.msra.mxu0 0
      %1210 = vmatprep.subr.bf16.mxu0 0
      %1211 = vmatpush2.bf16.msra.mxu0 0
      %1212 = vmatprep.mubr.bf16.mxu0 0
      %1213 = vmatmul.mubr.bf16.gmra.mxu0 %v1049
      %v1214 = vpop.f32.mrf.mxu0
      %v1215 = vadd.f32 %v951, %v1214
      %v1216 = vpop.f32.mrf.mxu0
      %v1217 = vadd.f32 %v953, %v1216
      %v1218 = vpop.f32.mrf.mxu0
      %v1219 = vadd.f32 %v955, %v1218
      %v1220 = vpop.f32.mrf.mxu0
      %v1221 = vadd.f32 %v957, %v1220
      %1222 = vdwg.mxu0
      %1223 = vmatprep.subr.bf16.mxu0 0
      %1224 = vmatpush1.bf16.msra.mxu0 0
      %1225 = vmatprep.subr.bf16.mxu0 0
      %1226 = vmatpush1.bf16.msra.mxu0 0
      %1227 = vmatprep.subr.bf16.mxu0 0
      %1228 = vmatpush1.bf16.msra.mxu0 0
      %1229 = vmatprep.subr.bf16.mxu0 0
      %1230 = vmatpush1.bf16.msra.mxu0 0
      %1231 = vmatprep.subr.bf16.mxu0 0
      %1232 = vmatpush1.bf16.msra.mxu0 0
      %1233 = vmatprep.subr.bf16.mxu0 %v348
      %1234 = vmatpush1.bf16.msra.mxu0 %v347
      %1235 = vmatprep.subr.bf16.mxu0 %v337
      %1236 = vmatpush1.bf16.msra.mxu0 %v336
      %1237 = vmatprep.subr.bf16.mxu0 %v326
      %1238 = vmatpush1.bf16.msra.mxu0 %v325
      %1239 = vmatprep.subr.bf16.mxu0 0
      %1240 = vmatpush2.bf16.msra.mxu0 0
      %1241 = vmatprep.subr.bf16.mxu0 0
      %1242 = vmatpush2.bf16.msra.mxu0 0
      %1243 = vmatprep.subr.bf16.mxu0 0
      %1244 = vmatpush2.bf16.msra.mxu0 0
      %1245 = vmatprep.subr.bf16.mxu0 0
      %1246 = vmatpush2.bf16.msra.mxu0 0
      %1247 = vmatprep.subr.bf16.mxu0 0
      %1248 = vmatpush2.bf16.msra.mxu0 0
      %1249 = vmatprep.subr.bf16.mxu0 0
      %1250 = vmatpush2.bf16.msra.mxu0 0
      %1251 = vmatprep.subr.bf16.mxu0 0
      %1252 = vmatpush2.bf16.msra.mxu0 0
      %1253 = vmatprep.subr.bf16.mxu0 0
      %1254 = vmatpush2.bf16.msra.mxu0 0
      %1255 = vmatprep.mubr.bf16.mxu0 0
      %1256 = vmatmul.mubr.bf16.gmra.mxu0 %v1049
      %v1257 = vpop.f32.mrf.mxu0
      %v1258 = vadd.f32 %v994, %v1257
      %v1259 = vpop.f32.mrf.mxu0
      %v1260 = vadd.f32 %v996, %v1259
      %v1261 = vpop.f32.mrf.mxu0
      %v1262 = vadd.f32 %v998, %v1261
      %v1263 = vpop.f32.mrf.mxu0
      %v1264 = vadd.f32 %v1000, %v1263
      %1265 = vdwg.mxu0
      %1266 = vmatprep.subr.bf16.mxu0 0
      %1267 = vmatpush1.bf16.msra.mxu0 0
      %1268 = vmatprep.subr.bf16.mxu0 0
      %1269 = vmatpush1.bf16.msra.mxu0 0
      %1270 = vmatprep.subr.bf16.mxu0 0
      %1271 = vmatpush1.bf16.msra.mxu0 0
      %1272 = vmatprep.subr.bf16.mxu0 0
      %1273 = vmatpush1.bf16.msra.mxu0 0
      %1274 = vmatprep.subr.bf16.mxu0 0
      %1275 = vmatpush1.bf16.msra.mxu0 0
      %1276 = vmatprep.subr.bf16.mxu0 0
      %1277 = vmatpush1.bf16.msra.mxu0 %v349
      %1278 = vmatprep.subr.bf16.mxu0 0
      %1279 = vmatpush1.bf16.msra.mxu0 %v338
      %1280 = vmatprep.subr.bf16.mxu0 0
      %1281 = vmatpush1.bf16.msra.mxu0 %v327
      %1282 = vmatprep.subr.bf16.mxu0 0
      %1283 = vmatpush2.bf16.msra.mxu0 0
      %1284 = vmatprep.subr.bf16.mxu0 0
      %1285 = vmatpush2.bf16.msra.mxu0 0
      %1286 = vmatprep.subr.bf16.mxu0 0
      %1287 = vmatpush2.bf16.msra.mxu0 0
      %1288 = vmatprep.subr.bf16.mxu0 0
      %1289 = vmatpush2.bf16.msra.mxu0 0
      %1290 = vmatprep.subr.bf16.mxu0 0
      %1291 = vmatpush2.bf16.msra.mxu0 0
      %1292 = vmatprep.subr.bf16.mxu0 0
      %1293 = vmatpush2.bf16.msra.mxu0 0
      %1294 = vmatprep.subr.bf16.mxu0 0
      %1295 = vmatpush2.bf16.msra.mxu0 0
      %1296 = vmatprep.subr.bf16.mxu0 0
      %1297 = vmatpush2.bf16.msra.mxu0 0
      %1298 = vmatprep.mubr.bf16.mxu0 0
      %1299 = vmatmul.mubr.bf16.gmra.mxu0 %v1049
      %v1300 = vpop.f32.mrf.mxu0
      %v1301 = vadd.f32 %v1037, %v1300
      %v1302 = vpop.f32.mrf.mxu0
      %v1303 = vpop.f32.mrf.mxu0
      %v1304 = vadd.f32 %v1040, %v1303
      %v1305 = vpop.f32.mrf.mxu0
      %1306 = vdwg.mxu0
      %v1307 = vmax.f32 %v422, %v1086
      %v1308 = vmax.f32 %v424, %v1088
      %v1309 = vmax.f32 %v465, %v1129
      %v1310 = vmax.f32 %v467, %v1131
      %v1311 = vmax.f32 %v508, %v1172
      %v1312 = vmax.f32 %v510, %v1174
      %v1313 = vmax.f32 %v551, %v1215
      %v1314 = vmax.f32 %v553, %v1217
      %v1315 = vmax.f32 %v594, %v1258
      %v1316 = vmax.f32 %v596, %v1260
      %v1317 = vmax.f32 %v637, %v1301
      %v1318 = vmax.f32 %v426, %v1090
      %v1319 = vmax.f32 %v428, %v1092
      %v1320 = vmax.f32 %v469, %v1133
      %v1321 = vmax.f32 %v471, %v1135
      %v1322 = vmax.f32 %v512, %v1176
      %v1323 = vmax.f32 %v514, %v1178
      %v1324 = vmax.f32 %v555, %v1219
      %v1325 = vmax.f32 %v557, %v1221
      %v1326 = vmax.f32 %v598, %v1262
      %v1327 = vmax.f32 %v600, %v1264
      %v1328 = vmax.f32 %v640, %v1304
      %s1329 = scalar_lea.vmem %s1, 64
      %v1330 = vld [vmem:[%s1329] sm:$0xf]
      %v1331 = vld [vmem:[%s1329 + $0x4] sm:$0xf]
      %s1332 = scalar_lea.vmem %s1, 80
      %v1333 = vld [vmem:[%s1332] sm:$0xf]
      %v1334 = vld [vmem:[%s1332 + $0x4] sm:$0xf]
      %v1337 = vunpack.c.l.b16 %v1333
      %v1338 = vunpack.c.l.b16 %v1334
      %v1339 = vpack.c.b16 %v1338, %v1337
      %1340 = vrot.lane.b32.xlu0 %v317, 91
      %v1341 = vpop.permute.xlu0 %1340
      %1342 = vrot.lane.b32.xlu0 %v318, 91
      %v1343 = vpop.permute.xlu0 %1342
      %1344 = vrot.lane.b32.xlu0 %v319, 91
      %v1345 = vpop.permute.xlu0 %1344
      %1346 = vrot.lane.b32.xlu0 %v320, 91
      %v1347 = vpop.permute.xlu0 %1346
      %1348 = vrot.lane.b32.xlu0 %v321, 91
      %v1349 = vpop.permute.xlu0 %1348
      %1350 = vrot.lane.b32.xlu0 %v322, 91
      %v1351 = vpop.permute.xlu0 %1350
      %1352 = vrot.lane.b32.xlu0 %v323, 91
      %v1353 = vpop.permute.xlu0 %1352
      %1354 = vrot.lane.b32.xlu0 %v324, 91
      %v1355 = vpop.permute.xlu0 %1354
      %1356 = vrot.lane.b32.xlu0 %v325, 91
      %v1357 = vpop.permute.xlu0 %1356
      %1358 = vrot.lane.b32.xlu0 %v326, 91
      %v1359 = vpop.permute.xlu0 %1358
      %1360 = vrot.lane.b32.xlu0 %v327, 91
      %v1361 = vpop.permute.xlu0 %1360
      %1362 = vrot.lane.b32.xlu0 %v328, 91
      %v1363 = vpop.permute.xlu0 %1362
      %1364 = vrot.lane.b32.xlu0 %v329, 91
      %v1365 = vpop.permute.xlu0 %1364
      %1366 = vrot.lane.b32.xlu0 %v330, 91
      %v1367 = vpop.permute.xlu0 %1366
      %1368 = vrot.lane.b32.xlu0 %v331, 91
      %v1369 = vpop.permute.xlu0 %1368
      %1370 = vrot.lane.b32.xlu0 %v332, 91
      %v1371 = vpop.permute.xlu0 %1370
      %1372 = vrot.lane.b32.xlu0 %v333, 91
      %v1373 = vpop.permute.xlu0 %1372
      %1374 = vrot.lane.b32.xlu0 %v334, 91
      %v1375 = vpop.permute.xlu0 %1374
      %1376 = vrot.lane.b32.xlu0 %v335, 91
      %v1377 = vpop.permute.xlu0 %1376
      %1378 = vrot.lane.b32.xlu0 %v336, 91
      %v1379 = vpop.permute.xlu0 %1378
      %1380 = vrot.lane.b32.xlu0 %v337, 91
      %v1381 = vpop.permute.xlu0 %1380
      %1382 = vrot.lane.b32.xlu0 %v338, 91
      %v1383 = vpop.permute.xlu0 %1382
      %1384 = vrot.lane.b32.xlu0 %v339, 91
      %v1385 = vpop.permute.xlu0 %1384
      %1386 = vrot.lane.b32.xlu0 %v340, 91
      %v1387 = vpop.permute.xlu0 %1386
      %1388 = vrot.lane.b32.xlu0 %v341, 91
      %v1389 = vpop.permute.xlu0 %1388
      %1390 = vrot.lane.b32.xlu0 %v342, 91
      %v1391 = vpop.permute.xlu0 %1390
      %1392 = vrot.lane.b32.xlu0 %v343, 91
      %v1393 = vpop.permute.xlu0 %1392
      %1394 = vrot.lane.b32.xlu0 %v344, 91
      %v1395 = vpop.permute.xlu0 %1394
      %1396 = vrot.lane.b32.xlu0 %v345, 91
      %v1397 = vpop.permute.xlu0 %1396
      %1398 = vrot.lane.b32.xlu0 %v346, 91
      %v1399 = vpop.permute.xlu0 %1398
      %1400 = vrot.lane.b32.xlu0 %v347, 91
      %v1401 = vpop.permute.xlu0 %1400
      %1402 = vrot.lane.b32.xlu0 %v348, 91
      %v1403 = vpop.permute.xlu0 %1402
      %1404 = vrot.lane.b32.xlu0 %v349, 91
      %v1405 = vpop.permute.xlu0 %1404
      %vm1406 = vcmask 744448
      %v1407 = vsel %vm1406, %v1341, %v1343
      %v1408 = vsel %vm1406, %v1343, %v1345
      %v1409 = vsel %vm1406, %v1345, %v1347
      %v1410 = vsel %vm1406, %v1347, %v1349
      %v1411 = vsel %vm1406, %v1349, %v1351
      %v1412 = vsel %vm1406, %v1351, %v1353
      %v1413 = vsel %vm1406, %v1353, %v1355
      %v1414 = vsel %vm1406, %v1355, %v1357
      %v1415 = vsel %vm1406, %v1357, %v1359
      %v1416 = vsel %vm1406, %v1359, %v1361
      %v1417 = vsel %vm1406, %v1363, %v1365
      %v1418 = vsel %vm1406, %v1365, %v1367
      %v1419 = vsel %vm1406, %v1367, %v1369
      %v1420 = vsel %vm1406, %v1369, %v1371
      %v1421 = vsel %vm1406, %v1371, %v1373
      %v1422 = vsel %vm1406, %v1373, %v1375
      %v1423 = vsel %vm1406, %v1375, %v1377
      %v1424 = vsel %vm1406, %v1377, %v1379
      %v1425 = vsel %vm1406, %v1379, %v1381
      %v1426 = vsel %vm1406, %v1381, %v1383
      %v1427 = vsel %vm1406, %v1385, %v1387
      %v1428 = vsel %vm1406, %v1387, %v1389
      %v1429 = vsel %vm1406, %v1389, %v1391
      %v1430 = vsel %vm1406, %v1391, %v1393
      %v1431 = vsel %vm1406, %v1393, %v1395
      %v1432 = vsel %vm1406, %v1395, %v1397
      %v1433 = vsel %vm1406, %v1397, %v1399
      %v1434 = vsel %vm1406, %v1399, %v1401
      %v1435 = vsel %vm1406, %v1401, %v1403
      %v1436 = vsel %vm1406, %v1403, %v1405
      %v1471 = vsel %vm383, %v1339, 0
      %1473 = vmatprep.subr.bf16.mxu0 0
      %1474 = vmatpush1.bf16.msra.mxu0 0
      %1475 = vmatprep.subr.bf16.mxu0 0
      %1476 = vmatpush1.bf16.msra.mxu0 0
      %1477 = vmatprep.subr.bf16.mxu0 0
      %1478 = vmatpush1.bf16.msra.mxu0 0
      %1479 = vmatprep.subr.bf16.mxu0 0
      %1480 = vmatpush1.bf16.msra.mxu0 0
      %1481 = vmatprep.subr.bf16.mxu0 0
      %1482 = vmatpush1.bf16.msra.mxu0 0
      %1483 = vmatprep.subr.bf16.mxu0 %v1428
      %1484 = vmatpush1.bf16.msra.mxu0 %v1427
      %1485 = vmatprep.subr.bf16.mxu0 %v1418
      %1486 = vmatpush1.bf16.msra.mxu0 %v1417
      %1487 = vmatprep.subr.bf16.mxu0 %v1408
      %1488 = vmatpush1.bf16.msra.mxu0 %v1407
      %1489 = vmatprep.subr.bf16.mxu0 0
      %1490 = vmatpush2.bf16.msra.mxu0 0
      %1491 = vmatprep.subr.bf16.mxu0 0
      %1492 = vmatpush2.bf16.msra.mxu0 0
      %1493 = vmatprep.subr.bf16.mxu0 0
      %1494 = vmatpush2.bf16.msra.mxu0 0
      %1495 = vmatprep.subr.bf16.mxu0 0
      %1496 = vmatpush2.bf16.msra.mxu0 0
      %1497 = vmatprep.subr.bf16.mxu0 0
      %1498 = vmatpush2.bf16.msra.mxu0 0
      %1499 = vmatprep.subr.bf16.mxu0 0
      %1500 = vmatpush2.bf16.msra.mxu0 0
      %1501 = vmatprep.subr.bf16.mxu0 0
      %1502 = vmatpush2.bf16.msra.mxu0 0
      %1503 = vmatprep.subr.bf16.mxu0 0
      %1504 = vmatpush2.bf16.msra.mxu0 0
      %1505 = vmatprep.mubr.bf16.mxu0 0
      %1506 = vmatmul.mubr.bf16.gmra.mxu0 %v1471
      %v1507 = vpop.f32.mrf.mxu0
      %v1508 = vadd.f32 0.0, %v1507
      %v1509 = vpop.f32.mrf.mxu0
      %v1510 = vadd.f32 0.0, %v1509
      %v1511 = vpop.f32.mrf.mxu0
      %v1512 = vadd.f32 0.0, %v1511
      %v1513 = vpop.f32.mrf.mxu0
      %v1514 = vadd.f32 0.0, %v1513
      %1515 = vdwg.mxu0
      %1516 = vmatprep.subr.bf16.mxu0 0
      %1517 = vmatpush1.bf16.msra.mxu0 0
      %1518 = vmatprep.subr.bf16.mxu0 0
      %1519 = vmatpush1.bf16.msra.mxu0 0
      %1520 = vmatprep.subr.bf16.mxu0 0
      %1521 = vmatpush1.bf16.msra.mxu0 0
      %1522 = vmatprep.subr.bf16.mxu0 0
      %1523 = vmatpush1.bf16.msra.mxu0 0
      %1524 = vmatprep.subr.bf16.mxu0 0
      %1525 = vmatpush1.bf16.msra.mxu0 0
      %1526 = vmatprep.subr.bf16.mxu0 %v1430
      %1527 = vmatpush1.bf16.msra.mxu0 %v1429
      %1528 = vmatprep.subr.bf16.mxu0 %v1420
      %1529 = vmatpush1.bf16.msra.mxu0 %v1419
      %1530 = vmatprep.subr.bf16.mxu0 %v1410
      %1531 = vmatpush1.bf16.msra.mxu0 %v1409
      %1532 = vmatprep.subr.bf16.mxu0 0
      %1533 = vmatpush2.bf16.msra.mxu0 0
      %1534 = vmatprep.subr.bf16.mxu0 0
      %1535 = vmatpush2.bf16.msra.mxu0 0
      %1536 = vmatprep.subr.bf16.mxu0 0
      %1537 = vmatpush2.bf16.msra.mxu0 0
      %1538 = vmatprep.subr.bf16.mxu0 0
      %1539 = vmatpush2.bf16.msra.mxu0 0
      %1540 = vmatprep.subr.bf16.mxu0 0
      %1541 = vmatpush2.bf16.msra.mxu0 0
      %1542 = vmatprep.subr.bf16.mxu0 0
      %1543 = vmatpush2.bf16.msra.mxu0 0
      %1544 = vmatprep.subr.bf16.mxu0 0
      %1545 = vmatpush2.bf16.msra.mxu0 0
      %1546 = vmatprep.subr.bf16.mxu0 0
      %1547 = vmatpush2.bf16.msra.mxu0 0
      %1548 = vmatprep.mubr.bf16.mxu0 0
      %1549 = vmatmul.mubr.bf16.gmra.mxu0 %v1471
      %v1550 = vpop.f32.mrf.mxu0
      %v1551 = vadd.f32 0.0, %v1550
      %v1552 = vpop.f32.mrf.mxu0
      %v1553 = vadd.f32 0.0, %v1552
      %v1554 = vpop.f32.mrf.mxu0
      %v1555 = vadd.f32 0.0, %v1554
      %v1556 = vpop.f32.mrf.mxu0
      %v1557 = vadd.f32 0.0, %v1556
      %1558 = vdwg.mxu0
      %1559 = vmatprep.subr.bf16.mxu0 0
      %1560 = vmatpush1.bf16.msra.mxu0 0
      %1561 = vmatprep.subr.bf16.mxu0 0
      %1562 = vmatpush1.bf16.msra.mxu0 0
      %1563 = vmatprep.subr.bf16.mxu0 0
      %1564 = vmatpush1.bf16.msra.mxu0 0
      %1565 = vmatprep.subr.bf16.mxu0 0
      %1566 = vmatpush1.bf16.msra.mxu0 0
      %1567 = vmatprep.subr.bf16.mxu0 0
      %1568 = vmatpush1.bf16.msra.mxu0 0
      %1569 = vmatprep.subr.bf16.mxu0 %v1432
      %1570 = vmatpush1.bf16.msra.mxu0 %v1431
      %1571 = vmatprep.subr.bf16.mxu0 %v1422
      %1572 = vmatpush1.bf16.msra.mxu0 %v1421
      %1573 = vmatprep.subr.bf16.mxu0 %v1412
      %1574 = vmatpush1.bf16.msra.mxu0 %v1411
      %1575 = vmatprep.subr.bf16.mxu0 0
      %1576 = vmatpush2.bf16.msra.mxu0 0
      %1577 = vmatprep.subr.bf16.mxu0 0
      %1578 = vmatpush2.bf16.msra.mxu0 0
      %1579 = vmatprep.subr.bf16.mxu0 0
      %1580 = vmatpush2.bf16.msra.mxu0 0
      %1581 = vmatprep.subr.bf16.mxu0 0
      %1582 = vmatpush2.bf16.msra.mxu0 0
      %1583 = vmatprep.subr.bf16.mxu0 0
      %1584 = vmatpush2.bf16.msra.mxu0 0
      %1585 = vmatprep.subr.bf16.mxu0 0
      %1586 = vmatpush2.bf16.msra.mxu0 0
      %1587 = vmatprep.subr.bf16.mxu0 0
      %1588 = vmatpush2.bf16.msra.mxu0 0
      %1589 = vmatprep.subr.bf16.mxu0 0
      %1590 = vmatpush2.bf16.msra.mxu0 0
      %1591 = vmatprep.mubr.bf16.mxu0 0
      %1592 = vmatmul.mubr.bf16.gmra.mxu0 %v1471
      %v1593 = vpop.f32.mrf.mxu0
      %v1594 = vadd.f32 0.0, %v1593
      %v1595 = vpop.f32.mrf.mxu0
      %v1596 = vadd.f32 0.0, %v1595
      %v1597 = vpop.f32.mrf.mxu0
      %v1598 = vadd.f32 0.0, %v1597
      %v1599 = vpop.f32.mrf.mxu0
      %v1600 = vadd.f32 0.0, %v1599
      %1601 = vdwg.mxu0
      %1602 = vmatprep.subr.bf16.mxu0 0
      %1603 = vmatpush1.bf16.msra.mxu0 0
      %1604 = vmatprep.subr.bf16.mxu0 0
      %1605 = vmatpush1.bf16.msra.mxu0 0
      %1606 = vmatprep.subr.bf16.mxu0 0
      %1607 = vmatpush1.bf16.msra.mxu0 0
      %1608 = vmatprep.subr.bf16.mxu0 0
      %1609 = vmatpush1.bf16.msra.mxu0 0
      %1610 = vmatprep.subr.bf16.mxu0 0
      %1611 = vmatpush1.bf16.msra.mxu0 0
      %1612 = vmatprep.subr.bf16.mxu0 %v1434
      %1613 = vmatpush1.bf16.msra.mxu0 %v1433
      %1614 = vmatprep.subr.bf16.mxu0 %v1424
      %1615 = vmatpush1.bf16.msra.mxu0 %v1423
      %1616 = vmatprep.subr.bf16.mxu0 %v1414
      %1617 = vmatpush1.bf16.msra.mxu0 %v1413
      %1618 = vmatprep.subr.bf16.mxu0 0
      %1619 = vmatpush2.bf16.msra.mxu0 0
      %1620 = vmatprep.subr.bf16.mxu0 0
      %1621 = vmatpush2.bf16.msra.mxu0 0
      %1622 = vmatprep.subr.bf16.mxu0 0
      %1623 = vmatpush2.bf16.msra.mxu0 0
      %1624 = vmatprep.subr.bf16.mxu0 0
      %1625 = vmatpush2.bf16.msra.mxu0 0
      %1626 = vmatprep.subr.bf16.mxu0 0
      %1627 = vmatpush2.bf16.msra.mxu0 0
      %1628 = vmatprep.subr.bf16.mxu0 0
      %1629 = vmatpush2.bf16.msra.mxu0 0
      %1630 = vmatprep.subr.bf16.mxu0 0
      %1631 = vmatpush2.bf16.msra.mxu0 0
      %1632 = vmatprep.subr.bf16.mxu0 0
      %1633 = vmatpush2.bf16.msra.mxu0 0
      %1634 = vmatprep.mubr.bf16.mxu0 0
      %1635 = vmatmul.mubr.bf16.gmra.mxu0 %v1471
      %v1636 = vpop.f32.mrf.mxu0
      %v1637 = vadd.f32 0.0, %v1636
      %v1638 = vpop.f32.mrf.mxu0
      %v1639 = vadd.f32 0.0, %v1638
      %v1640 = vpop.f32.mrf.mxu0
      %v1641 = vadd.f32 0.0, %v1640
      %v1642 = vpop.f32.mrf.mxu0
      %v1643 = vadd.f32 0.0, %v1642
      %1644 = vdwg.mxu0
      %1645 = vmatprep.subr.bf16.mxu0 0
      %1646 = vmatpush1.bf16.msra.mxu0 0
      %1647 = vmatprep.subr.bf16.mxu0 0
      %1648 = vmatpush1.bf16.msra.mxu0 0
      %1649 = vmatprep.subr.bf16.mxu0 0
      %1650 = vmatpush1.bf16.msra.mxu0 0
      %1651 = vmatprep.subr.bf16.mxu0 0
      %1652 = vmatpush1.bf16.msra.mxu0 0
      %1653 = vmatprep.subr.bf16.mxu0 0
      %1654 = vmatpush1.bf16.msra.mxu0 0
      %1655 = vmatprep.subr.bf16.mxu0 %v1436
      %1656 = vmatpush1.bf16.msra.mxu0 %v1435
      %1657 = vmatprep.subr.bf16.mxu0 %v1426
      %1658 = vmatpush1.bf16.msra.mxu0 %v1425
      %1659 = vmatprep.subr.bf16.mxu0 %v1416
      %1660 = vmatpush1.bf16.msra.mxu0 %v1415
      %1661 = vmatprep.subr.bf16.mxu0 0
      %1662 = vmatpush2.bf16.msra.mxu0 0
      %1663 = vmatprep.subr.bf16.mxu0 0
      %1664 = vmatpush2.bf16.msra.mxu0 0
      %1665 = vmatprep.subr.bf16.mxu0 0
      %1666 = vmatpush2.bf16.msra.mxu0 0
      %1667 = vmatprep.subr.bf16.mxu0 0
      %1668 = vmatpush2.bf16.msra.mxu0 0
      %1669 = vmatprep.subr.bf16.mxu0 0
      %1670 = vmatpush2.bf16.msra.mxu0 0
      %1671 = vmatprep.subr.bf16.mxu0 0
      %1672 = vmatpush2.bf16.msra.mxu0 0
      %1673 = vmatprep.subr.bf16.mxu0 0
      %1674 = vmatpush2.bf16.msra.mxu0 0
      %1675 = vmatprep.subr.bf16.mxu0 0
      %1676 = vmatpush2.bf16.msra.mxu0 0
      %1677 = vmatprep.mubr.bf16.mxu0 0
      %1678 = vmatmul.mubr.bf16.gmra.mxu0 %v1471
      %v1679 = vpop.f32.mrf.mxu0
      %v1680 = vadd.f32 0.0, %v1679
      %v1681 = vpop.f32.mrf.mxu0
      %v1682 = vadd.f32 0.0, %v1681
      %v1683 = vpop.f32.mrf.mxu0
      %v1684 = vadd.f32 0.0, %v1683
      %v1685 = vpop.f32.mrf.mxu0
      %v1686 = vadd.f32 0.0, %v1685
      %1687 = vdwg.mxu0
      %1688 = vmatprep.subr.bf16.mxu0 0
      %1689 = vmatpush1.bf16.msra.mxu0 0
      %1690 = vmatprep.subr.bf16.mxu0 0
      %1691 = vmatpush1.bf16.msra.mxu0 0
      %1692 = vmatprep.subr.bf16.mxu0 0
      %1693 = vmatpush1.bf16.msra.mxu0 0
      %1694 = vmatprep.subr.bf16.mxu0 0
      %1695 = vmatpush1.bf16.msra.mxu0 0
      %1696 = vmatprep.subr.bf16.mxu0 0
      %1697 = vmatpush1.bf16.msra.mxu0 0
      %1698 = vmatprep.subr.bf16.mxu0 0
      %1699 = vmatpush1.bf16.msra.mxu0 %v1405
      %1700 = vmatprep.subr.bf16.mxu0 0
      %1701 = vmatpush1.bf16.msra.mxu0 %v1383
      %1702 = vmatprep.subr.bf16.mxu0 0
      %1703 = vmatpush1.bf16.msra.mxu0 %v1361
      %1704 = vmatprep.subr.bf16.mxu0 0
      %1705 = vmatpush2.bf16.msra.mxu0 0
      %1706 = vmatprep.subr.bf16.mxu0 0
      %1707 = vmatpush2.bf16.msra.mxu0 0
      %1708 = vmatprep.subr.bf16.mxu0 0
      %1709 = vmatpush2.bf16.msra.mxu0 0
      %1710 = vmatprep.subr.bf16.mxu0 0
      %1711 = vmatpush2.bf16.msra.mxu0 0
      %1712 = vmatprep.subr.bf16.mxu0 0
      %1713 = vmatpush2.bf16.msra.mxu0 0
      %1714 = vmatprep.subr.bf16.mxu0 0
      %1715 = vmatpush2.bf16.msra.mxu0 0
      %1716 = vmatprep.subr.bf16.mxu0 0
      %1717 = vmatpush2.bf16.msra.mxu0 0
      %1718 = vmatprep.subr.bf16.mxu0 0
      %1719 = vmatpush2.bf16.msra.mxu0 0
      %1720 = vmatprep.mubr.bf16.mxu0 0
      %1721 = vmatmul.mubr.bf16.gmra.mxu0 %v1471
      %v1722 = vpop.f32.mrf.mxu0
      %v1723 = vadd.f32 0.0, %v1722
      %v1724 = vpop.f32.mrf.mxu0
      %v1725 = vpop.f32.mrf.mxu0
      %v1726 = vadd.f32 0.0, %v1725
      %v1727 = vpop.f32.mrf.mxu0
      %1728 = vdwg.mxu0
      %v1731 = vunpack.c.l.b16 %v1330
      %v1732 = vunpack.c.l.b16 %v1331
      %v1733 = vpack.c.b16 %v1732, %v1731
      %v1735 = vsel %vm383, %v1733, 0
      %1737 = vmatprep.subr.bf16.mxu0 0
      %1738 = vmatpush1.bf16.msra.mxu0 0
      %1739 = vmatprep.subr.bf16.mxu0 0
      %1740 = vmatpush1.bf16.msra.mxu0 0
      %1741 = vmatprep.subr.bf16.mxu0 0
      %1742 = vmatpush1.bf16.msra.mxu0 0
      %1743 = vmatprep.subr.bf16.mxu0 0
      %1744 = vmatpush1.bf16.msra.mxu0 0
      %1745 = vmatprep.subr.bf16.mxu0 0
      %1746 = vmatpush1.bf16.msra.mxu0 0
      %1747 = vmatprep.subr.bf16.mxu0 %v340
      %1748 = vmatpush1.bf16.msra.mxu0 %v339
      %1749 = vmatprep.subr.bf16.mxu0 %v329
      %1750 = vmatpush1.bf16.msra.mxu0 %v328
      %1751 = vmatprep.subr.bf16.mxu0 %v318
      %1752 = vmatpush1.bf16.msra.mxu0 %v317
      %1753 = vmatprep.subr.bf16.mxu0 0
      %1754 = vmatpush2.bf16.msra.mxu0 0
      %1755 = vmatprep.subr.bf16.mxu0 0
      %1756 = vmatpush2.bf16.msra.mxu0 0
      %1757 = vmatprep.subr.bf16.mxu0 0
      %1758 = vmatpush2.bf16.msra.mxu0 0
      %1759 = vmatprep.subr.bf16.mxu0 0
      %1760 = vmatpush2.bf16.msra.mxu0 0
      %1761 = vmatprep.subr.bf16.mxu0 0
      %1762 = vmatpush2.bf16.msra.mxu0 0
      %1763 = vmatprep.subr.bf16.mxu0 0
      %1764 = vmatpush2.bf16.msra.mxu0 0
      %1765 = vmatprep.subr.bf16.mxu0 0
      %1766 = vmatpush2.bf16.msra.mxu0 0
      %1767 = vmatprep.subr.bf16.mxu0 0
      %1768 = vmatpush2.bf16.msra.mxu0 0
      %1769 = vmatprep.mubr.bf16.mxu0 0
      %1770 = vmatmul.mubr.bf16.gmra.mxu0 %v1735
      %v1771 = vpop.f32.mrf.mxu0
      %v1772 = vadd.f32 %v1508, %v1771
      %v1773 = vpop.f32.mrf.mxu0
      %v1774 = vadd.f32 %v1510, %v1773
      %v1775 = vpop.f32.mrf.mxu0
      %v1776 = vadd.f32 %v1512, %v1775
      %v1777 = vpop.f32.mrf.mxu0
      %v1778 = vadd.f32 %v1514, %v1777
      %1779 = vdwg.mxu0
      %1780 = vmatprep.subr.bf16.mxu0 0
      %1781 = vmatpush1.bf16.msra.mxu0 0
      %1782 = vmatprep.subr.bf16.mxu0 0
      %1783 = vmatpush1.bf16.msra.mxu0 0
      %1784 = vmatprep.subr.bf16.mxu0 0
      %1785 = vmatpush1.bf16.msra.mxu0 0
      %1786 = vmatprep.subr.bf16.mxu0 0
      %1787 = vmatpush1.bf16.msra.mxu0 0
      %1788 = vmatprep.subr.bf16.mxu0 0
      %1789 = vmatpush1.bf16.msra.mxu0 0
      %1790 = vmatprep.subr.bf16.mxu0 %v342
      %1791 = vmatpush1.bf16.msra.mxu0 %v341
      %1792 = vmatprep.subr.bf16.mxu0 %v331
      %1793 = vmatpush1.bf16.msra.mxu0 %v330
      %1794 = vmatprep.subr.bf16.mxu0 %v320
      %1795 = vmatpush1.bf16.msra.mxu0 %v319
      %1796 = vmatprep.subr.bf16.mxu0 0
      %1797 = vmatpush2.bf16.msra.mxu0 0
      %1798 = vmatprep.subr.bf16.mxu0 0
      %1799 = vmatpush2.bf16.msra.mxu0 0
      %1800 = vmatprep.subr.bf16.mxu0 0
      %1801 = vmatpush2.bf16.msra.mxu0 0
      %1802 = vmatprep.subr.bf16.mxu0 0
      %1803 = vmatpush2.bf16.msra.mxu0 0
      %1804 = vmatprep.subr.bf16.mxu0 0
      %1805 = vmatpush2.bf16.msra.mxu0 0
      %1806 = vmatprep.subr.bf16.mxu0 0
      %1807 = vmatpush2.bf16.msra.mxu0 0
      %1808 = vmatprep.subr.bf16.mxu0 0
      %1809 = vmatpush2.bf16.msra.mxu0 0
      %1810 = vmatprep.subr.bf16.mxu0 0
      %1811 = vmatpush2.bf16.msra.mxu0 0
      %1812 = vmatprep.mubr.bf16.mxu0 0
      %1813 = vmatmul.mubr.bf16.gmra.mxu0 %v1735
      %v1814 = vpop.f32.mrf.mxu0
      %v1815 = vadd.f32 %v1551, %v1814
      %v1816 = vpop.f32.mrf.mxu0
      %v1817 = vadd.f32 %v1553, %v1816
      %v1818 = vpop.f32.mrf.mxu0
      %v1819 = vadd.f32 %v1555, %v1818
      %v1820 = vpop.f32.mrf.mxu0
      %v1821 = vadd.f32 %v1557, %v1820
      %1822 = vdwg.mxu0
      %1823 = vmatprep.subr.bf16.mxu0 0
      %1824 = vmatpush1.bf16.msra.mxu0 0
      %1825 = vmatprep.subr.bf16.mxu0 0
      %1826 = vmatpush1.bf16.msra.mxu0 0
      %1827 = vmatprep.subr.bf16.mxu0 0
      %1828 = vmatpush1.bf16.msra.mxu0 0
      %1829 = vmatprep.subr.bf16.mxu0 0
      %1830 = vmatpush1.bf16.msra.mxu0 0
      %1831 = vmatprep.subr.bf16.mxu0 0
      %1832 = vmatpush1.bf16.msra.mxu0 0
      %1833 = vmatprep.subr.bf16.mxu0 %v344
      %1834 = vmatpush1.bf16.msra.mxu0 %v343
      %1835 = vmatprep.subr.bf16.mxu0 %v333
      %1836 = vmatpush1.bf16.msra.mxu0 %v332
      %1837 = vmatprep.subr.bf16.mxu0 %v322
      %1838 = vmatpush1.bf16.msra.mxu0 %v321
      %1839 = vmatprep.subr.bf16.mxu0 0
      %1840 = vmatpush2.bf16.msra.mxu0 0
      %1841 = vmatprep.subr.bf16.mxu0 0
      %1842 = vmatpush2.bf16.msra.mxu0 0
      %1843 = vmatprep.subr.bf16.mxu0 0
      %1844 = vmatpush2.bf16.msra.mxu0 0
      %1845 = vmatprep.subr.bf16.mxu0 0
      %1846 = vmatpush2.bf16.msra.mxu0 0
      %1847 = vmatprep.subr.bf16.mxu0 0
      %1848 = vmatpush2.bf16.msra.mxu0 0
      %1849 = vmatprep.subr.bf16.mxu0 0
      %1850 = vmatpush2.bf16.msra.mxu0 0
      %1851 = vmatprep.subr.bf16.mxu0 0
      %1852 = vmatpush2.bf16.msra.mxu0 0
      %1853 = vmatprep.subr.bf16.mxu0 0
      %1854 = vmatpush2.bf16.msra.mxu0 0
      %1855 = vmatprep.mubr.bf16.mxu0 0
      %1856 = vmatmul.mubr.bf16.gmra.mxu0 %v1735
      %v1857 = vpop.f32.mrf.mxu0
      %v1858 = vadd.f32 %v1594, %v1857
      %v1859 = vpop.f32.mrf.mxu0
      %v1860 = vadd.f32 %v1596, %v1859
      %v1861 = vpop.f32.mrf.mxu0
      %v1862 = vadd.f32 %v1598, %v1861
      %v1863 = vpop.f32.mrf.mxu0
      %v1864 = vadd.f32 %v1600, %v1863
      %1865 = vdwg.mxu0
      %1866 = vmatprep.subr.bf16.mxu0 0
      %1867 = vmatpush1.bf16.msra.mxu0 0
      %1868 = vmatprep.subr.bf16.mxu0 0
      %1869 = vmatpush1.bf16.msra.mxu0 0
      %1870 = vmatprep.subr.bf16.mxu0 0
      %1871 = vmatpush1.bf16.msra.mxu0 0
      %1872 = vmatprep.subr.bf16.mxu0 0
      %1873 = vmatpush1.bf16.msra.mxu0 0
      %1874 = vmatprep.subr.bf16.mxu0 0
      %1875 = vmatpush1.bf16.msra.mxu0 0
      %1876 = vmatprep.subr.bf16.mxu0 %v346
      %1877 = vmatpush1.bf16.msra.mxu0 %v345
      %1878 = vmatprep.subr.bf16.mxu0 %v335
      %1879 = vmatpush1.bf16.msra.mxu0 %v334
      %1880 = vmatprep.subr.bf16.mxu0 %v324
      %1881 = vmatpush1.bf16.msra.mxu0 %v323
      %1882 = vmatprep.subr.bf16.mxu0 0
      %1883 = vmatpush2.bf16.msra.mxu0 0
      %1884 = vmatprep.subr.bf16.mxu0 0
      %1885 = vmatpush2.bf16.msra.mxu0 0
      %1886 = vmatprep.subr.bf16.mxu0 0
      %1887 = vmatpush2.bf16.msra.mxu0 0
      %1888 = vmatprep.subr.bf16.mxu0 0
      %1889 = vmatpush2.bf16.msra.mxu0 0
      %1890 = vmatprep.subr.bf16.mxu0 0
      %1891 = vmatpush2.bf16.msra.mxu0 0
      %1892 = vmatprep.subr.bf16.mxu0 0
      %1893 = vmatpush2.bf16.msra.mxu0 0
      %1894 = vmatprep.subr.bf16.mxu0 0
      %1895 = vmatpush2.bf16.msra.mxu0 0
      %1896 = vmatprep.subr.bf16.mxu0 0
      %1897 = vmatpush2.bf16.msra.mxu0 0
      %1898 = vmatprep.mubr.bf16.mxu0 0
      %1899 = vmatmul.mubr.bf16.gmra.mxu0 %v1735
      %v1900 = vpop.f32.mrf.mxu0
      %v1901 = vadd.f32 %v1637, %v1900
      %v1902 = vpop.f32.mrf.mxu0
      %v1903 = vadd.f32 %v1639, %v1902
      %v1904 = vpop.f32.mrf.mxu0
      %v1905 = vadd.f32 %v1641, %v1904
      %v1906 = vpop.f32.mrf.mxu0
      %v1907 = vadd.f32 %v1643, %v1906
      %1908 = vdwg.mxu0
      %1909 = vmatprep.subr.bf16.mxu0 0
      %1910 = vmatpush1.bf16.msra.mxu0 0
      %1911 = vmatprep.subr.bf16.mxu0 0
      %1912 = vmatpush1.bf16.msra.mxu0 0
      %1913 = vmatprep.subr.bf16.mxu0 0
      %1914 = vmatpush1.bf16.msra.mxu0 0
      %1915 = vmatprep.subr.bf16.mxu0 0
      %1916 = vmatpush1.bf16.msra.mxu0 0
      %1917 = vmatprep.subr.bf16.mxu0 0
      %1918 = vmatpush1.bf16.msra.mxu0 0
      %1919 = vmatprep.subr.bf16.mxu0 %v348
      %1920 = vmatpush1.bf16.msra.mxu0 %v347
      %1921 = vmatprep.subr.bf16.mxu0 %v337
      %1922 = vmatpush1.bf16.msra.mxu0 %v336
      %1923 = vmatprep.subr.bf16.mxu0 %v326
      %1924 = vmatpush1.bf16.msra.mxu0 %v325
      %1925 = vmatprep.subr.bf16.mxu0 0
      %1926 = vmatpush2.bf16.msra.mxu0 0
      %1927 = vmatprep.subr.bf16.mxu0 0
      %1928 = vmatpush2.bf16.msra.mxu0 0
      %1929 = vmatprep.subr.bf16.mxu0 0
      %1930 = vmatpush2.bf16.msra.mxu0 0
      %1931 = vmatprep.subr.bf16.mxu0 0
      %1932 = vmatpush2.bf16.msra.mxu0 0
      %1933 = vmatprep.subr.bf16.mxu0 0
      %1934 = vmatpush2.bf16.msra.mxu0 0
      %1935 = vmatprep.subr.bf16.mxu0 0
      %1936 = vmatpush2.bf16.msra.mxu0 0
      %1937 = vmatprep.subr.bf16.mxu0 0
      %1938 = vmatpush2.bf16.msra.mxu0 0
      %1939 = vmatprep.subr.bf16.mxu0 0
      %1940 = vmatpush2.bf16.msra.mxu0 0
      %1941 = vmatprep.mubr.bf16.mxu0 0
      %1942 = vmatmul.mubr.bf16.gmra.mxu0 %v1735
      %v1943 = vpop.f32.mrf.mxu0
      %v1944 = vadd.f32 %v1680, %v1943
      %v1945 = vpop.f32.mrf.mxu0
      %v1946 = vadd.f32 %v1682, %v1945
      %v1947 = vpop.f32.mrf.mxu0
      %v1948 = vadd.f32 %v1684, %v1947
      %v1949 = vpop.f32.mrf.mxu0
      %v1950 = vadd.f32 %v1686, %v1949
      %1951 = vdwg.mxu0
      %1952 = vmatprep.subr.bf16.mxu0 0
      %1953 = vmatpush1.bf16.msra.mxu0 0
      %1954 = vmatprep.subr.bf16.mxu0 0
      %1955 = vmatpush1.bf16.msra.mxu0 0
      %1956 = vmatprep.subr.bf16.mxu0 0
      %1957 = vmatpush1.bf16.msra.mxu0 0
      %1958 = vmatprep.subr.bf16.mxu0 0
      %1959 = vmatpush1.bf16.msra.mxu0 0
      %1960 = vmatprep.subr.bf16.mxu0 0
      %1961 = vmatpush1.bf16.msra.mxu0 0
      %1962 = vmatprep.subr.bf16.mxu0 0
      %1963 = vmatpush1.bf16.msra.mxu0 %v349
      %1964 = vmatprep.subr.bf16.mxu0 0
      %1965 = vmatpush1.bf16.msra.mxu0 %v338
      %1966 = vmatprep.subr.bf16.mxu0 0
      %1967 = vmatpush1.bf16.msra.mxu0 %v327
      %1968 = vmatprep.subr.bf16.mxu0 0
      %1969 = vmatpush2.bf16.msra.mxu0 0
      %1970 = vmatprep.subr.bf16.mxu0 0
      %1971 = vmatpush2.bf16.msra.mxu0 0
      %1972 = vmatprep.subr.bf16.mxu0 0
      %1973 = vmatpush2.bf16.msra.mxu0 0
      %1974 = vmatprep.subr.bf16.mxu0 0
      %1975 = vmatpush2.bf16.msra.mxu0 0
      %1976 = vmatprep.subr.bf16.mxu0 0
      %1977 = vmatpush2.bf16.msra.mxu0 0
      %1978 = vmatprep.subr.bf16.mxu0 0
      %1979 = vmatpush2.bf16.msra.mxu0 0
      %1980 = vmatprep.subr.bf16.mxu0 0
      %1981 = vmatpush2.bf16.msra.mxu0 0
      %1982 = vmatprep.subr.bf16.mxu0 0
      %1983 = vmatpush2.bf16.msra.mxu0 0
      %1984 = vmatprep.mubr.bf16.mxu0 0
      %1985 = vmatmul.mubr.bf16.gmra.mxu0 %v1735
      %v1986 = vpop.f32.mrf.mxu0
      %v1987 = vadd.f32 %v1723, %v1986
      %v1988 = vpop.f32.mrf.mxu0
      %v1989 = vpop.f32.mrf.mxu0
      %v1990 = vadd.f32 %v1726, %v1989
      %v1991 = vpop.f32.mrf.mxu0
      %1992 = vdwg.mxu0
      %v1993 = vmax.f32 %v1307, %v1772
      %v1994 = vmax.f32 %v1308, %v1774
      %v1995 = vmax.f32 %v1309, %v1815
      %v1996 = vmax.f32 %v1310, %v1817
      %v1997 = vmax.f32 %v1311, %v1858
      %v1998 = vmax.f32 %v1312, %v1860
      %v1999 = vmax.f32 %v1313, %v1901
      %v2000 = vmax.f32 %v1314, %v1903
      %v2001 = vmax.f32 %v1315, %v1944
      %v2002 = vmax.f32 %v1316, %v1946
      %v2003 = vmax.f32 %v1317, %v1987
      %v2004 = vmax.f32 %v1318, %v1776
      %v2005 = vmax.f32 %v1319, %v1778
      %v2006 = vmax.f32 %v1320, %v1819
      %v2007 = vmax.f32 %v1321, %v1821
      %v2008 = vmax.f32 %v1322, %v1862
      %v2009 = vmax.f32 %v1323, %v1864
      %v2010 = vmax.f32 %v1324, %v1905
      %v2011 = vmax.f32 %v1325, %v1907
      %v2012 = vmax.f32 %v1326, %v1948
      %v2013 = vmax.f32 %v1327, %v1950
      %v2014 = vmax.f32 %v1328, %v1990
      %s2015 = scalar_lea.vmem %s1, 96
      %v2016 = vld [vmem:[%s2015] sm:$0xf]
      %v2017 = vld [vmem:[%s2015 + $0x4] sm:$0xf]
      %s2018 = scalar_lea.vmem %s1, 104
      %v2019 = vld [vmem:[%s2018] sm:$0xf]
      %v2020 = vld [vmem:[%s2018 + $0x4] sm:$0xf]
      %v2023 = vunpack.c.l.b16 %v2019
      %v2024 = vunpack.c.l.b16 %v2020
      %v2025 = vpack.c.b16 %v2024, %v2023
      %v2027 = vsel %vm383, %v2025, 0
      %2029 = vmatprep.subr.bf16.mxu0 0
      %2030 = vmatpush1.bf16.msra.mxu0 0
      %2031 = vmatprep.subr.bf16.mxu0 0
      %2032 = vmatpush1.bf16.msra.mxu0 0
      %2033 = vmatprep.subr.bf16.mxu0 0
      %2034 = vmatpush1.bf16.msra.mxu0 0
      %2035 = vmatprep.subr.bf16.mxu0 0
      %2036 = vmatpush1.bf16.msra.mxu0 0
      %2037 = vmatprep.subr.bf16.mxu0 0
      %2038 = vmatpush1.bf16.msra.mxu0 0
      %2039 = vmatprep.subr.bf16.mxu0 %v742
      %2040 = vmatpush1.bf16.msra.mxu0 %v741
      %2041 = vmatprep.subr.bf16.mxu0 %v732
      %2042 = vmatpush1.bf16.msra.mxu0 %v731
      %2043 = vmatprep.subr.bf16.mxu0 %v722
      %2044 = vmatpush1.bf16.msra.mxu0 %v721
      %2045 = vmatprep.subr.bf16.mxu0 0
      %2046 = vmatpush2.bf16.msra.mxu0 0
      %2047 = vmatprep.subr.bf16.mxu0 0
      %2048 = vmatpush2.bf16.msra.mxu0 0
      %2049 = vmatprep.subr.bf16.mxu0 0
      %2050 = vmatpush2.bf16.msra.mxu0 0
      %2051 = vmatprep.subr.bf16.mxu0 0
      %2052 = vmatpush2.bf16.msra.mxu0 0
      %2053 = vmatprep.subr.bf16.mxu0 0
      %2054 = vmatpush2.bf16.msra.mxu0 0
      %2055 = vmatprep.subr.bf16.mxu0 0
      %2056 = vmatpush2.bf16.msra.mxu0 0
      %2057 = vmatprep.subr.bf16.mxu0 0
      %2058 = vmatpush2.bf16.msra.mxu0 0
      %2059 = vmatprep.subr.bf16.mxu0 0
      %2060 = vmatpush2.bf16.msra.mxu0 0
      %2061 = vmatprep.mubr.bf16.mxu0 0
      %2062 = vmatmul.mubr.bf16.gmra.mxu0 %v2027
      %v2063 = vpop.f32.mrf.mxu0
      %v2064 = vadd.f32 0.0, %v2063
      %v2065 = vpop.f32.mrf.mxu0
      %v2066 = vadd.f32 0.0, %v2065
      %v2067 = vpop.f32.mrf.mxu0
      %v2068 = vadd.f32 0.0, %v2067
      %v2069 = vpop.f32.mrf.mxu0
      %v2070 = vadd.f32 0.0, %v2069
      %2071 = vdwg.mxu0
      %2072 = vmatprep.subr.bf16.mxu0 0
      %2073 = vmatpush1.bf16.msra.mxu0 0
      %2074 = vmatprep.subr.bf16.mxu0 0
      %2075 = vmatpush1.bf16.msra.mxu0 0
      %2076 = vmatprep.subr.bf16.mxu0 0
      %2077 = vmatpush1.bf16.msra.mxu0 0
      %2078 = vmatprep.subr.bf16.mxu0 0
      %2079 = vmatpush1.bf16.msra.mxu0 0
      %2080 = vmatprep.subr.bf16.mxu0 0
      %2081 = vmatpush1.bf16.msra.mxu0 0
      %2082 = vmatprep.subr.bf16.mxu0 %v744
      %2083 = vmatpush1.bf16.msra.mxu0 %v743
      %2084 = vmatprep.subr.bf16.mxu0 %v734
      %2085 = vmatpush1.bf16.msra.mxu0 %v733
      %2086 = vmatprep.subr.bf16.mxu0 %v724
      %2087 = vmatpush1.bf16.msra.mxu0 %v723
      %2088 = vmatprep.subr.bf16.mxu0 0
      %2089 = vmatpush2.bf16.msra.mxu0 0
      %2090 = vmatprep.subr.bf16.mxu0 0
      %2091 = vmatpush2.bf16.msra.mxu0 0
      %2092 = vmatprep.subr.bf16.mxu0 0
      %2093 = vmatpush2.bf16.msra.mxu0 0
      %2094 = vmatprep.subr.bf16.mxu0 0
      %2095 = vmatpush2.bf16.msra.mxu0 0
      %2096 = vmatprep.subr.bf16.mxu0 0
      %2097 = vmatpush2.bf16.msra.mxu0 0
      %2098 = vmatprep.subr.bf16.mxu0 0
      %2099 = vmatpush2.bf16.msra.mxu0 0
      %2100 = vmatprep.subr.bf16.mxu0 0
      %2101 = vmatpush2.bf16.msra.mxu0 0
      %2102 = vmatprep.subr.bf16.mxu0 0
      %2103 = vmatpush2.bf16.msra.mxu0 0
      %2104 = vmatprep.mubr.bf16.mxu0 0
      %2105 = vmatmul.mubr.bf16.gmra.mxu0 %v2027
      %v2106 = vpop.f32.mrf.mxu0
      %v2107 = vadd.f32 0.0, %v2106
      %v2108 = vpop.f32.mrf.mxu0
      %v2109 = vadd.f32 0.0, %v2108
      %v2110 = vpop.f32.mrf.mxu0
      %v2111 = vadd.f32 0.0, %v2110
      %v2112 = vpop.f32.mrf.mxu0
      %v2113 = vadd.f32 0.0, %v2112
      %2114 = vdwg.mxu0
      %2115 = vmatprep.subr.bf16.mxu0 0
      %2116 = vmatpush1.bf16.msra.mxu0 0
      %2117 = vmatprep.subr.bf16.mxu0 0
      %2118 = vmatpush1.bf16.msra.mxu0 0
      %2119 = vmatprep.subr.bf16.mxu0 0
      %2120 = vmatpush1.bf16.msra.mxu0 0
      %2121 = vmatprep.subr.bf16.mxu0 0
      %2122 = vmatpush1.bf16.msra.mxu0 0
      %2123 = vmatprep.subr.bf16.mxu0 0
      %2124 = vmatpush1.bf16.msra.mxu0 0
      %2125 = vmatprep.subr.bf16.mxu0 %v746
      %2126 = vmatpush1.bf16.msra.mxu0 %v745
      %2127 = vmatprep.subr.bf16.mxu0 %v736
      %2128 = vmatpush1.bf16.msra.mxu0 %v735
      %2129 = vmatprep.subr.bf16.mxu0 %v726
      %2130 = vmatpush1.bf16.msra.mxu0 %v725
      %2131 = vmatprep.subr.bf16.mxu0 0
      %2132 = vmatpush2.bf16.msra.mxu0 0
      %2133 = vmatprep.subr.bf16.mxu0 0
      %2134 = vmatpush2.bf16.msra.mxu0 0
      %2135 = vmatprep.subr.bf16.mxu0 0
      %2136 = vmatpush2.bf16.msra.mxu0 0
      %2137 = vmatprep.subr.bf16.mxu0 0
      %2138 = vmatpush2.bf16.msra.mxu0 0
      %2139 = vmatprep.subr.bf16.mxu0 0
      %2140 = vmatpush2.bf16.msra.mxu0 0
      %2141 = vmatprep.subr.bf16.mxu0 0
      %2142 = vmatpush2.bf16.msra.mxu0 0
      %2143 = vmatprep.subr.bf16.mxu0 0
      %2144 = vmatpush2.bf16.msra.mxu0 0
      %2145 = vmatprep.subr.bf16.mxu0 0
      %2146 = vmatpush2.bf16.msra.mxu0 0
      %2147 = vmatprep.mubr.bf16.mxu0 0
      %2148 = vmatmul.mubr.bf16.gmra.mxu0 %v2027
      %v2149 = vpop.f32.mrf.mxu0
      %v2150 = vadd.f32 0.0, %v2149
      %v2151 = vpop.f32.mrf.mxu0
      %v2152 = vadd.f32 0.0, %v2151
      %v2153 = vpop.f32.mrf.mxu0
      %v2154 = vadd.f32 0.0, %v2153
      %v2155 = vpop.f32.mrf.mxu0
      %v2156 = vadd.f32 0.0, %v2155
      %2157 = vdwg.mxu0
      %2158 = vmatprep.subr.bf16.mxu0 0
      %2159 = vmatpush1.bf16.msra.mxu0 0
      %2160 = vmatprep.subr.bf16.mxu0 0
      %2161 = vmatpush1.bf16.msra.mxu0 0
      %2162 = vmatprep.subr.bf16.mxu0 0
      %2163 = vmatpush1.bf16.msra.mxu0 0
      %2164 = vmatprep.subr.bf16.mxu0 0
      %2165 = vmatpush1.bf16.msra.mxu0 0
      %2166 = vmatprep.subr.bf16.mxu0 0
      %2167 = vmatpush1.bf16.msra.mxu0 0
      %2168 = vmatprep.subr.bf16.mxu0 %v748
      %2169 = vmatpush1.bf16.msra.mxu0 %v747
      %2170 = vmatprep.subr.bf16.mxu0 %v738
      %2171 = vmatpush1.bf16.msra.mxu0 %v737
      %2172 = vmatprep.subr.bf16.mxu0 %v728
      %2173 = vmatpush1.bf16.msra.mxu0 %v727
      %2174 = vmatprep.subr.bf16.mxu0 0
      %2175 = vmatpush2.bf16.msra.mxu0 0
      %2176 = vmatprep.subr.bf16.mxu0 0
      %2177 = vmatpush2.bf16.msra.mxu0 0
      %2178 = vmatprep.subr.bf16.mxu0 0
      %2179 = vmatpush2.bf16.msra.mxu0 0
      %2180 = vmatprep.subr.bf16.mxu0 0
      %2181 = vmatpush2.bf16.msra.mxu0 0
      %2182 = vmatprep.subr.bf16.mxu0 0
      %2183 = vmatpush2.bf16.msra.mxu0 0
      %2184 = vmatprep.subr.bf16.mxu0 0
      %2185 = vmatpush2.bf16.msra.mxu0 0
      %2186 = vmatprep.subr.bf16.mxu0 0
      %2187 = vmatpush2.bf16.msra.mxu0 0
      %2188 = vmatprep.subr.bf16.mxu0 0
      %2189 = vmatpush2.bf16.msra.mxu0 0
      %2190 = vmatprep.mubr.bf16.mxu0 0
      %2191 = vmatmul.mubr.bf16.gmra.mxu0 %v2027
      %v2192 = vpop.f32.mrf.mxu0
      %v2193 = vadd.f32 0.0, %v2192
      %v2194 = vpop.f32.mrf.mxu0
      %v2195 = vadd.f32 0.0, %v2194
      %v2196 = vpop.f32.mrf.mxu0
      %v2197 = vadd.f32 0.0, %v2196
      %v2198 = vpop.f32.mrf.mxu0
      %v2199 = vadd.f32 0.0, %v2198
      %2200 = vdwg.mxu0
      %2201 = vmatprep.subr.bf16.mxu0 0
      %2202 = vmatpush1.bf16.msra.mxu0 0
      %2203 = vmatprep.subr.bf16.mxu0 0
      %2204 = vmatpush1.bf16.msra.mxu0 0
      %2205 = vmatprep.subr.bf16.mxu0 0
      %2206 = vmatpush1.bf16.msra.mxu0 0
      %2207 = vmatprep.subr.bf16.mxu0 0
      %2208 = vmatpush1.bf16.msra.mxu0 0
      %2209 = vmatprep.subr.bf16.mxu0 0
      %2210 = vmatpush1.bf16.msra.mxu0 0
      %2211 = vmatprep.subr.bf16.mxu0 %v750
      %2212 = vmatpush1.bf16.msra.mxu0 %v749
      %2213 = vmatprep.subr.bf16.mxu0 %v740
      %2214 = vmatpush1.bf16.msra.mxu0 %v739
      %2215 = vmatprep.subr.bf16.mxu0 %v730
      %2216 = vmatpush1.bf16.msra.mxu0 %v729
      %2217 = vmatprep.subr.bf16.mxu0 0
      %2218 = vmatpush2.bf16.msra.mxu0 0
      %2219 = vmatprep.subr.bf16.mxu0 0
      %2220 = vmatpush2.bf16.msra.mxu0 0
      %2221 = vmatprep.subr.bf16.mxu0 0
      %2222 = vmatpush2.bf16.msra.mxu0 0
      %2223 = vmatprep.subr.bf16.mxu0 0
      %2224 = vmatpush2.bf16.msra.mxu0 0
      %2225 = vmatprep.subr.bf16.mxu0 0
      %2226 = vmatpush2.bf16.msra.mxu0 0
      %2227 = vmatprep.subr.bf16.mxu0 0
      %2228 = vmatpush2.bf16.msra.mxu0 0
      %2229 = vmatprep.subr.bf16.mxu0 0
      %2230 = vmatpush2.bf16.msra.mxu0 0
      %2231 = vmatprep.subr.bf16.mxu0 0
      %2232 = vmatpush2.bf16.msra.mxu0 0
      %2233 = vmatprep.mubr.bf16.mxu0 0
      %2234 = vmatmul.mubr.bf16.gmra.mxu0 %v2027
      %v2235 = vpop.f32.mrf.mxu0
      %v2236 = vadd.f32 0.0, %v2235
      %v2237 = vpop.f32.mrf.mxu0
      %v2238 = vadd.f32 0.0, %v2237
      %v2239 = vpop.f32.mrf.mxu0
      %v2240 = vadd.f32 0.0, %v2239
      %v2241 = vpop.f32.mrf.mxu0
      %v2242 = vadd.f32 0.0, %v2241
      %2243 = vdwg.mxu0
      %2244 = vmatprep.subr.bf16.mxu0 0
      %2245 = vmatpush1.bf16.msra.mxu0 0
      %2246 = vmatprep.subr.bf16.mxu0 0
      %2247 = vmatpush1.bf16.msra.mxu0 0
      %2248 = vmatprep.subr.bf16.mxu0 0
      %2249 = vmatpush1.bf16.msra.mxu0 0
      %2250 = vmatprep.subr.bf16.mxu0 0
      %2251 = vmatpush1.bf16.msra.mxu0 0
      %2252 = vmatprep.subr.bf16.mxu0 0
      %2253 = vmatpush1.bf16.msra.mxu0 0
      %2254 = vmatprep.subr.bf16.mxu0 0
      %2255 = vmatpush1.bf16.msra.mxu0 %v719
      %2256 = vmatprep.subr.bf16.mxu0 0
      %2257 = vmatpush1.bf16.msra.mxu0 %v697
      %2258 = vmatprep.subr.bf16.mxu0 0
      %2259 = vmatpush1.bf16.msra.mxu0 %v675
      %2260 = vmatprep.subr.bf16.mxu0 0
      %2261 = vmatpush2.bf16.msra.mxu0 0
      %2262 = vmatprep.subr.bf16.mxu0 0
      %2263 = vmatpush2.bf16.msra.mxu0 0
      %2264 = vmatprep.subr.bf16.mxu0 0
      %2265 = vmatpush2.bf16.msra.mxu0 0
      %2266 = vmatprep.subr.bf16.mxu0 0
      %2267 = vmatpush2.bf16.msra.mxu0 0
      %2268 = vmatprep.subr.bf16.mxu0 0
      %2269 = vmatpush2.bf16.msra.mxu0 0
      %2270 = vmatprep.subr.bf16.mxu0 0
      %2271 = vmatpush2.bf16.msra.mxu0 0
      %2272 = vmatprep.subr.bf16.mxu0 0
      %2273 = vmatpush2.bf16.msra.mxu0 0
      %2274 = vmatprep.subr.bf16.mxu0 0
      %2275 = vmatpush2.bf16.msra.mxu0 0
      %2276 = vmatprep.mubr.bf16.mxu0 0
      %2277 = vmatmul.mubr.bf16.gmra.mxu0 %v2027
      %v2278 = vpop.f32.mrf.mxu0
      %v2279 = vadd.f32 0.0, %v2278
      %v2280 = vpop.f32.mrf.mxu0
      %v2281 = vpop.f32.mrf.mxu0
      %v2282 = vadd.f32 0.0, %v2281
      %v2283 = vpop.f32.mrf.mxu0
      %2284 = vdwg.mxu0
      %v2287 = vunpack.c.l.b16 %v2016
      %v2288 = vunpack.c.l.b16 %v2017
      %v2289 = vpack.c.b16 %v2288, %v2287
      %v2291 = vsel %vm383, %v2289, 0
      %2293 = vmatprep.subr.bf16.mxu0 0
      %2294 = vmatpush1.bf16.msra.mxu0 0
      %2295 = vmatprep.subr.bf16.mxu0 0
      %2296 = vmatpush1.bf16.msra.mxu0 0
      %2297 = vmatprep.subr.bf16.mxu0 0
      %2298 = vmatpush1.bf16.msra.mxu0 0
      %2299 = vmatprep.subr.bf16.mxu0 0
      %2300 = vmatpush1.bf16.msra.mxu0 0
      %2301 = vmatprep.subr.bf16.mxu0 0
      %2302 = vmatpush1.bf16.msra.mxu0 0
      %2303 = vmatprep.subr.bf16.mxu0 %v340
      %2304 = vmatpush1.bf16.msra.mxu0 %v339
      %2305 = vmatprep.subr.bf16.mxu0 %v329
      %2306 = vmatpush1.bf16.msra.mxu0 %v328
      %2307 = vmatprep.subr.bf16.mxu0 %v318
      %2308 = vmatpush1.bf16.msra.mxu0 %v317
      %2309 = vmatprep.subr.bf16.mxu0 0
      %2310 = vmatpush2.bf16.msra.mxu0 0
      %2311 = vmatprep.subr.bf16.mxu0 0
      %2312 = vmatpush2.bf16.msra.mxu0 0
      %2313 = vmatprep.subr.bf16.mxu0 0
      %2314 = vmatpush2.bf16.msra.mxu0 0
      %2315 = vmatprep.subr.bf16.mxu0 0
      %2316 = vmatpush2.bf16.msra.mxu0 0
      %2317 = vmatprep.subr.bf16.mxu0 0
      %2318 = vmatpush2.bf16.msra.mxu0 0
      %2319 = vmatprep.subr.bf16.mxu0 0
      %2320 = vmatpush2.bf16.msra.mxu0 0
      %2321 = vmatprep.subr.bf16.mxu0 0
      %2322 = vmatpush2.bf16.msra.mxu0 0
      %2323 = vmatprep.subr.bf16.mxu0 0
      %2324 = vmatpush2.bf16.msra.mxu0 0
      %2325 = vmatprep.mubr.bf16.mxu0 0
      %2326 = vmatmul.mubr.bf16.gmra.mxu0 %v2291
      %v2327 = vpop.f32.mrf.mxu0
      %v2328 = vadd.f32 %v2064, %v2327
      %v2329 = vpop.f32.mrf.mxu0
      %v2330 = vadd.f32 %v2066, %v2329
      %v2331 = vpop.f32.mrf.mxu0
      %v2332 = vadd.f32 %v2068, %v2331
      %v2333 = vpop.f32.mrf.mxu0
      %v2334 = vadd.f32 %v2070, %v2333
      %2335 = vdwg.mxu0
      %2336 = vmatprep.subr.bf16.mxu0 0
      %2337 = vmatpush1.bf16.msra.mxu0 0
      %2338 = vmatprep.subr.bf16.mxu0 0
      %2339 = vmatpush1.bf16.msra.mxu0 0
      %2340 = vmatprep.subr.bf16.mxu0 0
      %2341 = vmatpush1.bf16.msra.mxu0 0
      %2342 = vmatprep.subr.bf16.mxu0 0
      %2343 = vmatpush1.bf16.msra.mxu0 0
      %2344 = vmatprep.subr.bf16.mxu0 0
      %2345 = vmatpush1.bf16.msra.mxu0 0
      %2346 = vmatprep.subr.bf16.mxu0 %v342
      %2347 = vmatpush1.bf16.msra.mxu0 %v341
      %2348 = vmatprep.subr.bf16.mxu0 %v331
      %2349 = vmatpush1.bf16.msra.mxu0 %v330
      %2350 = vmatprep.subr.bf16.mxu0 %v320
      %2351 = vmatpush1.bf16.msra.mxu0 %v319
      %2352 = vmatprep.subr.bf16.mxu0 0
      %2353 = vmatpush2.bf16.msra.mxu0 0
      %2354 = vmatprep.subr.bf16.mxu0 0
      %2355 = vmatpush2.bf16.msra.mxu0 0
      %2356 = vmatprep.subr.bf16.mxu0 0
      %2357 = vmatpush2.bf16.msra.mxu0 0
      %2358 = vmatprep.subr.bf16.mxu0 0
      %2359 = vmatpush2.bf16.msra.mxu0 0
      %2360 = vmatprep.subr.bf16.mxu0 0
      %2361 = vmatpush2.bf16.msra.mxu0 0
      %2362 = vmatprep.subr.bf16.mxu0 0
      %2363 = vmatpush2.bf16.msra.mxu0 0
      %2364 = vmatprep.subr.bf16.mxu0 0
      %2365 = vmatpush2.bf16.msra.mxu0 0
      %2366 = vmatprep.subr.bf16.mxu0 0
      %2367 = vmatpush2.bf16.msra.mxu0 0
      %2368 = vmatprep.mubr.bf16.mxu0 0
      %2369 = vmatmul.mubr.bf16.gmra.mxu0 %v2291
      %v2370 = vpop.f32.mrf.mxu0
      %v2371 = vadd.f32 %v2107, %v2370
      %v2372 = vpop.f32.mrf.mxu0
      %v2373 = vadd.f32 %v2109, %v2372
      %v2374 = vpop.f32.mrf.mxu0
      %v2375 = vadd.f32 %v2111, %v2374
      %v2376 = vpop.f32.mrf.mxu0
      %v2377 = vadd.f32 %v2113, %v2376
      %2378 = vdwg.mxu0
      %2379 = vmatprep.subr.bf16.mxu0 0
      %2380 = vmatpush1.bf16.msra.mxu0 0
      %2381 = vmatprep.subr.bf16.mxu0 0
      %2382 = vmatpush1.bf16.msra.mxu0 0
      %2383 = vmatprep.subr.bf16.mxu0 0
      %2384 = vmatpush1.bf16.msra.mxu0 0
      %2385 = vmatprep.subr.bf16.mxu0 0
      %2386 = vmatpush1.bf16.msra.mxu0 0
      %2387 = vmatprep.subr.bf16.mxu0 0
      %2388 = vmatpush1.bf16.msra.mxu0 0
      %2389 = vmatprep.subr.bf16.mxu0 %v344
      %2390 = vmatpush1.bf16.msra.mxu0 %v343
      %2391 = vmatprep.subr.bf16.mxu0 %v333
      %2392 = vmatpush1.bf16.msra.mxu0 %v332
      %2393 = vmatprep.subr.bf16.mxu0 %v322
      %2394 = vmatpush1.bf16.msra.mxu0 %v321
      %2395 = vmatprep.subr.bf16.mxu0 0
      %2396 = vmatpush2.bf16.msra.mxu0 0
      %2397 = vmatprep.subr.bf16.mxu0 0
      %2398 = vmatpush2.bf16.msra.mxu0 0
      %2399 = vmatprep.subr.bf16.mxu0 0
      %2400 = vmatpush2.bf16.msra.mxu0 0
      %2401 = vmatprep.subr.bf16.mxu0 0
      %2402 = vmatpush2.bf16.msra.mxu0 0
      %2403 = vmatprep.subr.bf16.mxu0 0
      %2404 = vmatpush2.bf16.msra.mxu0 0
      %2405 = vmatprep.subr.bf16.mxu0 0
      %2406 = vmatpush2.bf16.msra.mxu0 0
      %2407 = vmatprep.subr.bf16.mxu0 0
      %2408 = vmatpush2.bf16.msra.mxu0 0
      %2409 = vmatprep.subr.bf16.mxu0 0
      %2410 = vmatpush2.bf16.msra.mxu0 0
      %2411 = vmatprep.mubr.bf16.mxu0 0
      %2412 = vmatmul.mubr.bf16.gmra.mxu0 %v2291
      %v2413 = vpop.f32.mrf.mxu0
      %v2414 = vadd.f32 %v2150, %v2413
      %v2415 = vpop.f32.mrf.mxu0
      %v2416 = vadd.f32 %v2152, %v2415
      %v2417 = vpop.f32.mrf.mxu0
      %v2418 = vadd.f32 %v2154, %v2417
      %v2419 = vpop.f32.mrf.mxu0
      %v2420 = vadd.f32 %v2156, %v2419
      %2421 = vdwg.mxu0
      %2422 = vmatprep.subr.bf16.mxu0 0
      %2423 = vmatpush1.bf16.msra.mxu0 0
      %2424 = vmatprep.subr.bf16.mxu0 0
      %2425 = vmatpush1.bf16.msra.mxu0 0
      %2426 = vmatprep.subr.bf16.mxu0 0
      %2427 = vmatpush1.bf16.msra.mxu0 0
      %2428 = vmatprep.subr.bf16.mxu0 0
      %2429 = vmatpush1.bf16.msra.mxu0 0
      %2430 = vmatprep.subr.bf16.mxu0 0
      %2431 = vmatpush1.bf16.msra.mxu0 0
      %2432 = vmatprep.subr.bf16.mxu0 %v346
      %2433 = vmatpush1.bf16.msra.mxu0 %v345
      %2434 = vmatprep.subr.bf16.mxu0 %v335
      %2435 = vmatpush1.bf16.msra.mxu0 %v334
      %2436 = vmatprep.subr.bf16.mxu0 %v324
      %2437 = vmatpush1.bf16.msra.mxu0 %v323
      %2438 = vmatprep.subr.bf16.mxu0 0
      %2439 = vmatpush2.bf16.msra.mxu0 0
      %2440 = vmatprep.subr.bf16.mxu0 0
      %2441 = vmatpush2.bf16.msra.mxu0 0
      %2442 = vmatprep.subr.bf16.mxu0 0
      %2443 = vmatpush2.bf16.msra.mxu0 0
      %2444 = vmatprep.subr.bf16.mxu0 0
      %2445 = vmatpush2.bf16.msra.mxu0 0
      %2446 = vmatprep.subr.bf16.mxu0 0
      %2447 = vmatpush2.bf16.msra.mxu0 0
      %2448 = vmatprep.subr.bf16.mxu0 0
      %2449 = vmatpush2.bf16.msra.mxu0 0
      %2450 = vmatprep.subr.bf16.mxu0 0
      %2451 = vmatpush2.bf16.msra.mxu0 0
      %2452 = vmatprep.subr.bf16.mxu0 0
      %2453 = vmatpush2.bf16.msra.mxu0 0
      %2454 = vmatprep.mubr.bf16.mxu0 0
      %2455 = vmatmul.mubr.bf16.gmra.mxu0 %v2291
      %v2456 = vpop.f32.mrf.mxu0
      %v2457 = vadd.f32 %v2193, %v2456
      %v2458 = vpop.f32.mrf.mxu0
      %v2459 = vadd.f32 %v2195, %v2458
      %v2460 = vpop.f32.mrf.mxu0
      %v2461 = vadd.f32 %v2197, %v2460
      %v2462 = vpop.f32.mrf.mxu0
      %v2463 = vadd.f32 %v2199, %v2462
      %2464 = vdwg.mxu0
      %2465 = vmatprep.subr.bf16.mxu0 0
      %2466 = vmatpush1.bf16.msra.mxu0 0
      %2467 = vmatprep.subr.bf16.mxu0 0
      %2468 = vmatpush1.bf16.msra.mxu0 0
      %2469 = vmatprep.subr.bf16.mxu0 0
      %2470 = vmatpush1.bf16.msra.mxu0 0
      %2471 = vmatprep.subr.bf16.mxu0 0
      %2472 = vmatpush1.bf16.msra.mxu0 0
      %2473 = vmatprep.subr.bf16.mxu0 0
      %2474 = vmatpush1.bf16.msra.mxu0 0
      %2475 = vmatprep.subr.bf16.mxu0 %v348
      %2476 = vmatpush1.bf16.msra.mxu0 %v347
      %2477 = vmatprep.subr.bf16.mxu0 %v337
      %2478 = vmatpush1.bf16.msra.mxu0 %v336
      %2479 = vmatprep.subr.bf16.mxu0 %v326
      %2480 = vmatpush1.bf16.msra.mxu0 %v325
      %2481 = vmatprep.subr.bf16.mxu0 0
      %2482 = vmatpush2.bf16.msra.mxu0 0
      %2483 = vmatprep.subr.bf16.mxu0 0
      %2484 = vmatpush2.bf16.msra.mxu0 0
      %2485 = vmatprep.subr.bf16.mxu0 0
      %2486 = vmatpush2.bf16.msra.mxu0 0
      %2487 = vmatprep.subr.bf16.mxu0 0
      %2488 = vmatpush2.bf16.msra.mxu0 0
      %2489 = vmatprep.subr.bf16.mxu0 0
      %2490 = vmatpush2.bf16.msra.mxu0 0
      %2491 = vmatprep.subr.bf16.mxu0 0
      %2492 = vmatpush2.bf16.msra.mxu0 0
      %2493 = vmatprep.subr.bf16.mxu0 0
      %2494 = vmatpush2.bf16.msra.mxu0 0
      %2495 = vmatprep.subr.bf16.mxu0 0
      %2496 = vmatpush2.bf16.msra.mxu0 0
      %2497 = vmatprep.mubr.bf16.mxu0 0
      %2498 = vmatmul.mubr.bf16.gmra.mxu0 %v2291
      %v2499 = vpop.f32.mrf.mxu0
      %v2500 = vadd.f32 %v2236, %v2499
      %v2501 = vpop.f32.mrf.mxu0
      %v2502 = vadd.f32 %v2238, %v2501
      %v2503 = vpop.f32.mrf.mxu0
      %v2504 = vadd.f32 %v2240, %v2503
      %v2505 = vpop.f32.mrf.mxu0
      %v2506 = vadd.f32 %v2242, %v2505
      %2507 = vdwg.mxu0
      %2508 = vmatprep.subr.bf16.mxu0 0
      %2509 = vmatpush1.bf16.msra.mxu0 0
      %2510 = vmatprep.subr.bf16.mxu0 0
      %2511 = vmatpush1.bf16.msra.mxu0 0
      %2512 = vmatprep.subr.bf16.mxu0 0
      %2513 = vmatpush1.bf16.msra.mxu0 0
      %2514 = vmatprep.subr.bf16.mxu0 0
      %2515 = vmatpush1.bf16.msra.mxu0 0
      %2516 = vmatprep.subr.bf16.mxu0 0
      %2517 = vmatpush1.bf16.msra.mxu0 0
      %2518 = vmatprep.subr.bf16.mxu0 0
      %2519 = vmatpush1.bf16.msra.mxu0 %v349
      %2520 = vmatprep.subr.bf16.mxu0 0
      %2521 = vmatpush1.bf16.msra.mxu0 %v338
      %2522 = vmatprep.subr.bf16.mxu0 0
      %2523 = vmatpush1.bf16.msra.mxu0 %v327
      %2524 = vmatprep.subr.bf16.mxu0 0
      %2525 = vmatpush2.bf16.msra.mxu0 0
      %2526 = vmatprep.subr.bf16.mxu0 0
      %2527 = vmatpush2.bf16.msra.mxu0 0
      %2528 = vmatprep.subr.bf16.mxu0 0
      %2529 = vmatpush2.bf16.msra.mxu0 0
      %2530 = vmatprep.subr.bf16.mxu0 0
      %2531 = vmatpush2.bf16.msra.mxu0 0
      %2532 = vmatprep.subr.bf16.mxu0 0
      %2533 = vmatpush2.bf16.msra.mxu0 0
      %2534 = vmatprep.subr.bf16.mxu0 0
      %2535 = vmatpush2.bf16.msra.mxu0 0
      %2536 = vmatprep.subr.bf16.mxu0 0
      %2537 = vmatpush2.bf16.msra.mxu0 0
      %2538 = vmatprep.subr.bf16.mxu0 0
      %2539 = vmatpush2.bf16.msra.mxu0 0
      %2540 = vmatprep.mubr.bf16.mxu0 0
      %2541 = vmatmul.mubr.bf16.gmra.mxu0 %v2291
      %v2542 = vpop.f32.mrf.mxu0
      %v2543 = vadd.f32 %v2279, %v2542
      %v2544 = vpop.f32.mrf.mxu0
      %v2545 = vpop.f32.mrf.mxu0
      %v2546 = vadd.f32 %v2282, %v2545
      %v2547 = vpop.f32.mrf.mxu0
      %2548 = vdwg.mxu0
      %s2549 = scalar_lea.vmem %s1, 112
      %v2550 = vld [vmem:[%s2549] sm:$0xf]
      %v2551 = vld [vmem:[%s2549 + $0x4] sm:$0xf]
      %v2554 = vunpack.c.l.b16 %v2550
      %v2555 = vunpack.c.l.b16 %v2551
      %v2556 = vpack.c.b16 %v2555, %v2554
      %v2558 = vsel %vm383, %v2556, 0
      %2560 = vmatprep.subr.bf16.mxu0 0
      %2561 = vmatpush1.bf16.msra.mxu0 0
      %2562 = vmatprep.subr.bf16.mxu0 0
      %2563 = vmatpush1.bf16.msra.mxu0 0
      %2564 = vmatprep.subr.bf16.mxu0 0
      %2565 = vmatpush1.bf16.msra.mxu0 0
      %2566 = vmatprep.subr.bf16.mxu0 0
      %2567 = vmatpush1.bf16.msra.mxu0 0
      %2568 = vmatprep.subr.bf16.mxu0 0
      %2569 = vmatpush1.bf16.msra.mxu0 0
      %2570 = vmatprep.subr.bf16.mxu0 %v1428
      %2571 = vmatpush1.bf16.msra.mxu0 %v1427
      %2572 = vmatprep.subr.bf16.mxu0 %v1418
      %2573 = vmatpush1.bf16.msra.mxu0 %v1417
      %2574 = vmatprep.subr.bf16.mxu0 %v1408
      %2575 = vmatpush1.bf16.msra.mxu0 %v1407
      %2576 = vmatprep.subr.bf16.mxu0 0
      %2577 = vmatpush2.bf16.msra.mxu0 0
      %2578 = vmatprep.subr.bf16.mxu0 0
      %2579 = vmatpush2.bf16.msra.mxu0 0
      %2580 = vmatprep.subr.bf16.mxu0 0
      %2581 = vmatpush2.bf16.msra.mxu0 0
      %2582 = vmatprep.subr.bf16.mxu0 0
      %2583 = vmatpush2.bf16.msra.mxu0 0
      %2584 = vmatprep.subr.bf16.mxu0 0
      %2585 = vmatpush2.bf16.msra.mxu0 0
      %2586 = vmatprep.subr.bf16.mxu0 0
      %2587 = vmatpush2.bf16.msra.mxu0 0
      %2588 = vmatprep.subr.bf16.mxu0 0
      %2589 = vmatpush2.bf16.msra.mxu0 0
      %2590 = vmatprep.subr.bf16.mxu0 0
      %2591 = vmatpush2.bf16.msra.mxu0 0
      %2592 = vmatprep.mubr.bf16.mxu0 0
      %2593 = vmatmul.mubr.bf16.gmra.mxu0 %v2558
      %v2594 = vpop.f32.mrf.mxu0
      %v2595 = vadd.f32 0.0, %v2594
      %v2596 = vpop.f32.mrf.mxu0
      %v2597 = vadd.f32 0.0, %v2596
      %v2598 = vpop.f32.mrf.mxu0
      %v2599 = vadd.f32 0.0, %v2598
      %v2600 = vpop.f32.mrf.mxu0
      %v2601 = vadd.f32 0.0, %v2600
      %2602 = vdwg.mxu0
      %2603 = vmatprep.subr.bf16.mxu0 0
      %2604 = vmatpush1.bf16.msra.mxu0 0
      %2605 = vmatprep.subr.bf16.mxu0 0
      %2606 = vmatpush1.bf16.msra.mxu0 0
      %2607 = vmatprep.subr.bf16.mxu0 0
      %2608 = vmatpush1.bf16.msra.mxu0 0
      %2609 = vmatprep.subr.bf16.mxu0 0
      %2610 = vmatpush1.bf16.msra.mxu0 0
      %2611 = vmatprep.subr.bf16.mxu0 0
      %2612 = vmatpush1.bf16.msra.mxu0 0
      %2613 = vmatprep.subr.bf16.mxu0 %v1430
      %2614 = vmatpush1.bf16.msra.mxu0 %v1429
      %2615 = vmatprep.subr.bf16.mxu0 %v1420
      %2616 = vmatpush1.bf16.msra.mxu0 %v1419
      %2617 = vmatprep.subr.bf16.mxu0 %v1410
      %2618 = vmatpush1.bf16.msra.mxu0 %v1409
      %2619 = vmatprep.subr.bf16.mxu0 0
      %2620 = vmatpush2.bf16.msra.mxu0 0
      %2621 = vmatprep.subr.bf16.mxu0 0
      %2622 = vmatpush2.bf16.msra.mxu0 0
      %2623 = vmatprep.subr.bf16.mxu0 0
      %2624 = vmatpush2.bf16.msra.mxu0 0
      %2625 = vmatprep.subr.bf16.mxu0 0
      %2626 = vmatpush2.bf16.msra.mxu0 0
      %2627 = vmatprep.subr.bf16.mxu0 0
      %2628 = vmatpush2.bf16.msra.mxu0 0
      %2629 = vmatprep.subr.bf16.mxu0 0
      %2630 = vmatpush2.bf16.msra.mxu0 0
      %2631 = vmatprep.subr.bf16.mxu0 0
      %2632 = vmatpush2.bf16.msra.mxu0 0
      %2633 = vmatprep.subr.bf16.mxu0 0
      %2634 = vmatpush2.bf16.msra.mxu0 0
      %2635 = vmatprep.mubr.bf16.mxu0 0
      %2636 = vmatmul.mubr.bf16.gmra.mxu0 %v2558
      %v2637 = vpop.f32.mrf.mxu0
      %v2638 = vadd.f32 0.0, %v2637
      %v2639 = vpop.f32.mrf.mxu0
      %v2640 = vadd.f32 0.0, %v2639
      %v2641 = vpop.f32.mrf.mxu0
      %v2642 = vadd.f32 0.0, %v2641
      %v2643 = vpop.f32.mrf.mxu0
      %v2644 = vadd.f32 0.0, %v2643
      %2645 = vdwg.mxu0
      %2646 = vmatprep.subr.bf16.mxu0 0
      %2647 = vmatpush1.bf16.msra.mxu0 0
      %2648 = vmatprep.subr.bf16.mxu0 0
      %2649 = vmatpush1.bf16.msra.mxu0 0
      %2650 = vmatprep.subr.bf16.mxu0 0
      %2651 = vmatpush1.bf16.msra.mxu0 0
      %2652 = vmatprep.subr.bf16.mxu0 0
      %2653 = vmatpush1.bf16.msra.mxu0 0
      %2654 = vmatprep.subr.bf16.mxu0 0
      %2655 = vmatpush1.bf16.msra.mxu0 0
      %2656 = vmatprep.subr.bf16.mxu0 %v1432
      %2657 = vmatpush1.bf16.msra.mxu0 %v1431
      %2658 = vmatprep.subr.bf16.mxu0 %v1422
      %2659 = vmatpush1.bf16.msra.mxu0 %v1421
      %2660 = vmatprep.subr.bf16.mxu0 %v1412
      %2661 = vmatpush1.bf16.msra.mxu0 %v1411
      %2662 = vmatprep.subr.bf16.mxu0 0
      %2663 = vmatpush2.bf16.msra.mxu0 0
      %2664 = vmatprep.subr.bf16.mxu0 0
      %2665 = vmatpush2.bf16.msra.mxu0 0
      %2666 = vmatprep.subr.bf16.mxu0 0
      %2667 = vmatpush2.bf16.msra.mxu0 0
      %2668 = vmatprep.subr.bf16.mxu0 0
      %2669 = vmatpush2.bf16.msra.mxu0 0
      %2670 = vmatprep.subr.bf16.mxu0 0
      %2671 = vmatpush2.bf16.msra.mxu0 0
      %2672 = vmatprep.subr.bf16.mxu0 0
      %2673 = vmatpush2.bf16.msra.mxu0 0
      %2674 = vmatprep.subr.bf16.mxu0 0
      %2675 = vmatpush2.bf16.msra.mxu0 0
      %2676 = vmatprep.subr.bf16.mxu0 0
      %2677 = vmatpush2.bf16.msra.mxu0 0
      %2678 = vmatprep.mubr.bf16.mxu0 0
      %2679 = vmatmul.mubr.bf16.gmra.mxu0 %v2558
      %v2680 = vpop.f32.mrf.mxu0
      %v2681 = vadd.f32 0.0, %v2680
      %v2682 = vpop.f32.mrf.mxu0
      %v2683 = vadd.f32 0.0, %v2682
      %v2684 = vpop.f32.mrf.mxu0
      %v2685 = vadd.f32 0.0, %v2684
      %v2686 = vpop.f32.mrf.mxu0
      %v2687 = vadd.f32 0.0, %v2686
      %2688 = vdwg.mxu0
      %2689 = vmatprep.subr.bf16.mxu0 0
      %2690 = vmatpush1.bf16.msra.mxu0 0
      %2691 = vmatprep.subr.bf16.mxu0 0
      %2692 = vmatpush1.bf16.msra.mxu0 0
      %2693 = vmatprep.subr.bf16.mxu0 0
      %2694 = vmatpush1.bf16.msra.mxu0 0
      %2695 = vmatprep.subr.bf16.mxu0 0
      %2696 = vmatpush1.bf16.msra.mxu0 0
      %2697 = vmatprep.subr.bf16.mxu0 0
      %2698 = vmatpush1.bf16.msra.mxu0 0
      %2699 = vmatprep.subr.bf16.mxu0 %v1434
      %2700 = vmatpush1.bf16.msra.mxu0 %v1433
      %2701 = vmatprep.subr.bf16.mxu0 %v1424
      %2702 = vmatpush1.bf16.msra.mxu0 %v1423
      %2703 = vmatprep.subr.bf16.mxu0 %v1414
      %2704 = vmatpush1.bf16.msra.mxu0 %v1413
      %2705 = vmatprep.subr.bf16.mxu0 0
      %2706 = vmatpush2.bf16.msra.mxu0 0
      %2707 = vmatprep.subr.bf16.mxu0 0
      %2708 = vmatpush2.bf16.msra.mxu0 0
      %2709 = vmatprep.subr.bf16.mxu0 0
      %2710 = vmatpush2.bf16.msra.mxu0 0
      %2711 = vmatprep.subr.bf16.mxu0 0
      %2712 = vmatpush2.bf16.msra.mxu0 0
      %2713 = vmatprep.subr.bf16.mxu0 0
      %2714 = vmatpush2.bf16.msra.mxu0 0
      %2715 = vmatprep.subr.bf16.mxu0 0
      %2716 = vmatpush2.bf16.msra.mxu0 0
      %2717 = vmatprep.subr.bf16.mxu0 0
      %2718 = vmatpush2.bf16.msra.mxu0 0
      %2719 = vmatprep.subr.bf16.mxu0 0
      %2720 = vmatpush2.bf16.msra.mxu0 0
      %2721 = vmatprep.mubr.bf16.mxu0 0
      %2722 = vmatmul.mubr.bf16.gmra.mxu0 %v2558
      %v2723 = vpop.f32.mrf.mxu0
      %v2724 = vadd.f32 0.0, %v2723
      %v2725 = vpop.f32.mrf.mxu0
      %v2726 = vadd.f32 0.0, %v2725
      %v2727 = vpop.f32.mrf.mxu0
      %v2728 = vadd.f32 0.0, %v2727
      %v2729 = vpop.f32.mrf.mxu0
      %v2730 = vadd.f32 0.0, %v2729
      %2731 = vdwg.mxu0
      %2732 = vmatprep.subr.bf16.mxu0 0
      %2733 = vmatpush1.bf16.msra.mxu0 0
      %2734 = vmatprep.subr.bf16.mxu0 0
      %2735 = vmatpush1.bf16.msra.mxu0 0
      %2736 = vmatprep.subr.bf16.mxu0 0
      %2737 = vmatpush1.bf16.msra.mxu0 0
      %2738 = vmatprep.subr.bf16.mxu0 0
      %2739 = vmatpush1.bf16.msra.mxu0 0
      %2740 = vmatprep.subr.bf16.mxu0 0
      %2741 = vmatpush1.bf16.msra.mxu0 0
      %2742 = vmatprep.subr.bf16.mxu0 %v1436
      %2743 = vmatpush1.bf16.msra.mxu0 %v1435
      %2744 = vmatprep.subr.bf16.mxu0 %v1426
      %2745 = vmatpush1.bf16.msra.mxu0 %v1425
      %2746 = vmatprep.subr.bf16.mxu0 %v1416
      %2747 = vmatpush1.bf16.msra.mxu0 %v1415
      %2748 = vmatprep.subr.bf16.mxu0 0
      %2749 = vmatpush2.bf16.msra.mxu0 0
      %2750 = vmatprep.subr.bf16.mxu0 0
      %2751 = vmatpush2.bf16.msra.mxu0 0
      %2752 = vmatprep.subr.bf16.mxu0 0
      %2753 = vmatpush2.bf16.msra.mxu0 0
      %2754 = vmatprep.subr.bf16.mxu0 0
      %2755 = vmatpush2.bf16.msra.mxu0 0
      %2756 = vmatprep.subr.bf16.mxu0 0
      %2757 = vmatpush2.bf16.msra.mxu0 0
      %2758 = vmatprep.subr.bf16.mxu0 0
      %2759 = vmatpush2.bf16.msra.mxu0 0
      %2760 = vmatprep.subr.bf16.mxu0 0
      %2761 = vmatpush2.bf16.msra.mxu0 0
      %2762 = vmatprep.subr.bf16.mxu0 0
      %2763 = vmatpush2.bf16.msra.mxu0 0
      %2764 = vmatprep.mubr.bf16.mxu0 0
      %2765 = vmatmul.mubr.bf16.gmra.mxu0 %v2558
      %v2766 = vpop.f32.mrf.mxu0
      %v2767 = vadd.f32 0.0, %v2766
      %v2768 = vpop.f32.mrf.mxu0
      %v2769 = vadd.f32 0.0, %v2768
      %v2770 = vpop.f32.mrf.mxu0
      %v2771 = vadd.f32 0.0, %v2770
      %v2772 = vpop.f32.mrf.mxu0
      %v2773 = vadd.f32 0.0, %v2772
      %2774 = vdwg.mxu0
      %2775 = vmatprep.subr.bf16.mxu0 0
      %2776 = vmatpush1.bf16.msra.mxu0 0
      %2777 = vmatprep.subr.bf16.mxu0 0
      %2778 = vmatpush1.bf16.msra.mxu0 0
      %2779 = vmatprep.subr.bf16.mxu0 0
      %2780 = vmatpush1.bf16.msra.mxu0 0
      %2781 = vmatprep.subr.bf16.mxu0 0
      %2782 = vmatpush1.bf16.msra.mxu0 0
      %2783 = vmatprep.subr.bf16.mxu0 0
      %2784 = vmatpush1.bf16.msra.mxu0 0
      %2785 = vmatprep.subr.bf16.mxu0 0
      %2786 = vmatpush1.bf16.msra.mxu0 %v1405
      %2787 = vmatprep.subr.bf16.mxu0 0
      %2788 = vmatpush1.bf16.msra.mxu0 %v1383
      %2789 = vmatprep.subr.bf16.mxu0 0
      %2790 = vmatpush1.bf16.msra.mxu0 %v1361
      %2791 = vmatprep.subr.bf16.mxu0 0
      %2792 = vmatpush2.bf16.msra.mxu0 0
      %2793 = vmatprep.subr.bf16.mxu0 0
      %2794 = vmatpush2.bf16.msra.mxu0 0
      %2795 = vmatprep.subr.bf16.mxu0 0
      %2796 = vmatpush2.bf16.msra.mxu0 0
      %2797 = vmatprep.subr.bf16.mxu0 0
      %2798 = vmatpush2.bf16.msra.mxu0 0
      %2799 = vmatprep.subr.bf16.mxu0 0
      %2800 = vmatpush2.bf16.msra.mxu0 0
      %2801 = vmatprep.subr.bf16.mxu0 0
      %2802 = vmatpush2.bf16.msra.mxu0 0
      %2803 = vmatprep.subr.bf16.mxu0 0
      %2804 = vmatpush2.bf16.msra.mxu0 0
      %2805 = vmatprep.subr.bf16.mxu0 0
      %2806 = vmatpush2.bf16.msra.mxu0 0
      %2807 = vmatprep.mubr.bf16.mxu0 0
      %2808 = vmatmul.mubr.bf16.gmra.mxu0 %v2558
      %v2809 = vpop.f32.mrf.mxu0
      %v2810 = vadd.f32 0.0, %v2809
      %v2811 = vpop.f32.mrf.mxu0
      %v2812 = vpop.f32.mrf.mxu0
      %v2813 = vadd.f32 0.0, %v2812
      %v2814 = vpop.f32.mrf.mxu0
      %2815 = vdwg.mxu0
      %v2816 = vadd.f32 %v2328, %v2595
      %v2817 = vadd.f32 %v2330, %v2597
      %v2818 = vadd.f32 %v2371, %v2638
      %v2819 = vadd.f32 %v2373, %v2640
      %v2820 = vadd.f32 %v2414, %v2681
      %v2821 = vadd.f32 %v2416, %v2683
      %v2822 = vadd.f32 %v2457, %v2724
      %v2823 = vadd.f32 %v2459, %v2726
      %v2824 = vadd.f32 %v2500, %v2767
      %v2825 = vadd.f32 %v2502, %v2769
      %v2826 = vadd.f32 %v2543, %v2810
      %v2827 = vadd.f32 %v2332, %v2599
      %v2828 = vadd.f32 %v2334, %v2601
      %v2829 = vadd.f32 %v2375, %v2642
      %v2830 = vadd.f32 %v2377, %v2644
      %v2831 = vadd.f32 %v2418, %v2685
      %v2832 = vadd.f32 %v2420, %v2687
      %v2833 = vadd.f32 %v2461, %v2728
      %v2834 = vadd.f32 %v2463, %v2730
      %v2835 = vadd.f32 %v2504, %v2771
      %v2836 = vadd.f32 %v2506, %v2773
      %v2837 = vadd.f32 %v2546, %v2813
      %s2838 = scalar_lea.vmem %s1, 120
      %v2839 = vld [vmem:[%s2838] sm:$0xf]
      %v2840 = vld [vmem:[%s2838 + $0x4] sm:$0xf]
      %v2843 = vunpack.c.l.b16 %v2839
      %v2844 = vunpack.c.l.b16 %v2840
      %v2845 = vpack.c.b16 %v2844, %v2843
      %2846 = vrot.lane.b32.xlu0 %v317, 90
      %v2847 = vpop.permute.xlu0 %2846
      %2848 = vrot.lane.b32.xlu0 %v318, 90
      %v2849 = vpop.permute.xlu0 %2848
      %2850 = vrot.lane.b32.xlu0 %v319, 90
      %v2851 = vpop.permute.xlu0 %2850
      %2852 = vrot.lane.b32.xlu0 %v320, 90
      %v2853 = vpop.permute.xlu0 %2852
      %2854 = vrot.lane.b32.xlu0 %v321, 90
      %v2855 = vpop.permute.xlu0 %2854
      %2856 = vrot.lane.b32.xlu0 %v322, 90
      %v2857 = vpop.permute.xlu0 %2856
      %2858 = vrot.lane.b32.xlu0 %v323, 90
      %v2859 = vpop.permute.xlu0 %2858
      %2860 = vrot.lane.b32.xlu0 %v324, 90
      %v2861 = vpop.permute.xlu0 %2860
      %2862 = vrot.lane.b32.xlu0 %v325, 90
      %v2863 = vpop.permute.xlu0 %2862
      %2864 = vrot.lane.b32.xlu0 %v326, 90
      %v2865 = vpop.permute.xlu0 %2864
      %2866 = vrot.lane.b32.xlu0 %v327, 90
      %v2867 = vpop.permute.xlu0 %2866
      %2868 = vrot.lane.b32.xlu0 %v328, 90
      %v2869 = vpop.permute.xlu0 %2868
      %2870 = vrot.lane.b32.xlu0 %v329, 90
      %v2871 = vpop.permute.xlu0 %2870
      %2872 = vrot.lane.b32.xlu0 %v330, 90
      %v2873 = vpop.permute.xlu0 %2872
      %2874 = vrot.lane.b32.xlu0 %v331, 90
      %v2875 = vpop.permute.xlu0 %2874
      %2876 = vrot.lane.b32.xlu0 %v332, 90
      %v2877 = vpop.permute.xlu0 %2876
      %2878 = vrot.lane.b32.xlu0 %v333, 90
      %v2879 = vpop.permute.xlu0 %2878
      %2880 = vrot.lane.b32.xlu0 %v334, 90
      %v2881 = vpop.permute.xlu0 %2880
      %2882 = vrot.lane.b32.xlu0 %v335, 90
      %v2883 = vpop.permute.xlu0 %2882
      %2884 = vrot.lane.b32.xlu0 %v336, 90
      %v2885 = vpop.permute.xlu0 %2884
      %2886 = vrot.lane.b32.xlu0 %v337, 90
      %v2887 = vpop.permute.xlu0 %2886
      %2888 = vrot.lane.b32.xlu0 %v338, 90
      %v2889 = vpop.permute.xlu0 %2888
      %2890 = vrot.lane.b32.xlu0 %v339, 90
      %v2891 = vpop.permute.xlu0 %2890
      %2892 = vrot.lane.b32.xlu0 %v340, 90
      %v2893 = vpop.permute.xlu0 %2892
      %2894 = vrot.lane.b32.xlu0 %v341, 90
      %v2895 = vpop.permute.xlu0 %2894
      %2896 = vrot.lane.b32.xlu0 %v342, 90
      %v2897 = vpop.permute.xlu0 %2896
      %2898 = vrot.lane.b32.xlu0 %v343, 90
      %v2899 = vpop.permute.xlu0 %2898
      %2900 = vrot.lane.b32.xlu0 %v344, 90
      %v2901 = vpop.permute.xlu0 %2900
      %2902 = vrot.lane.b32.xlu0 %v345, 90
      %v2903 = vpop.permute.xlu0 %2902
      %2904 = vrot.lane.b32.xlu0 %v346, 90
      %v2905 = vpop.permute.xlu0 %2904
      %2906 = vrot.lane.b32.xlu0 %v347, 90
      %v2907 = vpop.permute.xlu0 %2906
      %2908 = vrot.lane.b32.xlu0 %v348, 90
      %v2909 = vpop.permute.xlu0 %2908
      %2910 = vrot.lane.b32.xlu0 %v349, 90
      %v2911 = vpop.permute.xlu0 %2910
      %vm2912 = vcmask 736256
      %v2913 = vsel %vm2912, %v2847, %v2849
      %v2914 = vsel %vm2912, %v2849, %v2851
      %v2915 = vsel %vm2912, %v2851, %v2853
      %v2916 = vsel %vm2912, %v2853, %v2855
      %v2917 = vsel %vm2912, %v2855, %v2857
      %v2918 = vsel %vm2912, %v2857, %v2859
      %v2919 = vsel %vm2912, %v2859, %v2861
      %v2920 = vsel %vm2912, %v2861, %v2863
      %v2921 = vsel %vm2912, %v2863, %v2865
      %v2922 = vsel %vm2912, %v2865, %v2867
      %v2923 = vsel %vm2912, %v2869, %v2871
      %v2924 = vsel %vm2912, %v2871, %v2873
      %v2925 = vsel %vm2912, %v2873, %v2875
      %v2926 = vsel %vm2912, %v2875, %v2877
      %v2927 = vsel %vm2912, %v2877, %v2879
      %v2928 = vsel %vm2912, %v2879, %v2881
      %v2929 = vsel %vm2912, %v2881, %v2883
      %v2930 = vsel %vm2912, %v2883, %v2885
      %v2931 = vsel %vm2912, %v2885, %v2887
      %v2932 = vsel %vm2912, %v2887, %v2889
      %v2933 = vsel %vm2912, %v2891, %v2893
      %v2934 = vsel %vm2912, %v2893, %v2895
      %v2935 = vsel %vm2912, %v2895, %v2897
      %v2936 = vsel %vm2912, %v2897, %v2899
      %v2937 = vsel %vm2912, %v2899, %v2901
      %v2938 = vsel %vm2912, %v2901, %v2903
      %v2939 = vsel %vm2912, %v2903, %v2905
      %v2940 = vsel %vm2912, %v2905, %v2907
      %v2941 = vsel %vm2912, %v2907, %v2909
      %v2942 = vsel %vm2912, %v2909, %v2911
      %v2977 = vsel %vm383, %v2845, 0
      %2979 = vmatprep.subr.bf16.mxu0 0
      %2980 = vmatpush1.bf16.msra.mxu0 0
      %2981 = vmatprep.subr.bf16.mxu0 0
      %2982 = vmatpush1.bf16.msra.mxu0 0
      %2983 = vmatprep.subr.bf16.mxu0 0
      %2984 = vmatpush1.bf16.msra.mxu0 0
      %2985 = vmatprep.subr.bf16.mxu0 0
      %2986 = vmatpush1.bf16.msra.mxu0 0
      %2987 = vmatprep.subr.bf16.mxu0 0
      %2988 = vmatpush1.bf16.msra.mxu0 0
      %2989 = vmatprep.subr.bf16.mxu0 %v2934
      %2990 = vmatpush1.bf16.msra.mxu0 %v2933
      %2991 = vmatprep.subr.bf16.mxu0 %v2924
      %2992 = vmatpush1.bf16.msra.mxu0 %v2923
      %2993 = vmatprep.subr.bf16.mxu0 %v2914
      %2994 = vmatpush1.bf16.msra.mxu0 %v2913
      %2995 = vmatprep.subr.bf16.mxu0 0
      %2996 = vmatpush2.bf16.msra.mxu0 0
      %2997 = vmatprep.subr.bf16.mxu0 0
      %2998 = vmatpush2.bf16.msra.mxu0 0
      %2999 = vmatprep.subr.bf16.mxu0 0
      %3000 = vmatpush2.bf16.msra.mxu0 0
      %3001 = vmatprep.subr.bf16.mxu0 0
      %3002 = vmatpush2.bf16.msra.mxu0 0
      %3003 = vmatprep.subr.bf16.mxu0 0
      %3004 = vmatpush2.bf16.msra.mxu0 0
      %3005 = vmatprep.subr.bf16.mxu0 0
      %3006 = vmatpush2.bf16.msra.mxu0 0
      %3007 = vmatprep.subr.bf16.mxu0 0
      %3008 = vmatpush2.bf16.msra.mxu0 0
      %3009 = vmatprep.subr.bf16.mxu0 0
      %3010 = vmatpush2.bf16.msra.mxu0 0
      %3011 = vmatprep.mubr.bf16.mxu0 0
      %3012 = vmatmul.mubr.bf16.gmra.mxu0 %v2977
      %v3013 = vpop.f32.mrf.mxu0
      %v3014 = vadd.f32 0.0, %v3013
      %v3015 = vpop.f32.mrf.mxu0
      %v3016 = vadd.f32 0.0, %v3015
      %v3017 = vpop.f32.mrf.mxu0
      %v3018 = vadd.f32 0.0, %v3017
      %v3019 = vpop.f32.mrf.mxu0
      %v3020 = vadd.f32 0.0, %v3019
      %3021 = vdwg.mxu0
      %3022 = vmatprep.subr.bf16.mxu0 0
      %3023 = vmatpush1.bf16.msra.mxu0 0
      %3024 = vmatprep.subr.bf16.mxu0 0
      %3025 = vmatpush1.bf16.msra.mxu0 0
      %3026 = vmatprep.subr.bf16.mxu0 0
      %3027 = vmatpush1.bf16.msra.mxu0 0
      %3028 = vmatprep.subr.bf16.mxu0 0
      %3029 = vmatpush1.bf16.msra.mxu0 0
      %3030 = vmatprep.subr.bf16.mxu0 0
      %3031 = vmatpush1.bf16.msra.mxu0 0
      %3032 = vmatprep.subr.bf16.mxu0 %v2936
      %3033 = vmatpush1.bf16.msra.mxu0 %v2935
      %3034 = vmatprep.subr.bf16.mxu0 %v2926
      %3035 = vmatpush1.bf16.msra.mxu0 %v2925
      %3036 = vmatprep.subr.bf16.mxu0 %v2916
      %3037 = vmatpush1.bf16.msra.mxu0 %v2915
      %3038 = vmatprep.subr.bf16.mxu0 0
      %3039 = vmatpush2.bf16.msra.mxu0 0
      %3040 = vmatprep.subr.bf16.mxu0 0
      %3041 = vmatpush2.bf16.msra.mxu0 0
      %3042 = vmatprep.subr.bf16.mxu0 0
      %3043 = vmatpush2.bf16.msra.mxu0 0
      %3044 = vmatprep.subr.bf16.mxu0 0
      %3045 = vmatpush2.bf16.msra.mxu0 0
      %3046 = vmatprep.subr.bf16.mxu0 0
      %3047 = vmatpush2.bf16.msra.mxu0 0
      %3048 = vmatprep.subr.bf16.mxu0 0
      %3049 = vmatpush2.bf16.msra.mxu0 0
      %3050 = vmatprep.subr.bf16.mxu0 0
      %3051 = vmatpush2.bf16.msra.mxu0 0
      %3052 = vmatprep.subr.bf16.mxu0 0
      %3053 = vmatpush2.bf16.msra.mxu0 0
      %3054 = vmatprep.mubr.bf16.mxu0 0
      %3055 = vmatmul.mubr.bf16.gmra.mxu0 %v2977
      %v3056 = vpop.f32.mrf.mxu0
      %v3057 = vadd.f32 0.0, %v3056
      %v3058 = vpop.f32.mrf.mxu0
      %v3059 = vadd.f32 0.0, %v3058
      %v3060 = vpop.f32.mrf.mxu0
      %v3061 = vadd.f32 0.0, %v3060
      %v3062 = vpop.f32.mrf.mxu0
      %v3063 = vadd.f32 0.0, %v3062
      %3064 = vdwg.mxu0
      %3065 = vmatprep.subr.bf16.mxu0 0
      %3066 = vmatpush1.bf16.msra.mxu0 0
      %3067 = vmatprep.subr.bf16.mxu0 0
      %3068 = vmatpush1.bf16.msra.mxu0 0
      %3069 = vmatprep.subr.bf16.mxu0 0
      %3070 = vmatpush1.bf16.msra.mxu0 0
      %3071 = vmatprep.subr.bf16.mxu0 0
      %3072 = vmatpush1.bf16.msra.mxu0 0
      %3073 = vmatprep.subr.bf16.mxu0 0
      %3074 = vmatpush1.bf16.msra.mxu0 0
      %3075 = vmatprep.subr.bf16.mxu0 %v2938
      %3076 = vmatpush1.bf16.msra.mxu0 %v2937
      %3077 = vmatprep.subr.bf16.mxu0 %v2928
      %3078 = vmatpush1.bf16.msra.mxu0 %v2927
      %3079 = vmatprep.subr.bf16.mxu0 %v2918
      %3080 = vmatpush1.bf16.msra.mxu0 %v2917
      %3081 = vmatprep.subr.bf16.mxu0 0
      %3082 = vmatpush2.bf16.msra.mxu0 0
      %3083 = vmatprep.subr.bf16.mxu0 0
      %3084 = vmatpush2.bf16.msra.mxu0 0
      %3085 = vmatprep.subr.bf16.mxu0 0
      %3086 = vmatpush2.bf16.msra.mxu0 0
      %3087 = vmatprep.subr.bf16.mxu0 0
      %3088 = vmatpush2.bf16.msra.mxu0 0
      %3089 = vmatprep.subr.bf16.mxu0 0
      %3090 = vmatpush2.bf16.msra.mxu0 0
      %3091 = vmatprep.subr.bf16.mxu0 0
      %3092 = vmatpush2.bf16.msra.mxu0 0
      %3093 = vmatprep.subr.bf16.mxu0 0
      %3094 = vmatpush2.bf16.msra.mxu0 0
      %3095 = vmatprep.subr.bf16.mxu0 0
      %3096 = vmatpush2.bf16.msra.mxu0 0
      %3097 = vmatprep.mubr.bf16.mxu0 0
      %3098 = vmatmul.mubr.bf16.gmra.mxu0 %v2977
      %v3099 = vpop.f32.mrf.mxu0
      %v3100 = vadd.f32 0.0, %v3099
      %v3101 = vpop.f32.mrf.mxu0
      %v3102 = vadd.f32 0.0, %v3101
      %v3103 = vpop.f32.mrf.mxu0
      %v3104 = vadd.f32 0.0, %v3103
      %v3105 = vpop.f32.mrf.mxu0
      %v3106 = vadd.f32 0.0, %v3105
      %3107 = vdwg.mxu0
      %3108 = vmatprep.subr.bf16.mxu0 0
      %3109 = vmatpush1.bf16.msra.mxu0 0
      %3110 = vmatprep.subr.bf16.mxu0 0
      %3111 = vmatpush1.bf16.msra.mxu0 0
      %3112 = vmatprep.subr.bf16.mxu0 0
      %3113 = vmatpush1.bf16.msra.mxu0 0
      %3114 = vmatprep.subr.bf16.mxu0 0
      %3115 = vmatpush1.bf16.msra.mxu0 0
      %3116 = vmatprep.subr.bf16.mxu0 0
      %3117 = vmatpush1.bf16.msra.mxu0 0
      %3118 = vmatprep.subr.bf16.mxu0 %v2940
      %3119 = vmatpush1.bf16.msra.mxu0 %v2939
      %3120 = vmatprep.subr.bf16.mxu0 %v2930
      %3121 = vmatpush1.bf16.msra.mxu0 %v2929
      %3122 = vmatprep.subr.bf16.mxu0 %v2920
      %3123 = vmatpush1.bf16.msra.mxu0 %v2919
      %3124 = vmatprep.subr.bf16.mxu0 0
      %3125 = vmatpush2.bf16.msra.mxu0 0
      %3126 = vmatprep.subr.bf16.mxu0 0
      %3127 = vmatpush2.bf16.msra.mxu0 0
      %3128 = vmatprep.subr.bf16.mxu0 0
      %3129 = vmatpush2.bf16.msra.mxu0 0
      %3130 = vmatprep.subr.bf16.mxu0 0
      %3131 = vmatpush2.bf16.msra.mxu0 0
      %3132 = vmatprep.subr.bf16.mxu0 0
      %3133 = vmatpush2.bf16.msra.mxu0 0
      %3134 = vmatprep.subr.bf16.mxu0 0
      %3135 = vmatpush2.bf16.msra.mxu0 0
      %3136 = vmatprep.subr.bf16.mxu0 0
      %3137 = vmatpush2.bf16.msra.mxu0 0
      %3138 = vmatprep.subr.bf16.mxu0 0
      %3139 = vmatpush2.bf16.msra.mxu0 0
      %3140 = vmatprep.mubr.bf16.mxu0 0
      %3141 = vmatmul.mubr.bf16.gmra.mxu0 %v2977
      %v3142 = vpop.f32.mrf.mxu0
      %v3143 = vadd.f32 0.0, %v3142
      %v3144 = vpop.f32.mrf.mxu0
      %v3145 = vadd.f32 0.0, %v3144
      %v3146 = vpop.f32.mrf.mxu0
      %v3147 = vadd.f32 0.0, %v3146
      %v3148 = vpop.f32.mrf.mxu0
      %v3149 = vadd.f32 0.0, %v3148
      %3150 = vdwg.mxu0
      %3151 = vmatprep.subr.bf16.mxu0 0
      %3152 = vmatpush1.bf16.msra.mxu0 0
      %3153 = vmatprep.subr.bf16.mxu0 0
      %3154 = vmatpush1.bf16.msra.mxu0 0
      %3155 = vmatprep.subr.bf16.mxu0 0
      %3156 = vmatpush1.bf16.msra.mxu0 0
      %3157 = vmatprep.subr.bf16.mxu0 0
      %3158 = vmatpush1.bf16.msra.mxu0 0
      %3159 = vmatprep.subr.bf16.mxu0 0
      %3160 = vmatpush1.bf16.msra.mxu0 0
      %3161 = vmatprep.subr.bf16.mxu0 %v2942
      %3162 = vmatpush1.bf16.msra.mxu0 %v2941
      %3163 = vmatprep.subr.bf16.mxu0 %v2932
      %3164 = vmatpush1.bf16.msra.mxu0 %v2931
      %3165 = vmatprep.subr.bf16.mxu0 %v2922
      %3166 = vmatpush1.bf16.msra.mxu0 %v2921
      %3167 = vmatprep.subr.bf16.mxu0 0
      %3168 = vmatpush2.bf16.msra.mxu0 0
      %3169 = vmatprep.subr.bf16.mxu0 0
      %3170 = vmatpush2.bf16.msra.mxu0 0
      %3171 = vmatprep.subr.bf16.mxu0 0
      %3172 = vmatpush2.bf16.msra.mxu0 0
      %3173 = vmatprep.subr.bf16.mxu0 0
      %3174 = vmatpush2.bf16.msra.mxu0 0
      %3175 = vmatprep.subr.bf16.mxu0 0
      %3176 = vmatpush2.bf16.msra.mxu0 0
      %3177 = vmatprep.subr.bf16.mxu0 0
      %3178 = vmatpush2.bf16.msra.mxu0 0
      %3179 = vmatprep.subr.bf16.mxu0 0
      %3180 = vmatpush2.bf16.msra.mxu0 0
      %3181 = vmatprep.subr.bf16.mxu0 0
      %3182 = vmatpush2.bf16.msra.mxu0 0
      %3183 = vmatprep.mubr.bf16.mxu0 0
      %3184 = vmatmul.mubr.bf16.gmra.mxu0 %v2977
      %v3185 = vpop.f32.mrf.mxu0
      %v3186 = vadd.f32 0.0, %v3185
      %v3187 = vpop.f32.mrf.mxu0
      %v3188 = vadd.f32 0.0, %v3187
      %v3189 = vpop.f32.mrf.mxu0
      %v3190 = vadd.f32 0.0, %v3189
      %v3191 = vpop.f32.mrf.mxu0
      %v3192 = vadd.f32 0.0, %v3191
      %3193 = vdwg.mxu0
      %3194 = vmatprep.subr.bf16.mxu0 0
      %3195 = vmatpush1.bf16.msra.mxu0 0
      %3196 = vmatprep.subr.bf16.mxu0 0
      %3197 = vmatpush1.bf16.msra.mxu0 0
      %3198 = vmatprep.subr.bf16.mxu0 0
      %3199 = vmatpush1.bf16.msra.mxu0 0
      %3200 = vmatprep.subr.bf16.mxu0 0
      %3201 = vmatpush1.bf16.msra.mxu0 0
      %3202 = vmatprep.subr.bf16.mxu0 0
      %3203 = vmatpush1.bf16.msra.mxu0 0
      %3204 = vmatprep.subr.bf16.mxu0 0
      %3205 = vmatpush1.bf16.msra.mxu0 %v2911
      %3206 = vmatprep.subr.bf16.mxu0 0
      %3207 = vmatpush1.bf16.msra.mxu0 %v2889
      %3208 = vmatprep.subr.bf16.mxu0 0
      %3209 = vmatpush1.bf16.msra.mxu0 %v2867
      %3210 = vmatprep.subr.bf16.mxu0 0
      %3211 = vmatpush2.bf16.msra.mxu0 0
      %3212 = vmatprep.subr.bf16.mxu0 0
      %3213 = vmatpush2.bf16.msra.mxu0 0
      %3214 = vmatprep.subr.bf16.mxu0 0
      %3215 = vmatpush2.bf16.msra.mxu0 0
      %3216 = vmatprep.subr.bf16.mxu0 0
      %3217 = vmatpush2.bf16.msra.mxu0 0
      %3218 = vmatprep.subr.bf16.mxu0 0
      %3219 = vmatpush2.bf16.msra.mxu0 0
      %3220 = vmatprep.subr.bf16.mxu0 0
      %3221 = vmatpush2.bf16.msra.mxu0 0
      %3222 = vmatprep.subr.bf16.mxu0 0
      %3223 = vmatpush2.bf16.msra.mxu0 0
      %3224 = vmatprep.subr.bf16.mxu0 0
      %3225 = vmatpush2.bf16.msra.mxu0 0
      %3226 = vmatprep.mubr.bf16.mxu0 0
      %3227 = vmatmul.mubr.bf16.gmra.mxu0 %v2977
      %v3228 = vpop.f32.mrf.mxu0
      %v3229 = vadd.f32 0.0, %v3228
      %v3230 = vpop.f32.mrf.mxu0
      %v3231 = vpop.f32.mrf.mxu0
      %v3232 = vadd.f32 0.0, %v3231
      %v3233 = vpop.f32.mrf.mxu0
      %3234 = vdwg.mxu0
      %v3235 = vadd.f32 %v2816, %v3014
      %v3236 = vadd.f32 %v2817, %v3016
      %v3237 = vadd.f32 %v2818, %v3057
      %v3238 = vadd.f32 %v2819, %v3059
      %v3239 = vadd.f32 %v2820, %v3100
      %v3240 = vadd.f32 %v2821, %v3102
      %v3241 = vadd.f32 %v2822, %v3143
      %v3242 = vadd.f32 %v2823, %v3145
      %v3243 = vadd.f32 %v2824, %v3186
      %v3244 = vadd.f32 %v2825, %v3188
      %v3245 = vadd.f32 %v2826, %v3229
      %v3246 = vadd.f32 %v2827, %v3018
      %v3247 = vadd.f32 %v2828, %v3020
      %v3248 = vadd.f32 %v2829, %v3061
      %v3249 = vadd.f32 %v2830, %v3063
      %v3250 = vadd.f32 %v2831, %v3104
      %v3251 = vadd.f32 %v2832, %v3106
      %v3252 = vadd.f32 %v2833, %v3147
      %v3253 = vadd.f32 %v2834, %v3149
      %v3254 = vadd.f32 %v2835, %v3190
      %v3255 = vadd.f32 %v2836, %v3192
      %v3256 = vadd.f32 %v2837, %v3232
      %v3257 = vmax.f32 %v1993, %v3235
      %v3258 = vmax.f32 %v1994, %v3236
      %v3259 = vmax.f32 %v1995, %v3237
      %v3260 = vmax.f32 %v1996, %v3238
      %v3261 = vmax.f32 %v1997, %v3239
      %v3262 = vmax.f32 %v1998, %v3240
      %v3263 = vmax.f32 %v1999, %v3241
      %v3264 = vmax.f32 %v2000, %v3242
      %v3265 = vmax.f32 %v2001, %v3243
      %v3266 = vmax.f32 %v2002, %v3244
      %v3267 = vmax.f32 %v2003, %v3245
      %v3268 = vmax.f32 %v2004, %v3246
      %v3269 = vmax.f32 %v2005, %v3247
      %v3270 = vmax.f32 %v2006, %v3248
      %v3271 = vmax.f32 %v2007, %v3249
      %v3272 = vmax.f32 %v2008, %v3250
      %v3273 = vmax.f32 %v2009, %v3251
      %v3274 = vmax.f32 %v2010, %v3252
      %v3275 = vmax.f32 %v2011, %v3253
      %v3276 = vmax.f32 %v2012, %v3254
      %v3277 = vmax.f32 %v2013, %v3255
      %v3278 = vmax.f32 %v2014, %v3256
      %v3279 = vld [vmem:[%s2] sm:$0xff]
      %v3280 = vld [vmem:[%s2 + $0x8] sm:$0xff]
      %3282 = vset.pattern.permute.xlu0 0
      %3283 = vperm.xlu0 %3282, %v3279
      %v3284 = vpop.permute.xlu0 %3283
      %3287 = vset.pattern.permute.xlu0 0
      %3288 = vperm.xlu0 %3287, %v3280
      %v3289 = vpop.permute.xlu0 %3288
      %v3291 = vadd.f32 %v3257, %v3284
      %v3292 = vadd.f32 %v3258, %v3284
      %v3293 = vadd.f32 %v3259, %v3284
      %v3294 = vadd.f32 %v3260, %v3284
      %v3295 = vadd.f32 %v3261, %v3284
      %v3296 = vadd.f32 %v3262, %v3284
      %v3297 = vadd.f32 %v3263, %v3284
      %v3298 = vadd.f32 %v3264, %v3284
      %v3299 = vadd.f32 %v3265, %v3284
      %v3300 = vadd.f32 %v3266, %v3284
      %v3301 = vadd.f32 %v3267, %v3284
      %v3302 = vadd.f32 %v3268, %v3289
      %v3303 = vadd.f32 %v3269, %v3289
      %v3304 = vadd.f32 %v3270, %v3289
      %v3305 = vadd.f32 %v3271, %v3289
      %v3306 = vadd.f32 %v3272, %v3289
      %v3307 = vadd.f32 %v3273, %v3289
      %v3308 = vadd.f32 %v3274, %v3289
      %v3309 = vadd.f32 %v3275, %v3289
      %v3310 = vadd.f32 %v3276, %v3289
      %v3311 = vadd.f32 %v3277, %v3289
      %v3312 = vadd.f32 %v3278, %v3289
      %v3313 = vmax.f32 %v3291, 0.0
      %v3314 = vmax.f32 %v3292, 0.0
      %v3315 = vmax.f32 %v3293, 0.0
      %v3316 = vmax.f32 %v3294, 0.0
      %v3317 = vmax.f32 %v3295, 0.0
      %v3318 = vmax.f32 %v3296, 0.0
      %v3319 = vmax.f32 %v3297, 0.0
      %v3320 = vmax.f32 %v3298, 0.0
      %v3321 = vmax.f32 %v3299, 0.0
      %v3322 = vmax.f32 %v3300, 0.0
      %v3323 = vmax.f32 %v3301, 0.0
      %v3324 = vmax.f32 %v3302, 0.0
      %v3325 = vmax.f32 %v3303, 0.0
      %v3326 = vmax.f32 %v3304, 0.0
      %v3327 = vmax.f32 %v3305, 0.0
      %v3328 = vmax.f32 %v3306, 0.0
      %v3329 = vmax.f32 %v3307, 0.0
      %v3330 = vmax.f32 %v3308, 0.0
      %v3331 = vmax.f32 %v3309, 0.0
      %v3332 = vmax.f32 %v3310, 0.0
      %v3333 = vmax.f32 %v3311, 0.0
      %v3334 = vmax.f32 %v3312, 0.0
      %v3335 = vpack.c.bf16 %v3324, %v3313
      %v3336 = vpack.c.bf16 %v3325, %v3314
      %v3337 = vpack.c.bf16 %v3326, %v3315
      %v3338 = vpack.c.bf16 %v3327, %v3316
      %v3339 = vpack.c.bf16 %v3328, %v3317
      %v3340 = vpack.c.bf16 %v3329, %v3318
      %v3341 = vpack.c.bf16 %v3330, %v3319
      %v3342 = vpack.c.bf16 %v3331, %v3320
      %v3343 = vpack.c.bf16 %v3332, %v3321
      %v3344 = vpack.c.bf16 %v3333, %v3322
      %v3345 = vpack.c.bf16 %v3334, %v3323
      %v3357 = vunpack.c.l.b16 %v3335
      %v3358 = vunpack.c.l.b16 %v3336
      %v3359 = vunpack.c.l.b16 %v3337
      %v3360 = vunpack.c.l.b16 %v3338
      %v3361 = vunpack.c.l.b16 %v3339
      %v3362 = vunpack.c.l.b16 %v3340
      %v3363 = vunpack.c.l.b16 %v3341
      %v3364 = vunpack.c.l.b16 %v3342
      %v3365 = vunpack.c.l.b16 %v3343
      %v3366 = vunpack.c.l.b16 %v3344
      %v3367 = vunpack.c.l.b16 %v3345
      %v3368 = vunpack.c.h.b16 %v3335
      %v3369 = vunpack.c.h.b16 %v3336
      %v3370 = vunpack.c.h.b16 %v3337
      %v3371 = vunpack.c.h.b16 %v3338
      %v3372 = vunpack.c.h.b16 %v3339
      %v3373 = vunpack.c.h.b16 %v3340
      %v3374 = vunpack.c.h.b16 %v3341
      %v3375 = vunpack.c.h.b16 %v3342
      %v3376 = vunpack.c.h.b16 %v3343
      %v3377 = vunpack.c.h.b16 %v3344
      %v3378 = vunpack.c.h.b16 %v3345
      %v3379 = vpack.c.b16 %v3358, %v3357
      %v3380 = vpack.c.b16 %v3360, %v3359
      %v3381 = vpack.c.b16 %v3362, %v3361
      %v3382 = vpack.c.b16 %v3364, %v3363
      %v3383 = vpack.c.b16 %v3366, %v3365
      %v3384 = vpack.c.b16 %v3367, %v3367
      %v3385 = vpack.c.b16 %v3369, %v3368
      %v3386 = vpack.c.b16 %v3371, %v3370
      %v3387 = vpack.c.b16 %v3373, %v3372
      %v3388 = vpack.c.b16 %v3375, %v3374
      %v3389 = vpack.c.b16 %v3377, %v3376
      %v3390 = vpack.c.b16 %v3378, %v3378
      %3403 = vst [vmem:[%s170] sm:$0xff] %v3379
      %3404 = vst [vmem:[%s170 + $0x8] sm:$0xff] %v3380
      %3405 = vst [vmem:[%s170 + $0x10] sm:$0xff] %v3381
      %3406 = vst [vmem:[%s170 + $0x18] sm:$0xff] %v3382
      %3407 = vst [vmem:[%s170 + $0x20] sm:$0xff] %v3383
      %vm3408 = vcmask 420864
      %3409 = vst.msk [vmem:[%s170 + $0x28] sm:$0xf] %vm3408, %v3384
      %3410 = vst [vmem:[%s170 + $0x2c] sm:$0xff] %v3385
      %3411 = vst [vmem:[%s170 + $0x34] sm:$0xff] %v3386
      %3412 = vst [vmem:[%s170 + $0x3c] sm:$0xff] %v3387
      %3413 = vst [vmem:[%s170 + $0x44] sm:$0xff] %v3388
      %3414 = vst [vmem:[%s170 + $0x4c] sm:$0xff] %v3389
      %3415 = vst.msk [vmem:[%s170 + $0x54] sm:$0xf] %vm3408, %v3390
      %p3416 = scmp.lt.s32.totalorder %s14, 1
      %s3417 = scalar_select %p3416, %s14, 1
      %s3418 = smul.addr %s3417, 22
      %s3419 = smul.addr %s3418, 4
      %s3420 = scalar_lea.vmem %s3, %s3419
      // Predicated region
      $region33: #{cnn_forward.3} parent=31 // pred_check
        %p3421 = pneg %p100
      $region34: #{cnn_forward.3} parent=31 // pred_check_branch
        %3423 = sbr.rel (%p3421) target = $region36
      $region35: #{cnn_forward.3} parent=31 // pred_region
        _
      $region36: #{cnn_forward.3} parent=31 // pred_fallthru
        _
    $region32: #{cnn_forward.3} parent=5 // pred_fallthru
      _
    %p3424 = scmp.le.s32.totalorder 2, %s9
    // Predicated region
    $region37: #{cnn_forward.3} parent=5 // pred_check
      %p3425 = pneg %p3424
    $region38: #{cnn_forward.3} parent=5 // pred_check_branch
      %3427 = sbr.rel (%p3425) target = $region40
    $region39: #{cnn_forward.3} parent=5 // pred_region
      %s3428 = ssub.s32 %s9, 2
      // Predicated region
      $region41: #{cnn_forward.3} parent=39 // pred_check
        %p3429 = pneg %p106
      $region42: #{cnn_forward.3} parent=39 // pred_check_branch
        %3431 = sbr.rel (%p3429) target = $region44
      $region43: #{cnn_forward.3} parent=39 // pred_region
        %p3432 = scmp.lt.s32.totalorder %s15, 1
        %s3433 = scalar_select %p3432, %s15, 1
        %s3434 = smul.addr %s3433, 22
        %s3435 = smul.addr %s3434, 4
        %s3436 = scalar_lea.vmem %s3, %s3435
      $region44: #{cnn_forward.3} parent=39 // pred_fallthru
        _
    $region40: #{cnn_forward.3} parent=5 // pred_fallthru
      _
  $region6: #{cnn_forward.3} parent=0 // loop_footer
    %s13 = sadd.s32 1, %s9
  $region7: #{cnn_forward.3} parent=0 // loop_footer_branch
    %8 = sbr.rel target = $region3
  $region8: #{cnn_forward.3} parent=0 // loop_exit
    _

// kernel: cnn_forward.4
$region0: #{cnn_forward.4}
  #allocation0 [shape = 'u32[]', space=smem, size = 0x4, offset = 0x4, fixed_abs, tag = 'smem constant byte address 0x4 - core index']
  #allocation1 [shape = 'u32[144,128]{1,0:T(1,128)}', space=vmem, size = 0x12000, scoped, tag = 'internal scratch']
  %s0 = inlined_call_operand.vmem [shape: bf16[2,256,128], index: 0, kind: input, shape index: {}]
  %s1 = inlined_call_operand.vmem [shape: bf16[4,4,32,256], index: 1, kind: input, shape index: {}]
  %s2 = inlined_call_operand.vmem [shape: f32[32,1], index: 2, kind: input, shape index: {}]
  %s3 = inlined_call_operand.vmem [shape: bf16[2,32,90], index: 3, kind: output, shape index: {}]
  %s4 = sld [smem:[#allocation0]]
  $region45: #{cnn_forward.4} parent=0
    _
  %s6 = ssub.s32 1, %s4
  %s7 = scalar_select 0, %s6, %s4
  loop: start=0, step=1, limit=4
  $region2: #{cnn_forward.4} parent=0 // loop_pre_header
    _
  $region3: #{cnn_forward.4} parent=0 // loop_header
    %s9 = sphi 0, %s13
    %p10 = scmp.ge.s32.totalorder %s9, 4
    %s19 = sphi 0, %s21
    %s22 = sphi 0, %s19
    %s23 = sphi 0, %s22
    %s39 = sphi 0, %s23
    %s43 = sphi 0, %s43
    %s45 = sphi 0, %s43
    %s46 = sphi 0, %s45
    %s60 = sphi 0, %s46
    %s64 = sphi 0, %s64
    %s66 = sphi 0, %s64
    %s67 = sphi 0, %s66
    %s81 = sphi 0, %s67
    %s87 = sphi 0, %s89
    %s90 = sphi 0, %s87
    %s91 = sphi 0, %s90
    %s107 = sphi 0, %s91
  $region4: #{cnn_forward.4} parent=0 // loop_header_branch
    %12 = sbr.rel (%p10) target = $region8
  $region5: #{cnn_forward.4} parent=0 // loop_body
    %s14 = ssub.s32 %s9, 1
    %s15 = ssub.s32 %s9, 2
    %s16 = sadd.s32 %s9, 1
    %s17 = ssub.s32 %s9, %s16
    %p18 = scmp.eq.s32.totalorder %s17, 0
    %s20 = sadd.s32 %s19, 1
    %s21 = scalar_select %p18, %s19, %s20
    %p24 = pneg %p18
    %p25 = scmp.eq.s32.totalorder %s9, 1
    %p26 = por %p24, %p25
    %p27 = scmp.ne.s32.totalorder %s19, %s22
    %p28 = scmp.eq.s32.totalorder %s9, 0
    %p29 = por %p27, %p28
    %p30 = scmp.ne.s32.totalorder %s19, %s22
    %p31 = scmp.eq.s32.totalorder %s14, 1
    %p32 = por %p30, %p31
    %p33 = scmp.ne.s32.totalorder %s22, %s23
    %p34 = scmp.eq.s32.totalorder %s14, 0
    %p35 = por %p33, %p34
    %p36 = scmp.ne.s32.totalorder %s22, %s23
    %p37 = scmp.eq.s32.totalorder %s15, 1
    %p38 = por %p36, %p37
    %p40 = scmp.ne.s32.totalorder %s23, %s39
    %p41 = scmp.eq.s32.totalorder %s15, 0
    %p42 = por %p40, %p41
    %s44 = sadd.s32 %s43, 1
    %p47 = scmp.eq.s32.totalorder %s9, 1
    %p48 = scmp.ne.s32.totalorder %s43, %s45
    %p49 = scmp.eq.s32.totalorder %s9, 0
    %p50 = por %p48, %p49
    %p51 = scmp.ne.s32.totalorder %s43, %s45
    %p52 = scmp.eq.s32.totalorder %s14, 1
    %p53 = por %p51, %p52
    %p54 = scmp.ne.s32.totalorder %s45, %s46
    %p55 = scmp.eq.s32.totalorder %s14, 0
    %p56 = por %p54, %p55
    %p57 = scmp.ne.s32.totalorder %s45, %s46
    %p58 = scmp.eq.s32.totalorder %s15, 1
    %p59 = por %p57, %p58
    %p61 = scmp.ne.s32.totalorder %s46, %s60
    %p62 = scmp.eq.s32.totalorder %s15, 0
    %p63 = por %p61, %p62
    %s65 = sadd.s32 %s64, 1
    %p68 = scmp.eq.s32.totalorder %s9, 1
    %p69 = scmp.ne.s32.totalorder %s64, %s66
    %p70 = scmp.eq.s32.totalorder %s9, 0
    %p71 = por %p69, %p70
    %p72 = scmp.ne.s32.totalorder %s64, %s66
    %p73 = scmp.eq.s32.totalorder %s14, 1
    %p74 = por %p72, %p73
    %p75 = scmp.ne.s32.totalorder %s66, %s67
    %p76 = scmp.eq.s32.totalorder %s14, 0
    %p77 = por %p75, %p76
    %p78 = scmp.ne.s32.totalorder %s66, %s67
    %p79 = scmp.eq.s32.totalorder %s15, 1
    %p80 = por %p78, %p79
    %p82 = scmp.ne.s32.totalorder %s67, %s81
    %p83 = scmp.eq.s32.totalorder %s15, 0
    %p84 = por %p82, %p83
    %s85 = ssub.s32 %s9, %s16
    %p86 = scmp.eq.s32.totalorder %s85, 0
    %s88 = sadd.s32 %s87, 1
    %s89 = scalar_select %p86, %s87, %s88
    %p92 = pneg %p86
    %p93 = scmp.eq.s32.totalorder %s9, 1
    %p94 = por %p92, %p93
    %p95 = scmp.ne.s32.totalorder %s87, %s90
    %p96 = scmp.eq.s32.totalorder %s9, 0
    %p97 = por %p95, %p96
    %p98 = scmp.ne.s32.totalorder %s87, %s90
    %p99 = scmp.eq.s32.totalorder %s14, 1
    %p100 = por %p98, %p99
    %p101 = scmp.ne.s32.totalorder %s90, %s91
    %p102 = scmp.eq.s32.totalorder %s14, 0
    %p103 = por %p101, %p102
    %p104 = scmp.ne.s32.totalorder %s90, %s91
    %p105 = scmp.eq.s32.totalorder %s15, 1
    %p106 = por %p104, %p105
    %p108 = scmp.ne.s32.totalorder %s91, %s107
    %p109 = scmp.eq.s32.totalorder %s15, 0
    %p110 = por %p108, %p109
    %p111 = scmp.le.s32.totalorder 1, %s9
    %p112 = scmp.lt.s32.totalorder %s9, 3
    %p113 = pnand %p111, %p112
    %p114 = pneg %p113
    // Predicated region
    $region9: #{cnn_forward.4} parent=5 // pred_check
      _
    $region10: #{cnn_forward.4} parent=5 // pred_check_branch
      %116 = sbr.rel (%p113) target = $region12
    $region11: #{cnn_forward.4} parent=5 // pred_region
      %s117 = ssub.s32 %s9, 1
      // Predicated region
      $region13: #{cnn_forward.4} parent=11 // pred_check
        %p118 = pneg %p56
      $region14: #{cnn_forward.4} parent=11 // pred_check_branch
        %120 = sbr.rel (%p118) target = $region16
      $region15: #{cnn_forward.4} parent=11 // pred_region
        _
      $region16: #{cnn_forward.4} parent=11 // pred_fallthru
        _
      // Predicated region
      $region17: #{cnn_forward.4} parent=11 // pred_check
        %p121 = pneg %p77
      $region18: #{cnn_forward.4} parent=11 // pred_check_branch
        %123 = sbr.rel (%p121) target = $region20
      $region19: #{cnn_forward.4} parent=11 // pred_region
        _
      $region20: #{cnn_forward.4} parent=11 // pred_fallthru
        _
    $region12: #{cnn_forward.4} parent=5 // pred_fallthru
      _
    %p124 = scmp.lt.s32.totalorder %s9, 2
    // Predicated region
    $region21: #{cnn_forward.4} parent=5 // pred_check
      %p125 = pneg %p124
    $region22: #{cnn_forward.4} parent=5 // pred_check_branch
      %127 = sbr.rel (%p125) target = $region24
    $region23: #{cnn_forward.4} parent=5 // pred_region
      // Predicated region
      $region25: #{cnn_forward.4} parent=23 // pred_check
        %p128 = pneg %p29
      $region26: #{cnn_forward.4} parent=23 // pred_check_branch
        %130 = sbr.rel (%p128) target = $region28
      $region27: #{cnn_forward.4} parent=23 // pred_region
        %p131 = scmp.lt.s32.totalorder %s9, 1
        %s132 = scalar_select %p131, %s9, 1
        %s133 = smul.addr %s132, 32
        %s134 = smul.addr %s133, 4
        %s135 = scalar_lea.vmem %s0, %s134
      $region28: #{cnn_forward.4} parent=23 // pred_fallthru
        _
    $region24: #{cnn_forward.4} parent=5 // pred_fallthru
      _
    %p136 = scmp.le.s32.totalorder 1, %s9
    %p137 = scmp.lt.s32.totalorder %s9, 3
    %p138 = pnand %p136, %p137
    %p139 = pneg %p138
    // Predicated region
    $region29: #{cnn_forward.4} parent=5 // pred_check
      _
    $region30: #{cnn_forward.4} parent=5 // pred_check_branch
      %141 = sbr.rel (%p138) target = $region32
    $region31: #{cnn_forward.4} parent=5 // pred_region
      %s142 = ssub.s32 %s9, 1
      %p143 = scmp.lt.s32.totalorder %s14, 1
      %s144 = scalar_select %p143, %s14, 1
      %s145 = smul.addr %s144, 32
      %s146 = smul.addr %s145, 4
      %s147 = scalar_lea.vmem %s0, %s146
      %p148 = pneg %p35
      %p149 = pneg %p32
      %p150 = pneg %p56
      %p151 = pneg %p53
      %p152 = pneg %p77
      %p153 = pneg %p74
      %p154 = pneg %p103
      %p155 = pneg %p100
      %p156 = scmp.lt.s32.totalorder %s14, 1
      %s157 = scalar_select %p156, %s14, 1
      %s158 = smul.addr %s157, 4
      %s159 = smul.addr %s158, 4
      %s160 = scalar_lea.vmem %s3, %s159
      %p161 = scmp.lt.s32.totalorder %s14, 1
      %s162 = scalar_select %p161, %s14, 1
      %s163 = smul.addr %s162, 32
      %s164 = smul.addr %s163, 4
      %s165 = scalar_lea.vmem %s0, %s164
      %p166 = scmp.lt.s32.totalorder %s14, 1
      %s167 = scalar_select %p166, %s14, 1
      %s168 = smul.addr %s167, 4
      %s169 = smul.addr %s168, 4
      %s170 = scalar_lea.vmem %s3, %s169
      %v172 = vld [vmem:[%s165] sm:$0xf]
      %v173 = vld [vmem:[%s165 + $0x4] sm:$0xf]
      %v174 = vld [vmem:[%s165 + $0x8] sm:$0xf]
      %v175 = vld [vmem:[%s165 + $0xc] sm:$0xf]
      %v176 = vld [vmem:[%s165 + $0x10] sm:$0xf]
      %v177 = vld [vmem:[%s165 + $0x14] sm:$0xf]
      %v178 = vld [vmem:[%s165 + $0x18] sm:$0xf]
      %v179 = vld [vmem:[%s165 + $0x1c] sm:$0xf]
      %v180 = vld [vmem:[%s165 + $0x20] sm:$0xf]
      %v181 = vld [vmem:[%s165 + $0x24] sm:$0xf]
      %v182 = vld [vmem:[%s165 + $0x28] sm:$0xf]
      %v183 = vld [vmem:[%s165 + $0x2c] sm:$0xf]
      %v184 = vld [vmem:[%s165 + $0x30] sm:$0xf]
      %v185 = vld [vmem:[%s165 + $0x34] sm:$0xf]
      %v186 = vld [vmem:[%s165 + $0x38] sm:$0xf]
      %v187 = vld [vmem:[%s165 + $0x3c] sm:$0xf]
      %v188 = vld [vmem:[%s165 + $0x40] sm:$0xf]
      %v189 = vld [vmem:[%s165 + $0x44] sm:$0xf]
      %v190 = vld [vmem:[%s165 + $0x48] sm:$0xf]
      %v191 = vld [vmem:[%s165 + $0x4c] sm:$0xf]
      %v192 = vld [vmem:[%s165 + $0x50] sm:$0xf]
      %v193 = vld [vmem:[%s165 + $0x54] sm:$0xf]
      %v194 = vld [vmem:[%s165 + $0x58] sm:$0xf]
      %v195 = vld [vmem:[%s165 + $0x5c] sm:$0xf]
      %v196 = vld [vmem:[%s165 + $0x60] sm:$0xf]
      %v197 = vld [vmem:[%s165 + $0x64] sm:$0xf]
      %v198 = vld [vmem:[%s165 + $0x68] sm:$0xf]
      %v199 = vld [vmem:[%s165 + $0x6c] sm:$0xf]
      %v200 = vld [vmem:[%s165 + $0x70] sm:$0xf]
      %v201 = vld [vmem:[%s165 + $0x74] sm:$0xf]
      %v202 = vld [vmem:[%s165 + $0x78] sm:$0xf]
      %v203 = vld [vmem:[%s165 + $0x7c] sm:$0xf]
      %v204 = vld [vmem:[%s1] sm:$0xff]
      %v205 = vld [vmem:[%s1 + $0x8] sm:$0xff]
      %v206 = vld [vmem:[%s1 + $0x10] sm:$0xff]
      %v207 = vld [vmem:[%s1 + $0x18] sm:$0xff]
      %v212 = vunpack.c.l.b16 %v204
      %v213 = vunpack.c.h.b16 %v204
      %v214 = vunpack.c.l.b16 %v205
      %v215 = vunpack.c.h.b16 %v205
      %v216 = vunpack.c.l.b16 %v206
      %v217 = vunpack.c.h.b16 %v206
      %v218 = vunpack.c.l.b16 %v207
      %v219 = vunpack.c.h.b16 %v207
      %v220 = vpack.c.b16 %v214, %v212
      %v221 = vpack.c.b16 %v215, %v213
      %v222 = vpack.c.b16 %v218, %v216
      %v223 = vpack.c.b16 %v219, %v217
      %v260 = vunpack.c.l.b16 %v172
      %v261 = vunpack.c.l.b16 %v173
      %v262 = vunpack.c.l.b16 %v174
      %v263 = vunpack.c.l.b16 %v175
      %v264 = vunpack.c.l.b16 %v176
      %v265 = vunpack.c.l.b16 %v177
      %v266 = vunpack.c.l.b16 %v178
      %v267 = vunpack.c.l.b16 %v179
      %v268 = vunpack.c.l.b16 %v180
      %v269 = vunpack.c.l.b16 %v181
      %v270 = vunpack.c.l.b16 %v182
      %v271 = vunpack.c.l.b16 %v183
      %v272 = vunpack.c.l.b16 %v184
      %v273 = vunpack.c.l.b16 %v185
      %v274 = vunpack.c.l.b16 %v186
      %v275 = vunpack.c.l.b16 %v187
      %v276 = vunpack.c.l.b16 %v188
      %v277 = vunpack.c.l.b16 %v189
      %v278 = vunpack.c.l.b16 %v190
      %v279 = vunpack.c.l.b16 %v191
      %v280 = vunpack.c.l.b16 %v192
      %v281 = vunpack.c.l.b16 %v193
      %v282 = vunpack.c.l.b16 %v194
      %v283 = vunpack.c.l.b16 %v195
      %v284 = vunpack.c.l.b16 %v196
      %v285 = vunpack.c.l.b16 %v197
      %v286 = vunpack.c.l.b16 %v198
      %v287 = vunpack.c.l.b16 %v199
      %v288 = vunpack.c.l.b16 %v200
      %v289 = vunpack.c.l.b16 %v201
      %v290 = vunpack.c.l.b16 %v202
      %v291 = vunpack.c.l.b16 %v203
      %v292 = vpack.c.b16 %v261, %v260
      %v293 = vpack.c.b16 %v263, %v262
      %v294 = vpack.c.b16 %v265, %v264
      %v295 = vpack.c.b16 %v267, %v266
      %v296 = vpack.c.b16 %v269, %v268
      %v297 = vpack.c.b16 %v271, %v270
      %v298 = vpack.c.b16 %v273, %v272
      %v299 = vpack.c.b16 %v275, %v274
      %v300 = vpack.c.b16 %v277, %v276
      %v301 = vpack.c.b16 %v279, %v278
      %v302 = vpack.c.b16 %v281, %v280
      %v303 = vpack.c.b16 %v283, %v282
      %v304 = vpack.c.b16 %v285, %v284
      %v305 = vpack.c.b16 %v287, %v286
      %v306 = vpack.c.b16 %v289, %v288
      %v307 = vpack.c.b16 %v291, %v290
      %324 = vmatprep.subr.bf16.mxu0 0
      %325 = vmatpush1.bf16.msra.mxu0 %v299
      %326 = vmatprep.subr.bf16.mxu0 0
      %327 = vmatpush1.bf16.msra.mxu0 %v298
      %328 = vmatprep.subr.bf16.mxu0 0
      %329 = vmatpush1.bf16.msra.mxu0 %v297
      %330 = vmatprep.subr.bf16.mxu0 0
      %331 = vmatpush1.bf16.msra.mxu0 %v296
      %332 = vmatprep.subr.bf16.mxu0 0
      %333 = vmatpush1.bf16.msra.mxu0 %v295
      %334 = vmatprep.subr.bf16.mxu0 0
      %335 = vmatpush1.bf16.msra.mxu0 %v294
      %336 = vmatprep.subr.bf16.mxu0 0
      %337 = vmatpush1.bf16.msra.mxu0 %v293
      %338 = vmatprep.subr.bf16.mxu0 0
      %339 = vmatpush1.bf16.msra.mxu0 %v292
      %340 = vmatprep.subr.bf16.mxu0 0
      %341 = vmatpush2.bf16.msra.mxu0 %v307
      %342 = vmatprep.subr.bf16.mxu0 0
      %343 = vmatpush2.bf16.msra.mxu0 %v306
      %344 = vmatprep.subr.bf16.mxu0 0
      %345 = vmatpush2.bf16.msra.mxu0 %v305
      %346 = vmatprep.subr.bf16.mxu0 0
      %347 = vmatpush2.bf16.msra.mxu0 %v304
      %348 = vmatprep.subr.bf16.mxu0 0
      %349 = vmatpush2.bf16.msra.mxu0 %v303
      %350 = vmatprep.subr.bf16.mxu0 0
      %351 = vmatpush2.bf16.msra.mxu0 %v302
      %352 = vmatprep.subr.bf16.mxu0 0
      %353 = vmatpush2.bf16.msra.mxu0 %v301
      %354 = vmatprep.subr.bf16.mxu0 0
      %355 = vmatpush2.bf16.msra.mxu0 %v300
      %356 = vmatprep.mubr.bf16.mxu0 %v221
      %357 = vmatmul.mubr.bf16.gmra.mxu0 %v220
      %v358 = vpop.f32.mrf.mxu0
      %v359 = vadd.f32 0.0, %v358
      %v360 = vpop.f32.mrf.mxu0
      %v361 = vpop.f32.mrf.mxu0
      %v362 = vadd.f32 0.0, %v361
      %v363 = vpop.f32.mrf.mxu0
      %364 = vmatprep.mubr.bf16.mxu0 %v223
      %365 = vmatmul.mubr.bf16.gmra.mxu0 %v222
      %v366 = vpop.f32.mrf.mxu0
      %v367 = vadd.f32 0.0, %v366
      %v368 = vpop.f32.mrf.mxu0
      %v369 = vpop.f32.mrf.mxu0
      %v370 = vadd.f32 0.0, %v369
      %v371 = vpop.f32.mrf.mxu0
      %372 = vdwg.mxu0
      %s373 = scalar_lea.vmem %s1, 128
      %v374 = vld [vmem:[%s373] sm:$0xff]
      %v375 = vld [vmem:[%s373 + $0x8] sm:$0xff]
      %v376 = vld [vmem:[%s373 + $0x10] sm:$0xff]
      %v377 = vld [vmem:[%s373 + $0x18] sm:$0xff]
      %s378 = scalar_lea.vmem %s1, 160
      %v379 = vld [vmem:[%s378] sm:$0xff]
      %v380 = vld [vmem:[%s378 + $0x8] sm:$0xff]
      %v381 = vld [vmem:[%s378 + $0x10] sm:$0xff]
      %v382 = vld [vmem:[%s378 + $0x18] sm:$0xff]
      %v387 = vunpack.c.l.b16 %v379
      %v388 = vunpack.c.h.b16 %v379
      %v389 = vunpack.c.l.b16 %v380
      %v390 = vunpack.c.h.b16 %v380
      %v391 = vunpack.c.l.b16 %v381
      %v392 = vunpack.c.h.b16 %v381
      %v393 = vunpack.c.l.b16 %v382
      %v394 = vunpack.c.h.b16 %v382
      %v395 = vpack.c.b16 %v389, %v387
      %v396 = vpack.c.b16 %v390, %v388
      %v397 = vpack.c.b16 %v393, %v391
      %v398 = vpack.c.b16 %v394, %v392
      %403 = vrot.lane.b32.xlu0 %v292, 127
      %v404 = vpop.permute.xlu0 %403
      %405 = vrot.lane.b32.xlu0 %v293, 127
      %v406 = vpop.permute.xlu0 %405
      %407 = vrot.lane.b32.xlu0 %v294, 127
      %v408 = vpop.permute.xlu0 %407
      %409 = vrot.lane.b32.xlu0 %v295, 127
      %v410 = vpop.permute.xlu0 %409
      %411 = vrot.lane.b32.xlu0 %v296, 127
      %v412 = vpop.permute.xlu0 %411
      %413 = vrot.lane.b32.xlu0 %v297, 127
      %v414 = vpop.permute.xlu0 %413
      %415 = vrot.lane.b32.xlu0 %v298, 127
      %v416 = vpop.permute.xlu0 %415
      %417 = vrot.lane.b32.xlu0 %v299, 127
      %v418 = vpop.permute.xlu0 %417
      %419 = vrot.lane.b32.xlu0 %v300, 127
      %v420 = vpop.permute.xlu0 %419
      %421 = vrot.lane.b32.xlu0 %v301, 127
      %v422 = vpop.permute.xlu0 %421
      %423 = vrot.lane.b32.xlu0 %v302, 127
      %v424 = vpop.permute.xlu0 %423
      %425 = vrot.lane.b32.xlu0 %v303, 127
      %v426 = vpop.permute.xlu0 %425
      %427 = vrot.lane.b32.xlu0 %v304, 127
      %v428 = vpop.permute.xlu0 %427
      %429 = vrot.lane.b32.xlu0 %v305, 127
      %v430 = vpop.permute.xlu0 %429
      %431 = vrot.lane.b32.xlu0 %v306, 127
      %v432 = vpop.permute.xlu0 %431
      %433 = vrot.lane.b32.xlu0 %v307, 127
      %v434 = vpop.permute.xlu0 %433
      %451 = vmatprep.subr.bf16.mxu0 0
      %452 = vmatpush1.bf16.msra.mxu0 %v418
      %453 = vmatprep.subr.bf16.mxu0 0
      %454 = vmatpush1.bf16.msra.mxu0 %v416
      %455 = vmatprep.subr.bf16.mxu0 0
      %456 = vmatpush1.bf16.msra.mxu0 %v414
      %457 = vmatprep.subr.bf16.mxu0 0
      %458 = vmatpush1.bf16.msra.mxu0 %v412
      %459 = vmatprep.subr.bf16.mxu0 0
      %460 = vmatpush1.bf16.msra.mxu0 %v410
      %461 = vmatprep.subr.bf16.mxu0 0
      %462 = vmatpush1.bf16.msra.mxu0 %v408
      %463 = vmatprep.subr.bf16.mxu0 0
      %464 = vmatpush1.bf16.msra.mxu0 %v406
      %465 = vmatprep.subr.bf16.mxu0 0
      %466 = vmatpush1.bf16.msra.mxu0 %v404
      %467 = vmatprep.subr.bf16.mxu0 0
      %468 = vmatpush2.bf16.msra.mxu0 %v434
      %469 = vmatprep.subr.bf16.mxu0 0
      %470 = vmatpush2.bf16.msra.mxu0 %v432
      %471 = vmatprep.subr.bf16.mxu0 0
      %472 = vmatpush2.bf16.msra.mxu0 %v430
      %473 = vmatprep.subr.bf16.mxu0 0
      %474 = vmatpush2.bf16.msra.mxu0 %v428
      %475 = vmatprep.subr.bf16.mxu0 0
      %476 = vmatpush2.bf16.msra.mxu0 %v426
      %477 = vmatprep.subr.bf16.mxu0 0
      %478 = vmatpush2.bf16.msra.mxu0 %v424
      %479 = vmatprep.subr.bf16.mxu0 0
      %480 = vmatpush2.bf16.msra.mxu0 %v422
      %481 = vmatprep.subr.bf16.mxu0 0
      %482 = vmatpush2.bf16.msra.mxu0 %v420
      %483 = vmatprep.mubr.bf16.mxu0 %v396
      %484 = vmatmul.mubr.bf16.gmra.mxu0 %v395
      %v485 = vpop.f32.mrf.mxu0
      %v486 = vadd.f32 0.0, %v485
      %v487 = vpop.f32.mrf.mxu0
      %v488 = vpop.f32.mrf.mxu0
      %v489 = vadd.f32 0.0, %v488
      %v490 = vpop.f32.mrf.mxu0
      %491 = vmatprep.mubr.bf16.mxu0 %v398
      %492 = vmatmul.mubr.bf16.gmra.mxu0 %v397
      %v493 = vpop.f32.mrf.mxu0
      %v494 = vadd.f32 0.0, %v493
      %v495 = vpop.f32.mrf.mxu0
      %v496 = vpop.f32.mrf.mxu0
      %v497 = vadd.f32 0.0, %v496
      %v498 = vpop.f32.mrf.mxu0
      %499 = vdwg.mxu0
      %v504 = vunpack.c.l.b16 %v374
      %v505 = vunpack.c.h.b16 %v374
      %v506 = vunpack.c.l.b16 %v375
      %v507 = vunpack.c.h.b16 %v375
      %v508 = vunpack.c.l.b16 %v376
      %v509 = vunpack.c.h.b16 %v376
      %v510 = vunpack.c.l.b16 %v377
      %v511 = vunpack.c.h.b16 %v377
      %v512 = vpack.c.b16 %v506, %v504
      %v513 = vpack.c.b16 %v507, %v505
      %v514 = vpack.c.b16 %v510, %v508
      %v515 = vpack.c.b16 %v511, %v509
      %520 = vmatprep.subr.bf16.mxu0 0
      %521 = vmatpush1.bf16.msra.mxu0 %v299
      %522 = vmatprep.subr.bf16.mxu0 0
      %523 = vmatpush1.bf16.msra.mxu0 %v298
      %524 = vmatprep.subr.bf16.mxu0 0
      %525 = vmatpush1.bf16.msra.mxu0 %v297
      %526 = vmatprep.subr.bf16.mxu0 0
      %527 = vmatpush1.bf16.msra.mxu0 %v296
      %528 = vmatprep.subr.bf16.mxu0 0
      %529 = vmatpush1.bf16.msra.mxu0 %v295
      %530 = vmatprep.subr.bf16.mxu0 0
      %531 = vmatpush1.bf16.msra.mxu0 %v294
      %532 = vmatprep.subr.bf16.mxu0 0
      %533 = vmatpush1.bf16.msra.mxu0 %v293
      %534 = vmatprep.subr.bf16.mxu0 0
      %535 = vmatpush1.bf16.msra.mxu0 %v292
      %536 = vmatprep.subr.bf16.mxu0 0
      %537 = vmatpush2.bf16.msra.mxu0 %v307
      %538 = vmatprep.subr.bf16.mxu0 0
      %539 = vmatpush2.bf16.msra.mxu0 %v306
      %540 = vmatprep.subr.bf16.mxu0 0
      %541 = vmatpush2.bf16.msra.mxu0 %v305
      %542 = vmatprep.subr.bf16.mxu0 0
      %543 = vmatpush2.bf16.msra.mxu0 %v304
      %544 = vmatprep.subr.bf16.mxu0 0
      %545 = vmatpush2.bf16.msra.mxu0 %v303
      %546 = vmatprep.subr.bf16.mxu0 0
      %547 = vmatpush2.bf16.msra.mxu0 %v302
      %548 = vmatprep.subr.bf16.mxu0 0
      %549 = vmatpush2.bf16.msra.mxu0 %v301
      %550 = vmatprep.subr.bf16.mxu0 0
      %551 = vmatpush2.bf16.msra.mxu0 %v300
      %552 = vmatprep.mubr.bf16.mxu0 %v513
      %553 = vmatmul.mubr.bf16.gmra.mxu0 %v512
      %v554 = vpop.f32.mrf.mxu0
      %v555 = vadd.f32 %v486, %v554
      %v556 = vpop.f32.mrf.mxu0
      %v557 = vpop.f32.mrf.mxu0
      %v558 = vadd.f32 %v489, %v557
      %v559 = vpop.f32.mrf.mxu0
      %560 = vmatprep.mubr.bf16.mxu0 %v515
      %561 = vmatmul.mubr.bf16.gmra.mxu0 %v514
      %v562 = vpop.f32.mrf.mxu0
      %v563 = vadd.f32 %v494, %v562
      %v564 = vpop.f32.mrf.mxu0
      %v565 = vpop.f32.mrf.mxu0
      %v566 = vadd.f32 %v497, %v565
      %v567 = vpop.f32.mrf.mxu0
      %568 = vdwg.mxu0
      %v569 = vmax.f32 %v359, %v555
      %v570 = vmax.f32 %v362, %v558
      %v571 = vmax.f32 %v367, %v563
      %v572 = vmax.f32 %v370, %v566
      %s573 = scalar_lea.vmem %s1, 256
      %v574 = vld [vmem:[%s573] sm:$0xff]
      %v575 = vld [vmem:[%s573 + $0x8] sm:$0xff]
      %v576 = vld [vmem:[%s573 + $0x10] sm:$0xff]
      %v577 = vld [vmem:[%s573 + $0x18] sm:$0xff]
      %s578 = scalar_lea.vmem %s1, 320
      %v579 = vld [vmem:[%s578] sm:$0xff]
      %v580 = vld [vmem:[%s578 + $0x8] sm:$0xff]
      %v581 = vld [vmem:[%s578 + $0x10] sm:$0xff]
      %v582 = vld [vmem:[%s578 + $0x18] sm:$0xff]
      %v587 = vunpack.c.l.b16 %v579
      %v588 = vunpack.c.h.b16 %v579
      %v589 = vunpack.c.l.b16 %v580
      %v590 = vunpack.c.h.b16 %v580
      %v591 = vunpack.c.l.b16 %v581
      %v592 = vunpack.c.h.b16 %v581
      %v593 = vunpack.c.l.b16 %v582
      %v594 = vunpack.c.h.b16 %v582
      %v595 = vpack.c.b16 %v589, %v587
      %v596 = vpack.c.b16 %v590, %v588
      %v597 = vpack.c.b16 %v593, %v591
      %v598 = vpack.c.b16 %v594, %v592
      %603 = vrot.lane.b32.xlu0 %v292, 118
      %v604 = vpop.permute.xlu0 %603
      %605 = vrot.lane.b32.xlu0 %v293, 118
      %v606 = vpop.permute.xlu0 %605
      %607 = vrot.lane.b32.xlu0 %v294, 118
      %v608 = vpop.permute.xlu0 %607
      %609 = vrot.lane.b32.xlu0 %v295, 118
      %v610 = vpop.permute.xlu0 %609
      %611 = vrot.lane.b32.xlu0 %v296, 118
      %v612 = vpop.permute.xlu0 %611
      %613 = vrot.lane.b32.xlu0 %v297, 118
      %v614 = vpop.permute.xlu0 %613
      %615 = vrot.lane.b32.xlu0 %v298, 118
      %v616 = vpop.permute.xlu0 %615
      %617 = vrot.lane.b32.xlu0 %v299, 118
      %v618 = vpop.permute.xlu0 %617
      %619 = vrot.lane.b32.xlu0 %v300, 118
      %v620 = vpop.permute.xlu0 %619
      %621 = vrot.lane.b32.xlu0 %v301, 118
      %v622 = vpop.permute.xlu0 %621
      %623 = vrot.lane.b32.xlu0 %v302, 118
      %v624 = vpop.permute.xlu0 %623
      %625 = vrot.lane.b32.xlu0 %v303, 118
      %v626 = vpop.permute.xlu0 %625
      %627 = vrot.lane.b32.xlu0 %v304, 118
      %v628 = vpop.permute.xlu0 %627
      %629 = vrot.lane.b32.xlu0 %v305, 118
      %v630 = vpop.permute.xlu0 %629
      %631 = vrot.lane.b32.xlu0 %v306, 118
      %v632 = vpop.permute.xlu0 %631
      %633 = vrot.lane.b32.xlu0 %v307, 118
      %v634 = vpop.permute.xlu0 %633
      %651 = vmatprep.subr.bf16.mxu0 0
      %652 = vmatpush1.bf16.msra.mxu0 %v618
      %653 = vmatprep.subr.bf16.mxu0 0
      %654 = vmatpush1.bf16.msra.mxu0 %v616
      %655 = vmatprep.subr.bf16.mxu0 0
      %656 = vmatpush1.bf16.msra.mxu0 %v614
      %657 = vmatprep.subr.bf16.mxu0 0
      %658 = vmatpush1.bf16.msra.mxu0 %v612
      %659 = vmatprep.subr.bf16.mxu0 0
      %660 = vmatpush1.bf16.msra.mxu0 %v610
      %661 = vmatprep.subr.bf16.mxu0 0
      %662 = vmatpush1.bf16.msra.mxu0 %v608
      %663 = vmatprep.subr.bf16.mxu0 0
      %664 = vmatpush1.bf16.msra.mxu0 %v606
      %665 = vmatprep.subr.bf16.mxu0 0
      %666 = vmatpush1.bf16.msra.mxu0 %v604
      %667 = vmatprep.subr.bf16.mxu0 0
      %668 = vmatpush2.bf16.msra.mxu0 %v634
      %669 = vmatprep.subr.bf16.mxu0 0
      %670 = vmatpush2.bf16.msra.mxu0 %v632
      %671 = vmatprep.subr.bf16.mxu0 0
      %672 = vmatpush2.bf16.msra.mxu0 %v630
      %673 = vmatprep.subr.bf16.mxu0 0
      %674 = vmatpush2.bf16.msra.mxu0 %v628
      %675 = vmatprep.subr.bf16.mxu0 0
      %676 = vmatpush2.bf16.msra.mxu0 %v626
      %677 = vmatprep.subr.bf16.mxu0 0
      %678 = vmatpush2.bf16.msra.mxu0 %v624
      %679 = vmatprep.subr.bf16.mxu0 0
      %680 = vmatpush2.bf16.msra.mxu0 %v622
      %681 = vmatprep.subr.bf16.mxu0 0
      %682 = vmatpush2.bf16.msra.mxu0 %v620
      %683 = vmatprep.mubr.bf16.mxu0 %v596
      %684 = vmatmul.mubr.bf16.gmra.mxu0 %v595
      %v685 = vpop.f32.mrf.mxu0
      %v686 = vadd.f32 0.0, %v685
      %v687 = vpop.f32.mrf.mxu0
      %v688 = vpop.f32.mrf.mxu0
      %v689 = vadd.f32 0.0, %v688
      %v690 = vpop.f32.mrf.mxu0
      %691 = vmatprep.mubr.bf16.mxu0 %v598
      %692 = vmatmul.mubr.bf16.gmra.mxu0 %v597
      %v693 = vpop.f32.mrf.mxu0
      %v694 = vadd.f32 0.0, %v693
      %v695 = vpop.f32.mrf.mxu0
      %v696 = vpop.f32.mrf.mxu0
      %v697 = vadd.f32 0.0, %v696
      %v698 = vpop.f32.mrf.mxu0
      %699 = vdwg.mxu0
      %v704 = vunpack.c.l.b16 %v574
      %v705 = vunpack.c.h.b16 %v574
      %v706 = vunpack.c.l.b16 %v575
      %v707 = vunpack.c.h.b16 %v575
      %v708 = vunpack.c.l.b16 %v576
      %v709 = vunpack.c.h.b16 %v576
      %v710 = vunpack.c.l.b16 %v577
      %v711 = vunpack.c.h.b16 %v577
      %v712 = vpack.c.b16 %v706, %v704
      %v713 = vpack.c.b16 %v707, %v705
      %v714 = vpack.c.b16 %v710, %v708
      %v715 = vpack.c.b16 %v711, %v709
      %720 = vmatprep.subr.bf16.mxu0 0
      %721 = vmatpush1.bf16.msra.mxu0 %v299
      %722 = vmatprep.subr.bf16.mxu0 0
      %723 = vmatpush1.bf16.msra.mxu0 %v298
      %724 = vmatprep.subr.bf16.mxu0 0
      %725 = vmatpush1.bf16.msra.mxu0 %v297
      %726 = vmatprep.subr.bf16.mxu0 0
      %727 = vmatpush1.bf16.msra.mxu0 %v296
      %728 = vmatprep.subr.bf16.mxu0 0
      %729 = vmatpush1.bf16.msra.mxu0 %v295
      %730 = vmatprep.subr.bf16.mxu0 0
      %731 = vmatpush1.bf16.msra.mxu0 %v294
      %732 = vmatprep.subr.bf16.mxu0 0
      %733 = vmatpush1.bf16.msra.mxu0 %v293
      %734 = vmatprep.subr.bf16.mxu0 0
      %735 = vmatpush1.bf16.msra.mxu0 %v292
      %736 = vmatprep.subr.bf16.mxu0 0
      %737 = vmatpush2.bf16.msra.mxu0 %v307
      %738 = vmatprep.subr.bf16.mxu0 0
      %739 = vmatpush2.bf16.msra.mxu0 %v306
      %740 = vmatprep.subr.bf16.mxu0 0
      %741 = vmatpush2.bf16.msra.mxu0 %v305
      %742 = vmatprep.subr.bf16.mxu0 0
      %743 = vmatpush2.bf16.msra.mxu0 %v304
      %744 = vmatprep.subr.bf16.mxu0 0
      %745 = vmatpush2.bf16.msra.mxu0 %v303
      %746 = vmatprep.subr.bf16.mxu0 0
      %747 = vmatpush2.bf16.msra.mxu0 %v302
      %748 = vmatprep.subr.bf16.mxu0 0
      %749 = vmatpush2.bf16.msra.mxu0 %v301
      %750 = vmatprep.subr.bf16.mxu0 0
      %751 = vmatpush2.bf16.msra.mxu0 %v300
      %752 = vmatprep.mubr.bf16.mxu0 %v713
      %753 = vmatmul.mubr.bf16.gmra.mxu0 %v712
      %v754 = vpop.f32.mrf.mxu0
      %v755 = vadd.f32 %v686, %v754
      %v756 = vpop.f32.mrf.mxu0
      %v757 = vpop.f32.mrf.mxu0
      %v758 = vadd.f32 %v689, %v757
      %v759 = vpop.f32.mrf.mxu0
      %760 = vmatprep.mubr.bf16.mxu0 %v715
      %761 = vmatmul.mubr.bf16.gmra.mxu0 %v714
      %v762 = vpop.f32.mrf.mxu0
      %v763 = vadd.f32 %v694, %v762
      %v764 = vpop.f32.mrf.mxu0
      %v765 = vpop.f32.mrf.mxu0
      %v766 = vadd.f32 %v697, %v765
      %v767 = vpop.f32.mrf.mxu0
      %768 = vdwg.mxu0
      %v769 = vmax.f32 %v569, %v755
      %v770 = vmax.f32 %v570, %v758
      %v771 = vmax.f32 %v571, %v763
      %v772 = vmax.f32 %v572, %v766
      %s773 = scalar_lea.vmem %s1, 384
      %v774 = vld [vmem:[%s773] sm:$0xff]
      %v775 = vld [vmem:[%s773 + $0x8] sm:$0xff]
      %v776 = vld [vmem:[%s773 + $0x10] sm:$0xff]
      %v777 = vld [vmem:[%s773 + $0x18] sm:$0xff]
      %s778 = scalar_lea.vmem %s1, 416
      %v779 = vld [vmem:[%s778] sm:$0xff]
      %v780 = vld [vmem:[%s778 + $0x8] sm:$0xff]
      %v781 = vld [vmem:[%s778 + $0x10] sm:$0xff]
      %v782 = vld [vmem:[%s778 + $0x18] sm:$0xff]
      %v787 = vunpack.c.l.b16 %v779
      %v788 = vunpack.c.h.b16 %v779
      %v789 = vunpack.c.l.b16 %v780
      %v790 = vunpack.c.h.b16 %v780
      %v791 = vunpack.c.l.b16 %v781
      %v792 = vunpack.c.h.b16 %v781
      %v793 = vunpack.c.l.b16 %v782
      %v794 = vunpack.c.h.b16 %v782
      %v795 = vpack.c.b16 %v789, %v787
      %v796 = vpack.c.b16 %v790, %v788
      %v797 = vpack.c.b16 %v793, %v791
      %v798 = vpack.c.b16 %v794, %v792
      %803 = vmatprep.subr.bf16.mxu0 0
      %804 = vmatpush1.bf16.msra.mxu0 %v418
      %805 = vmatprep.subr.bf16.mxu0 0
      %806 = vmatpush1.bf16.msra.mxu0 %v416
      %807 = vmatprep.subr.bf16.mxu0 0
      %808 = vmatpush1.bf16.msra.mxu0 %v414
      %809 = vmatprep.subr.bf16.mxu0 0
      %810 = vmatpush1.bf16.msra.mxu0 %v412
      %811 = vmatprep.subr.bf16.mxu0 0
      %812 = vmatpush1.bf16.msra.mxu0 %v410
      %813 = vmatprep.subr.bf16.mxu0 0
      %814 = vmatpush1.bf16.msra.mxu0 %v408
      %815 = vmatprep.subr.bf16.mxu0 0
      %816 = vmatpush1.bf16.msra.mxu0 %v406
      %817 = vmatprep.subr.bf16.mxu0 0
      %818 = vmatpush1.bf16.msra.mxu0 %v404
      %819 = vmatprep.subr.bf16.mxu0 0
      %820 = vmatpush2.bf16.msra.mxu0 %v434
      %821 = vmatprep.subr.bf16.mxu0 0
      %822 = vmatpush2.bf16.msra.mxu0 %v432
      %823 = vmatprep.subr.bf16.mxu0 0
      %824 = vmatpush2.bf16.msra.mxu0 %v430
      %825 = vmatprep.subr.bf16.mxu0 0
      %826 = vmatpush2.bf16.msra.mxu0 %v428
      %827 = vmatprep.subr.bf16.mxu0 0
      %828 = vmatpush2.bf16.msra.mxu0 %v426
      %829 = vmatprep.subr.bf16.mxu0 0
      %830 = vmatpush2.bf16.msra.mxu0 %v424
      %831 = vmatprep.subr.bf16.mxu0 0
      %832 = vmatpush2.bf16.msra.mxu0 %v422
      %833 = vmatprep.subr.bf16.mxu0 0
      %834 = vmatpush2.bf16.msra.mxu0 %v420
      %835 = vmatprep.mubr.bf16.mxu0 %v796
      %836 = vmatmul.mubr.bf16.gmra.mxu0 %v795
      %v837 = vpop.f32.mrf.mxu0
      %v838 = vadd.f32 0.0, %v837
      %v839 = vpop.f32.mrf.mxu0
      %v840 = vpop.f32.mrf.mxu0
      %v841 = vadd.f32 0.0, %v840
      %v842 = vpop.f32.mrf.mxu0
      %843 = vmatprep.mubr.bf16.mxu0 %v798
      %844 = vmatmul.mubr.bf16.gmra.mxu0 %v797
      %v845 = vpop.f32.mrf.mxu0
      %v846 = vadd.f32 0.0, %v845
      %v847 = vpop.f32.mrf.mxu0
      %v848 = vpop.f32.mrf.mxu0
      %v849 = vadd.f32 0.0, %v848
      %v850 = vpop.f32.mrf.mxu0
      %851 = vdwg.mxu0
      %v856 = vunpack.c.l.b16 %v774
      %v857 = vunpack.c.h.b16 %v774
      %v858 = vunpack.c.l.b16 %v775
      %v859 = vunpack.c.h.b16 %v775
      %v860 = vunpack.c.l.b16 %v776
      %v861 = vunpack.c.h.b16 %v776
      %v862 = vunpack.c.l.b16 %v777
      %v863 = vunpack.c.h.b16 %v777
      %v864 = vpack.c.b16 %v858, %v856
      %v865 = vpack.c.b16 %v859, %v857
      %v866 = vpack.c.b16 %v862, %v860
      %v867 = vpack.c.b16 %v863, %v861
      %872 = vmatprep.subr.bf16.mxu0 0
      %873 = vmatpush1.bf16.msra.mxu0 %v299
      %874 = vmatprep.subr.bf16.mxu0 0
      %875 = vmatpush1.bf16.msra.mxu0 %v298
      %876 = vmatprep.subr.bf16.mxu0 0
      %877 = vmatpush1.bf16.msra.mxu0 %v297
      %878 = vmatprep.subr.bf16.mxu0 0
      %879 = vmatpush1.bf16.msra.mxu0 %v296
      %880 = vmatprep.subr.bf16.mxu0 0
      %881 = vmatpush1.bf16.msra.mxu0 %v295
      %882 = vmatprep.subr.bf16.mxu0 0
      %883 = vmatpush1.bf16.msra.mxu0 %v294
      %884 = vmatprep.subr.bf16.mxu0 0
      %885 = vmatpush1.bf16.msra.mxu0 %v293
      %886 = vmatprep.subr.bf16.mxu0 0
      %887 = vmatpush1.bf16.msra.mxu0 %v292
      %888 = vmatprep.subr.bf16.mxu0 0
      %889 = vmatpush2.bf16.msra.mxu0 %v307
      %890 = vmatprep.subr.bf16.mxu0 0
      %891 = vmatpush2.bf16.msra.mxu0 %v306
      %892 = vmatprep.subr.bf16.mxu0 0
      %893 = vmatpush2.bf16.msra.mxu0 %v305
      %894 = vmatprep.subr.bf16.mxu0 0
      %895 = vmatpush2.bf16.msra.mxu0 %v304
      %896 = vmatprep.subr.bf16.mxu0 0
      %897 = vmatpush2.bf16.msra.mxu0 %v303
      %898 = vmatprep.subr.bf16.mxu0 0
      %899 = vmatpush2.bf16.msra.mxu0 %v302
      %900 = vmatprep.subr.bf16.mxu0 0
      %901 = vmatpush2.bf16.msra.mxu0 %v301
      %902 = vmatprep.subr.bf16.mxu0 0
      %903 = vmatpush2.bf16.msra.mxu0 %v300
      %904 = vmatprep.mubr.bf16.mxu0 %v865
      %905 = vmatmul.mubr.bf16.gmra.mxu0 %v864
      %v906 = vpop.f32.mrf.mxu0
      %v907 = vadd.f32 %v838, %v906
      %v908 = vpop.f32.mrf.mxu0
      %v909 = vpop.f32.mrf.mxu0
      %v910 = vadd.f32 %v841, %v909
      %v911 = vpop.f32.mrf.mxu0
      %912 = vmatprep.mubr.bf16.mxu0 %v867
      %913 = vmatmul.mubr.bf16.gmra.mxu0 %v866
      %v914 = vpop.f32.mrf.mxu0
      %v915 = vadd.f32 %v846, %v914
      %v916 = vpop.f32.mrf.mxu0
      %v917 = vpop.f32.mrf.mxu0
      %v918 = vadd.f32 %v849, %v917
      %v919 = vpop.f32.mrf.mxu0
      %920 = vdwg.mxu0
      %s921 = scalar_lea.vmem %s1, 448
      %v922 = vld [vmem:[%s921] sm:$0xff]
      %v923 = vld [vmem:[%s921 + $0x8] sm:$0xff]
      %v924 = vld [vmem:[%s921 + $0x10] sm:$0xff]
      %v925 = vld [vmem:[%s921 + $0x18] sm:$0xff]
      %v930 = vunpack.c.l.b16 %v922
      %v931 = vunpack.c.h.b16 %v922
      %v932 = vunpack.c.l.b16 %v923
      %v933 = vunpack.c.h.b16 %v923
      %v934 = vunpack.c.l.b16 %v924
      %v935 = vunpack.c.h.b16 %v924
      %v936 = vunpack.c.l.b16 %v925
      %v937 = vunpack.c.h.b16 %v925
      %v938 = vpack.c.b16 %v932, %v930
      %v939 = vpack.c.b16 %v933, %v931
      %v940 = vpack.c.b16 %v936, %v934
      %v941 = vpack.c.b16 %v937, %v935
      %946 = vmatprep.subr.bf16.mxu0 0
      %947 = vmatpush1.bf16.msra.mxu0 %v618
      %948 = vmatprep.subr.bf16.mxu0 0
      %949 = vmatpush1.bf16.msra.mxu0 %v616
      %950 = vmatprep.subr.bf16.mxu0 0
      %951 = vmatpush1.bf16.msra.mxu0 %v614
      %952 = vmatprep.subr.bf16.mxu0 0
      %953 = vmatpush1.bf16.msra.mxu0 %v612
      %954 = vmatprep.subr.bf16.mxu0 0
      %955 = vmatpush1.bf16.msra.mxu0 %v610
      %956 = vmatprep.subr.bf16.mxu0 0
      %957 = vmatpush1.bf16.msra.mxu0 %v608
      %958 = vmatprep.subr.bf16.mxu0 0
      %959 = vmatpush1.bf16.msra.mxu0 %v606
      %960 = vmatprep.subr.bf16.mxu0 0
      %961 = vmatpush1.bf16.msra.mxu0 %v604
      %962 = vmatprep.subr.bf16.mxu0 0
      %963 = vmatpush2.bf16.msra.mxu0 %v634
      %964 = vmatprep.subr.bf16.mxu0 0
      %965 = vmatpush2.bf16.msra.mxu0 %v632
      %966 = vmatprep.subr.bf16.mxu0 0
      %967 = vmatpush2.bf16.msra.mxu0 %v630
      %968 = vmatprep.subr.bf16.mxu0 0
      %969 = vmatpush2.bf16.msra.mxu0 %v628
      %970 = vmatprep.subr.bf16.mxu0 0
      %971 = vmatpush2.bf16.msra.mxu0 %v626
      %972 = vmatprep.subr.bf16.mxu0 0
      %973 = vmatpush2.bf16.msra.mxu0 %v624
      %974 = vmatprep.subr.bf16.mxu0 0
      %975 = vmatpush2.bf16.msra.mxu0 %v622
      %976 = vmatprep.subr.bf16.mxu0 0
      %977 = vmatpush2.bf16.msra.mxu0 %v620
      %978 = vmatprep.mubr.bf16.mxu0 %v939
      %979 = vmatmul.mubr.bf16.gmra.mxu0 %v938
      %v980 = vpop.f32.mrf.mxu0
      %v981 = vadd.f32 0.0, %v980
      %v982 = vpop.f32.mrf.mxu0
      %v983 = vpop.f32.mrf.mxu0
      %v984 = vadd.f32 0.0, %v983
      %v985 = vpop.f32.mrf.mxu0
      %986 = vmatprep.mubr.bf16.mxu0 %v941
      %987 = vmatmul.mubr.bf16.gmra.mxu0 %v940
      %v988 = vpop.f32.mrf.mxu0
      %v989 = vadd.f32 0.0, %v988
      %v990 = vpop.f32.mrf.mxu0
      %v991 = vpop.f32.mrf.mxu0
      %v992 = vadd.f32 0.0, %v991
      %v993 = vpop.f32.mrf.mxu0
      %994 = vdwg.mxu0
      %v995 = vadd.f32 %v907, %v981
      %v996 = vadd.f32 %v910, %v984
      %v997 = vadd.f32 %v915, %v989
      %v998 = vadd.f32 %v918, %v992
      %s999 = scalar_lea.vmem %s1, 480
      %v1000 = vld [vmem:[%s999] sm:$0xff]
      %v1001 = vld [vmem:[%s999 + $0x8] sm:$0xff]
      %v1002 = vld [vmem:[%s999 + $0x10] sm:$0xff]
      %v1003 = vld [vmem:[%s999 + $0x18] sm:$0xff]
      %v1008 = vunpack.c.l.b16 %v1000
      %v1009 = vunpack.c.h.b16 %v1000
      %v1010 = vunpack.c.l.b16 %v1001
      %v1011 = vunpack.c.h.b16 %v1001
      %v1012 = vunpack.c.l.b16 %v1002
      %v1013 = vunpack.c.h.b16 %v1002
      %v1014 = vunpack.c.l.b16 %v1003
      %v1015 = vunpack.c.h.b16 %v1003
      %v1016 = vpack.c.b16 %v1010, %v1008
      %v1017 = vpack.c.b16 %v1011, %v1009
      %v1018 = vpack.c.b16 %v1014, %v1012
      %v1019 = vpack.c.b16 %v1015, %v1013
      %1024 = vrot.lane.b32.xlu0 %v292, 117
      %v1025 = vpop.permute.xlu0 %1024
      %1026 = vrot.lane.b32.xlu0 %v293, 117
      %v1027 = vpop.permute.xlu0 %1026
      %1028 = vrot.lane.b32.xlu0 %v294, 117
      %v1029 = vpop.permute.xlu0 %1028
      %1030 = vrot.lane.b32.xlu0 %v295, 117
      %v1031 = vpop.permute.xlu0 %1030
      %1032 = vrot.lane.b32.xlu0 %v296, 117
      %v1033 = vpop.permute.xlu0 %1032
      %1034 = vrot.lane.b32.xlu0 %v297, 117
      %v1035 = vpop.permute.xlu0 %1034
      %1036 = vrot.lane.b32.xlu0 %v298, 117
      %v1037 = vpop.permute.xlu0 %1036
      %1038 = vrot.lane.b32.xlu0 %v299, 117
      %v1039 = vpop.permute.xlu0 %1038
      %1040 = vrot.lane.b32.xlu0 %v300, 117
      %v1041 = vpop.permute.xlu0 %1040
      %1042 = vrot.lane.b32.xlu0 %v301, 117
      %v1043 = vpop.permute.xlu0 %1042
      %1044 = vrot.lane.b32.xlu0 %v302, 117
      %v1045 = vpop.permute.xlu0 %1044
      %1046 = vrot.lane.b32.xlu0 %v303, 117
      %v1047 = vpop.permute.xlu0 %1046
      %1048 = vrot.lane.b32.xlu0 %v304, 117
      %v1049 = vpop.permute.xlu0 %1048
      %1050 = vrot.lane.b32.xlu0 %v305, 117
      %v1051 = vpop.permute.xlu0 %1050
      %1052 = vrot.lane.b32.xlu0 %v306, 117
      %v1053 = vpop.permute.xlu0 %1052
      %1054 = vrot.lane.b32.xlu0 %v307, 117
      %v1055 = vpop.permute.xlu0 %1054
      %1072 = vmatprep.subr.bf16.mxu0 0
      %1073 = vmatpush1.bf16.msra.mxu0 %v1039
      %1074 = vmatprep.subr.bf16.mxu0 0
      %1075 = vmatpush1.bf16.msra.mxu0 %v1037
      %1076 = vmatprep.subr.bf16.mxu0 0
      %1077 = vmatpush1.bf16.msra.mxu0 %v1035
      %1078 = vmatprep.subr.bf16.mxu0 0
      %1079 = vmatpush1.bf16.msra.mxu0 %v1033
      %1080 = vmatprep.subr.bf16.mxu0 0
      %1081 = vmatpush1.bf16.msra.mxu0 %v1031
      %1082 = vmatprep.subr.bf16.mxu0 0
      %1083 = vmatpush1.bf16.msra.mxu0 %v1029
      %1084 = vmatprep.subr.bf16.mxu0 0
      %1085 = vmatpush1.bf16.msra.mxu0 %v1027
      %1086 = vmatprep.subr.bf16.mxu0 0
      %1087 = vmatpush1.bf16.msra.mxu0 %v1025
      %1088 = vmatprep.subr.bf16.mxu0 0
      %1089 = vmatpush2.bf16.msra.mxu0 %v1055
      %1090 = vmatprep.subr.bf16.mxu0 0
      %1091 = vmatpush2.bf16.msra.mxu0 %v1053
      %1092 = vmatprep.subr.bf16.mxu0 0
      %1093 = vmatpush2.bf16.msra.mxu0 %v1051
      %1094 = vmatprep.subr.bf16.mxu0 0
      %1095 = vmatpush2.bf16.msra.mxu0 %v1049
      %1096 = vmatprep.subr.bf16.mxu0 0
      %1097 = vmatpush2.bf16.msra.mxu0 %v1047
      %1098 = vmatprep.subr.bf16.mxu0 0
      %1099 = vmatpush2.bf16.msra.mxu0 %v1045
      %1100 = vmatprep.subr.bf16.mxu0 0
      %1101 = vmatpush2.bf16.msra.mxu0 %v1043
      %1102 = vmatprep.subr.bf16.mxu0 0
      %1103 = vmatpush2.bf16.msra.mxu0 %v1041
      %1104 = vmatprep.mubr.bf16.mxu0 %v1017
      %1105 = vmatmul.mubr.bf16.gmra.mxu0 %v1016
      %v1106 = vpop.f32.mrf.mxu0
      %v1107 = vadd.f32 0.0, %v1106
      %v1108 = vpop.f32.mrf.mxu0
      %v1109 = vpop.f32.mrf.mxu0
      %v1110 = vadd.f32 0.0, %v1109
      %v1111 = vpop.f32.mrf.mxu0
      %1112 = vmatprep.mubr.bf16.mxu0 %v1019
      %1113 = vmatmul.mubr.bf16.gmra.mxu0 %v1018
      %v1114 = vpop.f32.mrf.mxu0
      %v1115 = vadd.f32 0.0, %v1114
      %v1116 = vpop.f32.mrf.mxu0
      %v1117 = vpop.f32.mrf.mxu0
      %v1118 = vadd.f32 0.0, %v1117
      %v1119 = vpop.f32.mrf.mxu0
      %1120 = vdwg.mxu0
      %v1121 = vadd.f32 %v995, %v1107
      %v1122 = vadd.f32 %v996, %v1110
      %v1123 = vadd.f32 %v997, %v1115
      %v1124 = vadd.f32 %v998, %v1118
      %v1125 = vmax.f32 %v769, %v1121
      %v1126 = vmax.f32 %v770, %v1122
      %v1127 = vmax.f32 %v771, %v1123
      %v1128 = vmax.f32 %v772, %v1124
      %v1129 = vld [vmem:[%s2] sm:$0xff]
      %v1130 = vld [vmem:[%s2 + $0x8] sm:$0xff]
      %v1131 = vld [vmem:[%s2 + $0x10] sm:$0xff]
      %v1132 = vld [vmem:[%s2 + $0x18] sm:$0xff]
      %1134 = vset.pattern.permute.xlu0 0
      %1135 = vperm.xlu0 %1134, %v1129
      %v1136 = vpop.permute.xlu0 %1135
      %1139 = vset.pattern.permute.xlu0 0
      %1140 = vperm.xlu0 %1139, %v1130
      %v1141 = vpop.permute.xlu0 %1140
      %1144 = vset.pattern.permute.xlu0 0
      %1145 = vperm.xlu0 %1144, %v1131
      %v1146 = vpop.permute.xlu0 %1145
      %1149 = vset.pattern.permute.xlu0 0
      %1150 = vperm.xlu0 %1149, %v1132
      %v1151 = vpop.permute.xlu0 %1150
      %v1153 = vadd.f32 %v1125, %v1136
      %v1154 = vadd.f32 %v1126, %v1141
      %v1155 = vadd.f32 %v1127, %v1146
      %v1156 = vadd.f32 %v1128, %v1151
      %v1157 = vmax.f32 %v1153, 0.0
      %v1158 = vmax.f32 %v1154, 0.0
      %v1159 = vmax.f32 %v1155, 0.0
      %v1160 = vmax.f32 %v1156, 0.0
      %v1161 = vpack.c.bf16 %v1158, %v1157
      %v1162 = vpack.c.bf16 %v1160, %v1159
      %v1165 = vunpack.c.l.b16 %v1161
      %v1166 = vunpack.c.h.b16 %v1161
      %v1167 = vunpack.c.l.b16 %v1162
      %v1168 = vunpack.c.h.b16 %v1162
      %v1169 = vpack.c.b16 %v1165, %v1165
      %v1170 = vpack.c.b16 %v1166, %v1166
      %v1171 = vpack.c.b16 %v1167, %v1167
      %v1172 = vpack.c.b16 %v1168, %v1168
      %vm1177 = vcmask 732160
      %1178 = vst.msk [vmem:[%s170] sm:$0xf] %vm1177, %v1169
      %1179 = vst.msk [vmem:[%s170 + $0x4] sm:$0xf] %vm1177, %v1170
      %1180 = vst.msk [vmem:[%s170 + $0x8] sm:$0xf] %vm1177, %v1171
      %1181 = vst.msk [vmem:[%s170 + $0xc] sm:$0xf] %vm1177, %v1172
      %p1182 = scmp.lt.s32.totalorder %s14, 1
      %s1183 = scalar_select %p1182, %s14, 1
      %s1184 = smul.addr %s1183, 4
      %s1185 = smul.addr %s1184, 4
      %s1186 = scalar_lea.vmem %s3, %s1185
      // Predicated region
      $region33: #{cnn_forward.4} parent=31 // pred_check
        %p1187 = pneg %p100
      $region34: #{cnn_forward.4} parent=31 // pred_check_branch
        %1189 = sbr.rel (%p1187) target = $region36
      $region35: #{cnn_forward.4} parent=31 // pred_region
        _
      $region36: #{cnn_forward.4} parent=31 // pred_fallthru
        _
    $region32: #{cnn_forward.4} parent=5 // pred_fallthru
      _
    %p1190 = scmp.le.s32.totalorder 2, %s9
    // Predicated region
    $region37: #{cnn_forward.4} parent=5 // pred_check
      %p1191 = pneg %p1190
    $region38: #{cnn_forward.4} parent=5 // pred_check_branch
      %1193 = sbr.rel (%p1191) target = $region40
    $region39: #{cnn_forward.4} parent=5 // pred_region
      %s1194 = ssub.s32 %s9, 2
      // Predicated region
      $region41: #{cnn_forward.4} parent=39 // pred_check
        %p1195 = pneg %p106
      $region42: #{cnn_forward.4} parent=39 // pred_check_branch
        %1197 = sbr.rel (%p1195) target = $region44
      $region43: #{cnn_forward.4} parent=39 // pred_region
        %p1198 = scmp.lt.s32.totalorder %s15, 1
        %s1199 = scalar_select %p1198, %s15, 1
        %s1200 = smul.addr %s1199, 4
        %s1201 = smul.addr %s1200, 4
        %s1202 = scalar_lea.vmem %s3, %s1201
      $region44: #{cnn_forward.4} parent=39 // pred_fallthru
        _
    $region40: #{cnn_forward.4} parent=5 // pred_fallthru
      _
  $region6: #{cnn_forward.4} parent=0 // loop_footer
    %s13 = sadd.s32 1, %s9
  $region7: #{cnn_forward.4} parent=0 // loop_footer_branch
    %8 = sbr.rel target = $region3
  $region8: #{cnn_forward.4} parent=0 // loop_exit
    _

// kernel: cnn_forward.5
$region0: #{cnn_forward.5}
  #allocation0 [shape = 'u32[]', space=smem, size = 0x4, offset = 0x4, fixed_abs, tag = 'smem constant byte address 0x4 - core index']
  #allocation1 [shape = 'u32[144,128]{1,0:T(1,128)}', space=vmem, size = 0x12000, scoped, tag = 'internal scratch']
  %s0 = inlined_call_operand.vmem [shape: bf16[2,2880], index: 0, kind: input, shape index: {}]
  %s1 = inlined_call_operand.vmem [shape: bf16[2880,256], index: 1, kind: input, shape index: {}]
  %s2 = inlined_call_operand.vmem [shape: f32[1,256], index: 2, kind: input, shape index: {}]
  %s3 = inlined_call_operand.vmem [shape: bf16[256,2], index: 3, kind: input, shape index: {}]
  %s4 = inlined_call_operand.vmem [shape: f32[2,2,2], index: 4, kind: output, shape index: {}]
  %s5 = sld [smem:[#allocation0]]
  $region90: #{cnn_forward.5} parent=0
    _
  %s7 = ssub.s32 1, %s5
  %s8 = scalar_select 0, %s7, %s5
  $region1: #{cnn_forward.5} parent=0
    #allocation2 [shape = 'u8[1474560]{0}', space=vmem, size = 0x168000, scoped, tag = 'input window, operand 1']
    loop: start=0, step=1, limit=4
    $region2: #{cnn_forward.5} parent=1 // loop_pre_header
      _
    $region3: #{cnn_forward.5} parent=1 // loop_header
      %s10 = sphi 0, %s14
      %p11 = scmp.ge.s32.totalorder %s10, 4
      %s18 = sphi 0, %s18
      %s20 = sphi 0, %s18
      %s21 = sphi 0, %s20
      %s35 = sphi 0, %s21
      %s41 = sphi 0, %s43
      %s44 = sphi 0, %s41
      %s45 = sphi 0, %s44
      %s61 = sphi 0, %s45
      %s67 = sphi 0, %s69
      %s70 = sphi 0, %s67
      %s71 = sphi 0, %s70
      %s87 = sphi 0, %s71
      %s93 = sphi 0, %s95
      %s96 = sphi 0, %s93
      %s97 = sphi 0, %s96
      %s113 = sphi 0, %s97
      %s119 = sphi 0, %s121
      %s122 = sphi 0, %s119
      %s123 = sphi 0, %s122
      %s139 = sphi 0, %s123
    $region4: #{cnn_forward.5} parent=1 // loop_header_branch
      %13 = sbr.rel (%p11) target = $region8
    $region5: #{cnn_forward.5} parent=1 // loop_body
      %s15 = ssub.s32 %s10, 1
      %s16 = ssub.s32 %s10, 2
      %s17 = sadd.s32 %s10, 1
      %s19 = sadd.s32 %s18, 1
      %p22 = scmp.eq.s32.totalorder %s10, 1
      %p23 = scmp.ne.s32.totalorder %s18, %s20
      %p24 = scmp.eq.s32.totalorder %s10, 0
      %p25 = por %p23, %p24
      %p26 = scmp.ne.s32.totalorder %s18, %s20
      %p27 = scmp.eq.s32.totalorder %s15, 1
      %p28 = por %p26, %p27
      %p29 = scmp.ne.s32.totalorder %s20, %s21
      %p30 = scmp.eq.s32.totalorder %s15, 0
      %p31 = por %p29, %p30
      %p32 = scmp.ne.s32.totalorder %s20, %s21
      %p33 = scmp.eq.s32.totalorder %s16, 1
      %p34 = por %p32, %p33
      %p36 = scmp.ne.s32.totalorder %s21, %s35
      %p37 = scmp.eq.s32.totalorder %s16, 0
      %p38 = por %p36, %p37
      %s39 = ssub.s32 %s10, %s17
      %p40 = scmp.eq.s32.totalorder %s39, 0
      %s42 = sadd.s32 %s41, 1
      %s43 = scalar_select %p40, %s41, %s42
      %p46 = pneg %p40
      %p47 = scmp.eq.s32.totalorder %s10, 1
      %p48 = por %p46, %p47
      %p49 = scmp.ne.s32.totalorder %s41, %s44
      %p50 = scmp.eq.s32.totalorder %s10, 0
      %p51 = por %p49, %p50
      %p52 = scmp.ne.s32.totalorder %s41, %s44
      %p53 = scmp.eq.s32.totalorder %s15, 1
      %p54 = por %p52, %p53
      %p55 = scmp.ne.s32.totalorder %s44, %s45
      %p56 = scmp.eq.s32.totalorder %s15, 0
      %p57 = por %p55, %p56
      %p58 = scmp.ne.s32.totalorder %s44, %s45
      %p59 = scmp.eq.s32.totalorder %s16, 1
      %p60 = por %p58, %p59
      %p62 = scmp.ne.s32.totalorder %s45, %s61
      %p63 = scmp.eq.s32.totalorder %s16, 0
      %p64 = por %p62, %p63
      %s65 = ssub.s32 %s10, %s17
      %p66 = scmp.eq.s32.totalorder %s65, 0
      %s68 = sadd.s32 %s67, 1
      %s69 = scalar_select %p66, %s67, %s68
      %p72 = pneg %p66
      %p73 = scmp.eq.s32.totalorder %s10, 1
      %p74 = por %p72, %p73
      %p75 = scmp.ne.s32.totalorder %s67, %s70
      %p76 = scmp.eq.s32.totalorder %s10, 0
      %p77 = por %p75, %p76
      %p78 = scmp.ne.s32.totalorder %s67, %s70
      %p79 = scmp.eq.s32.totalorder %s15, 1
      %p80 = por %p78, %p79
      %p81 = scmp.ne.s32.totalorder %s70, %s71
      %p82 = scmp.eq.s32.totalorder %s15, 0
      %p83 = por %p81, %p82
      %p84 = scmp.ne.s32.totalorder %s70, %s71
      %p85 = scmp.eq.s32.totalorder %s16, 1
      %p86 = por %p84, %p85
      %p88 = scmp.ne.s32.totalorder %s71, %s87
      %p89 = scmp.eq.s32.totalorder %s16, 0
      %p90 = por %p88, %p89
      %s91 = ssub.s32 %s10, %s17
      %p92 = scmp.eq.s32.totalorder %s91, 0
      %s94 = sadd.s32 %s93, 1
      %s95 = scalar_select %p92, %s93, %s94
      %p98 = pneg %p92
      %p99 = scmp.eq.s32.totalorder %s10, 1
      %p100 = por %p98, %p99
      %p101 = scmp.ne.s32.totalorder %s93, %s96
      %p102 = scmp.eq.s32.totalorder %s10, 0
      %p103 = por %p101, %p102
      %p104 = scmp.ne.s32.totalorder %s93, %s96
      %p105 = scmp.eq.s32.totalorder %s15, 1
      %p106 = por %p104, %p105
      %p107 = scmp.ne.s32.totalorder %s96, %s97
      %p108 = scmp.eq.s32.totalorder %s15, 0
      %p109 = por %p107, %p108
      %p110 = scmp.ne.s32.totalorder %s96, %s97
      %p111 = scmp.eq.s32.totalorder %s16, 1
      %p112 = por %p110, %p111
      %p114 = scmp.ne.s32.totalorder %s97, %s113
      %p115 = scmp.eq.s32.totalorder %s16, 0
      %p116 = por %p114, %p115
      %s117 = ssub.s32 %s10, %s17
      %p118 = scmp.eq.s32.totalorder %s117, 0
      %s120 = sadd.s32 %s119, 1
      %s121 = scalar_select %p118, %s119, %s120
      %p124 = pneg %p118
      %p125 = scmp.eq.s32.totalorder %s10, 1
      %p126 = por %p124, %p125
      %p127 = scmp.ne.s32.totalorder %s119, %s122
      %p128 = scmp.eq.s32.totalorder %s10, 0
      %p129 = por %p127, %p128
      %p130 = scmp.ne.s32.totalorder %s119, %s122
      %p131 = scmp.eq.s32.totalorder %s15, 1
      %p132 = por %p130, %p131
      %p133 = scmp.ne.s32.totalorder %s122, %s123
      %p134 = scmp.eq.s32.totalorder %s15, 0
      %p135 = por %p133, %p134
      %p136 = scmp.ne.s32.totalorder %s122, %s123
      %p137 = scmp.eq.s32.totalorder %s16, 1
      %p138 = por %p136, %p137
      %p140 = scmp.ne.s32.totalorder %s123, %s139
      %p141 = scmp.eq.s32.totalorder %s16, 0
      %p142 = por %p140, %p141
      %p143 = scmp.le.s32.totalorder 1, %s10
      %p144 = scmp.lt.s32.totalorder %s10, 3
      %p145 = pnand %p143, %p144
      %p146 = pneg %p145
      // Predicated region
      $region9: #{cnn_forward.5} parent=5 // pred_check
        _
      $region10: #{cnn_forward.5} parent=5 // pred_check_branch
        %148 = sbr.rel (%p145) target = $region12
      $region11: #{cnn_forward.5} parent=5 // pred_region
        %s149 = ssub.s32 %s10, 1
        // Predicated region
        $region13: #{cnn_forward.5} parent=11 // pred_check
          %p150 = pneg %p31
        $region14: #{cnn_forward.5} parent=11 // pred_check_branch
          %152 = sbr.rel (%p150) target = $region16
        $region15: #{cnn_forward.5} parent=11 // pred_region
          _
        $region16: #{cnn_forward.5} parent=11 // pred_fallthru
          _
      $region12: #{cnn_forward.5} parent=5 // pred_fallthru
        _
      %p153 = scmp.lt.s32.totalorder %s10, 2
      // Predicated region
      $region17: #{cnn_forward.5} parent=5 // pred_check
        %p154 = pneg %p153
      $region18: #{cnn_forward.5} parent=5 // pred_check_branch
        %156 = sbr.rel (%p154) target = $region20
      $region19: #{cnn_forward.5} parent=5 // pred_region
        // Predicated region
        $region21: #{cnn_forward.5} parent=19 // pred_check
          %p157 = pneg %p51
        $region22: #{cnn_forward.5} parent=19 // pred_check_branch
          %159 = sbr.rel (%p157) target = $region24
        $region23: #{cnn_forward.5} parent=19 // pred_region
          %s160 = sand.u32 %s41, 1
          %s161 = sand.u32 %s41, 1
          %s162 = smul.addr %s161, 1440
          %s163 = scalar_lea.vmem [#allocation2], %s162
          %s164 = smul.addr %s10, 4
          %s165 = scalar_lea.vmem %s1, %s164
          // Predicated region
          $region25: #{cnn_forward.5} parent=23 // pred_check
            _
          $region26: #{cnn_forward.5} parent=23 // pred_check_branch
            %167 = sbr.rel (0) target = $region28
          $region27: #{cnn_forward.5} parent=23 // pred_region
            // Predicated region
            $region29: #{cnn_forward.5} parent=27 // pred_check
              _
            $region30: #{cnn_forward.5} parent=27 // pred_check_branch
              %169 = sbr.rel target = $region32
            $region31: #{cnn_forward.5} parent=27 // pred_region
              // Predicated region
              $region44: #{cnn_forward.5} parent=31 // pred_check
                _
              $region45: #{cnn_forward.5} parent=31 // pred_check_branch
                %903 = sbr.rel (0) target = $region47
              $region46: #{cnn_forward.5} parent=31 // pred_region
                loop: start=0, step=1, limit=1
                $region48: #{cnn_forward.5} parent=46 // loop_pre_header
                  _
                $region49: #{cnn_forward.5} parent=46 // loop_header
                  %s905 = sphi 0, %s909
                  %p906 = scmp.ge.s32.totalorder %s905, 1
                  %s910 = sphi %s165, %s165
                  %s911 = sphi %s163, %s163
                $region50: #{cnn_forward.5} parent=46 // loop_header_branch
                  %908 = sbr.rel (%p906) target = $region54
                $region51: #{cnn_forward.5} parent=46 // loop_body
                  _
                $region52: #{cnn_forward.5} parent=46 // loop_footer
                  %s909 = sadd.s32 1, %s905
                $region53: #{cnn_forward.5} parent=46 // loop_footer_branch
                  %904 = sbr.rel target = $region49
                $region54: #{cnn_forward.5} parent=46 // loop_exit
                  _
                %s913 = ssub.s32 16, 1
                loop: start=0, step=1, limit=1
                $region55: #{cnn_forward.5} parent=46 // loop_pre_header
                  _
                $region56: #{cnn_forward.5} parent=46 // loop_header
                  %s915 = sphi 0, %s919
                  %p916 = scmp.ge.s32.totalorder %s915, 1
                  %s920 = sphi %s165, %s165
                  %s921 = sphi %s163, %s163
                $region57: #{cnn_forward.5} parent=46 // loop_header_branch
                  %918 = sbr.rel (%p916) target = $region61
                $region58: #{cnn_forward.5} parent=46 // loop_body
                  %v922 = vld [vmem:[%s920] sm:%s913]
                  %923 = vst [vmem:[%s921] sm:%s913] %v922
                  %v924 = vld [vmem:[%s920 + $0x8] sm:%s913]
                  %925 = vst [vmem:[%s921 + $0x4] sm:%s913] %v924
                  %v926 = vld [vmem:[%s920 + $0x10] sm:%s913]
                  %927 = vst [vmem:[%s921 + $0x8] sm:%s913] %v926
                  %v928 = vld [vmem:[%s920 + $0x18] sm:%s913]
                  %929 = vst [vmem:[%s921 + $0xc] sm:%s913] %v928
                  %v930 = vld [vmem:[%s920 + $0x20] sm:%s913]
                  %931 = vst [vmem:[%s921 + $0x10] sm:%s913] %v930
                  %v932 = vld [vmem:[%s920 + $0x28] sm:%s913]
                  %933 = vst [vmem:[%s921 + $0x14] sm:%s913] %v932
                  %v934 = vld [vmem:[%s920 + $0x30] sm:%s913]
                  %935 = vst [vmem:[%s921 + $0x18] sm:%s913] %v934
                  %v936 = vld [vmem:[%s920 + $0x38] sm:%s913]
                  %937 = vst [vmem:[%s921 + $0x1c] sm:%s913] %v936
                  %v938 = vld [vmem:[%s920 + $0x40] sm:%s913]
                  %939 = vst [vmem:[%s921 + $0x20] sm:%s913] %v938
                  %v940 = vld [vmem:[%s920 + $0x48] sm:%s913]
                  %941 = vst [vmem:[%s921 + $0x24] sm:%s913] %v940
                  %v942 = vld [vmem:[%s920 + $0x50] sm:%s913]
                  %943 = vst [vmem:[%s921 + $0x28] sm:%s913] %v942
                  %v944 = vld [vmem:[%s920 + $0x58] sm:%s913]
                  %945 = vst [vmem:[%s921 + $0x2c] sm:%s913] %v944
                  %v946 = vld [vmem:[%s920 + $0x60] sm:%s913]
                  %947 = vst [vmem:[%s921 + $0x30] sm:%s913] %v946
                  %v948 = vld [vmem:[%s920 + $0x68] sm:%s913]
                  %949 = vst [vmem:[%s921 + $0x34] sm:%s913] %v948
                  %v950 = vld [vmem:[%s920 + $0x70] sm:%s913]
                  %951 = vst [vmem:[%s921 + $0x38] sm:%s913] %v950
                  %v952 = vld [vmem:[%s920 + $0x78] sm:%s913]
                  %953 = vst [vmem:[%s921 + $0x3c] sm:%s913] %v952
                  %v954 = vld [vmem:[%s920 + $0x80] sm:%s913]
                  %955 = vst [vmem:[%s921 + $0x40] sm:%s913] %v954
                  %v956 = vld [vmem:[%s920 + $0x88] sm:%s913]
                  %957 = vst [vmem:[%s921 + $0x44] sm:%s913] %v956
                  %v958 = vld [vmem:[%s920 + $0x90] sm:%s913]
                  %959 = vst [vmem:[%s921 + $0x48] sm:%s913] %v958
                  %v960 = vld [vmem:[%s920 + $0x98] sm:%s913]
                  %961 = vst [vmem:[%s921 + $0x4c] sm:%s913] %v960
                  %v962 = vld [vmem:[%s920 + $0xa0] sm:%s913]
                  %963 = vst [vmem:[%s921 + $0x50] sm:%s913] %v962
                  %v964 = vld [vmem:[%s920 + $0xa8] sm:%s913]
                  %965 = vst [vmem:[%s921 + $0x54] sm:%s913] %v964
                  %v966 = vld [vmem:[%s920 + $0xb0] sm:%s913]
                  %967 = vst [vmem:[%s921 + $0x58] sm:%s913] %v966
                  %v968 = vld [vmem:[%s920 + $0xb8] sm:%s913]
                  %969 = vst [vmem:[%s921 + $0x5c] sm:%s913] %v968
                  %v970 = vld [vmem:[%s920 + $0xc0] sm:%s913]
                  %971 = vst [vmem:[%s921 + $0x60] sm:%s913] %v970
                  %v972 = vld [vmem:[%s920 + $0xc8] sm:%s913]
                  %973 = vst [vmem:[%s921 + $0x64] sm:%s913] %v972
                  %v974 = vld [vmem:[%s920 + $0xd0] sm:%s913]
                  %975 = vst [vmem:[%s921 + $0x68] sm:%s913] %v974
                  %v976 = vld [vmem:[%s920 + $0xd8] sm:%s913]
                  %977 = vst [vmem:[%s921 + $0x6c] sm:%s913] %v976
                  %v978 = vld [vmem:[%s920 + $0xe0] sm:%s913]
                  %979 = vst [vmem:[%s921 + $0x70] sm:%s913] %v978
                  %v980 = vld [vmem:[%s920 + $0xe8] sm:%s913]
                  %981 = vst [vmem:[%s921 + $0x74] sm:%s913] %v980
                  %v982 = vld [vmem:[%s920 + $0xf0] sm:%s913]
                  %983 = vst [vmem:[%s921 + $0x78] sm:%s913] %v982
                  %v984 = vld [vmem:[%s920 + $0xf8] sm:%s913]
                  %985 = vst [vmem:[%s921 + $0x7c] sm:%s913] %v984
                  %v986 = vld [vmem:[%s920 + $0x100] sm:%s913]
                  %987 = vst [vmem:[%s921 + $0x80] sm:%s913] %v986
                  %v988 = vld [vmem:[%s920 + $0x108] sm:%s913]
                  %989 = vst [vmem:[%s921 + $0x84] sm:%s913] %v988
                  %v990 = vld [vmem:[%s920 + $0x110] sm:%s913]
                  %991 = vst [vmem:[%s921 + $0x88] sm:%s913] %v990
                  %v992 = vld [vmem:[%s920 + $0x118] sm:%s913]
                  %993 = vst [vmem:[%s921 + $0x8c] sm:%s913] %v992
                  %v994 = vld [vmem:[%s920 + $0x120] sm:%s913]
                  %995 = vst [vmem:[%s921 + $0x90] sm:%s913] %v994
                  %v996 = vld [vmem:[%s920 + $0x128] sm:%s913]
                  %997 = vst [vmem:[%s921 + $0x94] sm:%s913] %v996
                  %v998 = vld [vmem:[%s920 + $0x130] sm:%s913]
                  %999 = vst [vmem:[%s921 + $0x98] sm:%s913] %v998
                  %v1000 = vld [vmem:[%s920 + $0x138] sm:%s913]
                  %1001 = vst [vmem:[%s921 + $0x9c] sm:%s913] %v1000
                  %v1002 = vld [vmem:[%s920 + $0x140] sm:%s913]
                  %1003 = vst [vmem:[%s921 + $0xa0] sm:%s913] %v1002
                  %v1004 = vld [vmem:[%s920 + $0x148] sm:%s913]
                  %1005 = vst [vmem:[%s921 + $0xa4] sm:%s913] %v1004
                  %v1006 = vld [vmem:[%s920 + $0x150] sm:%s913]
                  %1007 = vst [vmem:[%s921 + $0xa8] sm:%s913] %v1006
                  %v1008 = vld [vmem:[%s920 + $0x158] sm:%s913]
                  %1009 = vst [vmem:[%s921 + $0xac] sm:%s913] %v1008
                  %v1010 = vld [vmem:[%s920 + $0x160] sm:%s913]
                  %1011 = vst [vmem:[%s921 + $0xb0] sm:%s913] %v1010
                  %v1012 = vld [vmem:[%s920 + $0x168] sm:%s913]
                  %1013 = vst [vmem:[%s921 + $0xb4] sm:%s913] %v1012
                  %v1014 = vld [vmem:[%s920 + $0x170] sm:%s913]
                  %1015 = vst [vmem:[%s921 + $0xb8] sm:%s913] %v1014
                  %v1016 = vld [vmem:[%s920 + $0x178] sm:%s913]
                  %1017 = vst [vmem:[%s921 + $0xbc] sm:%s913] %v1016
                  %v1018 = vld [vmem:[%s920 + $0x180] sm:%s913]
                  %1019 = vst [vmem:[%s921 + $0xc0] sm:%s913] %v1018
                  %v1020 = vld [vmem:[%s920 + $0x188] sm:%s913]
                  %1021 = vst [vmem:[%s921 + $0xc4] sm:%s913] %v1020
                  %v1022 = vld [vmem:[%s920 + $0x190] sm:%s913]
                  %1023 = vst [vmem:[%s921 + $0xc8] sm:%s913] %v1022
                  %v1024 = vld [vmem:[%s920 + $0x198] sm:%s913]
                  %1025 = vst [vmem:[%s921 + $0xcc] sm:%s913] %v1024
                  %v1026 = vld [vmem:[%s920 + $0x1a0] sm:%s913]
                  %1027 = vst [vmem:[%s921 + $0xd0] sm:%s913] %v1026
                  %v1028 = vld [vmem:[%s920 + $0x1a8] sm:%s913]
                  %1029 = vst [vmem:[%s921 + $0xd4] sm:%s913] %v1028
                  %v1030 = vld [vmem:[%s920 + $0x1b0] sm:%s913]
                  %1031 = vst [vmem:[%s921 + $0xd8] sm:%s913] %v1030
                  %v1032 = vld [vmem:[%s920 + $0x1b8] sm:%s913]
                  %1033 = vst [vmem:[%s921 + $0xdc] sm:%s913] %v1032
                  %v1034 = vld [vmem:[%s920 + $0x1c0] sm:%s913]
                  %1035 = vst [vmem:[%s921 + $0xe0] sm:%s913] %v1034
                  %v1036 = vld [vmem:[%s920 + $0x1c8] sm:%s913]
                  %1037 = vst [vmem:[%s921 + $0xe4] sm:%s913] %v1036
                  %v1038 = vld [vmem:[%s920 + $0x1d0] sm:%s913]
                  %1039 = vst [vmem:[%s921 + $0xe8] sm:%s913] %v1038
                  %v1040 = vld [vmem:[%s920 + $0x1d8] sm:%s913]
                  %1041 = vst [vmem:[%s921 + $0xec] sm:%s913] %v1040
                  %v1042 = vld [vmem:[%s920 + $0x1e0] sm:%s913]
                  %1043 = vst [vmem:[%s921 + $0xf0] sm:%s913] %v1042
                  %v1044 = vld [vmem:[%s920 + $0x1e8] sm:%s913]
                  %1045 = vst [vmem:[%s921 + $0xf4] sm:%s913] %v1044
                  %v1046 = vld [vmem:[%s920 + $0x1f0] sm:%s913]
                  %1047 = vst [vmem:[%s921 + $0xf8] sm:%s913] %v1046
                  %v1048 = vld [vmem:[%s920 + $0x1f8] sm:%s913]
                  %1049 = vst [vmem:[%s921 + $0xfc] sm:%s913] %v1048
                  %v1050 = vld [vmem:[%s920 + $0x200] sm:%s913]
                  %1051 = vst [vmem:[%s921 + $0x100] sm:%s913] %v1050
                  %v1052 = vld [vmem:[%s920 + $0x208] sm:%s913]
                  %1053 = vst [vmem:[%s921 + $0x104] sm:%s913] %v1052
                  %v1054 = vld [vmem:[%s920 + $0x210] sm:%s913]
                  %1055 = vst [vmem:[%s921 + $0x108] sm:%s913] %v1054
                  %v1056 = vld [vmem:[%s920 + $0x218] sm:%s913]
                  %1057 = vst [vmem:[%s921 + $0x10c] sm:%s913] %v1056
                  %v1058 = vld [vmem:[%s920 + $0x220] sm:%s913]
                  %1059 = vst [vmem:[%s921 + $0x110] sm:%s913] %v1058
                  %v1060 = vld [vmem:[%s920 + $0x228] sm:%s913]
                  %1061 = vst [vmem:[%s921 + $0x114] sm:%s913] %v1060
                  %v1062 = vld [vmem:[%s920 + $0x230] sm:%s913]
                  %1063 = vst [vmem:[%s921 + $0x118] sm:%s913] %v1062
                  %v1064 = vld [vmem:[%s920 + $0x238] sm:%s913]
                  %1065 = vst [vmem:[%s921 + $0x11c] sm:%s913] %v1064
                  %v1066 = vld [vmem:[%s920 + $0x240] sm:%s913]
                  %1067 = vst [vmem:[%s921 + $0x120] sm:%s913] %v1066
                  %v1068 = vld [vmem:[%s920 + $0x248] sm:%s913]
                  %1069 = vst [vmem:[%s921 + $0x124] sm:%s913] %v1068
                  %v1070 = vld [vmem:[%s920 + $0x250] sm:%s913]
                  %1071 = vst [vmem:[%s921 + $0x128] sm:%s913] %v1070
                  %v1072 = vld [vmem:[%s920 + $0x258] sm:%s913]
                  %1073 = vst [vmem:[%s921 + $0x12c] sm:%s913] %v1072
                  %v1074 = vld [vmem:[%s920 + $0x260] sm:%s913]
                  %1075 = vst [vmem:[%s921 + $0x130] sm:%s913] %v1074
                  %v1076 = vld [vmem:[%s920 + $0x268] sm:%s913]
                  %1077 = vst [vmem:[%s921 + $0x134] sm:%s913] %v1076
                  %v1078 = vld [vmem:[%s920 + $0x270] sm:%s913]
                  %1079 = vst [vmem:[%s921 + $0x138] sm:%s913] %v1078
                  %v1080 = vld [vmem:[%s920 + $0x278] sm:%s913]
                  %1081 = vst [vmem:[%s921 + $0x13c] sm:%s913] %v1080
                  %v1082 = vld [vmem:[%s920 + $0x280] sm:%s913]
                  %1083 = vst [vmem:[%s921 + $0x140] sm:%s913] %v1082
                  %v1084 = vld [vmem:[%s920 + $0x288] sm:%s913]
                  %1085 = vst [vmem:[%s921 + $0x144] sm:%s913] %v1084
                  %v1086 = vld [vmem:[%s920 + $0x290] sm:%s913]
                  %1087 = vst [vmem:[%s921 + $0x148] sm:%s913] %v1086
                  %v1088 = vld [vmem:[%s920 + $0x298] sm:%s913]
                  %1089 = vst [vmem:[%s921 + $0x14c] sm:%s913] %v1088
                  %v1090 = vld [vmem:[%s920 + $0x2a0] sm:%s913]
                  %1091 = vst [vmem:[%s921 + $0x150] sm:%s913] %v1090
                  %v1092 = vld [vmem:[%s920 + $0x2a8] sm:%s913]
                  %1093 = vst [vmem:[%s921 + $0x154] sm:%s913] %v1092
                  %v1094 = vld [vmem:[%s920 + $0x2b0] sm:%s913]
                  %1095 = vst [vmem:[%s921 + $0x158] sm:%s913] %v1094
                  %v1096 = vld [vmem:[%s920 + $0x2b8] sm:%s913]
                  %1097 = vst [vmem:[%s921 + $0x15c] sm:%s913] %v1096
                  %v1098 = vld [vmem:[%s920 + $0x2c0] sm:%s913]
                  %1099 = vst [vmem:[%s921 + $0x160] sm:%s913] %v1098
                  %v1100 = vld [vmem:[%s920 + $0x2c8] sm:%s913]
                  %1101 = vst [vmem:[%s921 + $0x164] sm:%s913] %v1100
                  %v1102 = vld [vmem:[%s920 + $0x2d0] sm:%s913]
                  %1103 = vst [vmem:[%s921 + $0x168] sm:%s913] %v1102
                  %v1104 = vld [vmem:[%s920 + $0x2d8] sm:%s913]
                  %1105 = vst [vmem:[%s921 + $0x16c] sm:%s913] %v1104
                  %v1106 = vld [vmem:[%s920 + $0x2e0] sm:%s913]
                  %1107 = vst [vmem:[%s921 + $0x170] sm:%s913] %v1106
                  %v1108 = vld [vmem:[%s920 + $0x2e8] sm:%s913]
                  %1109 = vst [vmem:[%s921 + $0x174] sm:%s913] %v1108
                  %v1110 = vld [vmem:[%s920 + $0x2f0] sm:%s913]
                  %1111 = vst [vmem:[%s921 + $0x178] sm:%s913] %v1110
                  %v1112 = vld [vmem:[%s920 + $0x2f8] sm:%s913]
                  %1113 = vst [vmem:[%s921 + $0x17c] sm:%s913] %v1112
                  %v1114 = vld [vmem:[%s920 + $0x300] sm:%s913]
                  %1115 = vst [vmem:[%s921 + $0x180] sm:%s913] %v1114
                  %v1116 = vld [vmem:[%s920 + $0x308] sm:%s913]
                  %1117 = vst [vmem:[%s921 + $0x184] sm:%s913] %v1116
                  %v1118 = vld [vmem:[%s920 + $0x310] sm:%s913]
                  %1119 = vst [vmem:[%s921 + $0x188] sm:%s913] %v1118
                  %v1120 = vld [vmem:[%s920 + $0x318] sm:%s913]
                  %1121 = vst [vmem:[%s921 + $0x18c] sm:%s913] %v1120
                  %v1122 = vld [vmem:[%s920 + $0x320] sm:%s913]
                  %1123 = vst [vmem:[%s921 + $0x190] sm:%s913] %v1122
                  %v1124 = vld [vmem:[%s920 + $0x328] sm:%s913]
                  %1125 = vst [vmem:[%s921 + $0x194] sm:%s913] %v1124
                  %v1126 = vld [vmem:[%s920 + $0x330] sm:%s913]
                  %1127 = vst [vmem:[%s921 + $0x198] sm:%s913] %v1126
                  %v1128 = vld [vmem:[%s920 + $0x338] sm:%s913]
                  %1129 = vst [vmem:[%s921 + $0x19c] sm:%s913] %v1128
                  %v1130 = vld [vmem:[%s920 + $0x340] sm:%s913]
                  %1131 = vst [vmem:[%s921 + $0x1a0] sm:%s913] %v1130
                  %v1132 = vld [vmem:[%s920 + $0x348] sm:%s913]
                  %1133 = vst [vmem:[%s921 + $0x1a4] sm:%s913] %v1132
                  %v1134 = vld [vmem:[%s920 + $0x350] sm:%s913]
                  %1135 = vst [vmem:[%s921 + $0x1a8] sm:%s913] %v1134
                  %v1136 = vld [vmem:[%s920 + $0x358] sm:%s913]
                  %1137 = vst [vmem:[%s921 + $0x1ac] sm:%s913] %v1136
                  %v1138 = vld [vmem:[%s920 + $0x360] sm:%s913]
                  %1139 = vst [vmem:[%s921 + $0x1b0] sm:%s913] %v1138
                  %v1140 = vld [vmem:[%s920 + $0x368] sm:%s913]
                  %1141 = vst [vmem:[%s921 + $0x1b4] sm:%s913] %v1140
                  %v1142 = vld [vmem:[%s920 + $0x370] sm:%s913]
                  %1143 = vst [vmem:[%s921 + $0x1b8] sm:%s913] %v1142
                  %v1144 = vld [vmem:[%s920 + $0x378] sm:%s913]
                  %1145 = vst [vmem:[%s921 + $0x1bc] sm:%s913] %v1144
                  %v1146 = vld [vmem:[%s920 + $0x380] sm:%s913]
                  %1147 = vst [vmem:[%s921 + $0x1c0] sm:%s913] %v1146
                  %v1148 = vld [vmem:[%s920 + $0x388] sm:%s913]
                  %1149 = vst [vmem:[%s921 + $0x1c4] sm:%s913] %v1148
                  %v1150 = vld [vmem:[%s920 + $0x390] sm:%s913]
                  %1151 = vst [vmem:[%s921 + $0x1c8] sm:%s913] %v1150
                  %v1152 = vld [vmem:[%s920 + $0x398] sm:%s913]
                  %1153 = vst [vmem:[%s921 + $0x1cc] sm:%s913] %v1152
                  %v1154 = vld [vmem:[%s920 + $0x3a0] sm:%s913]
                  %1155 = vst [vmem:[%s921 + $0x1d0] sm:%s913] %v1154
                  %v1156 = vld [vmem:[%s920 + $0x3a8] sm:%s913]
                  %1157 = vst [vmem:[%s921 + $0x1d4] sm:%s913] %v1156
                  %v1158 = vld [vmem:[%s920 + $0x3b0] sm:%s913]
                  %1159 = vst [vmem:[%s921 + $0x1d8] sm:%s913] %v1158
                  %v1160 = vld [vmem:[%s920 + $0x3b8] sm:%s913]
                  %1161 = vst [vmem:[%s921 + $0x1dc] sm:%s913] %v1160
                  %v1162 = vld [vmem:[%s920 + $0x3c0] sm:%s913]
                  %1163 = vst [vmem:[%s921 + $0x1e0] sm:%s913] %v1162
                  %v1164 = vld [vmem:[%s920 + $0x3c8] sm:%s913]
                  %1165 = vst [vmem:[%s921 + $0x1e4] sm:%s913] %v1164
                  %v1166 = vld [vmem:[%s920 + $0x3d0] sm:%s913]
                  %1167 = vst [vmem:[%s921 + $0x1e8] sm:%s913] %v1166
                  %v1168 = vld [vmem:[%s920 + $0x3d8] sm:%s913]
                  %1169 = vst [vmem:[%s921 + $0x1ec] sm:%s913] %v1168
                  %v1170 = vld [vmem:[%s920 + $0x3e0] sm:%s913]
                  %1171 = vst [vmem:[%s921 + $0x1f0] sm:%s913] %v1170
                  %v1172 = vld [vmem:[%s920 + $0x3e8] sm:%s913]
                  %1173 = vst [vmem:[%s921 + $0x1f4] sm:%s913] %v1172
                  %v1174 = vld [vmem:[%s920 + $0x3f0] sm:%s913]
                  %1175 = vst [vmem:[%s921 + $0x1f8] sm:%s913] %v1174
                  %v1176 = vld [vmem:[%s920 + $0x3f8] sm:%s913]
                  %1177 = vst [vmem:[%s921 + $0x1fc] sm:%s913] %v1176
                  %v1178 = vld [vmem:[%s920 + $0x400] sm:%s913]
                  %1179 = vst [vmem:[%s921 + $0x200] sm:%s913] %v1178
                  %v1180 = vld [vmem:[%s920 + $0x408] sm:%s913]
                  %1181 = vst [vmem:[%s921 + $0x204] sm:%s913] %v1180
                  %v1182 = vld [vmem:[%s920 + $0x410] sm:%s913]
                  %1183 = vst [vmem:[%s921 + $0x208] sm:%s913] %v1182
                  %v1184 = vld [vmem:[%s920 + $0x418] sm:%s913]
                  %1185 = vst [vmem:[%s921 + $0x20c] sm:%s913] %v1184
                  %v1186 = vld [vmem:[%s920 + $0x420] sm:%s913]
                  %1187 = vst [vmem:[%s921 + $0x210] sm:%s913] %v1186
                  %v1188 = vld [vmem:[%s920 + $0x428] sm:%s913]
                  %1189 = vst [vmem:[%s921 + $0x214] sm:%s913] %v1188
                  %v1190 = vld [vmem:[%s920 + $0x430] sm:%s913]
                  %1191 = vst [vmem:[%s921 + $0x218] sm:%s913] %v1190
                  %v1192 = vld [vmem:[%s920 + $0x438] sm:%s913]
                  %1193 = vst [vmem:[%s921 + $0x21c] sm:%s913] %v1192
                  %v1194 = vld [vmem:[%s920 + $0x440] sm:%s913]
                  %1195 = vst [vmem:[%s921 + $0x220] sm:%s913] %v1194
                  %v1196 = vld [vmem:[%s920 + $0x448] sm:%s913]
                  %1197 = vst [vmem:[%s921 + $0x224] sm:%s913] %v1196
                  %v1198 = vld [vmem:[%s920 + $0x450] sm:%s913]
                  %1199 = vst [vmem:[%s921 + $0x228] sm:%s913] %v1198
                  %v1200 = vld [vmem:[%s920 + $0x458] sm:%s913]
                  %1201 = vst [vmem:[%s921 + $0x22c] sm:%s913] %v1200
                  %v1202 = vld [vmem:[%s920 + $0x460] sm:%s913]
                  %1203 = vst [vmem:[%s921 + $0x230] sm:%s913] %v1202
                  %v1204 = vld [vmem:[%s920 + $0x468] sm:%s913]
                  %1205 = vst [vmem:[%s921 + $0x234] sm:%s913] %v1204
                  %v1206 = vld [vmem:[%s920 + $0x470] sm:%s913]
                  %1207 = vst [vmem:[%s921 + $0x238] sm:%s913] %v1206
                  %v1208 = vld [vmem:[%s920 + $0x478] sm:%s913]
                  %1209 = vst [vmem:[%s921 + $0x23c] sm:%s913] %v1208
                  %v1210 = vld [vmem:[%s920 + $0x480] sm:%s913]
                  %1211 = vst [vmem:[%s921 + $0x240] sm:%s913] %v1210
                  %v1212 = vld [vmem:[%s920 + $0x488] sm:%s913]
                  %1213 = vst [vmem:[%s921 + $0x244] sm:%s913] %v1212
                  %v1214 = vld [vmem:[%s920 + $0x490] sm:%s913]
                  %1215 = vst [vmem:[%s921 + $0x248] sm:%s913] %v1214
                  %v1216 = vld [vmem:[%s920 + $0x498] sm:%s913]
                  %1217 = vst [vmem:[%s921 + $0x24c] sm:%s913] %v1216
                  %v1218 = vld [vmem:[%s920 + $0x4a0] sm:%s913]
                  %1219 = vst [vmem:[%s921 + $0x250] sm:%s913] %v1218
                  %v1220 = vld [vmem:[%s920 + $0x4a8] sm:%s913]
                  %1221 = vst [vmem:[%s921 + $0x254] sm:%s913] %v1220
                  %v1222 = vld [vmem:[%s920 + $0x4b0] sm:%s913]
                  %1223 = vst [vmem:[%s921 + $0x258] sm:%s913] %v1222
                  %v1224 = vld [vmem:[%s920 + $0x4b8] sm:%s913]
                  %1225 = vst [vmem:[%s921 + $0x25c] sm:%s913] %v1224
                  %v1226 = vld [vmem:[%s920 + $0x4c0] sm:%s913]
                  %1227 = vst [vmem:[%s921 + $0x260] sm:%s913] %v1226
                  %v1228 = vld [vmem:[%s920 + $0x4c8] sm:%s913]
                  %1229 = vst [vmem:[%s921 + $0x264] sm:%s913] %v1228
                  %v1230 = vld [vmem:[%s920 + $0x4d0] sm:%s913]
                  %1231 = vst [vmem:[%s921 + $0x268] sm:%s913] %v1230
                  %v1232 = vld [vmem:[%s920 + $0x4d8] sm:%s913]
                  %1233 = vst [vmem:[%s921 + $0x26c] sm:%s913] %v1232
                  %v1234 = vld [vmem:[%s920 + $0x4e0] sm:%s913]
                  %1235 = vst [vmem:[%s921 + $0x270] sm:%s913] %v1234
                  %v1236 = vld [vmem:[%s920 + $0x4e8] sm:%s913]
                  %1237 = vst [vmem:[%s921 + $0x274] sm:%s913] %v1236
                  %v1238 = vld [vmem:[%s920 + $0x4f0] sm:%s913]
                  %1239 = vst [vmem:[%s921 + $0x278] sm:%s913] %v1238
                  %v1240 = vld [vmem:[%s920 + $0x4f8] sm:%s913]
                  %1241 = vst [vmem:[%s921 + $0x27c] sm:%s913] %v1240
                  %v1242 = vld [vmem:[%s920 + $0x500] sm:%s913]
                  %1243 = vst [vmem:[%s921 + $0x280] sm:%s913] %v1242
                  %v1244 = vld [vmem:[%s920 + $0x508] sm:%s913]
                  %1245 = vst [vmem:[%s921 + $0x284] sm:%s913] %v1244
                  %v1246 = vld [vmem:[%s920 + $0x510] sm:%s913]
                  %1247 = vst [vmem:[%s921 + $0x288] sm:%s913] %v1246
                  %v1248 = vld [vmem:[%s920 + $0x518] sm:%s913]
                  %1249 = vst [vmem:[%s921 + $0x28c] sm:%s913] %v1248
                  %v1250 = vld [vmem:[%s920 + $0x520] sm:%s913]
                  %1251 = vst [vmem:[%s921 + $0x290] sm:%s913] %v1250
                  %v1252 = vld [vmem:[%s920 + $0x528] sm:%s913]
                  %1253 = vst [vmem:[%s921 + $0x294] sm:%s913] %v1252
                  %v1254 = vld [vmem:[%s920 + $0x530] sm:%s913]
                  %1255 = vst [vmem:[%s921 + $0x298] sm:%s913] %v1254
                  %v1256 = vld [vmem:[%s920 + $0x538] sm:%s913]
                  %1257 = vst [vmem:[%s921 + $0x29c] sm:%s913] %v1256
                  %v1258 = vld [vmem:[%s920 + $0x540] sm:%s913]
                  %1259 = vst [vmem:[%s921 + $0x2a0] sm:%s913] %v1258
                  %v1260 = vld [vmem:[%s920 + $0x548] sm:%s913]
                  %1261 = vst [vmem:[%s921 + $0x2a4] sm:%s913] %v1260
                  %v1262 = vld [vmem:[%s920 + $0x550] sm:%s913]
                  %1263 = vst [vmem:[%s921 + $0x2a8] sm:%s913] %v1262
                  %v1264 = vld [vmem:[%s920 + $0x558] sm:%s913]
                  %1265 = vst [vmem:[%s921 + $0x2ac] sm:%s913] %v1264
                  %v1266 = vld [vmem:[%s920 + $0x560] sm:%s913]
                  %1267 = vst [vmem:[%s921 + $0x2b0] sm:%s913] %v1266
                  %v1268 = vld [vmem:[%s920 + $0x568] sm:%s913]
                  %1269 = vst [vmem:[%s921 + $0x2b4] sm:%s913] %v1268
                  %v1270 = vld [vmem:[%s920 + $0x570] sm:%s913]
                  %1271 = vst [vmem:[%s921 + $0x2b8] sm:%s913] %v1270
                  %v1272 = vld [vmem:[%s920 + $0x578] sm:%s913]
                  %1273 = vst [vmem:[%s921 + $0x2bc] sm:%s913] %v1272
                  %v1274 = vld [vmem:[%s920 + $0x580] sm:%s913]
                  %1275 = vst [vmem:[%s921 + $0x2c0] sm:%s913] %v1274
                  %v1276 = vld [vmem:[%s920 + $0x588] sm:%s913]
                  %1277 = vst [vmem:[%s921 + $0x2c4] sm:%s913] %v1276
                  %v1278 = vld [vmem:[%s920 + $0x590] sm:%s913]
                  %1279 = vst [vmem:[%s921 + $0x2c8] sm:%s913] %v1278
                  %v1280 = vld [vmem:[%s920 + $0x598] sm:%s913]
                  %1281 = vst [vmem:[%s921 + $0x2cc] sm:%s913] %v1280
                  %v1282 = vld [vmem:[%s920 + $0x5a0] sm:%s913]
                  %1283 = vst [vmem:[%s921 + $0x2d0] sm:%s913] %v1282
                  %v1284 = vld [vmem:[%s920 + $0x5a8] sm:%s913]
                  %1285 = vst [vmem:[%s921 + $0x2d4] sm:%s913] %v1284
                  %v1286 = vld [vmem:[%s920 + $0x5b0] sm:%s913]
                  %1287 = vst [vmem:[%s921 + $0x2d8] sm:%s913] %v1286
                  %v1288 = vld [vmem:[%s920 + $0x5b8] sm:%s913]
                  %1289 = vst [vmem:[%s921 + $0x2dc] sm:%s913] %v1288
                  %v1290 = vld [vmem:[%s920 + $0x5c0] sm:%s913]
                  %1291 = vst [vmem:[%s921 + $0x2e0] sm:%s913] %v1290
                  %v1292 = vld [vmem:[%s920 + $0x5c8] sm:%s913]
                  %1293 = vst [vmem:[%s921 + $0x2e4] sm:%s913] %v1292
                  %v1294 = vld [vmem:[%s920 + $0x5d0] sm:%s913]
                  %1295 = vst [vmem:[%s921 + $0x2e8] sm:%s913] %v1294
                  %v1296 = vld [vmem:[%s920 + $0x5d8] sm:%s913]
                  %1297 = vst [vmem:[%s921 + $0x2ec] sm:%s913] %v1296
                  %v1298 = vld [vmem:[%s920 + $0x5e0] sm:%s913]
                  %1299 = vst [vmem:[%s921 + $0x2f0] sm:%s913] %v1298
                  %v1300 = vld [vmem:[%s920 + $0x5e8] sm:%s913]
                  %1301 = vst [vmem:[%s921 + $0x2f4] sm:%s913] %v1300
                  %v1302 = vld [vmem:[%s920 + $0x5f0] sm:%s913]
                  %1303 = vst [vmem:[%s921 + $0x2f8] sm:%s913] %v1302
                  %v1304 = vld [vmem:[%s920 + $0x5f8] sm:%s913]
                  %1305 = vst [vmem:[%s921 + $0x2fc] sm:%s913] %v1304
                  %v1306 = vld [vmem:[%s920 + $0x600] sm:%s913]
                  %1307 = vst [vmem:[%s921 + $0x300] sm:%s913] %v1306
                  %v1308 = vld [vmem:[%s920 + $0x608] sm:%s913]
                  %1309 = vst [vmem:[%s921 + $0x304] sm:%s913] %v1308
                  %v1310 = vld [vmem:[%s920 + $0x610] sm:%s913]
                  %1311 = vst [vmem:[%s921 + $0x308] sm:%s913] %v1310
                  %v1312 = vld [vmem:[%s920 + $0x618] sm:%s913]
                  %1313 = vst [vmem:[%s921 + $0x30c] sm:%s913] %v1312
                  %v1314 = vld [vmem:[%s920 + $0x620] sm:%s913]
                  %1315 = vst [vmem:[%s921 + $0x310] sm:%s913] %v1314
                  %v1316 = vld [vmem:[%s920 + $0x628] sm:%s913]
                  %1317 = vst [vmem:[%s921 + $0x314] sm:%s913] %v1316
                  %v1318 = vld [vmem:[%s920 + $0x630] sm:%s913]
                  %1319 = vst [vmem:[%s921 + $0x318] sm:%s913] %v1318
                  %v1320 = vld [vmem:[%s920 + $0x638] sm:%s913]
                  %1321 = vst [vmem:[%s921 + $0x31c] sm:%s913] %v1320
                  %v1322 = vld [vmem:[%s920 + $0x640] sm:%s913]
                  %1323 = vst [vmem:[%s921 + $0x320] sm:%s913] %v1322
                  %v1324 = vld [vmem:[%s920 + $0x648] sm:%s913]
                  %1325 = vst [vmem:[%s921 + $0x324] sm:%s913] %v1324
                  %v1326 = vld [vmem:[%s920 + $0x650] sm:%s913]
                  %1327 = vst [vmem:[%s921 + $0x328] sm:%s913] %v1326
                  %v1328 = vld [vmem:[%s920 + $0x658] sm:%s913]
                  %1329 = vst [vmem:[%s921 + $0x32c] sm:%s913] %v1328
                  %v1330 = vld [vmem:[%s920 + $0x660] sm:%s913]
                  %1331 = vst [vmem:[%s921 + $0x330] sm:%s913] %v1330
                  %v1332 = vld [vmem:[%s920 + $0x668] sm:%s913]
                  %1333 = vst [vmem:[%s921 + $0x334] sm:%s913] %v1332
                  %v1334 = vld [vmem:[%s920 + $0x670] sm:%s913]
                  %1335 = vst [vmem:[%s921 + $0x338] sm:%s913] %v1334
                  %v1336 = vld [vmem:[%s920 + $0x678] sm:%s913]
                  %1337 = vst [vmem:[%s921 + $0x33c] sm:%s913] %v1336
                  %v1338 = vld [vmem:[%s920 + $0x680] sm:%s913]
                  %1339 = vst [vmem:[%s921 + $0x340] sm:%s913] %v1338
                  %v1340 = vld [vmem:[%s920 + $0x688] sm:%s913]
                  %1341 = vst [vmem:[%s921 + $0x344] sm:%s913] %v1340
                  %v1342 = vld [vmem:[%s920 + $0x690] sm:%s913]
                  %1343 = vst [vmem:[%s921 + $0x348] sm:%s913] %v1342
                  %v1344 = vld [vmem:[%s920 + $0x698] sm:%s913]
                  %1345 = vst [vmem:[%s921 + $0x34c] sm:%s913] %v1344
                  %v1346 = vld [vmem:[%s920 + $0x6a0] sm:%s913]
                  %1347 = vst [vmem:[%s921 + $0x350] sm:%s913] %v1346
                  %v1348 = vld [vmem:[%s920 + $0x6a8] sm:%s913]
                  %1349 = vst [vmem:[%s921 + $0x354] sm:%s913] %v1348
                  %v1350 = vld [vmem:[%s920 + $0x6b0] sm:%s913]
                  %1351 = vst [vmem:[%s921 + $0x358] sm:%s913] %v1350
                  %v1352 = vld [vmem:[%s920 + $0x6b8] sm:%s913]
                  %1353 = vst [vmem:[%s921 + $0x35c] sm:%s913] %v1352
                  %v1354 = vld [vmem:[%s920 + $0x6c0] sm:%s913]
                  %1355 = vst [vmem:[%s921 + $0x360] sm:%s913] %v1354
                  %v1356 = vld [vmem:[%s920 + $0x6c8] sm:%s913]
                  %1357 = vst [vmem:[%s921 + $0x364] sm:%s913] %v1356
                  %v1358 = vld [vmem:[%s920 + $0x6d0] sm:%s913]
                  %1359 = vst [vmem:[%s921 + $0x368] sm:%s913] %v1358
                  %v1360 = vld [vmem:[%s920 + $0x6d8] sm:%s913]
                  %1361 = vst [vmem:[%s921 + $0x36c] sm:%s913] %v1360
                  %v1362 = vld [vmem:[%s920 + $0x6e0] sm:%s913]
                  %1363 = vst [vmem:[%s921 + $0x370] sm:%s913] %v1362
                  %v1364 = vld [vmem:[%s920 + $0x6e8] sm:%s913]
                  %1365 = vst [vmem:[%s921 + $0x374] sm:%s913] %v1364
                  %v1366 = vld [vmem:[%s920 + $0x6f0] sm:%s913]
                  %1367 = vst [vmem:[%s921 + $0x378] sm:%s913] %v1366
                  %v1368 = vld [vmem:[%s920 + $0x6f8] sm:%s913]
                  %1369 = vst [vmem:[%s921 + $0x37c] sm:%s913] %v1368
                  %v1370 = vld [vmem:[%s920 + $0x700] sm:%s913]
                  %1371 = vst [vmem:[%s921 + $0x380] sm:%s913] %v1370
                  %v1372 = vld [vmem:[%s920 + $0x708] sm:%s913]
                  %1373 = vst [vmem:[%s921 + $0x384] sm:%s913] %v1372
                  %v1374 = vld [vmem:[%s920 + $0x710] sm:%s913]
                  %1375 = vst [vmem:[%s921 + $0x388] sm:%s913] %v1374
                  %v1376 = vld [vmem:[%s920 + $0x718] sm:%s913]
                  %1377 = vst [vmem:[%s921 + $0x38c] sm:%s913] %v1376
                  %v1378 = vld [vmem:[%s920 + $0x720] sm:%s913]
                  %1379 = vst [vmem:[%s921 + $0x390] sm:%s913] %v1378
                  %v1380 = vld [vmem:[%s920 + $0x728] sm:%s913]
                  %1381 = vst [vmem:[%s921 + $0x394] sm:%s913] %v1380
                  %v1382 = vld [vmem:[%s920 + $0x730] sm:%s913]
                  %1383 = vst [vmem:[%s921 + $0x398] sm:%s913] %v1382
                  %v1384 = vld [vmem:[%s920 + $0x738] sm:%s913]
                  %1385 = vst [vmem:[%s921 + $0x39c] sm:%s913] %v1384
                  %v1386 = vld [vmem:[%s920 + $0x740] sm:%s913]
                  %1387 = vst [vmem:[%s921 + $0x3a0] sm:%s913] %v1386
                  %v1388 = vld [vmem:[%s920 + $0x748] sm:%s913]
                  %1389 = vst [vmem:[%s921 + $0x3a4] sm:%s913] %v1388
                  %v1390 = vld [vmem:[%s920 + $0x750] sm:%s913]
                  %1391 = vst [vmem:[%s921 + $0x3a8] sm:%s913] %v1390
                  %v1392 = vld [vmem:[%s920 + $0x758] sm:%s913]
                  %1393 = vst [vmem:[%s921 + $0x3ac] sm:%s913] %v1392
                  %v1394 = vld [vmem:[%s920 + $0x760] sm:%s913]
                  %1395 = vst [vmem:[%s921 + $0x3b0] sm:%s913] %v1394
                  %v1396 = vld [vmem:[%s920 + $0x768] sm:%s913]
                  %1397 = vst [vmem:[%s921 + $0x3b4] sm:%s913] %v1396
                  %v1398 = vld [vmem:[%s920 + $0x770] sm:%s913]
                  %1399 = vst [vmem:[%s921 + $0x3b8] sm:%s913] %v1398
                  %v1400 = vld [vmem:[%s920 + $0x778] sm:%s913]
                  %1401 = vst [vmem:[%s921 + $0x3bc] sm:%s913] %v1400
                  %v1402 = vld [vmem:[%s920 + $0x780] sm:%s913]
                  %1403 = vst [vmem:[%s921 + $0x3c0] sm:%s913] %v1402
                  %v1404 = vld [vmem:[%s920 + $0x788] sm:%s913]
                  %1405 = vst [vmem:[%s921 + $0x3c4] sm:%s913] %v1404
                  %v1406 = vld [vmem:[%s920 + $0x790] sm:%s913]
                  %1407 = vst [vmem:[%s921 + $0x3c8] sm:%s913] %v1406
                  %v1408 = vld [vmem:[%s920 + $0x798] sm:%s913]
                  %1409 = vst [vmem:[%s921 + $0x3cc] sm:%s913] %v1408
                  %v1410 = vld [vmem:[%s920 + $0x7a0] sm:%s913]
                  %1411 = vst [vmem:[%s921 + $0x3d0] sm:%s913] %v1410
                  %v1412 = vld [vmem:[%s920 + $0x7a8] sm:%s913]
                  %1413 = vst [vmem:[%s921 + $0x3d4] sm:%s913] %v1412
                  %v1414 = vld [vmem:[%s920 + $0x7b0] sm:%s913]
                  %1415 = vst [vmem:[%s921 + $0x3d8] sm:%s913] %v1414
                  %v1416 = vld [vmem:[%s920 + $0x7b8] sm:%s913]
                  %1417 = vst [vmem:[%s921 + $0x3dc] sm:%s913] %v1416
                  %v1418 = vld [vmem:[%s920 + $0x7c0] sm:%s913]
                  %1419 = vst [vmem:[%s921 + $0x3e0] sm:%s913] %v1418
                  %v1420 = vld [vmem:[%s920 + $0x7c8] sm:%s913]
                  %1421 = vst [vmem:[%s921 + $0x3e4] sm:%s913] %v1420
                  %v1422 = vld [vmem:[%s920 + $0x7d0] sm:%s913]
                  %1423 = vst [vmem:[%s921 + $0x3e8] sm:%s913] %v1422
                  %v1424 = vld [vmem:[%s920 + $0x7d8] sm:%s913]
                  %1425 = vst [vmem:[%s921 + $0x3ec] sm:%s913] %v1424
                  %v1426 = vld [vmem:[%s920 + $0x7e0] sm:%s913]
                  %1427 = vst [vmem:[%s921 + $0x3f0] sm:%s913] %v1426
                  %v1428 = vld [vmem:[%s920 + $0x7e8] sm:%s913]
                  %1429 = vst [vmem:[%s921 + $0x3f4] sm:%s913] %v1428
                  %v1430 = vld [vmem:[%s920 + $0x7f0] sm:%s913]
                  %1431 = vst [vmem:[%s921 + $0x3f8] sm:%s913] %v1430
                  %v1432 = vld [vmem:[%s920 + $0x7f8] sm:%s913]
                  %1433 = vst [vmem:[%s921 + $0x3fc] sm:%s913] %v1432
                  %v1434 = vld [vmem:[%s920 + $0x800] sm:%s913]
                  %1435 = vst [vmem:[%s921 + $0x400] sm:%s913] %v1434
                  %v1436 = vld [vmem:[%s920 + $0x808] sm:%s913]
                  %1437 = vst [vmem:[%s921 + $0x404] sm:%s913] %v1436
                  %v1438 = vld [vmem:[%s920 + $0x810] sm:%s913]
                  %1439 = vst [vmem:[%s921 + $0x408] sm:%s913] %v1438
                  %v1440 = vld [vmem:[%s920 + $0x818] sm:%s913]
                  %1441 = vst [vmem:[%s921 + $0x40c] sm:%s913] %v1440
                  %v1442 = vld [vmem:[%s920 + $0x820] sm:%s913]
                  %1443 = vst [vmem:[%s921 + $0x410] sm:%s913] %v1442
                  %v1444 = vld [vmem:[%s920 + $0x828] sm:%s913]
                  %1445 = vst [vmem:[%s921 + $0x414] sm:%s913] %v1444
                  %v1446 = vld [vmem:[%s920 + $0x830] sm:%s913]
                  %1447 = vst [vmem:[%s921 + $0x418] sm:%s913] %v1446
                  %v1448 = vld [vmem:[%s920 + $0x838] sm:%s913]
                  %1449 = vst [vmem:[%s921 + $0x41c] sm:%s913] %v1448
                  %v1450 = vld [vmem:[%s920 + $0x840] sm:%s913]
                  %1451 = vst [vmem:[%s921 + $0x420] sm:%s913] %v1450
                  %v1452 = vld [vmem:[%s920 + $0x848] sm:%s913]
                  %1453 = vst [vmem:[%s921 + $0x424] sm:%s913] %v1452
                  %v1454 = vld [vmem:[%s920 + $0x850] sm:%s913]
                  %1455 = vst [vmem:[%s921 + $0x428] sm:%s913] %v1454
                  %v1456 = vld [vmem:[%s920 + $0x858] sm:%s913]
                  %1457 = vst [vmem:[%s921 + $0x42c] sm:%s913] %v1456
                  %v1458 = vld [vmem:[%s920 + $0x860] sm:%s913]
                  %1459 = vst [vmem:[%s921 + $0x430] sm:%s913] %v1458
                  %v1460 = vld [vmem:[%s920 + $0x868] sm:%s913]
                  %1461 = vst [vmem:[%s921 + $0x434] sm:%s913] %v1460
                  %v1462 = vld [vmem:[%s920 + $0x870] sm:%s913]
                  %1463 = vst [vmem:[%s921 + $0x438] sm:%s913] %v1462
                  %v1464 = vld [vmem:[%s920 + $0x878] sm:%s913]
                  %1465 = vst [vmem:[%s921 + $0x43c] sm:%s913] %v1464
                  %v1466 = vld [vmem:[%s920 + $0x880] sm:%s913]
                  %1467 = vst [vmem:[%s921 + $0x440] sm:%s913] %v1466
                  %v1468 = vld [vmem:[%s920 + $0x888] sm:%s913]
                  %1469 = vst [vmem:[%s921 + $0x444] sm:%s913] %v1468
                  %v1470 = vld [vmem:[%s920 + $0x890] sm:%s913]
                  %1471 = vst [vmem:[%s921 + $0x448] sm:%s913] %v1470
                  %v1472 = vld [vmem:[%s920 + $0x898] sm:%s913]
                  %1473 = vst [vmem:[%s921 + $0x44c] sm:%s913] %v1472
                  %v1474 = vld [vmem:[%s920 + $0x8a0] sm:%s913]
                  %1475 = vst [vmem:[%s921 + $0x450] sm:%s913] %v1474
                  %v1476 = vld [vmem:[%s920 + $0x8a8] sm:%s913]
                  %1477 = vst [vmem:[%s921 + $0x454] sm:%s913] %v1476
                  %v1478 = vld [vmem:[%s920 + $0x8b0] sm:%s913]
                  %1479 = vst [vmem:[%s921 + $0x458] sm:%s913] %v1478
                  %v1480 = vld [vmem:[%s920 + $0x8b8] sm:%s913]
                  %1481 = vst [vmem:[%s921 + $0x45c] sm:%s913] %v1480
                  %v1482 = vld [vmem:[%s920 + $0x8c0] sm:%s913]
                  %1483 = vst [vmem:[%s921 + $0x460] sm:%s913] %v1482
                  %v1484 = vld [vmem:[%s920 + $0x8c8] sm:%s913]
                  %1485 = vst [vmem:[%s921 + $0x464] sm:%s913] %v1484
                  %v1486 = vld [vmem:[%s920 + $0x8d0] sm:%s913]
                  %1487 = vst [vmem:[%s921 + $0x468] sm:%s913] %v1486
                  %v1488 = vld [vmem:[%s920 + $0x8d8] sm:%s913]
                  %1489 = vst [vmem:[%s921 + $0x46c] sm:%s913] %v1488
                  %v1490 = vld [vmem:[%s920 + $0x8e0] sm:%s913]
                  %1491 = vst [vmem:[%s921 + $0x470] sm:%s913] %v1490
                  %v1492 = vld [vmem:[%s920 + $0x8e8] sm:%s913]
                  %1493 = vst [vmem:[%s921 + $0x474] sm:%s913] %v1492
                  %v1494 = vld [vmem:[%s920 + $0x8f0] sm:%s913]
                  %1495 = vst [vmem:[%s921 + $0x478] sm:%s913] %v1494
                  %v1496 = vld [vmem:[%s920 + $0x8f8] sm:%s913]
                  %1497 = vst [vmem:[%s921 + $0x47c] sm:%s913] %v1496
                  %v1498 = vld [vmem:[%s920 + $0x900] sm:%s913]
                  %1499 = vst [vmem:[%s921 + $0x480] sm:%s913] %v1498
                  %v1500 = vld [vmem:[%s920 + $0x908] sm:%s913]
                  %1501 = vst [vmem:[%s921 + $0x484] sm:%s913] %v1500
                  %v1502 = vld [vmem:[%s920 + $0x910] sm:%s913]
                  %1503 = vst [vmem:[%s921 + $0x488] sm:%s913] %v1502
                  %v1504 = vld [vmem:[%s920 + $0x918] sm:%s913]
                  %1505 = vst [vmem:[%s921 + $0x48c] sm:%s913] %v1504
                  %v1506 = vld [vmem:[%s920 + $0x920] sm:%s913]
                  %1507 = vst [vmem:[%s921 + $0x490] sm:%s913] %v1506
                  %v1508 = vld [vmem:[%s920 + $0x928] sm:%s913]
                  %1509 = vst [vmem:[%s921 + $0x494] sm:%s913] %v1508
                  %v1510 = vld [vmem:[%s920 + $0x930] sm:%s913]
                  %1511 = vst [vmem:[%s921 + $0x498] sm:%s913] %v1510
                  %v1512 = vld [vmem:[%s920 + $0x938] sm:%s913]
                  %1513 = vst [vmem:[%s921 + $0x49c] sm:%s913] %v1512
                  %v1514 = vld [vmem:[%s920 + $0x940] sm:%s913]
                  %1515 = vst [vmem:[%s921 + $0x4a0] sm:%s913] %v1514
                  %v1516 = vld [vmem:[%s920 + $0x948] sm:%s913]
                  %1517 = vst [vmem:[%s921 + $0x4a4] sm:%s913] %v1516
                  %v1518 = vld [vmem:[%s920 + $0x950] sm:%s913]
                  %1519 = vst [vmem:[%s921 + $0x4a8] sm:%s913] %v1518
                  %v1520 = vld [vmem:[%s920 + $0x958] sm:%s913]
                  %1521 = vst [vmem:[%s921 + $0x4ac] sm:%s913] %v1520
                  %v1522 = vld [vmem:[%s920 + $0x960] sm:%s913]
                  %1523 = vst [vmem:[%s921 + $0x4b0] sm:%s913] %v1522
                  %v1524 = vld [vmem:[%s920 + $0x968] sm:%s913]
                  %1525 = vst [vmem:[%s921 + $0x4b4] sm:%s913] %v1524
                  %v1526 = vld [vmem:[%s920 + $0x970] sm:%s913]
                  %1527 = vst [vmem:[%s921 + $0x4b8] sm:%s913] %v1526
                  %v1528 = vld [vmem:[%s920 + $0x978] sm:%s913]
                  %1529 = vst [vmem:[%s921 + $0x4bc] sm:%s913] %v1528
                  %v1530 = vld [vmem:[%s920 + $0x980] sm:%s913]
                  %1531 = vst [vmem:[%s921 + $0x4c0] sm:%s913] %v1530
                  %v1532 = vld [vmem:[%s920 + $0x988] sm:%s913]
                  %1533 = vst [vmem:[%s921 + $0x4c4] sm:%s913] %v1532
                  %v1534 = vld [vmem:[%s920 + $0x990] sm:%s913]
                  %1535 = vst [vmem:[%s921 + $0x4c8] sm:%s913] %v1534
                  %v1536 = vld [vmem:[%s920 + $0x998] sm:%s913]
                  %1537 = vst [vmem:[%s921 + $0x4cc] sm:%s913] %v1536
                  %v1538 = vld [vmem:[%s920 + $0x9a0] sm:%s913]
                  %1539 = vst [vmem:[%s921 + $0x4d0] sm:%s913] %v1538
                  %v1540 = vld [vmem:[%s920 + $0x9a8] sm:%s913]
                  %1541 = vst [vmem:[%s921 + $0x4d4] sm:%s913] %v1540
                  %v1542 = vld [vmem:[%s920 + $0x9b0] sm:%s913]
                  %1543 = vst [vmem:[%s921 + $0x4d8] sm:%s913] %v1542
                  %v1544 = vld [vmem:[%s920 + $0x9b8] sm:%s913]
                  %1545 = vst [vmem:[%s921 + $0x4dc] sm:%s913] %v1544
                  %v1546 = vld [vmem:[%s920 + $0x9c0] sm:%s913]
                  %1547 = vst [vmem:[%s921 + $0x4e0] sm:%s913] %v1546
                  %v1548 = vld [vmem:[%s920 + $0x9c8] sm:%s913]
                  %1549 = vst [vmem:[%s921 + $0x4e4] sm:%s913] %v1548
                  %v1550 = vld [vmem:[%s920 + $0x9d0] sm:%s913]
                  %1551 = vst [vmem:[%s921 + $0x4e8] sm:%s913] %v1550
                  %v1552 = vld [vmem:[%s920 + $0x9d8] sm:%s913]
                  %1553 = vst [vmem:[%s921 + $0x4ec] sm:%s913] %v1552
                  %v1554 = vld [vmem:[%s920 + $0x9e0] sm:%s913]
                  %1555 = vst [vmem:[%s921 + $0x4f0] sm:%s913] %v1554
                  %v1556 = vld [vmem:[%s920 + $0x9e8] sm:%s913]
                  %1557 = vst [vmem:[%s921 + $0x4f4] sm:%s913] %v1556
                  %v1558 = vld [vmem:[%s920 + $0x9f0] sm:%s913]
                  %1559 = vst [vmem:[%s921 + $0x4f8] sm:%s913] %v1558
                  %v1560 = vld [vmem:[%s920 + $0x9f8] sm:%s913]
                  %1561 = vst [vmem:[%s921 + $0x4fc] sm:%s913] %v1560
                  %v1562 = vld [vmem:[%s920 + $0xa00] sm:%s913]
                  %1563 = vst [vmem:[%s921 + $0x500] sm:%s913] %v1562
                  %v1564 = vld [vmem:[%s920 + $0xa08] sm:%s913]
                  %1565 = vst [vmem:[%s921 + $0x504] sm:%s913] %v1564
                  %v1566 = vld [vmem:[%s920 + $0xa10] sm:%s913]
                  %1567 = vst [vmem:[%s921 + $0x508] sm:%s913] %v1566
                  %v1568 = vld [vmem:[%s920 + $0xa18] sm:%s913]
                  %1569 = vst [vmem:[%s921 + $0x50c] sm:%s913] %v1568
                  %v1570 = vld [vmem:[%s920 + $0xa20] sm:%s913]
                  %1571 = vst [vmem:[%s921 + $0x510] sm:%s913] %v1570
                  %v1572 = vld [vmem:[%s920 + $0xa28] sm:%s913]
                  %1573 = vst [vmem:[%s921 + $0x514] sm:%s913] %v1572
                  %v1574 = vld [vmem:[%s920 + $0xa30] sm:%s913]
                  %1575 = vst [vmem:[%s921 + $0x518] sm:%s913] %v1574
                  %v1576 = vld [vmem:[%s920 + $0xa38] sm:%s913]
                  %1577 = vst [vmem:[%s921 + $0x51c] sm:%s913] %v1576
                  %v1578 = vld [vmem:[%s920 + $0xa40] sm:%s913]
                  %1579 = vst [vmem:[%s921 + $0x520] sm:%s913] %v1578
                  %v1580 = vld [vmem:[%s920 + $0xa48] sm:%s913]
                  %1581 = vst [vmem:[%s921 + $0x524] sm:%s913] %v1580
                  %v1582 = vld [vmem:[%s920 + $0xa50] sm:%s913]
                  %1583 = vst [vmem:[%s921 + $0x528] sm:%s913] %v1582
                  %v1584 = vld [vmem:[%s920 + $0xa58] sm:%s913]
                  %1585 = vst [vmem:[%s921 + $0x52c] sm:%s913] %v1584
                  %v1586 = vld [vmem:[%s920 + $0xa60] sm:%s913]
                  %1587 = vst [vmem:[%s921 + $0x530] sm:%s913] %v1586
                  %v1588 = vld [vmem:[%s920 + $0xa68] sm:%s913]
                  %1589 = vst [vmem:[%s921 + $0x534] sm:%s913] %v1588
                  %v1590 = vld [vmem:[%s920 + $0xa70] sm:%s913]
                  %1591 = vst [vmem:[%s921 + $0x538] sm:%s913] %v1590
                  %v1592 = vld [vmem:[%s920 + $0xa78] sm:%s913]
                  %1593 = vst [vmem:[%s921 + $0x53c] sm:%s913] %v1592
                  %v1594 = vld [vmem:[%s920 + $0xa80] sm:%s913]
                  %1595 = vst [vmem:[%s921 + $0x540] sm:%s913] %v1594
                  %v1596 = vld [vmem:[%s920 + $0xa88] sm:%s913]
                  %1597 = vst [vmem:[%s921 + $0x544] sm:%s913] %v1596
                  %v1598 = vld [vmem:[%s920 + $0xa90] sm:%s913]
                  %1599 = vst [vmem:[%s921 + $0x548] sm:%s913] %v1598
                  %v1600 = vld [vmem:[%s920 + $0xa98] sm:%s913]
                  %1601 = vst [vmem:[%s921 + $0x54c] sm:%s913] %v1600
                  %v1602 = vld [vmem:[%s920 + $0xaa0] sm:%s913]
                  %1603 = vst [vmem:[%s921 + $0x550] sm:%s913] %v1602
                  %v1604 = vld [vmem:[%s920 + $0xaa8] sm:%s913]
                  %1605 = vst [vmem:[%s921 + $0x554] sm:%s913] %v1604
                  %v1606 = vld [vmem:[%s920 + $0xab0] sm:%s913]
                  %1607 = vst [vmem:[%s921 + $0x558] sm:%s913] %v1606
                  %v1608 = vld [vmem:[%s920 + $0xab8] sm:%s913]
                  %1609 = vst [vmem:[%s921 + $0x55c] sm:%s913] %v1608
                  %v1610 = vld [vmem:[%s920 + $0xac0] sm:%s913]
                  %1611 = vst [vmem:[%s921 + $0x560] sm:%s913] %v1610
                  %v1612 = vld [vmem:[%s920 + $0xac8] sm:%s913]
                  %1613 = vst [vmem:[%s921 + $0x564] sm:%s913] %v1612
                  %v1614 = vld [vmem:[%s920 + $0xad0] sm:%s913]
                  %1615 = vst [vmem:[%s921 + $0x568] sm:%s913] %v1614
                  %v1616 = vld [vmem:[%s920 + $0xad8] sm:%s913]
                  %1617 = vst [vmem:[%s921 + $0x56c] sm:%s913] %v1616
                  %v1618 = vld [vmem:[%s920 + $0xae0] sm:%s913]
                  %1619 = vst [vmem:[%s921 + $0x570] sm:%s913] %v1618
                  %v1620 = vld [vmem:[%s920 + $0xae8] sm:%s913]
                  %1621 = vst [vmem:[%s921 + $0x574] sm:%s913] %v1620
                  %v1622 = vld [vmem:[%s920 + $0xaf0] sm:%s913]
                  %1623 = vst [vmem:[%s921 + $0x578] sm:%s913] %v1622
                  %v1624 = vld [vmem:[%s920 + $0xaf8] sm:%s913]
                  %1625 = vst [vmem:[%s921 + $0x57c] sm:%s913] %v1624
                  %v1626 = vld [vmem:[%s920 + $0xb00] sm:%s913]
                  %1627 = vst [vmem:[%s921 + $0x580] sm:%s913] %v1626
                  %v1628 = vld [vmem:[%s920 + $0xb08] sm:%s913]
                  %1629 = vst [vmem:[%s921 + $0x584] sm:%s913] %v1628
                  %v1630 = vld [vmem:[%s920 + $0xb10] sm:%s913]
                  %1631 = vst [vmem:[%s921 + $0x588] sm:%s913] %v1630
                  %v1632 = vld [vmem:[%s920 + $0xb18] sm:%s913]
                  %1633 = vst [vmem:[%s921 + $0x58c] sm:%s913] %v1632
                  %v1634 = vld [vmem:[%s920 + $0xb20] sm:%s913]
                  %1635 = vst [vmem:[%s921 + $0x590] sm:%s913] %v1634
                  %v1636 = vld [vmem:[%s920 + $0xb28] sm:%s913]
                  %1637 = vst [vmem:[%s921 + $0x594] sm:%s913] %v1636
                  %v1638 = vld [vmem:[%s920 + $0xb30] sm:%s913]
                  %1639 = vst [vmem:[%s921 + $0x598] sm:%s913] %v1638
                  %v1640 = vld [vmem:[%s920 + $0xb38] sm:%s913]
                  %1641 = vst [vmem:[%s921 + $0x59c] sm:%s913] %v1640
                $region59: #{cnn_forward.5} parent=46 // loop_footer
                  %s919 = sadd.s32 1, %s915
                $region60: #{cnn_forward.5} parent=46 // loop_footer_branch
                  %914 = sbr.rel target = $region56
                $region61: #{cnn_forward.5} parent=46 // loop_exit
                  _
              $region47: #{cnn_forward.5} parent=31 // pred_fallthru
                _
            $region32: #{cnn_forward.5} parent=27 // pred_fallthru
              _
            // Predicated region
            $region33: #{cnn_forward.5} parent=27 // pred_check
              _
            $region34: #{cnn_forward.5} parent=27 // pred_check_branch
              %171 = sbr.rel (0) target = $region36
            $region35: #{cnn_forward.5} parent=27 // pred_region
              %s173 = ssub.s32 16, 1
              loop: start=0, step=1, limit=1
              $region37: #{cnn_forward.5} parent=35 // loop_pre_header
                _
              $region38: #{cnn_forward.5} parent=35 // loop_header
                %s175 = sphi 0, %s179
                %p176 = scmp.ge.s32.totalorder %s175, 1
                %s180 = sphi %s165, %s165
                %s181 = sphi %s163, %s163
              $region39: #{cnn_forward.5} parent=35 // loop_header_branch
                %178 = sbr.rel (%p176) target = $region43
              $region40: #{cnn_forward.5} parent=35 // loop_body
                %v182 = vld [vmem:[%s180] sm:%s173]
                %183 = vst [vmem:[%s181] sm:%s173] %v182
                %v184 = vld [vmem:[%s180 + $0x8] sm:%s173]
                %185 = vst [vmem:[%s181 + $0x4] sm:%s173] %v184
                %v186 = vld [vmem:[%s180 + $0x10] sm:%s173]
                %187 = vst [vmem:[%s181 + $0x8] sm:%s173] %v186
                %v188 = vld [vmem:[%s180 + $0x18] sm:%s173]
                %189 = vst [vmem:[%s181 + $0xc] sm:%s173] %v188
                %v190 = vld [vmem:[%s180 + $0x20] sm:%s173]
                %191 = vst [vmem:[%s181 + $0x10] sm:%s173] %v190
                %v192 = vld [vmem:[%s180 + $0x28] sm:%s173]
                %193 = vst [vmem:[%s181 + $0x14] sm:%s173] %v192
                %v194 = vld [vmem:[%s180 + $0x30] sm:%s173]
                %195 = vst [vmem:[%s181 + $0x18] sm:%s173] %v194
                %v196 = vld [vmem:[%s180 + $0x38] sm:%s173]
                %197 = vst [vmem:[%s181 + $0x1c] sm:%s173] %v196
                %v198 = vld [vmem:[%s180 + $0x40] sm:%s173]
                %199 = vst [vmem:[%s181 + $0x20] sm:%s173] %v198
                %v200 = vld [vmem:[%s180 + $0x48] sm:%s173]
                %201 = vst [vmem:[%s181 + $0x24] sm:%s173] %v200
                %v202 = vld [vmem:[%s180 + $0x50] sm:%s173]
                %203 = vst [vmem:[%s181 + $0x28] sm:%s173] %v202
                %v204 = vld [vmem:[%s180 + $0x58] sm:%s173]
                %205 = vst [vmem:[%s181 + $0x2c] sm:%s173] %v204
                %v206 = vld [vmem:[%s180 + $0x60] sm:%s173]
                %207 = vst [vmem:[%s181 + $0x30] sm:%s173] %v206
                %v208 = vld [vmem:[%s180 + $0x68] sm:%s173]
                %209 = vst [vmem:[%s181 + $0x34] sm:%s173] %v208
                %v210 = vld [vmem:[%s180 + $0x70] sm:%s173]
                %211 = vst [vmem:[%s181 + $0x38] sm:%s173] %v210
                %v212 = vld [vmem:[%s180 + $0x78] sm:%s173]
                %213 = vst [vmem:[%s181 + $0x3c] sm:%s173] %v212
                %v214 = vld [vmem:[%s180 + $0x80] sm:%s173]
                %215 = vst [vmem:[%s181 + $0x40] sm:%s173] %v214
                %v216 = vld [vmem:[%s180 + $0x88] sm:%s173]
                %217 = vst [vmem:[%s181 + $0x44] sm:%s173] %v216
                %v218 = vld [vmem:[%s180 + $0x90] sm:%s173]
                %219 = vst [vmem:[%s181 + $0x48] sm:%s173] %v218
                %v220 = vld [vmem:[%s180 + $0x98] sm:%s173]
                %221 = vst [vmem:[%s181 + $0x4c] sm:%s173] %v220
                %v222 = vld [vmem:[%s180 + $0xa0] sm:%s173]
                %223 = vst [vmem:[%s181 + $0x50] sm:%s173] %v222
                %v224 = vld [vmem:[%s180 + $0xa8] sm:%s173]
                %225 = vst [vmem:[%s181 + $0x54] sm:%s173] %v224
                %v226 = vld [vmem:[%s180 + $0xb0] sm:%s173]
                %227 = vst [vmem:[%s181 + $0x58] sm:%s173] %v226
                %v228 = vld [vmem:[%s180 + $0xb8] sm:%s173]
                %229 = vst [vmem:[%s181 + $0x5c] sm:%s173] %v228
                %v230 = vld [vmem:[%s180 + $0xc0] sm:%s173]
                %231 = vst [vmem:[%s181 + $0x60] sm:%s173] %v230
                %v232 = vld [vmem:[%s180 + $0xc8] sm:%s173]
                %233 = vst [vmem:[%s181 + $0x64] sm:%s173] %v232
                %v234 = vld [vmem:[%s180 + $0xd0] sm:%s173]
                %235 = vst [vmem:[%s181 + $0x68] sm:%s173] %v234
                %v236 = vld [vmem:[%s180 + $0xd8] sm:%s173]
                %237 = vst [vmem:[%s181 + $0x6c] sm:%s173] %v236
                %v238 = vld [vmem:[%s180 + $0xe0] sm:%s173]
                %239 = vst [vmem:[%s181 + $0x70] sm:%s173] %v238
                %v240 = vld [vmem:[%s180 + $0xe8] sm:%s173]
                %241 = vst [vmem:[%s181 + $0x74] sm:%s173] %v240
                %v242 = vld [vmem:[%s180 + $0xf0] sm:%s173]
                %243 = vst [vmem:[%s181 + $0x78] sm:%s173] %v242
                %v244 = vld [vmem:[%s180 + $0xf8] sm:%s173]
                %245 = vst [vmem:[%s181 + $0x7c] sm:%s173] %v244
                %v246 = vld [vmem:[%s180 + $0x100] sm:%s173]
                %247 = vst [vmem:[%s181 + $0x80] sm:%s173] %v246
                %v248 = vld [vmem:[%s180 + $0x108] sm:%s173]
                %249 = vst [vmem:[%s181 + $0x84] sm:%s173] %v248
                %v250 = vld [vmem:[%s180 + $0x110] sm:%s173]
                %251 = vst [vmem:[%s181 + $0x88] sm:%s173] %v250
                %v252 = vld [vmem:[%s180 + $0x118] sm:%s173]
                %253 = vst [vmem:[%s181 + $0x8c] sm:%s173] %v252
                %v254 = vld [vmem:[%s180 + $0x120] sm:%s173]
                %255 = vst [vmem:[%s181 + $0x90] sm:%s173] %v254
                %v256 = vld [vmem:[%s180 + $0x128] sm:%s173]
                %257 = vst [vmem:[%s181 + $0x94] sm:%s173] %v256
                %v258 = vld [vmem:[%s180 + $0x130] sm:%s173]
                %259 = vst [vmem:[%s181 + $0x98] sm:%s173] %v258
                %v260 = vld [vmem:[%s180 + $0x138] sm:%s173]
                %261 = vst [vmem:[%s181 + $0x9c] sm:%s173] %v260
                %v262 = vld [vmem:[%s180 + $0x140] sm:%s173]
                %263 = vst [vmem:[%s181 + $0xa0] sm:%s173] %v262
                %v264 = vld [vmem:[%s180 + $0x148] sm:%s173]
                %265 = vst [vmem:[%s181 + $0xa4] sm:%s173] %v264
                %v266 = vld [vmem:[%s180 + $0x150] sm:%s173]
                %267 = vst [vmem:[%s181 + $0xa8] sm:%s173] %v266
                %v268 = vld [vmem:[%s180 + $0x158] sm:%s173]
                %269 = vst [vmem:[%s181 + $0xac] sm:%s173] %v268
                %v270 = vld [vmem:[%s180 + $0x160] sm:%s173]
                %271 = vst [vmem:[%s181 + $0xb0] sm:%s173] %v270
                %v272 = vld [vmem:[%s180 + $0x168] sm:%s173]
                %273 = vst [vmem:[%s181 + $0xb4] sm:%s173] %v272
                %v274 = vld [vmem:[%s180 + $0x170] sm:%s173]
                %275 = vst [vmem:[%s181 + $0xb8] sm:%s173] %v274
                %v276 = vld [vmem:[%s180 + $0x178] sm:%s173]
                %277 = vst [vmem:[%s181 + $0xbc] sm:%s173] %v276
                %v278 = vld [vmem:[%s180 + $0x180] sm:%s173]
                %279 = vst [vmem:[%s181 + $0xc0] sm:%s173] %v278
                %v280 = vld [vmem:[%s180 + $0x188] sm:%s173]
                %281 = vst [vmem:[%s181 + $0xc4] sm:%s173] %v280
                %v282 = vld [vmem:[%s180 + $0x190] sm:%s173]
                %283 = vst [vmem:[%s181 + $0xc8] sm:%s173] %v282
                %v284 = vld [vmem:[%s180 + $0x198] sm:%s173]
                %285 = vst [vmem:[%s181 + $0xcc] sm:%s173] %v284
                %v286 = vld [vmem:[%s180 + $0x1a0] sm:%s173]
                %287 = vst [vmem:[%s181 + $0xd0] sm:%s173] %v286
                %v288 = vld [vmem:[%s180 + $0x1a8] sm:%s173]
                %289 = vst [vmem:[%s181 + $0xd4] sm:%s173] %v288
                %v290 = vld [vmem:[%s180 + $0x1b0] sm:%s173]
                %291 = vst [vmem:[%s181 + $0xd8] sm:%s173] %v290
                %v292 = vld [vmem:[%s180 + $0x1b8] sm:%s173]
                %293 = vst [vmem:[%s181 + $0xdc] sm:%s173] %v292
                %v294 = vld [vmem:[%s180 + $0x1c0] sm:%s173]
                %295 = vst [vmem:[%s181 + $0xe0] sm:%s173] %v294
                %v296 = vld [vmem:[%s180 + $0x1c8] sm:%s173]
                %297 = vst [vmem:[%s181 + $0xe4] sm:%s173] %v296
                %v298 = vld [vmem:[%s180 + $0x1d0] sm:%s173]
                %299 = vst [vmem:[%s181 + $0xe8] sm:%s173] %v298
                %v300 = vld [vmem:[%s180 + $0x1d8] sm:%s173]
                %301 = vst [vmem:[%s181 + $0xec] sm:%s173] %v300
                %v302 = vld [vmem:[%s180 + $0x1e0] sm:%s173]
                %303 = vst [vmem:[%s181 + $0xf0] sm:%s173] %v302
                %v304 = vld [vmem:[%s180 + $0x1e8] sm:%s173]
                %305 = vst [vmem:[%s181 + $0xf4] sm:%s173] %v304
                %v306 = vld [vmem:[%s180 + $0x1f0] sm:%s173]
                %307 = vst [vmem:[%s181 + $0xf8] sm:%s173] %v306
                %v308 = vld [vmem:[%s180 + $0x1f8] sm:%s173]
                %309 = vst [vmem:[%s181 + $0xfc] sm:%s173] %v308
                %v310 = vld [vmem:[%s180 + $0x200] sm:%s173]
                %311 = vst [vmem:[%s181 + $0x100] sm:%s173] %v310
                %v312 = vld [vmem:[%s180 + $0x208] sm:%s173]
                %313 = vst [vmem:[%s181 + $0x104] sm:%s173] %v312
                %v314 = vld [vmem:[%s180 + $0x210] sm:%s173]
                %315 = vst [vmem:[%s181 + $0x108] sm:%s173] %v314
                %v316 = vld [vmem:[%s180 + $0x218] sm:%s173]
                %317 = vst [vmem:[%s181 + $0x10c] sm:%s173] %v316
                %v318 = vld [vmem:[%s180 + $0x220] sm:%s173]
                %319 = vst [vmem:[%s181 + $0x110] sm:%s173] %v318
                %v320 = vld [vmem:[%s180 + $0x228] sm:%s173]
                %321 = vst [vmem:[%s181 + $0x114] sm:%s173] %v320
                %v322 = vld [vmem:[%s180 + $0x230] sm:%s173]
                %323 = vst [vmem:[%s181 + $0x118] sm:%s173] %v322
                %v324 = vld [vmem:[%s180 + $0x238] sm:%s173]
                %325 = vst [vmem:[%s181 + $0x11c] sm:%s173] %v324
                %v326 = vld [vmem:[%s180 + $0x240] sm:%s173]
                %327 = vst [vmem:[%s181 + $0x120] sm:%s173] %v326
                %v328 = vld [vmem:[%s180 + $0x248] sm:%s173]
                %329 = vst [vmem:[%s181 + $0x124] sm:%s173] %v328
                %v330 = vld [vmem:[%s180 + $0x250] sm:%s173]
                %331 = vst [vmem:[%s181 + $0x128] sm:%s173] %v330
                %v332 = vld [vmem:[%s180 + $0x258] sm:%s173]
                %333 = vst [vmem:[%s181 + $0x12c] sm:%s173] %v332
                %v334 = vld [vmem:[%s180 + $0x260] sm:%s173]
                %335 = vst [vmem:[%s181 + $0x130] sm:%s173] %v334
                %v336 = vld [vmem:[%s180 + $0x268] sm:%s173]
                %337 = vst [vmem:[%s181 + $0x134] sm:%s173] %v336
                %v338 = vld [vmem:[%s180 + $0x270] sm:%s173]
                %339 = vst [vmem:[%s181 + $0x138] sm:%s173] %v338
                %v340 = vld [vmem:[%s180 + $0x278] sm:%s173]
                %341 = vst [vmem:[%s181 + $0x13c] sm:%s173] %v340
                %v342 = vld [vmem:[%s180 + $0x280] sm:%s173]
                %343 = vst [vmem:[%s181 + $0x140] sm:%s173] %v342
                %v344 = vld [vmem:[%s180 + $0x288] sm:%s173]
                %345 = vst [vmem:[%s181 + $0x144] sm:%s173] %v344
                %v346 = vld [vmem:[%s180 + $0x290] sm:%s173]
                %347 = vst [vmem:[%s181 + $0x148] sm:%s173] %v346
                %v348 = vld [vmem:[%s180 + $0x298] sm:%s173]
                %349 = vst [vmem:[%s181 + $0x14c] sm:%s173] %v348
                %v350 = vld [vmem:[%s180 + $0x2a0] sm:%s173]
                %351 = vst [vmem:[%s181 + $0x150] sm:%s173] %v350
                %v352 = vld [vmem:[%s180 + $0x2a8] sm:%s173]
                %353 = vst [vmem:[%s181 + $0x154] sm:%s173] %v352
                %v354 = vld [vmem:[%s180 + $0x2b0] sm:%s173]
                %355 = vst [vmem:[%s181 + $0x158] sm:%s173] %v354
                %v356 = vld [vmem:[%s180 + $0x2b8] sm:%s173]
                %357 = vst [vmem:[%s181 + $0x15c] sm:%s173] %v356
                %v358 = vld [vmem:[%s180 + $0x2c0] sm:%s173]
                %359 = vst [vmem:[%s181 + $0x160] sm:%s173] %v358
                %v360 = vld [vmem:[%s180 + $0x2c8] sm:%s173]
                %361 = vst [vmem:[%s181 + $0x164] sm:%s173] %v360
                %v362 = vld [vmem:[%s180 + $0x2d0] sm:%s173]
                %363 = vst [vmem:[%s181 + $0x168] sm:%s173] %v362
                %v364 = vld [vmem:[%s180 + $0x2d8] sm:%s173]
                %365 = vst [vmem:[%s181 + $0x16c] sm:%s173] %v364
                %v366 = vld [vmem:[%s180 + $0x2e0] sm:%s173]
                %367 = vst [vmem:[%s181 + $0x170] sm:%s173] %v366
                %v368 = vld [vmem:[%s180 + $0x2e8] sm:%s173]
                %369 = vst [vmem:[%s181 + $0x174] sm:%s173] %v368
                %v370 = vld [vmem:[%s180 + $0x2f0] sm:%s173]
                %371 = vst [vmem:[%s181 + $0x178] sm:%s173] %v370
                %v372 = vld [vmem:[%s180 + $0x2f8] sm:%s173]
                %373 = vst [vmem:[%s181 + $0x17c] sm:%s173] %v372
                %v374 = vld [vmem:[%s180 + $0x300] sm:%s173]
                %375 = vst [vmem:[%s181 + $0x180] sm:%s173] %v374
                %v376 = vld [vmem:[%s180 + $0x308] sm:%s173]
                %377 = vst [vmem:[%s181 + $0x184] sm:%s173] %v376
                %v378 = vld [vmem:[%s180 + $0x310] sm:%s173]
                %379 = vst [vmem:[%s181 + $0x188] sm:%s173] %v378
                %v380 = vld [vmem:[%s180 + $0x318] sm:%s173]
                %381 = vst [vmem:[%s181 + $0x18c] sm:%s173] %v380
                %v382 = vld [vmem:[%s180 + $0x320] sm:%s173]
                %383 = vst [vmem:[%s181 + $0x190] sm:%s173] %v382
                %v384 = vld [vmem:[%s180 + $0x328] sm:%s173]
                %385 = vst [vmem:[%s181 + $0x194] sm:%s173] %v384
                %v386 = vld [vmem:[%s180 + $0x330] sm:%s173]
                %387 = vst [vmem:[%s181 + $0x198] sm:%s173] %v386
                %v388 = vld [vmem:[%s180 + $0x338] sm:%s173]
                %389 = vst [vmem:[%s181 + $0x19c] sm:%s173] %v388
                %v390 = vld [vmem:[%s180 + $0x340] sm:%s173]
                %391 = vst [vmem:[%s181 + $0x1a0] sm:%s173] %v390
                %v392 = vld [vmem:[%s180 + $0x348] sm:%s173]
                %393 = vst [vmem:[%s181 + $0x1a4] sm:%s173] %v392
                %v394 = vld [vmem:[%s180 + $0x350] sm:%s173]
                %395 = vst [vmem:[%s181 + $0x1a8] sm:%s173] %v394
                %v396 = vld [vmem:[%s180 + $0x358] sm:%s173]
                %397 = vst [vmem:[%s181 + $0x1ac] sm:%s173] %v396
                %v398 = vld [vmem:[%s180 + $0x360] sm:%s173]
                %399 = vst [vmem:[%s181 + $0x1b0] sm:%s173] %v398
                %v400 = vld [vmem:[%s180 + $0x368] sm:%s173]
                %401 = vst [vmem:[%s181 + $0x1b4] sm:%s173] %v400
                %v402 = vld [vmem:[%s180 + $0x370] sm:%s173]
                %403 = vst [vmem:[%s181 + $0x1b8] sm:%s173] %v402
                %v404 = vld [vmem:[%s180 + $0x378] sm:%s173]
                %405 = vst [vmem:[%s181 + $0x1bc] sm:%s173] %v404
                %v406 = vld [vmem:[%s180 + $0x380] sm:%s173]
                %407 = vst [vmem:[%s181 + $0x1c0] sm:%s173] %v406
                %v408 = vld [vmem:[%s180 + $0x388] sm:%s173]
                %409 = vst [vmem:[%s181 + $0x1c4] sm:%s173] %v408
                %v410 = vld [vmem:[%s180 + $0x390] sm:%s173]
                %411 = vst [vmem:[%s181 + $0x1c8] sm:%s173] %v410
                %v412 = vld [vmem:[%s180 + $0x398] sm:%s173]
                %413 = vst [vmem:[%s181 + $0x1cc] sm:%s173] %v412
                %v414 = vld [vmem:[%s180 + $0x3a0] sm:%s173]
                %415 = vst [vmem:[%s181 + $0x1d0] sm:%s173] %v414
                %v416 = vld [vmem:[%s180 + $0x3a8] sm:%s173]
                %417 = vst [vmem:[%s181 + $0x1d4] sm:%s173] %v416
                %v418 = vld [vmem:[%s180 + $0x3b0] sm:%s173]
                %419 = vst [vmem:[%s181 + $0x1d8] sm:%s173] %v418
                %v420 = vld [vmem:[%s180 + $0x3b8] sm:%s173]
                %421 = vst [vmem:[%s181 + $0x1dc] sm:%s173] %v420
                %v422 = vld [vmem:[%s180 + $0x3c0] sm:%s173]
                %423 = vst [vmem:[%s181 + $0x1e0] sm:%s173] %v422
                %v424 = vld [vmem:[%s180 + $0x3c8] sm:%s173]
                %425 = vst [vmem:[%s181 + $0x1e4] sm:%s173] %v424
                %v426 = vld [vmem:[%s180 + $0x3d0] sm:%s173]
                %427 = vst [vmem:[%s181 + $0x1e8] sm:%s173] %v426
                %v428 = vld [vmem:[%s180 + $0x3d8] sm:%s173]
                %429 = vst [vmem:[%s181 + $0x1ec] sm:%s173] %v428
                %v430 = vld [vmem:[%s180 + $0x3e0] sm:%s173]
                %431 = vst [vmem:[%s181 + $0x1f0] sm:%s173] %v430
                %v432 = vld [vmem:[%s180 + $0x3e8] sm:%s173]
                %433 = vst [vmem:[%s181 + $0x1f4] sm:%s173] %v432
                %v434 = vld [vmem:[%s180 + $0x3f0] sm:%s173]
                %435 = vst [vmem:[%s181 + $0x1f8] sm:%s173] %v434
                %v436 = vld [vmem:[%s180 + $0x3f8] sm:%s173]
                %437 = vst [vmem:[%s181 + $0x1fc] sm:%s173] %v436
                %v438 = vld [vmem:[%s180 + $0x400] sm:%s173]
                %439 = vst [vmem:[%s181 + $0x200] sm:%s173] %v438
                %v440 = vld [vmem:[%s180 + $0x408] sm:%s173]
                %441 = vst [vmem:[%s181 + $0x204] sm:%s173] %v440
                %v442 = vld [vmem:[%s180 + $0x410] sm:%s173]
                %443 = vst [vmem:[%s181 + $0x208] sm:%s173] %v442
                %v444 = vld [vmem:[%s180 + $0x418] sm:%s173]
                %445 = vst [vmem:[%s181 + $0x20c] sm:%s173] %v444
                %v446 = vld [vmem:[%s180 + $0x420] sm:%s173]
                %447 = vst [vmem:[%s181 + $0x210] sm:%s173] %v446
                %v448 = vld [vmem:[%s180 + $0x428] sm:%s173]
                %449 = vst [vmem:[%s181 + $0x214] sm:%s173] %v448
                %v450 = vld [vmem:[%s180 + $0x430] sm:%s173]
                %451 = vst [vmem:[%s181 + $0x218] sm:%s173] %v450
                %v452 = vld [vmem:[%s180 + $0x438] sm:%s173]
                %453 = vst [vmem:[%s181 + $0x21c] sm:%s173] %v452
                %v454 = vld [vmem:[%s180 + $0x440] sm:%s173]
                %455 = vst [vmem:[%s181 + $0x220] sm:%s173] %v454
                %v456 = vld [vmem:[%s180 + $0x448] sm:%s173]
                %457 = vst [vmem:[%s181 + $0x224] sm:%s173] %v456
                %v458 = vld [vmem:[%s180 + $0x450] sm:%s173]
                %459 = vst [vmem:[%s181 + $0x228] sm:%s173] %v458
                %v460 = vld [vmem:[%s180 + $0x458] sm:%s173]
                %461 = vst [vmem:[%s181 + $0x22c] sm:%s173] %v460
                %v462 = vld [vmem:[%s180 + $0x460] sm:%s173]
                %463 = vst [vmem:[%s181 + $0x230] sm:%s173] %v462
                %v464 = vld [vmem:[%s180 + $0x468] sm:%s173]
                %465 = vst [vmem:[%s181 + $0x234] sm:%s173] %v464
                %v466 = vld [vmem:[%s180 + $0x470] sm:%s173]
                %467 = vst [vmem:[%s181 + $0x238] sm:%s173] %v466
                %v468 = vld [vmem:[%s180 + $0x478] sm:%s173]
                %469 = vst [vmem:[%s181 + $0x23c] sm:%s173] %v468
                %v470 = vld [vmem:[%s180 + $0x480] sm:%s173]
                %471 = vst [vmem:[%s181 + $0x240] sm:%s173] %v470
                %v472 = vld [vmem:[%s180 + $0x488] sm:%s173]
                %473 = vst [vmem:[%s181 + $0x244] sm:%s173] %v472
                %v474 = vld [vmem:[%s180 + $0x490] sm:%s173]
                %475 = vst [vmem:[%s181 + $0x248] sm:%s173] %v474
                %v476 = vld [vmem:[%s180 + $0x498] sm:%s173]
                %477 = vst [vmem:[%s181 + $0x24c] sm:%s173] %v476
                %v478 = vld [vmem:[%s180 + $0x4a0] sm:%s173]
                %479 = vst [vmem:[%s181 + $0x250] sm:%s173] %v478
                %v480 = vld [vmem:[%s180 + $0x4a8] sm:%s173]
                %481 = vst [vmem:[%s181 + $0x254] sm:%s173] %v480
                %v482 = vld [vmem:[%s180 + $0x4b0] sm:%s173]
                %483 = vst [vmem:[%s181 + $0x258] sm:%s173] %v482
                %v484 = vld [vmem:[%s180 + $0x4b8] sm:%s173]
                %485 = vst [vmem:[%s181 + $0x25c] sm:%s173] %v484
                %v486 = vld [vmem:[%s180 + $0x4c0] sm:%s173]
                %487 = vst [vmem:[%s181 + $0x260] sm:%s173] %v486
                %v488 = vld [vmem:[%s180 + $0x4c8] sm:%s173]
                %489 = vst [vmem:[%s181 + $0x264] sm:%s173] %v488
                %v490 = vld [vmem:[%s180 + $0x4d0] sm:%s173]
                %491 = vst [vmem:[%s181 + $0x268] sm:%s173] %v490
                %v492 = vld [vmem:[%s180 + $0x4d8] sm:%s173]
                %493 = vst [vmem:[%s181 + $0x26c] sm:%s173] %v492
                %v494 = vld [vmem:[%s180 + $0x4e0] sm:%s173]
                %495 = vst [vmem:[%s181 + $0x270] sm:%s173] %v494
                %v496 = vld [vmem:[%s180 + $0x4e8] sm:%s173]
                %497 = vst [vmem:[%s181 + $0x274] sm:%s173] %v496
                %v498 = vld [vmem:[%s180 + $0x4f0] sm:%s173]
                %499 = vst [vmem:[%s181 + $0x278] sm:%s173] %v498
                %v500 = vld [vmem:[%s180 + $0x4f8] sm:%s173]
                %501 = vst [vmem:[%s181 + $0x27c] sm:%s173] %v500
                %v502 = vld [vmem:[%s180 + $0x500] sm:%s173]
                %503 = vst [vmem:[%s181 + $0x280] sm:%s173] %v502
                %v504 = vld [vmem:[%s180 + $0x508] sm:%s173]
                %505 = vst [vmem:[%s181 + $0x284] sm:%s173] %v504
                %v506 = vld [vmem:[%s180 + $0x510] sm:%s173]
                %507 = vst [vmem:[%s181 + $0x288] sm:%s173] %v506
                %v508 = vld [vmem:[%s180 + $0x518] sm:%s173]
                %509 = vst [vmem:[%s181 + $0x28c] sm:%s173] %v508
                %v510 = vld [vmem:[%s180 + $0x520] sm:%s173]
                %511 = vst [vmem:[%s181 + $0x290] sm:%s173] %v510
                %v512 = vld [vmem:[%s180 + $0x528] sm:%s173]
                %513 = vst [vmem:[%s181 + $0x294] sm:%s173] %v512
                %v514 = vld [vmem:[%s180 + $0x530] sm:%s173]
                %515 = vst [vmem:[%s181 + $0x298] sm:%s173] %v514
                %v516 = vld [vmem:[%s180 + $0x538] sm:%s173]
                %517 = vst [vmem:[%s181 + $0x29c] sm:%s173] %v516
                %v518 = vld [vmem:[%s180 + $0x540] sm:%s173]
                %519 = vst [vmem:[%s181 + $0x2a0] sm:%s173] %v518
                %v520 = vld [vmem:[%s180 + $0x548] sm:%s173]
                %521 = vst [vmem:[%s181 + $0x2a4] sm:%s173] %v520
                %v522 = vld [vmem:[%s180 + $0x550] sm:%s173]
                %523 = vst [vmem:[%s181 + $0x2a8] sm:%s173] %v522
                %v524 = vld [vmem:[%s180 + $0x558] sm:%s173]
                %525 = vst [vmem:[%s181 + $0x2ac] sm:%s173] %v524
                %v526 = vld [vmem:[%s180 + $0x560] sm:%s173]
                %527 = vst [vmem:[%s181 + $0x2b0] sm:%s173] %v526
                %v528 = vld [vmem:[%s180 + $0x568] sm:%s173]
                %529 = vst [vmem:[%s181 + $0x2b4] sm:%s173] %v528
                %v530 = vld [vmem:[%s180 + $0x570] sm:%s173]
                %531 = vst [vmem:[%s181 + $0x2b8] sm:%s173] %v530
                %v532 = vld [vmem:[%s180 + $0x578] sm:%s173]
                %533 = vst [vmem:[%s181 + $0x2bc] sm:%s173] %v532
                %v534 = vld [vmem:[%s180 + $0x580] sm:%s173]
                %535 = vst [vmem:[%s181 + $0x2c0] sm:%s173] %v534
                %v536 = vld [vmem:[%s180 + $0x588] sm:%s173]
                %537 = vst [vmem:[%s181 + $0x2c4] sm:%s173] %v536
                %v538 = vld [vmem:[%s180 + $0x590] sm:%s173]
                %539 = vst [vmem:[%s181 + $0x2c8] sm:%s173] %v538
                %v540 = vld [vmem:[%s180 + $0x598] sm:%s173]
                %541 = vst [vmem:[%s181 + $0x2cc] sm:%s173] %v540
                %v542 = vld [vmem:[%s180 + $0x5a0] sm:%s173]
                %543 = vst [vmem:[%s181 + $0x2d0] sm:%s173] %v542
                %v544 = vld [vmem:[%s180 + $0x5a8] sm:%s173]
                %545 = vst [vmem:[%s181 + $0x2d4] sm:%s173] %v544
                %v546 = vld [vmem:[%s180 + $0x5b0] sm:%s173]
                %547 = vst [vmem:[%s181 + $0x2d8] sm:%s173] %v546
                %v548 = vld [vmem:[%s180 + $0x5b8] sm:%s173]
                %549 = vst [vmem:[%s181 + $0x2dc] sm:%s173] %v548
                %v550 = vld [vmem:[%s180 + $0x5c0] sm:%s173]
                %551 = vst [vmem:[%s181 + $0x2e0] sm:%s173] %v550
                %v552 = vld [vmem:[%s180 + $0x5c8] sm:%s173]
                %553 = vst [vmem:[%s181 + $0x2e4] sm:%s173] %v552
                %v554 = vld [vmem:[%s180 + $0x5d0] sm:%s173]
                %555 = vst [vmem:[%s181 + $0x2e8] sm:%s173] %v554
                %v556 = vld [vmem:[%s180 + $0x5d8] sm:%s173]
                %557 = vst [vmem:[%s181 + $0x2ec] sm:%s173] %v556
                %v558 = vld [vmem:[%s180 + $0x5e0] sm:%s173]
                %559 = vst [vmem:[%s181 + $0x2f0] sm:%s173] %v558
                %v560 = vld [vmem:[%s180 + $0x5e8] sm:%s173]
                %561 = vst [vmem:[%s181 + $0x2f4] sm:%s173] %v560
                %v562 = vld [vmem:[%s180 + $0x5f0] sm:%s173]
                %563 = vst [vmem:[%s181 + $0x2f8] sm:%s173] %v562
                %v564 = vld [vmem:[%s180 + $0x5f8] sm:%s173]
                %565 = vst [vmem:[%s181 + $0x2fc] sm:%s173] %v564
                %v566 = vld [vmem:[%s180 + $0x600] sm:%s173]
                %567 = vst [vmem:[%s181 + $0x300] sm:%s173] %v566
                %v568 = vld [vmem:[%s180 + $0x608] sm:%s173]
                %569 = vst [vmem:[%s181 + $0x304] sm:%s173] %v568
                %v570 = vld [vmem:[%s180 + $0x610] sm:%s173]
                %571 = vst [vmem:[%s181 + $0x308] sm:%s173] %v570
                %v572 = vld [vmem:[%s180 + $0x618] sm:%s173]
                %573 = vst [vmem:[%s181 + $0x30c] sm:%s173] %v572
                %v574 = vld [vmem:[%s180 + $0x620] sm:%s173]
                %575 = vst [vmem:[%s181 + $0x310] sm:%s173] %v574
                %v576 = vld [vmem:[%s180 + $0x628] sm:%s173]
                %577 = vst [vmem:[%s181 + $0x314] sm:%s173] %v576
                %v578 = vld [vmem:[%s180 + $0x630] sm:%s173]
                %579 = vst [vmem:[%s181 + $0x318] sm:%s173] %v578
                %v580 = vld [vmem:[%s180 + $0x638] sm:%s173]
                %581 = vst [vmem:[%s181 + $0x31c] sm:%s173] %v580
                %v582 = vld [vmem:[%s180 + $0x640] sm:%s173]
                %583 = vst [vmem:[%s181 + $0x320] sm:%s173] %v582
                %v584 = vld [vmem:[%s180 + $0x648] sm:%s173]
                %585 = vst [vmem:[%s181 + $0x324] sm:%s173] %v584
                %v586 = vld [vmem:[%s180 + $0x650] sm:%s173]
                %587 = vst [vmem:[%s181 + $0x328] sm:%s173] %v586
                %v588 = vld [vmem:[%s180 + $0x658] sm:%s173]
                %589 = vst [vmem:[%s181 + $0x32c] sm:%s173] %v588
                %v590 = vld [vmem:[%s180 + $0x660] sm:%s173]
                %591 = vst [vmem:[%s181 + $0x330] sm:%s173] %v590
                %v592 = vld [vmem:[%s180 + $0x668] sm:%s173]
                %593 = vst [vmem:[%s181 + $0x334] sm:%s173] %v592
                %v594 = vld [vmem:[%s180 + $0x670] sm:%s173]
                %595 = vst [vmem:[%s181 + $0x338] sm:%s173] %v594
                %v596 = vld [vmem:[%s180 + $0x678] sm:%s173]
                %597 = vst [vmem:[%s181 + $0x33c] sm:%s173] %v596
                %v598 = vld [vmem:[%s180 + $0x680] sm:%s173]
                %599 = vst [vmem:[%s181 + $0x340] sm:%s173] %v598
                %v600 = vld [vmem:[%s180 + $0x688] sm:%s173]
                %601 = vst [vmem:[%s181 + $0x344] sm:%s173] %v600
                %v602 = vld [vmem:[%s180 + $0x690] sm:%s173]
                %603 = vst [vmem:[%s181 + $0x348] sm:%s173] %v602
                %v604 = vld [vmem:[%s180 + $0x698] sm:%s173]
                %605 = vst [vmem:[%s181 + $0x34c] sm:%s173] %v604
                %v606 = vld [vmem:[%s180 + $0x6a0] sm:%s173]
                %607 = vst [vmem:[%s181 + $0x350] sm:%s173] %v606
                %v608 = vld [vmem:[%s180 + $0x6a8] sm:%s173]
                %609 = vst [vmem:[%s181 + $0x354] sm:%s173] %v608
                %v610 = vld [vmem:[%s180 + $0x6b0] sm:%s173]
                %611 = vst [vmem:[%s181 + $0x358] sm:%s173] %v610
                %v612 = vld [vmem:[%s180 + $0x6b8] sm:%s173]
                %613 = vst [vmem:[%s181 + $0x35c] sm:%s173] %v612
                %v614 = vld [vmem:[%s180 + $0x6c0] sm:%s173]
                %615 = vst [vmem:[%s181 + $0x360] sm:%s173] %v614
                %v616 = vld [vmem:[%s180 + $0x6c8] sm:%s173]
                %617 = vst [vmem:[%s181 + $0x364] sm:%s173] %v616
                %v618 = vld [vmem:[%s180 + $0x6d0] sm:%s173]
                %619 = vst [vmem:[%s181 + $0x368] sm:%s173] %v618
                %v620 = vld [vmem:[%s180 + $0x6d8] sm:%s173]
                %621 = vst [vmem:[%s181 + $0x36c] sm:%s173] %v620
                %v622 = vld [vmem:[%s180 + $0x6e0] sm:%s173]
                %623 = vst [vmem:[%s181 + $0x370] sm:%s173] %v622
                %v624 = vld [vmem:[%s180 + $0x6e8] sm:%s173]
                %625 = vst [vmem:[%s181 + $0x374] sm:%s173] %v624
                %v626 = vld [vmem:[%s180 + $0x6f0] sm:%s173]
                %627 = vst [vmem:[%s181 + $0x378] sm:%s173] %v626
                %v628 = vld [vmem:[%s180 + $0x6f8] sm:%s173]
                %629 = vst [vmem:[%s181 + $0x37c] sm:%s173] %v628
                %v630 = vld [vmem:[%s180 + $0x700] sm:%s173]
                %631 = vst [vmem:[%s181 + $0x380] sm:%s173] %v630
                %v632 = vld [vmem:[%s180 + $0x708] sm:%s173]
                %633 = vst [vmem:[%s181 + $0x384] sm:%s173] %v632
                %v634 = vld [vmem:[%s180 + $0x710] sm:%s173]
                %635 = vst [vmem:[%s181 + $0x388] sm:%s173] %v634
                %v636 = vld [vmem:[%s180 + $0x718] sm:%s173]
                %637 = vst [vmem:[%s181 + $0x38c] sm:%s173] %v636
                %v638 = vld [vmem:[%s180 + $0x720] sm:%s173]
                %639 = vst [vmem:[%s181 + $0x390] sm:%s173] %v638
                %v640 = vld [vmem:[%s180 + $0x728] sm:%s173]
                %641 = vst [vmem:[%s181 + $0x394] sm:%s173] %v640
                %v642 = vld [vmem:[%s180 + $0x730] sm:%s173]
                %643 = vst [vmem:[%s181 + $0x398] sm:%s173] %v642
                %v644 = vld [vmem:[%s180 + $0x738] sm:%s173]
                %645 = vst [vmem:[%s181 + $0x39c] sm:%s173] %v644
                %v646 = vld [vmem:[%s180 + $0x740] sm:%s173]
                %647 = vst [vmem:[%s181 + $0x3a0] sm:%s173] %v646
                %v648 = vld [vmem:[%s180 + $0x748] sm:%s173]
                %649 = vst [vmem:[%s181 + $0x3a4] sm:%s173] %v648
                %v650 = vld [vmem:[%s180 + $0x750] sm:%s173]
                %651 = vst [vmem:[%s181 + $0x3a8] sm:%s173] %v650
                %v652 = vld [vmem:[%s180 + $0x758] sm:%s173]
                %653 = vst [vmem:[%s181 + $0x3ac] sm:%s173] %v652
                %v654 = vld [vmem:[%s180 + $0x760] sm:%s173]
                %655 = vst [vmem:[%s181 + $0x3b0] sm:%s173] %v654
                %v656 = vld [vmem:[%s180 + $0x768] sm:%s173]
                %657 = vst [vmem:[%s181 + $0x3b4] sm:%s173] %v656
                %v658 = vld [vmem:[%s180 + $0x770] sm:%s173]
                %659 = vst [vmem:[%s181 + $0x3b8] sm:%s173] %v658
                %v660 = vld [vmem:[%s180 + $0x778] sm:%s173]
                %661 = vst [vmem:[%s181 + $0x3bc] sm:%s173] %v660
                %v662 = vld [vmem:[%s180 + $0x780] sm:%s173]
                %663 = vst [vmem:[%s181 + $0x3c0] sm:%s173] %v662
                %v664 = vld [vmem:[%s180 + $0x788] sm:%s173]
                %665 = vst [vmem:[%s181 + $0x3c4] sm:%s173] %v664
                %v666 = vld [vmem:[%s180 + $0x790] sm:%s173]
                %667 = vst [vmem:[%s181 + $0x3c8] sm:%s173] %v666
                %v668 = vld [vmem:[%s180 + $0x798] sm:%s173]
                %669 = vst [vmem:[%s181 + $0x3cc] sm:%s173] %v668
                %v670 = vld [vmem:[%s180 + $0x7a0] sm:%s173]
                %671 = vst [vmem:[%s181 + $0x3d0] sm:%s173] %v670
                %v672 = vld [vmem:[%s180 + $0x7a8] sm:%s173]
                %673 = vst [vmem:[%s181 + $0x3d4] sm:%s173] %v672
                %v674 = vld [vmem:[%s180 + $0x7b0] sm:%s173]
                %675 = vst [vmem:[%s181 + $0x3d8] sm:%s173] %v674
                %v676 = vld [vmem:[%s180 + $0x7b8] sm:%s173]
                %677 = vst [vmem:[%s181 + $0x3dc] sm:%s173] %v676
                %v678 = vld [vmem:[%s180 + $0x7c0] sm:%s173]
                %679 = vst [vmem:[%s181 + $0x3e0] sm:%s173] %v678
                %v680 = vld [vmem:[%s180 + $0x7c8] sm:%s173]
                %681 = vst [vmem:[%s181 + $0x3e4] sm:%s173] %v680
                %v682 = vld [vmem:[%s180 + $0x7d0] sm:%s173]
                %683 = vst [vmem:[%s181 + $0x3e8] sm:%s173] %v682
                %v684 = vld [vmem:[%s180 + $0x7d8] sm:%s173]
                %685 = vst [vmem:[%s181 + $0x3ec] sm:%s173] %v684
                %v686 = vld [vmem:[%s180 + $0x7e0] sm:%s173]
                %687 = vst [vmem:[%s181 + $0x3f0] sm:%s173] %v686
                %v688 = vld [vmem:[%s180 + $0x7e8] sm:%s173]
                %689 = vst [vmem:[%s181 + $0x3f4] sm:%s173] %v688
                %v690 = vld [vmem:[%s180 + $0x7f0] sm:%s173]
                %691 = vst [vmem:[%s181 + $0x3f8] sm:%s173] %v690
                %v692 = vld [vmem:[%s180 + $0x7f8] sm:%s173]
                %693 = vst [vmem:[%s181 + $0x3fc] sm:%s173] %v692
                %v694 = vld [vmem:[%s180 + $0x800] sm:%s173]
                %695 = vst [vmem:[%s181 + $0x400] sm:%s173] %v694
                %v696 = vld [vmem:[%s180 + $0x808] sm:%s173]
                %697 = vst [vmem:[%s181 + $0x404] sm:%s173] %v696
                %v698 = vld [vmem:[%s180 + $0x810] sm:%s173]
                %699 = vst [vmem:[%s181 + $0x408] sm:%s173] %v698
                %v700 = vld [vmem:[%s180 + $0x818] sm:%s173]
                %701 = vst [vmem:[%s181 + $0x40c] sm:%s173] %v700
                %v702 = vld [vmem:[%s180 + $0x820] sm:%s173]
                %703 = vst [vmem:[%s181 + $0x410] sm:%s173] %v702
                %v704 = vld [vmem:[%s180 + $0x828] sm:%s173]
                %705 = vst [vmem:[%s181 + $0x414] sm:%s173] %v704
                %v706 = vld [vmem:[%s180 + $0x830] sm:%s173]
                %707 = vst [vmem:[%s181 + $0x418] sm:%s173] %v706
                %v708 = vld [vmem:[%s180 + $0x838] sm:%s173]
                %709 = vst [vmem:[%s181 + $0x41c] sm:%s173] %v708
                %v710 = vld [vmem:[%s180 + $0x840] sm:%s173]
                %711 = vst [vmem:[%s181 + $0x420] sm:%s173] %v710
                %v712 = vld [vmem:[%s180 + $0x848] sm:%s173]
                %713 = vst [vmem:[%s181 + $0x424] sm:%s173] %v712
                %v714 = vld [vmem:[%s180 + $0x850] sm:%s173]
                %715 = vst [vmem:[%s181 + $0x428] sm:%s173] %v714
                %v716 = vld [vmem:[%s180 + $0x858] sm:%s173]
                %717 = vst [vmem:[%s181 + $0x42c] sm:%s173] %v716
                %v718 = vld [vmem:[%s180 + $0x860] sm:%s173]
                %719 = vst [vmem:[%s181 + $0x430] sm:%s173] %v718
                %v720 = vld [vmem:[%s180 + $0x868] sm:%s173]
                %721 = vst [vmem:[%s181 + $0x434] sm:%s173] %v720
                %v722 = vld [vmem:[%s180 + $0x870] sm:%s173]
                %723 = vst [vmem:[%s181 + $0x438] sm:%s173] %v722
                %v724 = vld [vmem:[%s180 + $0x878] sm:%s173]
                %725 = vst [vmem:[%s181 + $0x43c] sm:%s173] %v724
                %v726 = vld [vmem:[%s180 + $0x880] sm:%s173]
                %727 = vst [vmem:[%s181 + $0x440] sm:%s173] %v726
                %v728 = vld [vmem:[%s180 + $0x888] sm:%s173]
                %729 = vst [vmem:[%s181 + $0x444] sm:%s173] %v728
                %v730 = vld [vmem:[%s180 + $0x890] sm:%s173]
                %731 = vst [vmem:[%s181 + $0x448] sm:%s173] %v730
                %v732 = vld [vmem:[%s180 + $0x898] sm:%s173]
                %733 = vst [vmem:[%s181 + $0x44c] sm:%s173] %v732
                %v734 = vld [vmem:[%s180 + $0x8a0] sm:%s173]
                %735 = vst [vmem:[%s181 + $0x450] sm:%s173] %v734
                %v736 = vld [vmem:[%s180 + $0x8a8] sm:%s173]
                %737 = vst [vmem:[%s181 + $0x454] sm:%s173] %v736
                %v738 = vld [vmem:[%s180 + $0x8b0] sm:%s173]
                %739 = vst [vmem:[%s181 + $0x458] sm:%s173] %v738
                %v740 = vld [vmem:[%s180 + $0x8b8] sm:%s173]
                %741 = vst [vmem:[%s181 + $0x45c] sm:%s173] %v740
                %v742 = vld [vmem:[%s180 + $0x8c0] sm:%s173]
                %743 = vst [vmem:[%s181 + $0x460] sm:%s173] %v742
                %v744 = vld [vmem:[%s180 + $0x8c8] sm:%s173]
                %745 = vst [vmem:[%s181 + $0x464] sm:%s173] %v744
                %v746 = vld [vmem:[%s180 + $0x8d0] sm:%s173]
                %747 = vst [vmem:[%s181 + $0x468] sm:%s173] %v746
                %v748 = vld [vmem:[%s180 + $0x8d8] sm:%s173]
                %749 = vst [vmem:[%s181 + $0x46c] sm:%s173] %v748
                %v750 = vld [vmem:[%s180 + $0x8e0] sm:%s173]
                %751 = vst [vmem:[%s181 + $0x470] sm:%s173] %v750
                %v752 = vld [vmem:[%s180 + $0x8e8] sm:%s173]
                %753 = vst [vmem:[%s181 + $0x474] sm:%s173] %v752
                %v754 = vld [vmem:[%s180 + $0x8f0] sm:%s173]
                %755 = vst [vmem:[%s181 + $0x478] sm:%s173] %v754
                %v756 = vld [vmem:[%s180 + $0x8f8] sm:%s173]
                %757 = vst [vmem:[%s181 + $0x47c] sm:%s173] %v756
                %v758 = vld [vmem:[%s180 + $0x900] sm:%s173]
                %759 = vst [vmem:[%s181 + $0x480] sm:%s173] %v758
                %v760 = vld [vmem:[%s180 + $0x908] sm:%s173]
                %761 = vst [vmem:[%s181 + $0x484] sm:%s173] %v760
                %v762 = vld [vmem:[%s180 + $0x910] sm:%s173]
                %763 = vst [vmem:[%s181 + $0x488] sm:%s173] %v762
                %v764 = vld [vmem:[%s180 + $0x918] sm:%s173]
                %765 = vst [vmem:[%s181 + $0x48c] sm:%s173] %v764
                %v766 = vld [vmem:[%s180 + $0x920] sm:%s173]
                %767 = vst [vmem:[%s181 + $0x490] sm:%s173] %v766
                %v768 = vld [vmem:[%s180 + $0x928] sm:%s173]
                %769 = vst [vmem:[%s181 + $0x494] sm:%s173] %v768
                %v770 = vld [vmem:[%s180 + $0x930] sm:%s173]
                %771 = vst [vmem:[%s181 + $0x498] sm:%s173] %v770
                %v772 = vld [vmem:[%s180 + $0x938] sm:%s173]
                %773 = vst [vmem:[%s181 + $0x49c] sm:%s173] %v772
                %v774 = vld [vmem:[%s180 + $0x940] sm:%s173]
                %775 = vst [vmem:[%s181 + $0x4a0] sm:%s173] %v774
                %v776 = vld [vmem:[%s180 + $0x948] sm:%s173]
                %777 = vst [vmem:[%s181 + $0x4a4] sm:%s173] %v776
                %v778 = vld [vmem:[%s180 + $0x950] sm:%s173]
                %779 = vst [vmem:[%s181 + $0x4a8] sm:%s173] %v778
                %v780 = vld [vmem:[%s180 + $0x958] sm:%s173]
                %781 = vst [vmem:[%s181 + $0x4ac] sm:%s173] %v780
                %v782 = vld [vmem:[%s180 + $0x960] sm:%s173]
                %783 = vst [vmem:[%s181 + $0x4b0] sm:%s173] %v782
                %v784 = vld [vmem:[%s180 + $0x968] sm:%s173]
                %785 = vst [vmem:[%s181 + $0x4b4] sm:%s173] %v784
                %v786 = vld [vmem:[%s180 + $0x970] sm:%s173]
                %787 = vst [vmem:[%s181 + $0x4b8] sm:%s173] %v786
                %v788 = vld [vmem:[%s180 + $0x978] sm:%s173]
                %789 = vst [vmem:[%s181 + $0x4bc] sm:%s173] %v788
                %v790 = vld [vmem:[%s180 + $0x980] sm:%s173]
                %791 = vst [vmem:[%s181 + $0x4c0] sm:%s173] %v790
                %v792 = vld [vmem:[%s180 + $0x988] sm:%s173]
                %793 = vst [vmem:[%s181 + $0x4c4] sm:%s173] %v792
                %v794 = vld [vmem:[%s180 + $0x990] sm:%s173]
                %795 = vst [vmem:[%s181 + $0x4c8] sm:%s173] %v794
                %v796 = vld [vmem:[%s180 + $0x998] sm:%s173]
                %797 = vst [vmem:[%s181 + $0x4cc] sm:%s173] %v796
                %v798 = vld [vmem:[%s180 + $0x9a0] sm:%s173]
                %799 = vst [vmem:[%s181 + $0x4d0] sm:%s173] %v798
                %v800 = vld [vmem:[%s180 + $0x9a8] sm:%s173]
                %801 = vst [vmem:[%s181 + $0x4d4] sm:%s173] %v800
                %v802 = vld [vmem:[%s180 + $0x9b0] sm:%s173]
                %803 = vst [vmem:[%s181 + $0x4d8] sm:%s173] %v802
                %v804 = vld [vmem:[%s180 + $0x9b8] sm:%s173]
                %805 = vst [vmem:[%s181 + $0x4dc] sm:%s173] %v804
                %v806 = vld [vmem:[%s180 + $0x9c0] sm:%s173]
                %807 = vst [vmem:[%s181 + $0x4e0] sm:%s173] %v806
                %v808 = vld [vmem:[%s180 + $0x9c8] sm:%s173]
                %809 = vst [vmem:[%s181 + $0x4e4] sm:%s173] %v808
                %v810 = vld [vmem:[%s180 + $0x9d0] sm:%s173]
                %811 = vst [vmem:[%s181 + $0x4e8] sm:%s173] %v810
                %v812 = vld [vmem:[%s180 + $0x9d8] sm:%s173]
                %813 = vst [vmem:[%s181 + $0x4ec] sm:%s173] %v812
                %v814 = vld [vmem:[%s180 + $0x9e0] sm:%s173]
                %815 = vst [vmem:[%s181 + $0x4f0] sm:%s173] %v814
                %v816 = vld [vmem:[%s180 + $0x9e8] sm:%s173]
                %817 = vst [vmem:[%s181 + $0x4f4] sm:%s173] %v816
                %v818 = vld [vmem:[%s180 + $0x9f0] sm:%s173]
                %819 = vst [vmem:[%s181 + $0x4f8] sm:%s173] %v818
                %v820 = vld [vmem:[%s180 + $0x9f8] sm:%s173]
                %821 = vst [vmem:[%s181 + $0x4fc] sm:%s173] %v820
                %v822 = vld [vmem:[%s180 + $0xa00] sm:%s173]
                %823 = vst [vmem:[%s181 + $0x500] sm:%s173] %v822
                %v824 = vld [vmem:[%s180 + $0xa08] sm:%s173]
                %825 = vst [vmem:[%s181 + $0x504] sm:%s173] %v824
                %v826 = vld [vmem:[%s180 + $0xa10] sm:%s173]
                %827 = vst [vmem:[%s181 + $0x508] sm:%s173] %v826
                %v828 = vld [vmem:[%s180 + $0xa18] sm:%s173]
                %829 = vst [vmem:[%s181 + $0x50c] sm:%s173] %v828
                %v830 = vld [vmem:[%s180 + $0xa20] sm:%s173]
                %831 = vst [vmem:[%s181 + $0x510] sm:%s173] %v830
                %v832 = vld [vmem:[%s180 + $0xa28] sm:%s173]
                %833 = vst [vmem:[%s181 + $0x514] sm:%s173] %v832
                %v834 = vld [vmem:[%s180 + $0xa30] sm:%s173]
                %835 = vst [vmem:[%s181 + $0x518] sm:%s173] %v834
                %v836 = vld [vmem:[%s180 + $0xa38] sm:%s173]
                %837 = vst [vmem:[%s181 + $0x51c] sm:%s173] %v836
                %v838 = vld [vmem:[%s180 + $0xa40] sm:%s173]
                %839 = vst [vmem:[%s181 + $0x520] sm:%s173] %v838
                %v840 = vld [vmem:[%s180 + $0xa48] sm:%s173]
                %841 = vst [vmem:[%s181 + $0x524] sm:%s173] %v840
                %v842 = vld [vmem:[%s180 + $0xa50] sm:%s173]
                %843 = vst [vmem:[%s181 + $0x528] sm:%s173] %v842
                %v844 = vld [vmem:[%s180 + $0xa58] sm:%s173]
                %845 = vst [vmem:[%s181 + $0x52c] sm:%s173] %v844
                %v846 = vld [vmem:[%s180 + $0xa60] sm:%s173]
                %847 = vst [vmem:[%s181 + $0x530] sm:%s173] %v846
                %v848 = vld [vmem:[%s180 + $0xa68] sm:%s173]
                %849 = vst [vmem:[%s181 + $0x534] sm:%s173] %v848
                %v850 = vld [vmem:[%s180 + $0xa70] sm:%s173]
                %851 = vst [vmem:[%s181 + $0x538] sm:%s173] %v850
                %v852 = vld [vmem:[%s180 + $0xa78] sm:%s173]
                %853 = vst [vmem:[%s181 + $0x53c] sm:%s173] %v852
                %v854 = vld [vmem:[%s180 + $0xa80] sm:%s173]
                %855 = vst [vmem:[%s181 + $0x540] sm:%s173] %v854
                %v856 = vld [vmem:[%s180 + $0xa88] sm:%s173]
                %857 = vst [vmem:[%s181 + $0x544] sm:%s173] %v856
                %v858 = vld [vmem:[%s180 + $0xa90] sm:%s173]
                %859 = vst [vmem:[%s181 + $0x548] sm:%s173] %v858
                %v860 = vld [vmem:[%s180 + $0xa98] sm:%s173]
                %861 = vst [vmem:[%s181 + $0x54c] sm:%s173] %v860
                %v862 = vld [vmem:[%s180 + $0xaa0] sm:%s173]
                %863 = vst [vmem:[%s181 + $0x550] sm:%s173] %v862
                %v864 = vld [vmem:[%s180 + $0xaa8] sm:%s173]
                %865 = vst [vmem:[%s181 + $0x554] sm:%s173] %v864
                %v866 = vld [vmem:[%s180 + $0xab0] sm:%s173]
                %867 = vst [vmem:[%s181 + $0x558] sm:%s173] %v866
                %v868 = vld [vmem:[%s180 + $0xab8] sm:%s173]
                %869 = vst [vmem:[%s181 + $0x55c] sm:%s173] %v868
                %v870 = vld [vmem:[%s180 + $0xac0] sm:%s173]
                %871 = vst [vmem:[%s181 + $0x560] sm:%s173] %v870
                %v872 = vld [vmem:[%s180 + $0xac8] sm:%s173]
                %873 = vst [vmem:[%s181 + $0x564] sm:%s173] %v872
                %v874 = vld [vmem:[%s180 + $0xad0] sm:%s173]
                %875 = vst [vmem:[%s181 + $0x568] sm:%s173] %v874
                %v876 = vld [vmem:[%s180 + $0xad8] sm:%s173]
                %877 = vst [vmem:[%s181 + $0x56c] sm:%s173] %v876
                %v878 = vld [vmem:[%s180 + $0xae0] sm:%s173]
                %879 = vst [vmem:[%s181 + $0x570] sm:%s173] %v878
                %v880 = vld [vmem:[%s180 + $0xae8] sm:%s173]
                %881 = vst [vmem:[%s181 + $0x574] sm:%s173] %v880
                %v882 = vld [vmem:[%s180 + $0xaf0] sm:%s173]
                %883 = vst [vmem:[%s181 + $0x578] sm:%s173] %v882
                %v884 = vld [vmem:[%s180 + $0xaf8] sm:%s173]
                %885 = vst [vmem:[%s181 + $0x57c] sm:%s173] %v884
                %v886 = vld [vmem:[%s180 + $0xb00] sm:%s173]
                %887 = vst [vmem:[%s181 + $0x580] sm:%s173] %v886
                %v888 = vld [vmem:[%s180 + $0xb08] sm:%s173]
                %889 = vst [vmem:[%s181 + $0x584] sm:%s173] %v888
                %v890 = vld [vmem:[%s180 + $0xb10] sm:%s173]
                %891 = vst [vmem:[%s181 + $0x588] sm:%s173] %v890
                %v892 = vld [vmem:[%s180 + $0xb18] sm:%s173]
                %893 = vst [vmem:[%s181 + $0x58c] sm:%s173] %v892
                %v894 = vld [vmem:[%s180 + $0xb20] sm:%s173]
                %895 = vst [vmem:[%s181 + $0x590] sm:%s173] %v894
                %v896 = vld [vmem:[%s180 + $0xb28] sm:%s173]
                %897 = vst [vmem:[%s181 + $0x594] sm:%s173] %v896
                %v898 = vld [vmem:[%s180 + $0xb30] sm:%s173]
                %899 = vst [vmem:[%s181 + $0x598] sm:%s173] %v898
                %v900 = vld [vmem:[%s180 + $0xb38] sm:%s173]
                %901 = vst [vmem:[%s181 + $0x59c] sm:%s173] %v900
              $region41: #{cnn_forward.5} parent=35 // loop_footer
                %s179 = sadd.s32 1, %s175
              $region42: #{cnn_forward.5} parent=35 // loop_footer_branch
                %174 = sbr.rel target = $region38
              $region43: #{cnn_forward.5} parent=35 // loop_exit
                _
            $region36: #{cnn_forward.5} parent=27 // pred_fallthru
              _
          $region28: #{cnn_forward.5} parent=23 // pred_fallthru
            _
          %1642 = vnop
        $region24: #{cnn_forward.5} parent=19 // pred_fallthru
          _
        // Predicated region
        $region62: #{cnn_forward.5} parent=19 // pred_check
          %p1643 = pneg %p77
        $region63: #{cnn_forward.5} parent=19 // pred_check_branch
          %1645 = sbr.rel (%p1643) target = $region65
        $region64: #{cnn_forward.5} parent=19 // pred_region
          %p1646 = scmp.lt.s32.totalorder %s10, 1
          %s1647 = scalar_select %p1646, %s10, 1
          %s1648 = scalar_lea.vmem %s2, %s1647
        $region65: #{cnn_forward.5} parent=19 // pred_fallthru
          _
        // Predicated region
        $region66: #{cnn_forward.5} parent=19 // pred_check
          %p1649 = pneg %p103
        $region67: #{cnn_forward.5} parent=19 // pred_check_branch
          %1651 = sbr.rel (%p1649) target = $region69
        $region68: #{cnn_forward.5} parent=19 // pred_region
          %s1652 = smul.u32 16, %s10
          %p1653 = scmp.lt.s32.totalorder %s1652, 31
          %s1654 = scalar_select %p1653, %s1652, 31
          %s1655 = smul.addr %s1654, 4
          %s1656 = scalar_lea.vmem %s3, %s1655
          %s1657 = smul.u32 16, %s10
        $region69: #{cnn_forward.5} parent=19 // pred_fallthru
          _
      $region20: #{cnn_forward.5} parent=5 // pred_fallthru
        _
      %p1658 = scmp.le.s32.totalorder 1, %s10
      %p1659 = scmp.lt.s32.totalorder %s10, 3
      %p1660 = pnand %p1658, %p1659
      %p1661 = pneg %p1660
      // Predicated region
      $region70: #{cnn_forward.5} parent=5 // pred_check
        _
      $region71: #{cnn_forward.5} parent=5 // pred_check_branch
        %1663 = sbr.rel (%p1660) target = $region73
      $region72: #{cnn_forward.5} parent=5 // pred_region
        %s1664 = ssub.s32 %s10, 1
        %s1665 = sand.u32 %s44, 1
        %s1666 = sand.u32 %s44, 1
        %s1667 = smul.addr %s1666, 1440
        %s1668 = scalar_lea.vmem [#allocation2], %s1667
        // Predicated region
        $region74: #{cnn_forward.5} parent=72 // pred_check
          %p1669 = pneg %p57
        $region75: #{cnn_forward.5} parent=72 // pred_check_branch
          %1671 = sbr.rel (%p1669) target = $region77
        $region76: #{cnn_forward.5} parent=72 // pred_region
          _
        $region77: #{cnn_forward.5} parent=72 // pred_fallthru
          _
        %p1672 = pneg %p31
        %p1673 = pneg %p28
        %s1674 = sand.u32 %s44, 1
        %s1675 = sand.u32 %s44, 1
        %s1676 = smul.addr %s1675, 1440
        %s1677 = scalar_lea.vmem [#allocation2], %s1676
        %p1678 = pneg %p57
        %p1679 = pneg %p54
        %p1680 = scmp.lt.s32.totalorder %s15, 1
        %s1681 = scalar_select %p1680, %s15, 1
        %s1682 = scalar_lea.vmem %s2, %s1681
        %p1683 = pneg %p83
        %p1684 = pneg %p80
        %s1685 = smul.u32 16, %s15
        %p1686 = scmp.lt.s32.totalorder %s1685, 31
        %s1687 = scalar_select %p1686, %s1685, 31
        %s1688 = smul.addr %s1687, 4
        %s1689 = scalar_lea.vmem %s3, %s1688
        %p1690 = pneg %p109
        %p1691 = pneg %p106
        %p1692 = pneg %p135
        %p1693 = pneg %p132
        %p1694 = scmp.lt.s32.totalorder %s15, 1
        %s1695 = scalar_select %p1694, %s15, 1
        %s1696 = smul.addr %s1695, 2
        %s1697 = scalar_lea.vmem %s4, %s1696
        %p1698 = scmp.lt.s32.totalorder %s15, 1
        %s1699 = scalar_select %p1698, %s15, 1
        %s1700 = scalar_lea.vmem %s2, %s1699
        %s1701 = smul.u32 16, %s15
        %p1702 = scmp.lt.s32.totalorder %s1701, 31
        %s1703 = scalar_select %p1702, %s1701, 31
        %s1704 = smul.addr %s1703, 4
        %s1705 = scalar_lea.vmem %s3, %s1704
        %s1706 = smul.u32 16, %s15
        %p1707 = scmp.lt.s32.totalorder %s15, 1
        %s1708 = scalar_select %p1707, %s15, 1
        %s1709 = smul.addr %s1708, 2
        %s1710 = scalar_lea.vmem %s4, %s1709
        %v1712 = vld [vmem:[%s0] sm:$0xff]
        %v1713 = vld [vmem:[%s0 + $0x8] sm:$0xff]
        %v1714 = vld [vmem:[%s0 + $0x10] sm:$0x7f]
        %v1715 = vld [vmem:[%s1668] sm:$0xf]
        %v1716 = vld [vmem:[%s1668 + $0x4] sm:$0xf]
        %v1717 = vld [vmem:[%s1668 + $0x8] sm:$0xf]
        %v1718 = vld [vmem:[%s1668 + $0xc] sm:$0xf]
        %v1719 = vld [vmem:[%s1668 + $0x10] sm:$0xf]
        %v1720 = vld [vmem:[%s1668 + $0x14] sm:$0xf]
        %v1721 = vld [vmem:[%s1668 + $0x18] sm:$0xf]
        %v1722 = vld [vmem:[%s1668 + $0x1c] sm:$0xf]
        %v1723 = vld [vmem:[%s1668 + $0x20] sm:$0xf]
        %v1724 = vld [vmem:[%s1668 + $0x24] sm:$0xf]
        %v1725 = vld [vmem:[%s1668 + $0x28] sm:$0xf]
        %v1726 = vld [vmem:[%s1668 + $0x2c] sm:$0xf]
        %v1727 = vld [vmem:[%s1668 + $0x30] sm:$0xf]
        %v1728 = vld [vmem:[%s1668 + $0x34] sm:$0xf]
        %v1729 = vld [vmem:[%s1668 + $0x38] sm:$0xf]
        %v1730 = vld [vmem:[%s1668 + $0x3c] sm:$0xf]
        %v1731 = vld [vmem:[%s1668 + $0x40] sm:$0xf]
        %v1732 = vld [vmem:[%s1668 + $0x44] sm:$0xf]
        %v1733 = vld [vmem:[%s1668 + $0x48] sm:$0xf]
        %v1734 = vld [vmem:[%s1668 + $0x4c] sm:$0xf]
        %v1735 = vld [vmem:[%s1668 + $0x50] sm:$0xf]
        %v1736 = vld [vmem:[%s1668 + $0x54] sm:$0xf]
        %v1737 = vld [vmem:[%s1668 + $0x58] sm:$0xf]
        %v1738 = vld [vmem:[%s1668 + $0x5c] sm:$0xf]
        %v1739 = vld [vmem:[%s1668 + $0x60] sm:$0xf]
        %v1740 = vld [vmem:[%s1668 + $0x64] sm:$0xf]
        %v1741 = vld [vmem:[%s1668 + $0x68] sm:$0xf]
        %v1742 = vld [vmem:[%s1668 + $0x6c] sm:$0xf]
        %v1743 = vld [vmem:[%s1668 + $0x70] sm:$0xf]
        %v1744 = vld [vmem:[%s1668 + $0x74] sm:$0xf]
        %v1745 = vld [vmem:[%s1668 + $0x78] sm:$0xf]
        %v1746 = vld [vmem:[%s1668 + $0x7c] sm:$0xf]
        %v1747 = vld [vmem:[%s1668 + $0x80] sm:$0xf]
        %v1748 = vld [vmem:[%s1668 + $0x84] sm:$0xf]
        %v1749 = vld [vmem:[%s1668 + $0x88] sm:$0xf]
        %v1750 = vld [vmem:[%s1668 + $0x8c] sm:$0xf]
        %v1751 = vld [vmem:[%s1668 + $0x90] sm:$0xf]
        %v1752 = vld [vmem:[%s1668 + $0x94] sm:$0xf]
        %v1753 = vld [vmem:[%s1668 + $0x98] sm:$0xf]
        %v1754 = vld [vmem:[%s1668 + $0x9c] sm:$0xf]
        %v1755 = vld [vmem:[%s1668 + $0xa0] sm:$0xf]
        %v1756 = vld [vmem:[%s1668 + $0xa4] sm:$0xf]
        %v1757 = vld [vmem:[%s1668 + $0xa8] sm:$0xf]
        %v1758 = vld [vmem:[%s1668 + $0xac] sm:$0xf]
        %v1759 = vld [vmem:[%s1668 + $0xb0] sm:$0xf]
        %v1760 = vld [vmem:[%s1668 + $0xb4] sm:$0xf]
        %v1761 = vld [vmem:[%s1668 + $0xb8] sm:$0xf]
        %v1762 = vld [vmem:[%s1668 + $0xbc] sm:$0xf]
        %v1763 = vld [vmem:[%s1668 + $0xc0] sm:$0xf]
        %v1764 = vld [vmem:[%s1668 + $0xc4] sm:$0xf]
        %v1765 = vld [vmem:[%s1668 + $0xc8] sm:$0xf]
        %v1766 = vld [vmem:[%s1668 + $0xcc] sm:$0xf]
        %v1767 = vld [vmem:[%s1668 + $0xd0] sm:$0xf]
        %v1768 = vld [vmem:[%s1668 + $0xd4] sm:$0xf]
        %v1769 = vld [vmem:[%s1668 + $0xd8] sm:$0xf]
        %v1770 = vld [vmem:[%s1668 + $0xdc] sm:$0xf]
        %v1771 = vld [vmem:[%s1668 + $0xe0] sm:$0xf]
        %v1772 = vld [vmem:[%s1668 + $0xe4] sm:$0xf]
        %v1773 = vld [vmem:[%s1668 + $0xe8] sm:$0xf]
        %v1774 = vld [vmem:[%s1668 + $0xec] sm:$0xf]
        %v1775 = vld [vmem:[%s1668 + $0xf0] sm:$0xf]
        %v1776 = vld [vmem:[%s1668 + $0xf4] sm:$0xf]
        %v1777 = vld [vmem:[%s1668 + $0xf8] sm:$0xf]
        %v1778 = vld [vmem:[%s1668 + $0xfc] sm:$0xf]
        %v1779 = vld [vmem:[%s1668 + $0x100] sm:$0xf]
        %v1780 = vld [vmem:[%s1668 + $0x104] sm:$0xf]
        %v1781 = vld [vmem:[%s1668 + $0x108] sm:$0xf]
        %v1782 = vld [vmem:[%s1668 + $0x10c] sm:$0xf]
        %v1783 = vld [vmem:[%s1668 + $0x110] sm:$0xf]
        %v1784 = vld [vmem:[%s1668 + $0x114] sm:$0xf]
        %v1785 = vld [vmem:[%s1668 + $0x118] sm:$0xf]
        %v1786 = vld [vmem:[%s1668 + $0x11c] sm:$0xf]
        %v1787 = vld [vmem:[%s1668 + $0x120] sm:$0xf]
        %v1788 = vld [vmem:[%s1668 + $0x124] sm:$0xf]
        %v1789 = vld [vmem:[%s1668 + $0x128] sm:$0xf]
        %v1790 = vld [vmem:[%s1668 + $0x12c] sm:$0xf]
        %v1791 = vld [vmem:[%s1668 + $0x130] sm:$0xf]
        %v1792 = vld [vmem:[%s1668 + $0x134] sm:$0xf]
        %v1793 = vld [vmem:[%s1668 + $0x138] sm:$0xf]
        %v1794 = vld [vmem:[%s1668 + $0x13c] sm:$0xf]
        %v1795 = vld [vmem:[%s1668 + $0x140] sm:$0xf]
        %v1796 = vld [vmem:[%s1668 + $0x144] sm:$0xf]
        %v1797 = vld [vmem:[%s1668 + $0x148] sm:$0xf]
        %v1798 = vld [vmem:[%s1668 + $0x14c] sm:$0xf]
        %v1799 = vld [vmem:[%s1668 + $0x150] sm:$0xf]
        %v1800 = vld [vmem:[%s1668 + $0x154] sm:$0xf]
        %v1801 = vld [vmem:[%s1668 + $0x158] sm:$0xf]
        %v1802 = vld [vmem:[%s1668 + $0x15c] sm:$0xf]
        %v1803 = vld [vmem:[%s1668 + $0x160] sm:$0xf]
        %v1804 = vld [vmem:[%s1668 + $0x164] sm:$0xf]
        %v1805 = vld [vmem:[%s1668 + $0x168] sm:$0xf]
        %v1806 = vld [vmem:[%s1668 + $0x16c] sm:$0xf]
        %v1807 = vld [vmem:[%s1668 + $0x170] sm:$0xf]
        %v1808 = vld [vmem:[%s1668 + $0x174] sm:$0xf]
        %v1809 = vld [vmem:[%s1668 + $0x178] sm:$0xf]
        %v1810 = vld [vmem:[%s1668 + $0x17c] sm:$0xf]
        %v1811 = vld [vmem:[%s1668 + $0x180] sm:$0xf]
        %v1812 = vld [vmem:[%s1668 + $0x184] sm:$0xf]
        %v1813 = vld [vmem:[%s1668 + $0x188] sm:$0xf]
        %v1814 = vld [vmem:[%s1668 + $0x18c] sm:$0xf]
        %v1815 = vld [vmem:[%s1668 + $0x190] sm:$0xf]
        %v1816 = vld [vmem:[%s1668 + $0x194] sm:$0xf]
        %v1817 = vld [vmem:[%s1668 + $0x198] sm:$0xf]
        %v1818 = vld [vmem:[%s1668 + $0x19c] sm:$0xf]
        %v1819 = vld [vmem:[%s1668 + $0x1a0] sm:$0xf]
        %v1820 = vld [vmem:[%s1668 + $0x1a4] sm:$0xf]
        %v1821 = vld [vmem:[%s1668 + $0x1a8] sm:$0xf]
        %v1822 = vld [vmem:[%s1668 + $0x1ac] sm:$0xf]
        %v1823 = vld [vmem:[%s1668 + $0x1b0] sm:$0xf]
        %v1824 = vld [vmem:[%s1668 + $0x1b4] sm:$0xf]
        %v1825 = vld [vmem:[%s1668 + $0x1b8] sm:$0xf]
        %v1826 = vld [vmem:[%s1668 + $0x1bc] sm:$0xf]
        %v1827 = vld [vmem:[%s1668 + $0x1c0] sm:$0xf]
        %v1828 = vld [vmem:[%s1668 + $0x1c4] sm:$0xf]
        %v1829 = vld [vmem:[%s1668 + $0x1c8] sm:$0xf]
        %v1830 = vld [vmem:[%s1668 + $0x1cc] sm:$0xf]
        %v1831 = vld [vmem:[%s1668 + $0x1d0] sm:$0xf]
        %v1832 = vld [vmem:[%s1668 + $0x1d4] sm:$0xf]
        %v1833 = vld [vmem:[%s1668 + $0x1d8] sm:$0xf]
        %v1834 = vld [vmem:[%s1668 + $0x1dc] sm:$0xf]
        %v1835 = vld [vmem:[%s1668 + $0x1e0] sm:$0xf]
        %v1836 = vld [vmem:[%s1668 + $0x1e4] sm:$0xf]
        %v1837 = vld [vmem:[%s1668 + $0x1e8] sm:$0xf]
        %v1838 = vld [vmem:[%s1668 + $0x1ec] sm:$0xf]
        %v1839 = vld [vmem:[%s1668 + $0x1f0] sm:$0xf]
        %v1840 = vld [vmem:[%s1668 + $0x1f4] sm:$0xf]
        %v1841 = vld [vmem:[%s1668 + $0x1f8] sm:$0xf]
        %v1842 = vld [vmem:[%s1668 + $0x1fc] sm:$0xf]
        %v1843 = vld [vmem:[%s1668 + $0x200] sm:$0xf]
        %v1844 = vld [vmem:[%s1668 + $0x204] sm:$0xf]
        %v1845 = vld [vmem:[%s1668 + $0x208] sm:$0xf]
        %v1846 = vld [vmem:[%s1668 + $0x20c] sm:$0xf]
        %v1847 = vld [vmem:[%s1668 + $0x210] sm:$0xf]
        %v1848 = vld [vmem:[%s1668 + $0x214] sm:$0xf]
        %v1849 = vld [vmem:[%s1668 + $0x218] sm:$0xf]
        %v1850 = vld [vmem:[%s1668 + $0x21c] sm:$0xf]
        %v1851 = vld [vmem:[%s1668 + $0x220] sm:$0xf]
        %v1852 = vld [vmem:[%s1668 + $0x224] sm:$0xf]
        %v1853 = vld [vmem:[%s1668 + $0x228] sm:$0xf]
        %v1854 = vld [vmem:[%s1668 + $0x22c] sm:$0xf]
        %v1855 = vld [vmem:[%s1668 + $0x230] sm:$0xf]
        %v1856 = vld [vmem:[%s1668 + $0x234] sm:$0xf]
        %v1857 = vld [vmem:[%s1668 + $0x238] sm:$0xf]
        %v1858 = vld [vmem:[%s1668 + $0x23c] sm:$0xf]
        %v1859 = vld [vmem:[%s1668 + $0x240] sm:$0xf]
        %v1860 = vld [vmem:[%s1668 + $0x244] sm:$0xf]
        %v1861 = vld [vmem:[%s1668 + $0x248] sm:$0xf]
        %v1862 = vld [vmem:[%s1668 + $0x24c] sm:$0xf]
        %v1863 = vld [vmem:[%s1668 + $0x250] sm:$0xf]
        %v1864 = vld [vmem:[%s1668 + $0x254] sm:$0xf]
        %v1865 = vld [vmem:[%s1668 + $0x258] sm:$0xf]
        %v1866 = vld [vmem:[%s1668 + $0x25c] sm:$0xf]
        %v1867 = vld [vmem:[%s1668 + $0x260] sm:$0xf]
        %v1868 = vld [vmem:[%s1668 + $0x264] sm:$0xf]
        %v1869 = vld [vmem:[%s1668 + $0x268] sm:$0xf]
        %v1870 = vld [vmem:[%s1668 + $0x26c] sm:$0xf]
        %v1871 = vld [vmem:[%s1668 + $0x270] sm:$0xf]
        %v1872 = vld [vmem:[%s1668 + $0x274] sm:$0xf]
        %v1873 = vld [vmem:[%s1668 + $0x278] sm:$0xf]
        %v1874 = vld [vmem:[%s1668 + $0x27c] sm:$0xf]
        %v1875 = vld [vmem:[%s1668 + $0x280] sm:$0xf]
        %v1876 = vld [vmem:[%s1668 + $0x284] sm:$0xf]
        %v1877 = vld [vmem:[%s1668 + $0x288] sm:$0xf]
        %v1878 = vld [vmem:[%s1668 + $0x28c] sm:$0xf]
        %v1879 = vld [vmem:[%s1668 + $0x290] sm:$0xf]
        %v1880 = vld [vmem:[%s1668 + $0x294] sm:$0xf]
        %v1881 = vld [vmem:[%s1668 + $0x298] sm:$0xf]
        %v1882 = vld [vmem:[%s1668 + $0x29c] sm:$0xf]
        %v1883 = vld [vmem:[%s1668 + $0x2a0] sm:$0xf]
        %v1884 = vld [vmem:[%s1668 + $0x2a4] sm:$0xf]
        %v1885 = vld [vmem:[%s1668 + $0x2a8] sm:$0xf]
        %v1886 = vld [vmem:[%s1668 + $0x2ac] sm:$0xf]
        %v1887 = vld [vmem:[%s1668 + $0x2b0] sm:$0xf]
        %v1888 = vld [vmem:[%s1668 + $0x2b4] sm:$0xf]
        %v1889 = vld [vmem:[%s1668 + $0x2b8] sm:$0xf]
        %v1890 = vld [vmem:[%s1668 + $0x2bc] sm:$0xf]
        %v1891 = vld [vmem:[%s1668 + $0x2c0] sm:$0xf]
        %v1892 = vld [vmem:[%s1668 + $0x2c4] sm:$0xf]
        %v1893 = vld [vmem:[%s1668 + $0x2c8] sm:$0xf]
        %v1894 = vld [vmem:[%s1668 + $0x2cc] sm:$0xf]
        %v1895 = vld [vmem:[%s1668 + $0x2d0] sm:$0xf]
        %v1896 = vld [vmem:[%s1668 + $0x2d4] sm:$0xf]
        %v1897 = vld [vmem:[%s1668 + $0x2d8] sm:$0xf]
        %v1898 = vld [vmem:[%s1668 + $0x2dc] sm:$0xf]
        %v1899 = vld [vmem:[%s1668 + $0x2e0] sm:$0xf]
        %v1900 = vld [vmem:[%s1668 + $0x2e4] sm:$0xf]
        %v1901 = vld [vmem:[%s1668 + $0x2e8] sm:$0xf]
        %v1902 = vld [vmem:[%s1668 + $0x2ec] sm:$0xf]
        %v1903 = vld [vmem:[%s1668 + $0x2f0] sm:$0xf]
        %v1904 = vld [vmem:[%s1668 + $0x2f4] sm:$0xf]
        %v1905 = vld [vmem:[%s1668 + $0x2f8] sm:$0xf]
        %v1906 = vld [vmem:[%s1668 + $0x2fc] sm:$0xf]
        %v1907 = vld [vmem:[%s1668 + $0x300] sm:$0xf]
        %v1908 = vld [vmem:[%s1668 + $0x304] sm:$0xf]
        %v1909 = vld [vmem:[%s1668 + $0x308] sm:$0xf]
        %v1910 = vld [vmem:[%s1668 + $0x30c] sm:$0xf]
        %v1911 = vld [vmem:[%s1668 + $0x310] sm:$0xf]
        %v1912 = vld [vmem:[%s1668 + $0x314] sm:$0xf]
        %v1913 = vld [vmem:[%s1668 + $0x318] sm:$0xf]
        %v1914 = vld [vmem:[%s1668 + $0x31c] sm:$0xf]
        %v1915 = vld [vmem:[%s1668 + $0x320] sm:$0xf]
        %v1916 = vld [vmem:[%s1668 + $0x324] sm:$0xf]
        %v1917 = vld [vmem:[%s1668 + $0x328] sm:$0xf]
        %v1918 = vld [vmem:[%s1668 + $0x32c] sm:$0xf]
        %v1919 = vld [vmem:[%s1668 + $0x330] sm:$0xf]
        %v1920 = vld [vmem:[%s1668 + $0x334] sm:$0xf]
        %v1921 = vld [vmem:[%s1668 + $0x338] sm:$0xf]
        %v1922 = vld [vmem:[%s1668 + $0x33c] sm:$0xf]
        %v1923 = vld [vmem:[%s1668 + $0x340] sm:$0xf]
        %v1924 = vld [vmem:[%s1668 + $0x344] sm:$0xf]
        %v1925 = vld [vmem:[%s1668 + $0x348] sm:$0xf]
        %v1926 = vld [vmem:[%s1668 + $0x34c] sm:$0xf]
        %v1927 = vld [vmem:[%s1668 + $0x350] sm:$0xf]
        %v1928 = vld [vmem:[%s1668 + $0x354] sm:$0xf]
        %v1929 = vld [vmem:[%s1668 + $0x358] sm:$0xf]
        %v1930 = vld [vmem:[%s1668 + $0x35c] sm:$0xf]
        %v1931 = vld [vmem:[%s1668 + $0x360] sm:$0xf]
        %v1932 = vld [vmem:[%s1668 + $0x364] sm:$0xf]
        %v1933 = vld [vmem:[%s1668 + $0x368] sm:$0xf]
        %v1934 = vld [vmem:[%s1668 + $0x36c] sm:$0xf]
        %v1935 = vld [vmem:[%s1668 + $0x370] sm:$0xf]
        %v1936 = vld [vmem:[%s1668 + $0x374] sm:$0xf]
        %v1937 = vld [vmem:[%s1668 + $0x378] sm:$0xf]
        %v1938 = vld [vmem:[%s1668 + $0x37c] sm:$0xf]
        %v1939 = vld [vmem:[%s1668 + $0x380] sm:$0xf]
        %v1940 = vld [vmem:[%s1668 + $0x384] sm:$0xf]
        %v1941 = vld [vmem:[%s1668 + $0x388] sm:$0xf]
        %v1942 = vld [vmem:[%s1668 + $0x38c] sm:$0xf]
        %v1943 = vld [vmem:[%s1668 + $0x390] sm:$0xf]
        %v1944 = vld [vmem:[%s1668 + $0x394] sm:$0xf]
        %v1945 = vld [vmem:[%s1668 + $0x398] sm:$0xf]
        %v1946 = vld [vmem:[%s1668 + $0x39c] sm:$0xf]
        %v1947 = vld [vmem:[%s1668 + $0x3a0] sm:$0xf]
        %v1948 = vld [vmem:[%s1668 + $0x3a4] sm:$0xf]
        %v1949 = vld [vmem:[%s1668 + $0x3a8] sm:$0xf]
        %v1950 = vld [vmem:[%s1668 + $0x3ac] sm:$0xf]
        %v1951 = vld [vmem:[%s1668 + $0x3b0] sm:$0xf]
        %v1952 = vld [vmem:[%s1668 + $0x3b4] sm:$0xf]
        %v1953 = vld [vmem:[%s1668 + $0x3b8] sm:$0xf]
        %v1954 = vld [vmem:[%s1668 + $0x3bc] sm:$0xf]
        %v1955 = vld [vmem:[%s1668 + $0x3c0] sm:$0xf]
        %v1956 = vld [vmem:[%s1668 + $0x3c4] sm:$0xf]
        %v1957 = vld [vmem:[%s1668 + $0x3c8] sm:$0xf]
        %v1958 = vld [vmem:[%s1668 + $0x3cc] sm:$0xf]
        %v1959 = vld [vmem:[%s1668 + $0x3d0] sm:$0xf]
        %v1960 = vld [vmem:[%s1668 + $0x3d4] sm:$0xf]
        %v1961 = vld [vmem:[%s1668 + $0x3d8] sm:$0xf]
        %v1962 = vld [vmem:[%s1668 + $0x3dc] sm:$0xf]
        %v1963 = vld [vmem:[%s1668 + $0x3e0] sm:$0xf]
        %v1964 = vld [vmem:[%s1668 + $0x3e4] sm:$0xf]
        %v1965 = vld [vmem:[%s1668 + $0x3e8] sm:$0xf]
        %v1966 = vld [vmem:[%s1668 + $0x3ec] sm:$0xf]
        %v1967 = vld [vmem:[%s1668 + $0x3f0] sm:$0xf]
        %v1968 = vld [vmem:[%s1668 + $0x3f4] sm:$0xf]
        %v1969 = vld [vmem:[%s1668 + $0x3f8] sm:$0xf]
        %v1970 = vld [vmem:[%s1668 + $0x3fc] sm:$0xf]
        %v1971 = vld [vmem:[%s1668 + $0x400] sm:$0xf]
        %v1972 = vld [vmem:[%s1668 + $0x404] sm:$0xf]
        %v1973 = vld [vmem:[%s1668 + $0x408] sm:$0xf]
        %v1974 = vld [vmem:[%s1668 + $0x40c] sm:$0xf]
        %v1975 = vld [vmem:[%s1668 + $0x410] sm:$0xf]
        %v1976 = vld [vmem:[%s1668 + $0x414] sm:$0xf]
        %v1977 = vld [vmem:[%s1668 + $0x418] sm:$0xf]
        %v1978 = vld [vmem:[%s1668 + $0x41c] sm:$0xf]
        %v1979 = vld [vmem:[%s1668 + $0x420] sm:$0xf]
        %v1980 = vld [vmem:[%s1668 + $0x424] sm:$0xf]
        %v1981 = vld [vmem:[%s1668 + $0x428] sm:$0xf]
        %v1982 = vld [vmem:[%s1668 + $0x42c] sm:$0xf]
        %v1983 = vld [vmem:[%s1668 + $0x430] sm:$0xf]
        %v1984 = vld [vmem:[%s1668 + $0x434] sm:$0xf]
        %v1985 = vld [vmem:[%s1668 + $0x438] sm:$0xf]
        %v1986 = vld [vmem:[%s1668 + $0x43c] sm:$0xf]
        %v1987 = vld [vmem:[%s1668 + $0x440] sm:$0xf]
        %v1988 = vld [vmem:[%s1668 + $0x444] sm:$0xf]
        %v1989 = vld [vmem:[%s1668 + $0x448] sm:$0xf]
        %v1990 = vld [vmem:[%s1668 + $0x44c] sm:$0xf]
        %v1991 = vld [vmem:[%s1668 + $0x450] sm:$0xf]
        %v1992 = vld [vmem:[%s1668 + $0x454] sm:$0xf]
        %v1993 = vld [vmem:[%s1668 + $0x458] sm:$0xf]
        %v1994 = vld [vmem:[%s1668 + $0x45c] sm:$0xf]
        %v1995 = vld [vmem:[%s1668 + $0x460] sm:$0xf]
        %v1996 = vld [vmem:[%s1668 + $0x464] sm:$0xf]
        %v1997 = vld [vmem:[%s1668 + $0x468] sm:$0xf]
        %v1998 = vld [vmem:[%s1668 + $0x46c] sm:$0xf]
        %v1999 = vld [vmem:[%s1668 + $0x470] sm:$0xf]
        %v2000 = vld [vmem:[%s1668 + $0x474] sm:$0xf]
        %v2001 = vld [vmem:[%s1668 + $0x478] sm:$0xf]
        %v2002 = vld [vmem:[%s1668 + $0x47c] sm:$0xf]
        %v2003 = vld [vmem:[%s1668 + $0x480] sm:$0xf]
        %v2004 = vld [vmem:[%s1668 + $0x484] sm:$0xf]
        %v2005 = vld [vmem:[%s1668 + $0x488] sm:$0xf]
        %v2006 = vld [vmem:[%s1668 + $0x48c] sm:$0xf]
        %v2007 = vld [vmem:[%s1668 + $0x490] sm:$0xf]
        %v2008 = vld [vmem:[%s1668 + $0x494] sm:$0xf]
        %v2009 = vld [vmem:[%s1668 + $0x498] sm:$0xf]
        %v2010 = vld [vmem:[%s1668 + $0x49c] sm:$0xf]
        %v2011 = vld [vmem:[%s1668 + $0x4a0] sm:$0xf]
        %v2012 = vld [vmem:[%s1668 + $0x4a4] sm:$0xf]
        %v2013 = vld [vmem:[%s1668 + $0x4a8] sm:$0xf]
        %v2014 = vld [vmem:[%s1668 + $0x4ac] sm:$0xf]
        %v2015 = vld [vmem:[%s1668 + $0x4b0] sm:$0xf]
        %v2016 = vld [vmem:[%s1668 + $0x4b4] sm:$0xf]
        %v2017 = vld [vmem:[%s1668 + $0x4b8] sm:$0xf]
        %v2018 = vld [vmem:[%s1668 + $0x4bc] sm:$0xf]
        %v2019 = vld [vmem:[%s1668 + $0x4c0] sm:$0xf]
        %v2020 = vld [vmem:[%s1668 + $0x4c4] sm:$0xf]
        %v2021 = vld [vmem:[%s1668 + $0x4c8] sm:$0xf]
        %v2022 = vld [vmem:[%s1668 + $0x4cc] sm:$0xf]
        %v2023 = vld [vmem:[%s1668 + $0x4d0] sm:$0xf]
        %v2024 = vld [vmem:[%s1668 + $0x4d4] sm:$0xf]
        %v2025 = vld [vmem:[%s1668 + $0x4d8] sm:$0xf]
        %v2026 = vld [vmem:[%s1668 + $0x4dc] sm:$0xf]
        %v2027 = vld [vmem:[%s1668 + $0x4e0] sm:$0xf]
        %v2028 = vld [vmem:[%s1668 + $0x4e4] sm:$0xf]
        %v2029 = vld [vmem:[%s1668 + $0x4e8] sm:$0xf]
        %v2030 = vld [vmem:[%s1668 + $0x4ec] sm:$0xf]
        %v2031 = vld [vmem:[%s1668 + $0x4f0] sm:$0xf]
        %v2032 = vld [vmem:[%s1668 + $0x4f4] sm:$0xf]
        %v2033 = vld [vmem:[%s1668 + $0x4f8] sm:$0xf]
        %v2034 = vld [vmem:[%s1668 + $0x4fc] sm:$0xf]
        %v2035 = vld [vmem:[%s1668 + $0x500] sm:$0xf]
        %v2036 = vld [vmem:[%s1668 + $0x504] sm:$0xf]
        %v2037 = vld [vmem:[%s1668 + $0x508] sm:$0xf]
        %v2038 = vld [vmem:[%s1668 + $0x50c] sm:$0xf]
        %v2039 = vld [vmem:[%s1668 + $0x510] sm:$0xf]
        %v2040 = vld [vmem:[%s1668 + $0x514] sm:$0xf]
        %v2041 = vld [vmem:[%s1668 + $0x518] sm:$0xf]
        %v2042 = vld [vmem:[%s1668 + $0x51c] sm:$0xf]
        %v2043 = vld [vmem:[%s1668 + $0x520] sm:$0xf]
        %v2044 = vld [vmem:[%s1668 + $0x524] sm:$0xf]
        %v2045 = vld [vmem:[%s1668 + $0x528] sm:$0xf]
        %v2046 = vld [vmem:[%s1668 + $0x52c] sm:$0xf]
        %v2047 = vld [vmem:[%s1668 + $0x530] sm:$0xf]
        %v2048 = vld [vmem:[%s1668 + $0x534] sm:$0xf]
        %v2049 = vld [vmem:[%s1668 + $0x538] sm:$0xf]
        %v2050 = vld [vmem:[%s1668 + $0x53c] sm:$0xf]
        %v2051 = vld [vmem:[%s1668 + $0x540] sm:$0xf]
        %v2052 = vld [vmem:[%s1668 + $0x544] sm:$0xf]
        %v2053 = vld [vmem:[%s1668 + $0x548] sm:$0xf]
        %v2054 = vld [vmem:[%s1668 + $0x54c] sm:$0xf]
        %v2055 = vld [vmem:[%s1668 + $0x550] sm:$0xf]
        %v2056 = vld [vmem:[%s1668 + $0x554] sm:$0xf]
        %v2057 = vld [vmem:[%s1668 + $0x558] sm:$0xf]
        %v2058 = vld [vmem:[%s1668 + $0x55c] sm:$0xf]
        %v2059 = vld [vmem:[%s1668 + $0x560] sm:$0xf]
        %v2060 = vld [vmem:[%s1668 + $0x564] sm:$0xf]
        %v2061 = vld [vmem:[%s1668 + $0x568] sm:$0xf]
        %v2062 = vld [vmem:[%s1668 + $0x56c] sm:$0xf]
        %v2063 = vld [vmem:[%s1668 + $0x570] sm:$0xf]
        %v2064 = vld [vmem:[%s1668 + $0x574] sm:$0xf]
        %v2065 = vld [vmem:[%s1668 + $0x578] sm:$0xf]
        %v2066 = vld [vmem:[%s1668 + $0x57c] sm:$0xf]
        %v2067 = vld [vmem:[%s1668 + $0x580] sm:$0xf]
        %v2068 = vld [vmem:[%s1668 + $0x584] sm:$0xf]
        %v2069 = vld [vmem:[%s1668 + $0x588] sm:$0xf]
        %v2070 = vld [vmem:[%s1668 + $0x58c] sm:$0xf]
        %v2071 = vld [vmem:[%s1668 + $0x590] sm:$0xf]
        %v2072 = vld [vmem:[%s1668 + $0x594] sm:$0xf]
        %v2073 = vld [vmem:[%s1668 + $0x598] sm:$0xf]
        %v2074 = vld [vmem:[%s1668 + $0x59c] sm:$0xf]
        %v2075 = vld [vmem:[%s1700] sm:$0x1]
        %v2077 = vlaneseq
        %v2078 = vshrl.u32 %v2077, 7
        %v2079 = vsub.s32 0, %v2078
        %v2080 = vrot.slane %v2075, %v2079
        %v2085 = vcombine.high %v1712, %v1712
        %v2087 = vunpack.c.l.s4 1966171168
        %v2088 = vunpack.c.0.s8 %v2087
        %v2089 = vlaneseq
        %v2090 = vshrl.u32 %v2089, 7
        %v2091 = vsub.s32 %v2088, %v2090
        %v2092 = vrot.slane %v1712, %v2091
        %v2094 = vunpack.c.l.s4 1966171168
        %v2095 = vunpack.c.0.s8 %v2094
        %v2096 = vlaneseq
        %v2097 = vshrl.u32 %v2096, 7
        %v2098 = vsub.s32 %v2095, %v2097
        %v2099 = vrot.slane %v2085, %v2098
        %v2100 = vcombine.high %v2092, %v2092
        %v2101 = vcombine.high %v2099, %v2099
        %v2103 = vunpack.c.l.s4 1966171168
        %v2104 = vunpack.c.0.s8 %v2103
        %v2105 = vlaneseq
        %v2106 = vshrl.u32 %v2105, 7
        %v2107 = vsub.s32 %v2104, %v2106
        %v2108 = vrot.slane %v2092, %v2107
        %v2110 = vunpack.c.l.s4 1966171168
        %v2111 = vunpack.c.0.s8 %v2110
        %v2112 = vlaneseq
        %v2113 = vshrl.u32 %v2112, 7
        %v2114 = vsub.s32 %v2111, %v2113
        %v2115 = vrot.slane %v2099, %v2114
        %v2117 = vunpack.c.l.s4 1966171168
        %v2118 = vunpack.c.0.s8 %v2117
        %v2119 = vlaneseq
        %v2120 = vshrl.u32 %v2119, 7
        %v2121 = vsub.s32 %v2118, %v2120
        %v2122 = vrot.slane %v2100, %v2121
        %v2124 = vunpack.c.l.s4 1966171168
        %v2125 = vunpack.c.0.s8 %v2124
        %v2126 = vlaneseq
        %v2127 = vshrl.u32 %v2126, 7
        %v2128 = vsub.s32 %v2125, %v2127
        %v2129 = vrot.slane %v2101, %v2128
        %v2130 = vcombine.high %v2108, %v2108
        %v2131 = vcombine.high %v2115, %v2115
        %v2132 = vcombine.high %v2122, %v2122
        %v2133 = vcombine.high %v2129, %v2129
        %v2134 = vcombine.high %v1713, %v1713
        %v2136 = vunpack.c.l.s4 1966171168
        %v2137 = vunpack.c.0.s8 %v2136
        %v2138 = vlaneseq
        %v2139 = vshrl.u32 %v2138, 7
        %v2140 = vsub.s32 %v2137, %v2139
        %v2141 = vrot.slane %v1713, %v2140
        %v2143 = vunpack.c.l.s4 1966171168
        %v2144 = vunpack.c.0.s8 %v2143
        %v2145 = vlaneseq
        %v2146 = vshrl.u32 %v2145, 7
        %v2147 = vsub.s32 %v2144, %v2146
        %v2148 = vrot.slane %v2134, %v2147
        %v2149 = vcombine.high %v2141, %v2141
        %v2150 = vcombine.high %v2148, %v2148
        %v2152 = vunpack.c.l.s4 1966171168
        %v2153 = vunpack.c.0.s8 %v2152
        %v2154 = vlaneseq
        %v2155 = vshrl.u32 %v2154, 7
        %v2156 = vsub.s32 %v2153, %v2155
        %v2157 = vrot.slane %v2141, %v2156
        %v2159 = vunpack.c.l.s4 1966171168
        %v2160 = vunpack.c.0.s8 %v2159
        %v2161 = vlaneseq
        %v2162 = vshrl.u32 %v2161, 7
        %v2163 = vsub.s32 %v2160, %v2162
        %v2164 = vrot.slane %v2148, %v2163
        %v2166 = vunpack.c.l.s4 1966171168
        %v2167 = vunpack.c.0.s8 %v2166
        %v2168 = vlaneseq
        %v2169 = vshrl.u32 %v2168, 7
        %v2170 = vsub.s32 %v2167, %v2169
        %v2171 = vrot.slane %v2149, %v2170
        %v2173 = vunpack.c.l.s4 1966171168
        %v2174 = vunpack.c.0.s8 %v2173
        %v2175 = vlaneseq
        %v2176 = vshrl.u32 %v2175, 7
        %v2177 = vsub.s32 %v2174, %v2176
        %v2178 = vrot.slane %v2150, %v2177
        %v2179 = vcombine.high %v2157, %v2157
        %v2180 = vcombine.high %v2164, %v2164
        %v2181 = vcombine.high %v2171, %v2171
        %v2182 = vcombine.high %v2178, %v2178
        %v2183 = vcombine.high %v1714, %v1714
        %v2185 = vunpack.c.l.s4 1966171168
        %v2186 = vunpack.c.0.s8 %v2185
        %v2187 = vlaneseq
        %v2188 = vshrl.u32 %v2187, 7
        %v2189 = vsub.s32 %v2186, %v2188
        %v2190 = vrot.slane %v1714, %v2189
        %v2192 = vunpack.c.l.s4 1966171168
        %v2193 = vunpack.c.0.s8 %v2192
        %v2194 = vlaneseq
        %v2195 = vshrl.u32 %v2194, 7
        %v2196 = vsub.s32 %v2193, %v2195
        %v2197 = vrot.slane %v2183, %v2196
        %v2198 = vcombine.high %v2190, %v2190
        %v2199 = vcombine.high %v2197, %v2197
        %v2201 = vunpack.c.l.s4 1966171168
        %v2202 = vunpack.c.0.s8 %v2201
        %v2203 = vlaneseq
        %v2204 = vshrl.u32 %v2203, 7
        %v2205 = vsub.s32 %v2202, %v2204
        %v2206 = vrot.slane %v2190, %v2205
        %v2208 = vunpack.c.l.s4 1966171168
        %v2209 = vunpack.c.0.s8 %v2208
        %v2210 = vlaneseq
        %v2211 = vshrl.u32 %v2210, 7
        %v2212 = vsub.s32 %v2209, %v2211
        %v2213 = vrot.slane %v2197, %v2212
        %v2215 = vunpack.c.l.s4 1966171168
        %v2216 = vunpack.c.0.s8 %v2215
        %v2217 = vlaneseq
        %v2218 = vshrl.u32 %v2217, 7
        %v2219 = vsub.s32 %v2216, %v2218
        %v2220 = vrot.slane %v2198, %v2219
        %v2222 = vunpack.c.l.s4 1966171168
        %v2223 = vunpack.c.0.s8 %v2222
        %v2224 = vlaneseq
        %v2225 = vshrl.u32 %v2224, 7
        %v2226 = vsub.s32 %v2223, %v2225
        %v2227 = vrot.slane %v2199, %v2226
        %v2228 = vcombine.high %v2206, %v2206
        %v2229 = vcombine.high %v2213, %v2213
        %v2230 = vcombine.high %v2220, %v2220
        %v2613 = vunpack.c.l.b16 %v1715
        %v2614 = vunpack.c.l.b16 %v1716
        %v2615 = vunpack.c.l.b16 %v1717
        %v2616 = vunpack.c.l.b16 %v1718
        %v2617 = vunpack.c.l.b16 %v1719
        %v2618 = vunpack.c.l.b16 %v1720
        %v2619 = vunpack.c.l.b16 %v1721
        %v2620 = vunpack.c.l.b16 %v1722
        %v2621 = vunpack.c.l.b16 %v1723
        %v2622 = vunpack.c.l.b16 %v1724
        %v2623 = vunpack.c.l.b16 %v1725
        %v2624 = vunpack.c.l.b16 %v1726
        %v2625 = vunpack.c.l.b16 %v1727
        %v2626 = vunpack.c.l.b16 %v1728
        %v2627 = vunpack.c.l.b16 %v1729
        %v2628 = vunpack.c.l.b16 %v1730
        %v2629 = vunpack.c.l.b16 %v1731
        %v2630 = vunpack.c.l.b16 %v1732
        %v2631 = vunpack.c.l.b16 %v1733
        %v2632 = vunpack.c.l.b16 %v1734
        %v2633 = vunpack.c.l.b16 %v1735
        %v2634 = vunpack.c.l.b16 %v1736
        %v2635 = vunpack.c.l.b16 %v1737
        %v2636 = vunpack.c.l.b16 %v1738
        %v2637 = vunpack.c.l.b16 %v1739
        %v2638 = vunpack.c.l.b16 %v1740
        %v2639 = vunpack.c.l.b16 %v1741
        %v2640 = vunpack.c.l.b16 %v1742
        %v2641 = vunpack.c.l.b16 %v1743
        %v2642 = vunpack.c.l.b16 %v1744
        %v2643 = vunpack.c.l.b16 %v1745
        %v2644 = vunpack.c.l.b16 %v1746
        %v2645 = vunpack.c.l.b16 %v1747
        %v2646 = vunpack.c.l.b16 %v1748
        %v2647 = vunpack.c.l.b16 %v1749
        %v2648 = vunpack.c.l.b16 %v1750
        %v2649 = vunpack.c.l.b16 %v1751
        %v2650 = vunpack.c.l.b16 %v1752
        %v2651 = vunpack.c.l.b16 %v1753
        %v2652 = vunpack.c.l.b16 %v1754
        %v2653 = vunpack.c.l.b16 %v1755
        %v2654 = vunpack.c.l.b16 %v1756
        %v2655 = vunpack.c.l.b16 %v1757
        %v2656 = vunpack.c.l.b16 %v1758
        %v2657 = vunpack.c.l.b16 %v1759
        %v2658 = vunpack.c.l.b16 %v1760
        %v2659 = vunpack.c.l.b16 %v1761
        %v2660 = vunpack.c.l.b16 %v1762
        %v2661 = vunpack.c.l.b16 %v1763
        %v2662 = vunpack.c.l.b16 %v1764
        %v2663 = vunpack.c.l.b16 %v1765
        %v2664 = vunpack.c.l.b16 %v1766
        %v2665 = vunpack.c.l.b16 %v1767
        %v2666 = vunpack.c.l.b16 %v1768
        %v2667 = vunpack.c.l.b16 %v1769
        %v2668 = vunpack.c.l.b16 %v1770
        %v2669 = vunpack.c.l.b16 %v1771
        %v2670 = vunpack.c.l.b16 %v1772
        %v2671 = vunpack.c.l.b16 %v1773
        %v2672 = vunpack.c.l.b16 %v1774
        %v2673 = vunpack.c.l.b16 %v1775
        %v2674 = vunpack.c.l.b16 %v1776
        %v2675 = vunpack.c.l.b16 %v1777
        %v2676 = vunpack.c.l.b16 %v1778
        %v2677 = vunpack.c.l.b16 %v1779
        %v2678 = vunpack.c.l.b16 %v1780
        %v2679 = vunpack.c.l.b16 %v1781
        %v2680 = vunpack.c.l.b16 %v1782
        %v2681 = vunpack.c.l.b16 %v1783
        %v2682 = vunpack.c.l.b16 %v1784
        %v2683 = vunpack.c.l.b16 %v1785
        %v2684 = vunpack.c.l.b16 %v1786
        %v2685 = vunpack.c.l.b16 %v1787
        %v2686 = vunpack.c.l.b16 %v1788
        %v2687 = vunpack.c.l.b16 %v1789
        %v2688 = vunpack.c.l.b16 %v1790
        %v2689 = vunpack.c.l.b16 %v1791
        %v2690 = vunpack.c.l.b16 %v1792
        %v2691 = vunpack.c.l.b16 %v1793
        %v2692 = vunpack.c.l.b16 %v1794
        %v2693 = vunpack.c.l.b16 %v1795
        %v2694 = vunpack.c.l.b16 %v1796
        %v2695 = vunpack.c.l.b16 %v1797
        %v2696 = vunpack.c.l.b16 %v1798
        %v2697 = vunpack.c.l.b16 %v1799
        %v2698 = vunpack.c.l.b16 %v1800
        %v2699 = vunpack.c.l.b16 %v1801
        %v2700 = vunpack.c.l.b16 %v1802
        %v2701 = vunpack.c.l.b16 %v1803
        %v2702 = vunpack.c.l.b16 %v1804
        %v2703 = vunpack.c.l.b16 %v1805
        %v2704 = vunpack.c.l.b16 %v1806
        %v2705 = vunpack.c.l.b16 %v1807
        %v2706 = vunpack.c.l.b16 %v1808
        %v2707 = vunpack.c.l.b16 %v1809
        %v2708 = vunpack.c.l.b16 %v1810
        %v2709 = vunpack.c.l.b16 %v1811
        %v2710 = vunpack.c.l.b16 %v1812
        %v2711 = vunpack.c.l.b16 %v1813
        %v2712 = vunpack.c.l.b16 %v1814
        %v2713 = vunpack.c.l.b16 %v1815
        %v2714 = vunpack.c.l.b16 %v1816
        %v2715 = vunpack.c.l.b16 %v1817
        %v2716 = vunpack.c.l.b16 %v1818
        %v2717 = vunpack.c.l.b16 %v1819
        %v2718 = vunpack.c.l.b16 %v1820
        %v2719 = vunpack.c.l.b16 %v1821
        %v2720 = vunpack.c.l.b16 %v1822
        %v2721 = vunpack.c.l.b16 %v1823
        %v2722 = vunpack.c.l.b16 %v1824
        %v2723 = vunpack.c.l.b16 %v1825
        %v2724 = vunpack.c.l.b16 %v1826
        %v2725 = vunpack.c.l.b16 %v1827
        %v2726 = vunpack.c.l.b16 %v1828
        %v2727 = vunpack.c.l.b16 %v1829
        %v2728 = vunpack.c.l.b16 %v1830
        %v2729 = vunpack.c.l.b16 %v1831
        %v2730 = vunpack.c.l.b16 %v1832
        %v2731 = vunpack.c.l.b16 %v1833
        %v2732 = vunpack.c.l.b16 %v1834
        %v2733 = vunpack.c.l.b16 %v1835
        %v2734 = vunpack.c.l.b16 %v1836
        %v2735 = vunpack.c.l.b16 %v1837
        %v2736 = vunpack.c.l.b16 %v1838
        %v2737 = vunpack.c.l.b16 %v1839
        %v2738 = vunpack.c.l.b16 %v1840
        %v2739 = vunpack.c.l.b16 %v1841
        %v2740 = vunpack.c.l.b16 %v1842
        %v2741 = vunpack.c.l.b16 %v1843
        %v2742 = vunpack.c.l.b16 %v1844
        %v2743 = vunpack.c.l.b16 %v1845
        %v2744 = vunpack.c.l.b16 %v1846
        %v2745 = vunpack.c.l.b16 %v1847
        %v2746 = vunpack.c.l.b16 %v1848
        %v2747 = vunpack.c.l.b16 %v1849
        %v2748 = vunpack.c.l.b16 %v1850
        %v2749 = vunpack.c.l.b16 %v1851
        %v2750 = vunpack.c.l.b16 %v1852
        %v2751 = vunpack.c.l.b16 %v1853
        %v2752 = vunpack.c.l.b16 %v1854
        %v2753 = vunpack.c.l.b16 %v1855
        %v2754 = vunpack.c.l.b16 %v1856
        %v2755 = vunpack.c.l.b16 %v1857
        %v2756 = vunpack.c.l.b16 %v1858
        %v2757 = vunpack.c.l.b16 %v1859
        %v2758 = vunpack.c.l.b16 %v1860
        %v2759 = vunpack.c.l.b16 %v1861
        %v2760 = vunpack.c.l.b16 %v1862
        %v2761 = vunpack.c.l.b16 %v1863
        %v2762 = vunpack.c.l.b16 %v1864
        %v2763 = vunpack.c.l.b16 %v1865
        %v2764 = vunpack.c.l.b16 %v1866
        %v2765 = vunpack.c.l.b16 %v1867
        %v2766 = vunpack.c.l.b16 %v1868
        %v2767 = vunpack.c.l.b16 %v1869
        %v2768 = vunpack.c.l.b16 %v1870
        %v2769 = vunpack.c.l.b16 %v1871
        %v2770 = vunpack.c.l.b16 %v1872
        %v2771 = vunpack.c.l.b16 %v1873
        %v2772 = vunpack.c.l.b16 %v1874
        %v2773 = vunpack.c.l.b16 %v1875
        %v2774 = vunpack.c.l.b16 %v1876
        %v2775 = vunpack.c.l.b16 %v1877
        %v2776 = vunpack.c.l.b16 %v1878
        %v2777 = vunpack.c.l.b16 %v1879
        %v2778 = vunpack.c.l.b16 %v1880
        %v2779 = vunpack.c.l.b16 %v1881
        %v2780 = vunpack.c.l.b16 %v1882
        %v2781 = vunpack.c.l.b16 %v1883
        %v2782 = vunpack.c.l.b16 %v1884
        %v2783 = vunpack.c.l.b16 %v1885
        %v2784 = vunpack.c.l.b16 %v1886
        %v2785 = vunpack.c.l.b16 %v1887
        %v2786 = vunpack.c.l.b16 %v1888
        %v2787 = vunpack.c.l.b16 %v1889
        %v2788 = vunpack.c.l.b16 %v1890
        %v2789 = vunpack.c.l.b16 %v1891
        %v2790 = vunpack.c.l.b16 %v1892
        %v2791 = vunpack.c.l.b16 %v1893
        %v2792 = vunpack.c.l.b16 %v1894
        %v2793 = vunpack.c.l.b16 %v1895
        %v2794 = vunpack.c.l.b16 %v1896
        %v2795 = vunpack.c.l.b16 %v1897
        %v2796 = vunpack.c.l.b16 %v1898
        %v2797 = vunpack.c.l.b16 %v1899
        %v2798 = vunpack.c.l.b16 %v1900
        %v2799 = vunpack.c.l.b16 %v1901
        %v2800 = vunpack.c.l.b16 %v1902
        %v2801 = vunpack.c.l.b16 %v1903
        %v2802 = vunpack.c.l.b16 %v1904
        %v2803 = vunpack.c.l.b16 %v1905
        %v2804 = vunpack.c.l.b16 %v1906
        %v2805 = vunpack.c.l.b16 %v1907
        %v2806 = vunpack.c.l.b16 %v1908
        %v2807 = vunpack.c.l.b16 %v1909
        %v2808 = vunpack.c.l.b16 %v1910
        %v2809 = vunpack.c.l.b16 %v1911
        %v2810 = vunpack.c.l.b16 %v1912
        %v2811 = vunpack.c.l.b16 %v1913
        %v2812 = vunpack.c.l.b16 %v1914
        %v2813 = vunpack.c.l.b16 %v1915
        %v2814 = vunpack.c.l.b16 %v1916
        %v2815 = vunpack.c.l.b16 %v1917
        %v2816 = vunpack.c.l.b16 %v1918
        %v2817 = vunpack.c.l.b16 %v1919
        %v2818 = vunpack.c.l.b16 %v1920
        %v2819 = vunpack.c.l.b16 %v1921
        %v2820 = vunpack.c.l.b16 %v1922
        %v2821 = vunpack.c.l.b16 %v1923
        %v2822 = vunpack.c.l.b16 %v1924
        %v2823 = vunpack.c.l.b16 %v1925
        %v2824 = vunpack.c.l.b16 %v1926
        %v2825 = vunpack.c.l.b16 %v1927
        %v2826 = vunpack.c.l.b16 %v1928
        %v2827 = vunpack.c.l.b16 %v1929
        %v2828 = vunpack.c.l.b16 %v1930
        %v2829 = vunpack.c.l.b16 %v1931
        %v2830 = vunpack.c.l.b16 %v1932
        %v2831 = vunpack.c.l.b16 %v1933
        %v2832 = vunpack.c.l.b16 %v1934
        %v2833 = vunpack.c.l.b16 %v1935
        %v2834 = vunpack.c.l.b16 %v1936
        %v2835 = vunpack.c.l.b16 %v1937
        %v2836 = vunpack.c.l.b16 %v1938
        %v2837 = vunpack.c.l.b16 %v1939
        %v2838 = vunpack.c.l.b16 %v1940
        %v2839 = vunpack.c.l.b16 %v1941
        %v2840 = vunpack.c.l.b16 %v1942
        %v2841 = vunpack.c.l.b16 %v1943
        %v2842 = vunpack.c.l.b16 %v1944
        %v2843 = vunpack.c.l.b16 %v1945
        %v2844 = vunpack.c.l.b16 %v1946
        %v2845 = vunpack.c.l.b16 %v1947
        %v2846 = vunpack.c.l.b16 %v1948
        %v2847 = vunpack.c.l.b16 %v1949
        %v2848 = vunpack.c.l.b16 %v1950
        %v2849 = vunpack.c.l.b16 %v1951
        %v2850 = vunpack.c.l.b16 %v1952
        %v2851 = vunpack.c.l.b16 %v1953
        %v2852 = vunpack.c.l.b16 %v1954
        %v2853 = vunpack.c.l.b16 %v1955
        %v2854 = vunpack.c.l.b16 %v1956
        %v2855 = vunpack.c.l.b16 %v1957
        %v2856 = vunpack.c.l.b16 %v1958
        %v2857 = vunpack.c.l.b16 %v1959
        %v2858 = vunpack.c.l.b16 %v1960
        %v2859 = vunpack.c.l.b16 %v1961
        %v2860 = vunpack.c.l.b16 %v1962
        %v2861 = vunpack.c.l.b16 %v1963
        %v2862 = vunpack.c.l.b16 %v1964
        %v2863 = vunpack.c.l.b16 %v1965
        %v2864 = vunpack.c.l.b16 %v1966
        %v2865 = vunpack.c.l.b16 %v1967
        %v2866 = vunpack.c.l.b16 %v1968
        %v2867 = vunpack.c.l.b16 %v1969
        %v2868 = vunpack.c.l.b16 %v1970
        %v2869 = vunpack.c.l.b16 %v1971
        %v2870 = vunpack.c.l.b16 %v1972
        %v2871 = vunpack.c.l.b16 %v1973
        %v2872 = vunpack.c.l.b16 %v1974
        %v2873 = vunpack.c.l.b16 %v1975
        %v2874 = vunpack.c.l.b16 %v1976
        %v2875 = vunpack.c.l.b16 %v1977
        %v2876 = vunpack.c.l.b16 %v1978
        %v2877 = vunpack.c.l.b16 %v1979
        %v2878 = vunpack.c.l.b16 %v1980
        %v2879 = vunpack.c.l.b16 %v1981
        %v2880 = vunpack.c.l.b16 %v1982
        %v2881 = vunpack.c.l.b16 %v1983
        %v2882 = vunpack.c.l.b16 %v1984
        %v2883 = vunpack.c.l.b16 %v1985
        %v2884 = vunpack.c.l.b16 %v1986
        %v2885 = vunpack.c.l.b16 %v1987
        %v2886 = vunpack.c.l.b16 %v1988
        %v2887 = vunpack.c.l.b16 %v1989
        %v2888 = vunpack.c.l.b16 %v1990
        %v2889 = vunpack.c.l.b16 %v1991
        %v2890 = vunpack.c.l.b16 %v1992
        %v2891 = vunpack.c.l.b16 %v1993
        %v2892 = vunpack.c.l.b16 %v1994
        %v2893 = vunpack.c.l.b16 %v1995
        %v2894 = vunpack.c.l.b16 %v1996
        %v2895 = vunpack.c.l.b16 %v1997
        %v2896 = vunpack.c.l.b16 %v1998
        %v2897 = vunpack.c.l.b16 %v1999
        %v2898 = vunpack.c.l.b16 %v2000
        %v2899 = vunpack.c.l.b16 %v2001
        %v2900 = vunpack.c.l.b16 %v2002
        %v2901 = vunpack.c.l.b16 %v2003
        %v2902 = vunpack.c.l.b16 %v2004
        %v2903 = vunpack.c.l.b16 %v2005
        %v2904 = vunpack.c.l.b16 %v2006
        %v2905 = vunpack.c.l.b16 %v2007
        %v2906 = vunpack.c.l.b16 %v2008
        %v2907 = vunpack.c.l.b16 %v2009
        %v2908 = vunpack.c.l.b16 %v2010
        %v2909 = vunpack.c.l.b16 %v2011
        %v2910 = vunpack.c.l.b16 %v2012
        %v2911 = vunpack.c.l.b16 %v2013
        %v2912 = vunpack.c.l.b16 %v2014
        %v2913 = vunpack.c.l.b16 %v2015
        %v2914 = vunpack.c.l.b16 %v2016
        %v2915 = vunpack.c.l.b16 %v2017
        %v2916 = vunpack.c.l.b16 %v2018
        %v2917 = vunpack.c.l.b16 %v2019
        %v2918 = vunpack.c.l.b16 %v2020
        %v2919 = vunpack.c.l.b16 %v2021
        %v2920 = vunpack.c.l.b16 %v2022
        %v2921 = vunpack.c.l.b16 %v2023
        %v2922 = vunpack.c.l.b16 %v2024
        %v2923 = vunpack.c.l.b16 %v2025
        %v2924 = vunpack.c.l.b16 %v2026
        %v2925 = vunpack.c.l.b16 %v2027
        %v2926 = vunpack.c.l.b16 %v2028
        %v2927 = vunpack.c.l.b16 %v2029
        %v2928 = vunpack.c.l.b16 %v2030
        %v2929 = vunpack.c.l.b16 %v2031
        %v2930 = vunpack.c.l.b16 %v2032
        %v2931 = vunpack.c.l.b16 %v2033
        %v2932 = vunpack.c.l.b16 %v2034
        %v2933 = vunpack.c.l.b16 %v2035
        %v2934 = vunpack.c.l.b16 %v2036
        %v2935 = vunpack.c.l.b16 %v2037
        %v2936 = vunpack.c.l.b16 %v2038
        %v2937 = vunpack.c.l.b16 %v2039
        %v2938 = vunpack.c.l.b16 %v2040
        %v2939 = vunpack.c.l.b16 %v2041
        %v2940 = vunpack.c.l.b16 %v2042
        %v2941 = vunpack.c.l.b16 %v2043
        %v2942 = vunpack.c.l.b16 %v2044
        %v2943 = vunpack.c.l.b16 %v2045
        %v2944 = vunpack.c.l.b16 %v2046
        %v2945 = vunpack.c.l.b16 %v2047
        %v2946 = vunpack.c.l.b16 %v2048
        %v2947 = vunpack.c.l.b16 %v2049
        %v2948 = vunpack.c.l.b16 %v2050
        %v2949 = vunpack.c.l.b16 %v2051
        %v2950 = vunpack.c.l.b16 %v2052
        %v2951 = vunpack.c.l.b16 %v2053
        %v2952 = vunpack.c.l.b16 %v2054
        %v2953 = vunpack.c.l.b16 %v2055
        %v2954 = vunpack.c.l.b16 %v2056
        %v2955 = vunpack.c.l.b16 %v2057
        %v2956 = vunpack.c.l.b16 %v2058
        %v2957 = vunpack.c.l.b16 %v2059
        %v2958 = vunpack.c.l.b16 %v2060
        %v2959 = vunpack.c.l.b16 %v2061
        %v2960 = vunpack.c.l.b16 %v2062
        %v2961 = vunpack.c.l.b16 %v2063
        %v2962 = vunpack.c.l.b16 %v2064
        %v2963 = vunpack.c.l.b16 %v2065
        %v2964 = vunpack.c.l.b16 %v2066
        %v2965 = vunpack.c.l.b16 %v2067
        %v2966 = vunpack.c.l.b16 %v2068
        %v2967 = vunpack.c.l.b16 %v2069
        %v2968 = vunpack.c.l.b16 %v2070
        %v2969 = vunpack.c.l.b16 %v2071
        %v2970 = vunpack.c.l.b16 %v2072
        %v2971 = vunpack.c.l.b16 %v2073
        %v2972 = vunpack.c.l.b16 %v2074
        %v2973 = vpack.c.b16 %v2614, %v2613
        %v2974 = vpack.c.b16 %v2616, %v2615
        %v2975 = vpack.c.b16 %v2618, %v2617
        %v2976 = vpack.c.b16 %v2620, %v2619
        %v2977 = vpack.c.b16 %v2622, %v2621
        %v2978 = vpack.c.b16 %v2624, %v2623
        %v2979 = vpack.c.b16 %v2626, %v2625
        %v2980 = vpack.c.b16 %v2628, %v2627
        %v2981 = vpack.c.b16 %v2630, %v2629
        %v2982 = vpack.c.b16 %v2632, %v2631
        %v2983 = vpack.c.b16 %v2634, %v2633
        %v2984 = vpack.c.b16 %v2636, %v2635
        %v2985 = vpack.c.b16 %v2638, %v2637
        %v2986 = vpack.c.b16 %v2640, %v2639
        %v2987 = vpack.c.b16 %v2642, %v2641
        %v2988 = vpack.c.b16 %v2644, %v2643
        %v2989 = vpack.c.b16 %v2646, %v2645
        %v2990 = vpack.c.b16 %v2648, %v2647
        %v2991 = vpack.c.b16 %v2650, %v2649
        %v2992 = vpack.c.b16 %v2652, %v2651
        %v2993 = vpack.c.b16 %v2654, %v2653
        %v2994 = vpack.c.b16 %v2656, %v2655
        %v2995 = vpack.c.b16 %v2658, %v2657
        %v2996 = vpack.c.b16 %v2660, %v2659
        %v2997 = vpack.c.b16 %v2662, %v2661
        %v2998 = vpack.c.b16 %v2664, %v2663
        %v2999 = vpack.c.b16 %v2666, %v2665
        %v3000 = vpack.c.b16 %v2668, %v2667
        %v3001 = vpack.c.b16 %v2670, %v2669
        %v3002 = vpack.c.b16 %v2672, %v2671
        %v3003 = vpack.c.b16 %v2674, %v2673
        %v3004 = vpack.c.b16 %v2676, %v2675
        %v3005 = vpack.c.b16 %v2678, %v2677
        %v3006 = vpack.c.b16 %v2680, %v2679
        %v3007 = vpack.c.b16 %v2682, %v2681
        %v3008 = vpack.c.b16 %v2684, %v2683
        %v3009 = vpack.c.b16 %v2686, %v2685
        %v3010 = vpack.c.b16 %v2688, %v2687
        %v3011 = vpack.c.b16 %v2690, %v2689
        %v3012 = vpack.c.b16 %v2692, %v2691
        %v3013 = vpack.c.b16 %v2694, %v2693
        %v3014 = vpack.c.b16 %v2696, %v2695
        %v3015 = vpack.c.b16 %v2698, %v2697
        %v3016 = vpack.c.b16 %v2700, %v2699
        %v3017 = vpack.c.b16 %v2702, %v2701
        %v3018 = vpack.c.b16 %v2704, %v2703
        %v3019 = vpack.c.b16 %v2706, %v2705
        %v3020 = vpack.c.b16 %v2708, %v2707
        %v3021 = vpack.c.b16 %v2710, %v2709
        %v3022 = vpack.c.b16 %v2712, %v2711
        %v3023 = vpack.c.b16 %v2714, %v2713
        %v3024 = vpack.c.b16 %v2716, %v2715
        %v3025 = vpack.c.b16 %v2718, %v2717
        %v3026 = vpack.c.b16 %v2720, %v2719
        %v3027 = vpack.c.b16 %v2722, %v2721
        %v3028 = vpack.c.b16 %v2724, %v2723
        %v3029 = vpack.c.b16 %v2726, %v2725
        %v3030 = vpack.c.b16 %v2728, %v2727
        %v3031 = vpack.c.b16 %v2730, %v2729
        %v3032 = vpack.c.b16 %v2732, %v2731
        %v3033 = vpack.c.b16 %v2734, %v2733
        %v3034 = vpack.c.b16 %v2736, %v2735
        %v3035 = vpack.c.b16 %v2738, %v2737
        %v3036 = vpack.c.b16 %v2740, %v2739
        %v3037 = vpack.c.b16 %v2742, %v2741
        %v3038 = vpack.c.b16 %v2744, %v2743
        %v3039 = vpack.c.b16 %v2746, %v2745
        %v3040 = vpack.c.b16 %v2748, %v2747
        %v3041 = vpack.c.b16 %v2750, %v2749
        %v3042 = vpack.c.b16 %v2752, %v2751
        %v3043 = vpack.c.b16 %v2754, %v2753
        %v3044 = vpack.c.b16 %v2756, %v2755
        %v3045 = vpack.c.b16 %v2758, %v2757
        %v3046 = vpack.c.b16 %v2760, %v2759
        %v3047 = vpack.c.b16 %v2762, %v2761
        %v3048 = vpack.c.b16 %v2764, %v2763
        %v3049 = vpack.c.b16 %v2766, %v2765
        %v3050 = vpack.c.b16 %v2768, %v2767
        %v3051 = vpack.c.b16 %v2770, %v2769
        %v3052 = vpack.c.b16 %v2772, %v2771
        %v3053 = vpack.c.b16 %v2774, %v2773
        %v3054 = vpack.c.b16 %v2776, %v2775
        %v3055 = vpack.c.b16 %v2778, %v2777
        %v3056 = vpack.c.b16 %v2780, %v2779
        %v3057 = vpack.c.b16 %v2782, %v2781
        %v3058 = vpack.c.b16 %v2784, %v2783
        %v3059 = vpack.c.b16 %v2786, %v2785
        %v3060 = vpack.c.b16 %v2788, %v2787
        %v3061 = vpack.c.b16 %v2790, %v2789
        %v3062 = vpack.c.b16 %v2792, %v2791
        %v3063 = vpack.c.b16 %v2794, %v2793
        %v3064 = vpack.c.b16 %v2796, %v2795
        %v3065 = vpack.c.b16 %v2798, %v2797
        %v3066 = vpack.c.b16 %v2800, %v2799
        %v3067 = vpack.c.b16 %v2802, %v2801
        %v3068 = vpack.c.b16 %v2804, %v2803
        %v3069 = vpack.c.b16 %v2806, %v2805
        %v3070 = vpack.c.b16 %v2808, %v2807
        %v3071 = vpack.c.b16 %v2810, %v2809
        %v3072 = vpack.c.b16 %v2812, %v2811
        %v3073 = vpack.c.b16 %v2814, %v2813
        %v3074 = vpack.c.b16 %v2816, %v2815
        %v3075 = vpack.c.b16 %v2818, %v2817
        %v3076 = vpack.c.b16 %v2820, %v2819
        %v3077 = vpack.c.b16 %v2822, %v2821
        %v3078 = vpack.c.b16 %v2824, %v2823
        %v3079 = vpack.c.b16 %v2826, %v2825
        %v3080 = vpack.c.b16 %v2828, %v2827
        %v3081 = vpack.c.b16 %v2830, %v2829
        %v3082 = vpack.c.b16 %v2832, %v2831
        %v3083 = vpack.c.b16 %v2834, %v2833
        %v3084 = vpack.c.b16 %v2836, %v2835
        %v3085 = vpack.c.b16 %v2838, %v2837
        %v3086 = vpack.c.b16 %v2840, %v2839
        %v3087 = vpack.c.b16 %v2842, %v2841
        %v3088 = vpack.c.b16 %v2844, %v2843
        %v3089 = vpack.c.b16 %v2846, %v2845
        %v3090 = vpack.c.b16 %v2848, %v2847
        %v3091 = vpack.c.b16 %v2850, %v2849
        %v3092 = vpack.c.b16 %v2852, %v2851
        %v3093 = vpack.c.b16 %v2854, %v2853
        %v3094 = vpack.c.b16 %v2856, %v2855
        %v3095 = vpack.c.b16 %v2858, %v2857
        %v3096 = vpack.c.b16 %v2860, %v2859
        %v3097 = vpack.c.b16 %v2862, %v2861
        %v3098 = vpack.c.b16 %v2864, %v2863
        %v3099 = vpack.c.b16 %v2866, %v2865
        %v3100 = vpack.c.b16 %v2868, %v2867
        %v3101 = vpack.c.b16 %v2870, %v2869
        %v3102 = vpack.c.b16 %v2872, %v2871
        %v3103 = vpack.c.b16 %v2874, %v2873
        %v3104 = vpack.c.b16 %v2876, %v2875
        %v3105 = vpack.c.b16 %v2878, %v2877
        %v3106 = vpack.c.b16 %v2880, %v2879
        %v3107 = vpack.c.b16 %v2882, %v2881
        %v3108 = vpack.c.b16 %v2884, %v2883
        %v3109 = vpack.c.b16 %v2886, %v2885
        %v3110 = vpack.c.b16 %v2888, %v2887
        %v3111 = vpack.c.b16 %v2890, %v2889
        %v3112 = vpack.c.b16 %v2892, %v2891
        %v3113 = vpack.c.b16 %v2894, %v2893
        %v3114 = vpack.c.b16 %v2896, %v2895
        %v3115 = vpack.c.b16 %v2898, %v2897
        %v3116 = vpack.c.b16 %v2900, %v2899
        %v3117 = vpack.c.b16 %v2902, %v2901
        %v3118 = vpack.c.b16 %v2904, %v2903
        %v3119 = vpack.c.b16 %v2906, %v2905
        %v3120 = vpack.c.b16 %v2908, %v2907
        %v3121 = vpack.c.b16 %v2910, %v2909
        %v3122 = vpack.c.b16 %v2912, %v2911
        %v3123 = vpack.c.b16 %v2914, %v2913
        %v3124 = vpack.c.b16 %v2916, %v2915
        %v3125 = vpack.c.b16 %v2918, %v2917
        %v3126 = vpack.c.b16 %v2920, %v2919
        %v3127 = vpack.c.b16 %v2922, %v2921
        %v3128 = vpack.c.b16 %v2924, %v2923
        %v3129 = vpack.c.b16 %v2926, %v2925
        %v3130 = vpack.c.b16 %v2928, %v2927
        %v3131 = vpack.c.b16 %v2930, %v2929
        %v3132 = vpack.c.b16 %v2932, %v2931
        %v3133 = vpack.c.b16 %v2934, %v2933
        %v3134 = vpack.c.b16 %v2936, %v2935
        %v3135 = vpack.c.b16 %v2938, %v2937
        %v3136 = vpack.c.b16 %v2940, %v2939
        %v3137 = vpack.c.b16 %v2942, %v2941
        %v3138 = vpack.c.b16 %v2944, %v2943
        %v3139 = vpack.c.b16 %v2946, %v2945
        %v3140 = vpack.c.b16 %v2948, %v2947
        %v3141 = vpack.c.b16 %v2950, %v2949
        %v3142 = vpack.c.b16 %v2952, %v2951
        %v3143 = vpack.c.b16 %v2954, %v2953
        %v3144 = vpack.c.b16 %v2956, %v2955
        %v3145 = vpack.c.b16 %v2958, %v2957
        %v3146 = vpack.c.b16 %v2960, %v2959
        %v3147 = vpack.c.b16 %v2962, %v2961
        %v3148 = vpack.c.b16 %v2964, %v2963
        %v3149 = vpack.c.b16 %v2966, %v2965
        %v3150 = vpack.c.b16 %v2968, %v2967
        %v3151 = vpack.c.b16 %v2970, %v2969
        %v3152 = vpack.c.b16 %v2972, %v2971
        %vm3333 = vcmask 523264
        %v3335 = vsel %vm3333, %v2229, 0
        %3337 = vmatprep.subr.bf16.mxu0 0
        %3338 = vmatpush1.bf16.msra.mxu0 %v2980
        %3339 = vmatprep.subr.bf16.mxu0 0
        %3340 = vmatpush1.bf16.msra.mxu0 %v2979
        %3341 = vmatprep.subr.bf16.mxu0 0
        %3342 = vmatpush1.bf16.msra.mxu0 %v2978
        %3343 = vmatprep.subr.bf16.mxu0 0
        %3344 = vmatpush1.bf16.msra.mxu0 %v2977
        %3345 = vmatprep.subr.bf16.mxu0 0
        %3346 = vmatpush1.bf16.msra.mxu0 %v2976
        %3347 = vmatprep.subr.bf16.mxu0 0
        %3348 = vmatpush1.bf16.msra.mxu0 %v2975
        %3349 = vmatprep.subr.bf16.mxu0 0
        %3350 = vmatpush1.bf16.msra.mxu0 %v2974
        %3351 = vmatprep.subr.bf16.mxu0 0
        %3352 = vmatpush1.bf16.msra.mxu0 %v2973
        %3353 = vmatprep.subr.bf16.mxu0 0
        %3354 = vmatpush2.bf16.msra.mxu0 %v2988
        %3355 = vmatprep.subr.bf16.mxu0 0
        %3356 = vmatpush2.bf16.msra.mxu0 %v2987
        %3357 = vmatprep.subr.bf16.mxu0 0
        %3358 = vmatpush2.bf16.msra.mxu0 %v2986
        %3359 = vmatprep.subr.bf16.mxu0 0
        %3360 = vmatpush2.bf16.msra.mxu0 %v2985
        %3361 = vmatprep.subr.bf16.mxu0 0
        %3362 = vmatpush2.bf16.msra.mxu0 %v2984
        %3363 = vmatprep.subr.bf16.mxu0 0
        %3364 = vmatpush2.bf16.msra.mxu0 %v2983
        %3365 = vmatprep.subr.bf16.mxu0 0
        %3366 = vmatpush2.bf16.msra.mxu0 %v2982
        %3367 = vmatprep.subr.bf16.mxu0 0
        %3368 = vmatpush2.bf16.msra.mxu0 %v2981
        %3369 = vmatprep.mubr.bf16.mxu0 %v2122
        %3370 = vmatmul.mubr.bf16.gmra.mxu0 %v2108
        %v3371 = vpop.f32.mrf.mxu0
        %v3372 = vadd.f32 %v2080, %v3371
        %v3373 = vpop.f32.mrf.mxu0
        %v3374 = vpop.f32.mrf.mxu0
        %v3375 = vpop.f32.mrf.mxu0
        %3376 = vdwg.mxu0
        %3377 = vmatprep.subr.bf16.mxu0 0
        %3378 = vmatpush1.bf16.msra.mxu0 %v2996
        %3379 = vmatprep.subr.bf16.mxu0 0
        %3380 = vmatpush1.bf16.msra.mxu0 %v2995
        %3381 = vmatprep.subr.bf16.mxu0 0
        %3382 = vmatpush1.bf16.msra.mxu0 %v2994
        %3383 = vmatprep.subr.bf16.mxu0 0
        %3384 = vmatpush1.bf16.msra.mxu0 %v2993
        %3385 = vmatprep.subr.bf16.mxu0 0
        %3386 = vmatpush1.bf16.msra.mxu0 %v2992
        %3387 = vmatprep.subr.bf16.mxu0 0
        %3388 = vmatpush1.bf16.msra.mxu0 %v2991
        %3389 = vmatprep.subr.bf16.mxu0 0
        %3390 = vmatpush1.bf16.msra.mxu0 %v2990
        %3391 = vmatprep.subr.bf16.mxu0 0
        %3392 = vmatpush1.bf16.msra.mxu0 %v2989
        %3393 = vmatprep.subr.bf16.mxu0 0
        %3394 = vmatpush2.bf16.msra.mxu0 %v3004
        %3395 = vmatprep.subr.bf16.mxu0 0
        %3396 = vmatpush2.bf16.msra.mxu0 %v3003
        %3397 = vmatprep.subr.bf16.mxu0 0
        %3398 = vmatpush2.bf16.msra.mxu0 %v3002
        %3399 = vmatprep.subr.bf16.mxu0 0
        %3400 = vmatpush2.bf16.msra.mxu0 %v3001
        %3401 = vmatprep.subr.bf16.mxu0 0
        %3402 = vmatpush2.bf16.msra.mxu0 %v3000
        %3403 = vmatprep.subr.bf16.mxu0 0
        %3404 = vmatpush2.bf16.msra.mxu0 %v2999
        %3405 = vmatprep.subr.bf16.mxu0 0
        %3406 = vmatpush2.bf16.msra.mxu0 %v2998
        %3407 = vmatprep.subr.bf16.mxu0 0
        %3408 = vmatpush2.bf16.msra.mxu0 %v2997
        %3409 = vmatprep.mubr.bf16.mxu0 %v2132
        %3410 = vmatmul.mubr.bf16.gmra.mxu0 %v2130
        %v3411 = vpop.f32.mrf.mxu0
        %v3412 = vadd.f32 %v3372, %v3411
        %v3413 = vpop.f32.mrf.mxu0
        %v3414 = vpop.f32.mrf.mxu0
        %v3415 = vpop.f32.mrf.mxu0
        %3416 = vdwg.mxu0
        %3417 = vmatprep.subr.bf16.mxu0 0
        %3418 = vmatpush1.bf16.msra.mxu0 %v3012
        %3419 = vmatprep.subr.bf16.mxu0 0
        %3420 = vmatpush1.bf16.msra.mxu0 %v3011
        %3421 = vmatprep.subr.bf16.mxu0 0
        %3422 = vmatpush1.bf16.msra.mxu0 %v3010
        %3423 = vmatprep.subr.bf16.mxu0 0
        %3424 = vmatpush1.bf16.msra.mxu0 %v3009
        %3425 = vmatprep.subr.bf16.mxu0 0
        %3426 = vmatpush1.bf16.msra.mxu0 %v3008
        %3427 = vmatprep.subr.bf16.mxu0 0
        %3428 = vmatpush1.bf16.msra.mxu0 %v3007
        %3429 = vmatprep.subr.bf16.mxu0 0
        %3430 = vmatpush1.bf16.msra.mxu0 %v3006
        %3431 = vmatprep.subr.bf16.mxu0 0
        %3432 = vmatpush1.bf16.msra.mxu0 %v3005
        %3433 = vmatprep.subr.bf16.mxu0 0
        %3434 = vmatpush2.bf16.msra.mxu0 %v3020
        %3435 = vmatprep.subr.bf16.mxu0 0
        %3436 = vmatpush2.bf16.msra.mxu0 %v3019
        %3437 = vmatprep.subr.bf16.mxu0 0
        %3438 = vmatpush2.bf16.msra.mxu0 %v3018
        %3439 = vmatprep.subr.bf16.mxu0 0
        %3440 = vmatpush2.bf16.msra.mxu0 %v3017
        %3441 = vmatprep.subr.bf16.mxu0 0
        %3442 = vmatpush2.bf16.msra.mxu0 %v3016
        %3443 = vmatprep.subr.bf16.mxu0 0
        %3444 = vmatpush2.bf16.msra.mxu0 %v3015
        %3445 = vmatprep.subr.bf16.mxu0 0
        %3446 = vmatpush2.bf16.msra.mxu0 %v3014
        %3447 = vmatprep.subr.bf16.mxu0 0
        %3448 = vmatpush2.bf16.msra.mxu0 %v3013
        %3449 = vmatprep.mubr.bf16.mxu0 %v2129
        %3450 = vmatmul.mubr.bf16.gmra.mxu0 %v2115
        %v3451 = vpop.f32.mrf.mxu0
        %v3452 = vadd.f32 %v3412, %v3451
        %v3453 = vpop.f32.mrf.mxu0
        %v3454 = vpop.f32.mrf.mxu0
        %v3455 = vpop.f32.mrf.mxu0
        %3456 = vdwg.mxu0
        %3457 = vmatprep.subr.bf16.mxu0 0
        %3458 = vmatpush1.bf16.msra.mxu0 %v3028
        %3459 = vmatprep.subr.bf16.mxu0 0
        %3460 = vmatpush1.bf16.msra.mxu0 %v3027
        %3461 = vmatprep.subr.bf16.mxu0 0
        %3462 = vmatpush1.bf16.msra.mxu0 %v3026
        %3463 = vmatprep.subr.bf16.mxu0 0
        %3464 = vmatpush1.bf16.msra.mxu0 %v3025
        %3465 = vmatprep.subr.bf16.mxu0 0
        %3466 = vmatpush1.bf16.msra.mxu0 %v3024
        %3467 = vmatprep.subr.bf16.mxu0 0
        %3468 = vmatpush1.bf16.msra.mxu0 %v3023
        %3469 = vmatprep.subr.bf16.mxu0 0
        %3470 = vmatpush1.bf16.msra.mxu0 %v3022
        %3471 = vmatprep.subr.bf16.mxu0 0
        %3472 = vmatpush1.bf16.msra.mxu0 %v3021
        %3473 = vmatprep.subr.bf16.mxu0 0
        %3474 = vmatpush2.bf16.msra.mxu0 %v3036
        %3475 = vmatprep.subr.bf16.mxu0 0
        %3476 = vmatpush2.bf16.msra.mxu0 %v3035
        %3477 = vmatprep.subr.bf16.mxu0 0
        %3478 = vmatpush2.bf16.msra.mxu0 %v3034
        %3479 = vmatprep.subr.bf16.mxu0 0
        %3480 = vmatpush2.bf16.msra.mxu0 %v3033
        %3481 = vmatprep.subr.bf16.mxu0 0
        %3482 = vmatpush2.bf16.msra.mxu0 %v3032
        %3483 = vmatprep.subr.bf16.mxu0 0
        %3484 = vmatpush2.bf16.msra.mxu0 %v3031
        %3485 = vmatprep.subr.bf16.mxu0 0
        %3486 = vmatpush2.bf16.msra.mxu0 %v3030
        %3487 = vmatprep.subr.bf16.mxu0 0
        %3488 = vmatpush2.bf16.msra.mxu0 %v3029
        %3489 = vmatprep.mubr.bf16.mxu0 %v2133
        %3490 = vmatmul.mubr.bf16.gmra.mxu0 %v2131
        %v3491 = vpop.f32.mrf.mxu0
        %v3492 = vadd.f32 %v3452, %v3491
        %v3493 = vpop.f32.mrf.mxu0
        %v3494 = vpop.f32.mrf.mxu0
        %v3495 = vpop.f32.mrf.mxu0
        %3496 = vdwg.mxu0
        %3497 = vmatprep.subr.bf16.mxu0 0
        %3498 = vmatpush1.bf16.msra.mxu0 %v3044
        %3499 = vmatprep.subr.bf16.mxu0 0
        %3500 = vmatpush1.bf16.msra.mxu0 %v3043
        %3501 = vmatprep.subr.bf16.mxu0 0
        %3502 = vmatpush1.bf16.msra.mxu0 %v3042
        %3503 = vmatprep.subr.bf16.mxu0 0
        %3504 = vmatpush1.bf16.msra.mxu0 %v3041
        %3505 = vmatprep.subr.bf16.mxu0 0
        %3506 = vmatpush1.bf16.msra.mxu0 %v3040
        %3507 = vmatprep.subr.bf16.mxu0 0
        %3508 = vmatpush1.bf16.msra.mxu0 %v3039
        %3509 = vmatprep.subr.bf16.mxu0 0
        %3510 = vmatpush1.bf16.msra.mxu0 %v3038
        %3511 = vmatprep.subr.bf16.mxu0 0
        %3512 = vmatpush1.bf16.msra.mxu0 %v3037
        %3513 = vmatprep.subr.bf16.mxu0 0
        %3514 = vmatpush2.bf16.msra.mxu0 %v3052
        %3515 = vmatprep.subr.bf16.mxu0 0
        %3516 = vmatpush2.bf16.msra.mxu0 %v3051
        %3517 = vmatprep.subr.bf16.mxu0 0
        %3518 = vmatpush2.bf16.msra.mxu0 %v3050
        %3519 = vmatprep.subr.bf16.mxu0 0
        %3520 = vmatpush2.bf16.msra.mxu0 %v3049
        %3521 = vmatprep.subr.bf16.mxu0 0
        %3522 = vmatpush2.bf16.msra.mxu0 %v3048
        %3523 = vmatprep.subr.bf16.mxu0 0
        %3524 = vmatpush2.bf16.msra.mxu0 %v3047
        %3525 = vmatprep.subr.bf16.mxu0 0
        %3526 = vmatpush2.bf16.msra.mxu0 %v3046
        %3527 = vmatprep.subr.bf16.mxu0 0
        %3528 = vmatpush2.bf16.msra.mxu0 %v3045
        %3529 = vmatprep.mubr.bf16.mxu0 %v2171
        %3530 = vmatmul.mubr.bf16.gmra.mxu0 %v2157
        %v3531 = vpop.f32.mrf.mxu0
        %v3532 = vadd.f32 %v3492, %v3531
        %v3533 = vpop.f32.mrf.mxu0
        %v3534 = vpop.f32.mrf.mxu0
        %v3535 = vpop.f32.mrf.mxu0
        %3536 = vdwg.mxu0
        %3537 = vmatprep.subr.bf16.mxu0 0
        %3538 = vmatpush1.bf16.msra.mxu0 %v3060
        %3539 = vmatprep.subr.bf16.mxu0 0
        %3540 = vmatpush1.bf16.msra.mxu0 %v3059
        %3541 = vmatprep.subr.bf16.mxu0 0
        %3542 = vmatpush1.bf16.msra.mxu0 %v3058
        %3543 = vmatprep.subr.bf16.mxu0 0
        %3544 = vmatpush1.bf16.msra.mxu0 %v3057
        %3545 = vmatprep.subr.bf16.mxu0 0
        %3546 = vmatpush1.bf16.msra.mxu0 %v3056
        %3547 = vmatprep.subr.bf16.mxu0 0
        %3548 = vmatpush1.bf16.msra.mxu0 %v3055
        %3549 = vmatprep.subr.bf16.mxu0 0
        %3550 = vmatpush1.bf16.msra.mxu0 %v3054
        %3551 = vmatprep.subr.bf16.mxu0 0
        %3552 = vmatpush1.bf16.msra.mxu0 %v3053
        %3553 = vmatprep.subr.bf16.mxu0 0
        %3554 = vmatpush2.bf16.msra.mxu0 %v3068
        %3555 = vmatprep.subr.bf16.mxu0 0
        %3556 = vmatpush2.bf16.msra.mxu0 %v3067
        %3557 = vmatprep.subr.bf16.mxu0 0
        %3558 = vmatpush2.bf16.msra.mxu0 %v3066
        %3559 = vmatprep.subr.bf16.mxu0 0
        %3560 = vmatpush2.bf16.msra.mxu0 %v3065
        %3561 = vmatprep.subr.bf16.mxu0 0
        %3562 = vmatpush2.bf16.msra.mxu0 %v3064
        %3563 = vmatprep.subr.bf16.mxu0 0
        %3564 = vmatpush2.bf16.msra.mxu0 %v3063
        %3565 = vmatprep.subr.bf16.mxu0 0
        %3566 = vmatpush2.bf16.msra.mxu0 %v3062
        %3567 = vmatprep.subr.bf16.mxu0 0
        %3568 = vmatpush2.bf16.msra.mxu0 %v3061
        %3569 = vmatprep.mubr.bf16.mxu0 %v2181
        %3570 = vmatmul.mubr.bf16.gmra.mxu0 %v2179
        %v3571 = vpop.f32.mrf.mxu0
        %v3572 = vadd.f32 %v3532, %v3571
        %v3573 = vpop.f32.mrf.mxu0
        %v3574 = vpop.f32.mrf.mxu0
        %v3575 = vpop.f32.mrf.mxu0
        %3576 = vdwg.mxu0
        %3577 = vmatprep.subr.bf16.mxu0 0
        %3578 = vmatpush1.bf16.msra.mxu0 %v3076
        %3579 = vmatprep.subr.bf16.mxu0 0
        %3580 = vmatpush1.bf16.msra.mxu0 %v3075
        %3581 = vmatprep.subr.bf16.mxu0 0
        %3582 = vmatpush1.bf16.msra.mxu0 %v3074
        %3583 = vmatprep.subr.bf16.mxu0 0
        %3584 = vmatpush1.bf16.msra.mxu0 %v3073
        %3585 = vmatprep.subr.bf16.mxu0 0
        %3586 = vmatpush1.bf16.msra.mxu0 %v3072
        %3587 = vmatprep.subr.bf16.mxu0 0
        %3588 = vmatpush1.bf16.msra.mxu0 %v3071
        %3589 = vmatprep.subr.bf16.mxu0 0
        %3590 = vmatpush1.bf16.msra.mxu0 %v3070
        %3591 = vmatprep.subr.bf16.mxu0 0
        %3592 = vmatpush1.bf16.msra.mxu0 %v3069
        %3593 = vmatprep.subr.bf16.mxu0 0
        %3594 = vmatpush2.bf16.msra.mxu0 %v3084
        %3595 = vmatprep.subr.bf16.mxu0 0
        %3596 = vmatpush2.bf16.msra.mxu0 %v3083
        %3597 = vmatprep.subr.bf16.mxu0 0
        %3598 = vmatpush2.bf16.msra.mxu0 %v3082
        %3599 = vmatprep.subr.bf16.mxu0 0
        %3600 = vmatpush2.bf16.msra.mxu0 %v3081
        %3601 = vmatprep.subr.bf16.mxu0 0
        %3602 = vmatpush2.bf16.msra.mxu0 %v3080
        %3603 = vmatprep.subr.bf16.mxu0 0
        %3604 = vmatpush2.bf16.msra.mxu0 %v3079
        %3605 = vmatprep.subr.bf16.mxu0 0
        %3606 = vmatpush2.bf16.msra.mxu0 %v3078
        %3607 = vmatprep.subr.bf16.mxu0 0
        %3608 = vmatpush2.bf16.msra.mxu0 %v3077
        %3609 = vmatprep.mubr.bf16.mxu0 %v2178
        %3610 = vmatmul.mubr.bf16.gmra.mxu0 %v2164
        %v3611 = vpop.f32.mrf.mxu0
        %v3612 = vadd.f32 %v3572, %v3611
        %v3613 = vpop.f32.mrf.mxu0
        %v3614 = vpop.f32.mrf.mxu0
        %v3615 = vpop.f32.mrf.mxu0
        %3616 = vdwg.mxu0
        %3617 = vmatprep.subr.bf16.mxu0 0
        %3618 = vmatpush1.bf16.msra.mxu0 %v3092
        %3619 = vmatprep.subr.bf16.mxu0 0
        %3620 = vmatpush1.bf16.msra.mxu0 %v3091
        %3621 = vmatprep.subr.bf16.mxu0 0
        %3622 = vmatpush1.bf16.msra.mxu0 %v3090
        %3623 = vmatprep.subr.bf16.mxu0 0
        %3624 = vmatpush1.bf16.msra.mxu0 %v3089
        %3625 = vmatprep.subr.bf16.mxu0 0
        %3626 = vmatpush1.bf16.msra.mxu0 %v3088
        %3627 = vmatprep.subr.bf16.mxu0 0
        %3628 = vmatpush1.bf16.msra.mxu0 %v3087
        %3629 = vmatprep.subr.bf16.mxu0 0
        %3630 = vmatpush1.bf16.msra.mxu0 %v3086
        %3631 = vmatprep.subr.bf16.mxu0 0
        %3632 = vmatpush1.bf16.msra.mxu0 %v3085
        %3633 = vmatprep.subr.bf16.mxu0 0
        %3634 = vmatpush2.bf16.msra.mxu0 %v3100
        %3635 = vmatprep.subr.bf16.mxu0 0
        %3636 = vmatpush2.bf16.msra.mxu0 %v3099
        %3637 = vmatprep.subr.bf16.mxu0 0
        %3638 = vmatpush2.bf16.msra.mxu0 %v3098
        %3639 = vmatprep.subr.bf16.mxu0 0
        %3640 = vmatpush2.bf16.msra.mxu0 %v3097
        %3641 = vmatprep.subr.bf16.mxu0 0
        %3642 = vmatpush2.bf16.msra.mxu0 %v3096
        %3643 = vmatprep.subr.bf16.mxu0 0
        %3644 = vmatpush2.bf16.msra.mxu0 %v3095
        %3645 = vmatprep.subr.bf16.mxu0 0
        %3646 = vmatpush2.bf16.msra.mxu0 %v3094
        %3647 = vmatprep.subr.bf16.mxu0 0
        %3648 = vmatpush2.bf16.msra.mxu0 %v3093
        %3649 = vmatprep.mubr.bf16.mxu0 %v2182
        %3650 = vmatmul.mubr.bf16.gmra.mxu0 %v2180
        %v3651 = vpop.f32.mrf.mxu0
        %v3652 = vadd.f32 %v3612, %v3651
        %v3653 = vpop.f32.mrf.mxu0
        %v3654 = vpop.f32.mrf.mxu0
        %v3655 = vpop.f32.mrf.mxu0
        %3656 = vdwg.mxu0
        %3657 = vmatprep.subr.bf16.mxu0 0
        %3658 = vmatpush1.bf16.msra.mxu0 %v3108
        %3659 = vmatprep.subr.bf16.mxu0 0
        %3660 = vmatpush1.bf16.msra.mxu0 %v3107
        %3661 = vmatprep.subr.bf16.mxu0 0
        %3662 = vmatpush1.bf16.msra.mxu0 %v3106
        %3663 = vmatprep.subr.bf16.mxu0 0
        %3664 = vmatpush1.bf16.msra.mxu0 %v3105
        %3665 = vmatprep.subr.bf16.mxu0 0
        %3666 = vmatpush1.bf16.msra.mxu0 %v3104
        %3667 = vmatprep.subr.bf16.mxu0 0
        %3668 = vmatpush1.bf16.msra.mxu0 %v3103
        %3669 = vmatprep.subr.bf16.mxu0 0
        %3670 = vmatpush1.bf16.msra.mxu0 %v3102
        %3671 = vmatprep.subr.bf16.mxu0 0
        %3672 = vmatpush1.bf16.msra.mxu0 %v3101
        %3673 = vmatprep.subr.bf16.mxu0 0
        %3674 = vmatpush2.bf16.msra.mxu0 %v3116
        %3675 = vmatprep.subr.bf16.mxu0 0
        %3676 = vmatpush2.bf16.msra.mxu0 %v3115
        %3677 = vmatprep.subr.bf16.mxu0 0
        %3678 = vmatpush2.bf16.msra.mxu0 %v3114
        %3679 = vmatprep.subr.bf16.mxu0 0
        %3680 = vmatpush2.bf16.msra.mxu0 %v3113
        %3681 = vmatprep.subr.bf16.mxu0 0
        %3682 = vmatpush2.bf16.msra.mxu0 %v3112
        %3683 = vmatprep.subr.bf16.mxu0 0
        %3684 = vmatpush2.bf16.msra.mxu0 %v3111
        %3685 = vmatprep.subr.bf16.mxu0 0
        %3686 = vmatpush2.bf16.msra.mxu0 %v3110
        %3687 = vmatprep.subr.bf16.mxu0 0
        %3688 = vmatpush2.bf16.msra.mxu0 %v3109
        %3689 = vmatprep.mubr.bf16.mxu0 %v2220
        %3690 = vmatmul.mubr.bf16.gmra.mxu0 %v2206
        %v3691 = vpop.f32.mrf.mxu0
        %v3692 = vadd.f32 %v3652, %v3691
        %v3693 = vpop.f32.mrf.mxu0
        %v3694 = vpop.f32.mrf.mxu0
        %v3695 = vpop.f32.mrf.mxu0
        %3696 = vdwg.mxu0
        %3697 = vmatprep.subr.bf16.mxu0 0
        %3698 = vmatpush1.bf16.msra.mxu0 %v3124
        %3699 = vmatprep.subr.bf16.mxu0 0
        %3700 = vmatpush1.bf16.msra.mxu0 %v3123
        %3701 = vmatprep.subr.bf16.mxu0 0
        %3702 = vmatpush1.bf16.msra.mxu0 %v3122
        %3703 = vmatprep.subr.bf16.mxu0 0
        %3704 = vmatpush1.bf16.msra.mxu0 %v3121
        %3705 = vmatprep.subr.bf16.mxu0 0
        %3706 = vmatpush1.bf16.msra.mxu0 %v3120
        %3707 = vmatprep.subr.bf16.mxu0 0
        %3708 = vmatpush1.bf16.msra.mxu0 %v3119
        %3709 = vmatprep.subr.bf16.mxu0 0
        %3710 = vmatpush1.bf16.msra.mxu0 %v3118
        %3711 = vmatprep.subr.bf16.mxu0 0
        %3712 = vmatpush1.bf16.msra.mxu0 %v3117
        %3713 = vmatprep.subr.bf16.mxu0 0
        %3714 = vmatpush2.bf16.msra.mxu0 %v3132
        %3715 = vmatprep.subr.bf16.mxu0 0
        %3716 = vmatpush2.bf16.msra.mxu0 %v3131
        %3717 = vmatprep.subr.bf16.mxu0 0
        %3718 = vmatpush2.bf16.msra.mxu0 %v3130
        %3719 = vmatprep.subr.bf16.mxu0 0
        %3720 = vmatpush2.bf16.msra.mxu0 %v3129
        %3721 = vmatprep.subr.bf16.mxu0 0
        %3722 = vmatpush2.bf16.msra.mxu0 %v3128
        %3723 = vmatprep.subr.bf16.mxu0 0
        %3724 = vmatpush2.bf16.msra.mxu0 %v3127
        %3725 = vmatprep.subr.bf16.mxu0 0
        %3726 = vmatpush2.bf16.msra.mxu0 %v3126
        %3727 = vmatprep.subr.bf16.mxu0 0
        %3728 = vmatpush2.bf16.msra.mxu0 %v3125
        %3729 = vmatprep.mubr.bf16.mxu0 %v2230
        %3730 = vmatmul.mubr.bf16.gmra.mxu0 %v2228
        %v3731 = vpop.f32.mrf.mxu0
        %v3732 = vadd.f32 %v3692, %v3731
        %v3733 = vpop.f32.mrf.mxu0
        %v3734 = vpop.f32.mrf.mxu0
        %v3735 = vpop.f32.mrf.mxu0
        %3736 = vdwg.mxu0
        %3737 = vmatprep.subr.bf16.mxu0 0
        %3738 = vmatpush1.bf16.msra.mxu0 %v3140
        %3739 = vmatprep.subr.bf16.mxu0 0
        %3740 = vmatpush1.bf16.msra.mxu0 %v3139
        %3741 = vmatprep.subr.bf16.mxu0 0
        %3742 = vmatpush1.bf16.msra.mxu0 %v3138
        %3743 = vmatprep.subr.bf16.mxu0 0
        %3744 = vmatpush1.bf16.msra.mxu0 %v3137
        %3745 = vmatprep.subr.bf16.mxu0 0
        %3746 = vmatpush1.bf16.msra.mxu0 %v3136
        %3747 = vmatprep.subr.bf16.mxu0 0
        %3748 = vmatpush1.bf16.msra.mxu0 %v3135
        %3749 = vmatprep.subr.bf16.mxu0 0
        %3750 = vmatpush1.bf16.msra.mxu0 %v3134
        %3751 = vmatprep.subr.bf16.mxu0 0
        %3752 = vmatpush1.bf16.msra.mxu0 %v3133
        %3753 = vmatprep.subr.bf16.mxu0 0
        %3754 = vmatpush2.bf16.msra.mxu0 %v3148
        %3755 = vmatprep.subr.bf16.mxu0 0
        %3756 = vmatpush2.bf16.msra.mxu0 %v3147
        %3757 = vmatprep.subr.bf16.mxu0 0
        %3758 = vmatpush2.bf16.msra.mxu0 %v3146
        %3759 = vmatprep.subr.bf16.mxu0 0
        %3760 = vmatpush2.bf16.msra.mxu0 %v3145
        %3761 = vmatprep.subr.bf16.mxu0 0
        %3762 = vmatpush2.bf16.msra.mxu0 %v3144
        %3763 = vmatprep.subr.bf16.mxu0 0
        %3764 = vmatpush2.bf16.msra.mxu0 %v3143
        %3765 = vmatprep.subr.bf16.mxu0 0
        %3766 = vmatpush2.bf16.msra.mxu0 %v3142
        %3767 = vmatprep.subr.bf16.mxu0 0
        %3768 = vmatpush2.bf16.msra.mxu0 %v3141
        %3769 = vmatprep.mubr.bf16.mxu0 %v2227
        %3770 = vmatmul.mubr.bf16.gmra.mxu0 %v2213
        %v3771 = vpop.f32.mrf.mxu0
        %v3772 = vadd.f32 %v3732, %v3771
        %v3773 = vpop.f32.mrf.mxu0
        %v3774 = vpop.f32.mrf.mxu0
        %v3775 = vpop.f32.mrf.mxu0
        %3776 = vdwg.mxu0
        %3777 = vmatprep.subr.bf16.mxu0 0
        %3778 = vmatpush1.bf16.msra.mxu0 0
        %3779 = vmatprep.subr.bf16.mxu0 0
        %3780 = vmatpush1.bf16.msra.mxu0 0
        %3781 = vmatprep.subr.bf16.mxu0 0
        %3782 = vmatpush1.bf16.msra.mxu0 0
        %3783 = vmatprep.subr.bf16.mxu0 0
        %3784 = vmatpush1.bf16.msra.mxu0 0
        %3785 = vmatprep.subr.bf16.mxu0 0
        %3786 = vmatpush1.bf16.msra.mxu0 %v3152
        %3787 = vmatprep.subr.bf16.mxu0 0
        %3788 = vmatpush1.bf16.msra.mxu0 %v3151
        %3789 = vmatprep.subr.bf16.mxu0 0
        %3790 = vmatpush1.bf16.msra.mxu0 %v3150
        %3791 = vmatprep.subr.bf16.mxu0 0
        %3792 = vmatpush1.bf16.msra.mxu0 %v3149
        %3793 = vmatprep.subr.bf16.mxu0 0
        %3794 = vmatpush2.bf16.msra.mxu0 0
        %3795 = vmatprep.subr.bf16.mxu0 0
        %3796 = vmatpush2.bf16.msra.mxu0 0
        %3797 = vmatprep.subr.bf16.mxu0 0
        %3798 = vmatpush2.bf16.msra.mxu0 0
        %3799 = vmatprep.subr.bf16.mxu0 0
        %3800 = vmatpush2.bf16.msra.mxu0 0
        %3801 = vmatprep.subr.bf16.mxu0 0
        %3802 = vmatpush2.bf16.msra.mxu0 0
        %3803 = vmatprep.subr.bf16.mxu0 0
        %3804 = vmatpush2.bf16.msra.mxu0 0
        %3805 = vmatprep.subr.bf16.mxu0 0
        %3806 = vmatpush2.bf16.msra.mxu0 0
        %3807 = vmatprep.subr.bf16.mxu0 0
        %3808 = vmatpush2.bf16.msra.mxu0 0
        %3809 = vmatprep.mubr.bf16.mxu0 0
        %3810 = vmatmul.mubr.bf16.gmra.mxu0 %v3335
        %v3811 = vpop.f32.mrf.mxu0
        %v3812 = vadd.f32 %v3772, %v3811
        %v3813 = vpop.f32.mrf.mxu0
        %v3814 = vpop.f32.mrf.mxu0
        %v3815 = vpop.f32.mrf.mxu0
        %3816 = vdwg.mxu0
        %v3817 = vmax.f32 %v3812, 0.0
        %v3818 = vpack.c.bf16 %v3817, %v3817
        %v3819 = vld [vmem:[%s1705] sm:$0xf]
        %v3820 = vld [vmem:[%s1705 + $0x4] sm:$0xf]
        %v3821 = vld [vmem:[%s1705 + $0x8] sm:$0xf]
        %v3822 = vld [vmem:[%s1705 + $0xc] sm:$0xf]
        %v3823 = vld [vmem:[%s1705 + $0x10] sm:$0xf]
        %v3824 = vld [vmem:[%s1705 + $0x14] sm:$0xf]
        %v3825 = vld [vmem:[%s1705 + $0x18] sm:$0xf]
        %v3826 = vld [vmem:[%s1705 + $0x1c] sm:$0xf]
        %v3827 = vld [vmem:[%s1705 + $0x20] sm:$0xf]
        %v3828 = vld [vmem:[%s1705 + $0x24] sm:$0xf]
        %v3829 = vld [vmem:[%s1705 + $0x28] sm:$0xf]
        %v3830 = vld [vmem:[%s1705 + $0x2c] sm:$0xf]
        %v3831 = vld [vmem:[%s1705 + $0x30] sm:$0xf]
        %v3832 = vld [vmem:[%s1705 + $0x34] sm:$0xf]
        %v3833 = vld [vmem:[%s1705 + $0x38] sm:$0xf]
        %v3834 = vld [vmem:[%s1705 + $0x3c] sm:$0xf]
        %v3851 = vunpack.c.l.b16 %v3819
        %v3852 = vunpack.c.l.b16 %v3820
        %v3853 = vunpack.c.l.b16 %v3821
        %v3854 = vunpack.c.l.b16 %v3822
        %v3855 = vunpack.c.l.b16 %v3823
        %v3856 = vunpack.c.l.b16 %v3824
        %v3857 = vunpack.c.l.b16 %v3825
        %v3858 = vunpack.c.l.b16 %v3826
        %v3859 = vunpack.c.l.b16 %v3827
        %v3860 = vunpack.c.l.b16 %v3828
        %v3861 = vunpack.c.l.b16 %v3829
        %v3862 = vunpack.c.l.b16 %v3830
        %v3863 = vunpack.c.l.b16 %v3831
        %v3864 = vunpack.c.l.b16 %v3832
        %v3865 = vunpack.c.l.b16 %v3833
        %v3866 = vunpack.c.l.b16 %v3834
        %v3867 = vpack.c.b16 %v3852, %v3851
        %v3868 = vpack.c.b16 %v3854, %v3853
        %v3869 = vpack.c.b16 %v3856, %v3855
        %v3870 = vpack.c.b16 %v3858, %v3857
        %v3871 = vpack.c.b16 %v3860, %v3859
        %v3872 = vpack.c.b16 %v3862, %v3861
        %v3873 = vpack.c.b16 %v3864, %v3863
        %v3874 = vpack.c.b16 %v3866, %v3865
        %3883 = vmatprep.subr.bf16.mxu0 0
        %3884 = vmatpush1.bf16.msra.mxu0 %v3874
        %3885 = vmatprep.subr.bf16.mxu0 0
        %3886 = vmatpush1.bf16.msra.mxu0 %v3873
        %3887 = vmatprep.subr.bf16.mxu0 0
        %3888 = vmatpush1.bf16.msra.mxu0 %v3872
        %3889 = vmatprep.subr.bf16.mxu0 0
        %3890 = vmatpush1.bf16.msra.mxu0 %v3871
        %3891 = vmatprep.subr.bf16.mxu0 0
        %3892 = vmatpush1.bf16.msra.mxu0 %v3870
        %3893 = vmatprep.subr.bf16.mxu0 0
        %3894 = vmatpush1.bf16.msra.mxu0 %v3869
        %3895 = vmatprep.subr.bf16.mxu0 0
        %3896 = vmatpush1.bf16.msra.mxu0 %v3868
        %3897 = vmatprep.subr.bf16.mxu0 0
        %3898 = vmatpush1.bf16.msra.mxu0 %v3867
        %3899 = vmatprep.subr.bf16.mxu0 0
        %3900 = vmatpush2.bf16.msra.mxu0 0
        %3901 = vmatprep.subr.bf16.mxu0 0
        %3902 = vmatpush2.bf16.msra.mxu0 0
        %3903 = vmatprep.subr.bf16.mxu0 0
        %3904 = vmatpush2.bf16.msra.mxu0 0
        %3905 = vmatprep.subr.bf16.mxu0 0
        %3906 = vmatpush2.bf16.msra.mxu0 0
        %3907 = vmatprep.subr.bf16.mxu0 0
        %3908 = vmatpush2.bf16.msra.mxu0 0
        %3909 = vmatprep.subr.bf16.mxu0 0
        %3910 = vmatpush2.bf16.msra.mxu0 0
        %3911 = vmatprep.subr.bf16.mxu0 0
        %3912 = vmatpush2.bf16.msra.mxu0 0
        %3913 = vmatprep.subr.bf16.mxu0 0
        %3914 = vmatpush2.bf16.msra.mxu0 0
        %3915 = vmatprep.mubr.bf16.mxu0 0
        %3916 = vmatmul.mubr.bf16.gmra.mxu0 %v3818
        %v3917 = vpop.f32.mrf.mxu0
        %v3918 = vadd.f32 0.0, %v3917
        %v3919 = vpop.f32.mrf.mxu0
        %v3920 = vpop.f32.mrf.mxu0
        %v3921 = vpop.f32.mrf.mxu0
        %3922 = vdwg.mxu0
        %vm3923 = vcmask 9216
        %3924 = vst.msk [vmem:[%s1710] sm:$0x3] %vm3923, %v3918
        %p3925 = scmp.lt.s32.totalorder %s15, 1
        %s3926 = scalar_select %p3925, %s15, 1
        %s3927 = smul.addr %s3926, 2
        %s3928 = scalar_lea.vmem %s4, %s3927
        // Predicated region
        $region78: #{cnn_forward.5} parent=72 // pred_check
          %p3929 = pneg %p132
        $region79: #{cnn_forward.5} parent=72 // pred_check_branch
          %3931 = sbr.rel (%p3929) target = $region81
        $region80: #{cnn_forward.5} parent=72 // pred_region
          _
        $region81: #{cnn_forward.5} parent=72 // pred_fallthru
          _
      $region73: #{cnn_forward.5} parent=5 // pred_fallthru
        _
      %p3932 = scmp.le.s32.totalorder 2, %s10
      // Predicated region
      $region82: #{cnn_forward.5} parent=5 // pred_check
        %p3933 = pneg %p3932
      $region83: #{cnn_forward.5} parent=5 // pred_check_branch
        %3935 = sbr.rel (%p3933) target = $region85
      $region84: #{cnn_forward.5} parent=5 // pred_region
        %s3936 = ssub.s32 %s10, 2
        // Predicated region
        $region86: #{cnn_forward.5} parent=84 // pred_check
          %p3937 = pneg %p138
        $region87: #{cnn_forward.5} parent=84 // pred_check_branch
          %3939 = sbr.rel (%p3937) target = $region89
        $region88: #{cnn_forward.5} parent=84 // pred_region
          %p3940 = scmp.lt.s32.totalorder %s16, 1
          %s3941 = scalar_select %p3940, %s16, 1
          %s3942 = smul.addr %s3941, 2
          %s3943 = scalar_lea.vmem %s4, %s3942
        $region89: #{cnn_forward.5} parent=84 // pred_fallthru
          _
      $region85: #{cnn_forward.5} parent=5 // pred_fallthru
        _
    $region6: #{cnn_forward.5} parent=1 // loop_footer
      %s14 = sadd.s32 1, %s10
    $region7: #{cnn_forward.5} parent=1 // loop_footer_branch
      %9 = sbr.rel target = $region3
    $region8: #{cnn_forward.5} parent=1 // loop_exit
      _

</llo_original>
